<compile_context>
chip_gen: v7x
topology: tpu7x:2x2x1
jax: 0.10.0
libtpu: 0.0.40
codegen_flags: <defaults>
</compile_context>

<pallas_src>
import functools

import jax
import jax.numpy as jnp
import numpy as np
from jax.experimental import pallas as pl
from jax.experimental.pallas import tpu as pltpu

MXU_DTYPE = jnp.bfloat16    # MXU operand dtype (set to jnp.float32 for exact f32)
ACC_DTYPE = jnp.float32     # accumulation / bias / ReLU / pooling dtype
VMEM_LIMIT_BYTES = 32 * 1024 * 1024
NUM_CLASSES = 10
FC3_PAD = 128               # fc3 output columns padded to a full lane tile


def _round_up(v, m):
    return ((v + m - 1) // m) * m


# ---------------------------------------------------------------------------
# Fused Conv2d(valid, 5x5) + bias + ReLU + MaxPool(2,2), Bt images per grid step
# ---------------------------------------------------------------------------
def _conv_relu_pool_kernel(x_ref, w_ref, b_ref, s_ref, o_ref, col_ref, m2_ref, *,
                           Bt, C, W, OC, K, Pcols, flatten_out):
    # x_ref:   (Bt, C, H*W)       flattened images (bf16)
    # w_ref:   (OC, K*K*C)        im2col-packed weights (bf16), resident
    # b_ref:   (OC, 1)            bias (f32), resident
    # s_ref:   (M2, PH*PW)        exact 0/1 pooling-anchor selector (bf16), resident
    # o_ref:   (Bt, OC, PH*PW)    or (Bt, OC*PH*PW) when flatten_out (lane-dense)
    # col_ref: (K*K*C, Pcols)     im2col VMEM scratch (reused per image)
    # m2_ref:  (Bt*OC, M2)        stacked shifted-max results (bf16)
    PHPW = s_ref.shape[1]

    # Phase 1: per image, build the im2col scratch with 25 unit-stride lane
    # slices and run ONE conv matmul (contraction K*K*C); bias + ReLU + the two
    # shifted max-pool passes happen in f32; m2 rows are stacked per block.
    for b in range(Bt):
        x = x_ref[b]                                             # (C, H*W)
        for ki in range(K):
            for kj in range(K):
                tap = ki * K + kj
                shift = ki * W + kj
                col_ref[tap * C:(tap + 1) * C, :] = x[:, shift:shift + Pcols]
        acc = jnp.dot(w_ref[...], col_ref[...],
                      preferred_element_type=ACC_DTYPE)          # (OC, Pcols)
        acc = jnp.maximum(acc + b_ref[...], 0.0)                 # bias + ReLU (f32)
        m1 = jnp.maximum(acc[:, :-1], acc[:, 1:])                # horizontal pair max
        m2 = jnp.maximum(m1[:, :-W], m1[:, W:])                  # vertical pair max
        m2_ref[b * OC:(b + 1) * OC, :] = m2.astype(m2_ref.dtype)

    # Phase 2: ONE block-stacked bf16 0/1 anchor-selection matmul on the MXU
    # (exact: sel is 0/1 and the result is cast to bf16 anyway).
    pooled = jnp.dot(m2_ref[...], s_ref[...],
                     preferred_element_type=ACC_DTYPE)           # (Bt*OC, PHPW)
    pooled = pooled.astype(o_ref.dtype)

    if flatten_out:
        # Lane-dense (Bt, OC*PHPW) output: oc-major flatten == torch .view order.
        for b in range(Bt):
            for oc in range(OC):
                r = b * OC + oc
                o_ref[pl.ds(b, 1), pl.ds(oc * PHPW, PHPW)] = pooled[r:r + 1, :]
    else:
        for b in range(Bt):
            o_ref[b] = pooled[b * OC:(b + 1) * OC, :]


def conv_relu_pool(x_flat, w_packed, b_col, *, H, W, K=5, block_n=8,
                   flatten_out=False, out_dtype=MXU_DTYPE):
    """x_flat: (N, C, H*W); w_packed: (OC, K*K*C); b_col: (OC, 1).
    Returns (N, OC, PH*PW), or (N, OC*PH*PW) lane-dense when flatten_out."""
    N, C, HW = x_flat.shape
    assert HW == H * W
    OC, KKC = w_packed.shape
    assert KKC == K * K * C
    OH, OW = H - K + 1, W - K + 1
    assert OH % 2 == 0 and OW % 2 == 0, "MaxPool2d(2,2) requires even conv output dims"
    PH, PW = OH // 2, OW // 2
    PHPW = PH * PW
    Pcols = (OH - 1) * W + OW          # flat-spatial columns computed by the kernel
    M2 = Pcols - 1 - W                 # columns surviving the two shifted-max passes

    # 0/1 selection matrix: pooled column q = ph*PW + pw picks anchor 2*ph*W + 2*pw.
    q = np.arange(PHPW)
    anchors = 2 * (q // PW) * W + 2 * (q % PW)
    sel = (np.arange(M2)[:, None] == anchors[None, :]).astype(np.float32)
    sel = jnp.asarray(sel, dtype=MXU_DTYPE)       # exact 0/1 in bf16

    bt = max(1, min(block_n, N))
    n_pad = pl.cdiv(N, bt) * bt
    if n_pad != N:
        x_flat = jnp.pad(x_flat, ((0, n_pad - N), (0, 0), (0, 0)))

    if flatten_out:
        out_shape = jax.ShapeDtypeStruct((n_pad, OC * PHPW), out_dtype)
        out_spec = pl.BlockSpec((bt, OC * PHPW), lambda n: (n, 0))
    else:
        out_shape = jax.ShapeDtypeStruct((n_pad, OC, PHPW), out_dtype)
        out_spec = pl.BlockSpec((bt, OC, PHPW), lambda n: (n, 0, 0))

    kernel = functools.partial(_conv_relu_pool_kernel, Bt=bt, C=C, W=W, OC=OC,
                               K=K, Pcols=Pcols, flatten_out=flatten_out)
    out = pl.pallas_call(
        kernel,
        out_shape=out_shape,
        grid=(n_pad // bt,),
        in_specs=[
            pl.BlockSpec((bt, C, HW), lambda n: (n, 0, 0)),     # per-block images
            pl.BlockSpec((OC, KKC), lambda n: (0, 0)),          # resident weights
            pl.BlockSpec((OC, 1), lambda n: (0, 0)),            # resident bias
            pl.BlockSpec((M2, PHPW), lambda n: (0, 0)),         # resident selector
        ],
        out_specs=out_spec,
        scratch_shapes=[
            pltpu.VMEM((KKC, Pcols), MXU_DTYPE),                # im2col scratch
            pltpu.VMEM((bt * OC, M2), MXU_DTYPE),               # stacked m2
        ],
        compiler_params=pltpu.CompilerParams(
            dimension_semantics=("parallel",),                  # megacore on v7x
            vmem_limit_bytes=VMEM_LIMIT_BYTES,
        ),
    )(x_flat, w_packed, b_col, sel)
    return out[:N] if n_pad != N else out


# ---------------------------------------------------------------------------
# Fused fc1 -> ReLU -> fc2 -> ReLU -> fc3 -> ReLU  (batch-tiled, weights resident)
# ---------------------------------------------------------------------------
def _fc_stack_kernel(x_ref, w1_ref, b1_ref, w2_ref, b2_ref, w3_ref, b3_ref, o_ref):
    h = jnp.dot(x_ref[...], w1_ref[...], preferred_element_type=ACC_DTYPE)
    h = jnp.maximum(h + b1_ref[...], 0.0)
    h = jnp.dot(h.astype(w2_ref.dtype), w2_ref[...], preferred_element_type=ACC_DTYPE)
    h = jnp.maximum(h + b2_ref[...], 0.0)
    h = jnp.dot(h.astype(w3_ref.dtype), w3_ref[...], preferred_element_type=ACC_DTYPE)
    o_ref[...] = jnp.maximum(h + b3_ref[...], 0.0)   # spec keeps ReLU on fc3


def fc_stack(x, w1, b1, w2, b2, w3, b3, *, tile_m=1024):
    M, K1 = x.shape
    N1, N2, N3 = w1.shape[1], w2.shape[1], w3.shape[1]
    tm = max(1, min(tile_m, M))
    m_pad = pl.cdiv(M, tm) * tm
    if m_pad != M:
        x = jnp.pad(x, ((0, m_pad - M), (0, 0)))
    out = pl.pallas_call(
        _fc_stack_kernel,
        out_shape=jax.ShapeDtypeStruct((m_pad, N3), jnp.float32),
        grid=(m_pad // tm,),
        in_specs=[
            pl.BlockSpec((tm, K1), lambda i: (i, 0)),
            pl.BlockSpec((K1, N1), lambda i: (0, 0)),
            pl.BlockSpec((1, N1), lambda i: (0, 0)),
            pl.BlockSpec((N1, N2), lambda i: (0, 0)),
            pl.BlockSpec((1, N2), lambda i: (0, 0)),
            pl.BlockSpec((N2, N3), lambda i: (0, 0)),
            pl.BlockSpec((1, N3), lambda i: (0, 0)),
        ],
        out_specs=pl.BlockSpec((tm, N3), lambda i: (i, 0)),
        compiler_params=pltpu.CompilerParams(
            dimension_semantics=("parallel",),
            vmem_limit_bytes=VMEM_LIMIT_BYTES,
        ),
    )(x, w1, b1, w2, b2, w3, b3)
    return out[:M] if m_pad != M else out


# ---------------------------------------------------------------------------
# Parameters (PyTorch-style init) + one-time layout prep
# ---------------------------------------------------------------------------
def init_params(key):
    keys = jax.random.split(key, 10)

    def init(k, shape, fan_in):
        bound = 1.0 / np.sqrt(fan_in)
        return jax.random.uniform(k, shape, jnp.float32, -bound, bound)

    return {
        "conv1_w": init(keys[0], (16, 3, 5, 5), 3 * 5 * 5),
        "conv1_b": init(keys[1], (16,), 3 * 5 * 5),
        "conv2_w": init(keys[2], (32, 16, 5, 5), 16 * 5 * 5),
        "conv2_b": init(keys[3], (32,), 16 * 5 * 5),
        "fc1_w": init(keys[4], (120, 32 * 5 * 5), 32 * 5 * 5),
        "fc1_b": init(keys[5], (120,), 32 * 5 * 5),
        "fc2_w": init(keys[6], (84, 120), 120),
        "fc2_b": init(keys[7], (84,), 120),
        "fc3_w": init(keys[8], (10, 84), 84),
        "fc3_b": init(keys[9], (10,), 84),
    }


def _pack_conv_weight(w):
    """(OC, C, K, K) -> (OC, K*K*C_pad), (ki,kj,c)-major, channels zero-padded to 8."""
    OC, C, K, _ = w.shape
    c_pad = _round_up(C, 8)
    if c_pad != C:
        w = jnp.pad(w, ((0, 0), (0, c_pad - C), (0, 0), (0, 0)))
    return jnp.transpose(w, (0, 2, 3, 1)).reshape(OC, K * K * c_pad).astype(MXU_DTYPE)


def prep_params(params):
    """One-time layout prep (no .T / reshape in the hot path)."""
    f3w = params["fc3_w"].T                       # (84, 10), columns padded to 128
    f3b = params["fc3_b"].reshape(1, -1)
    pad = FC3_PAD - f3w.shape[1]
    f3w = jnp.pad(f3w, ((0, 0), (0, pad)))
    f3b = jnp.pad(f3b, ((0, 0), (0, pad)))

    return {
        "c1w": _pack_conv_weight(params["conv1_w"]),
        "c1b": params["conv1_b"].reshape(-1, 1).astype(ACC_DTYPE),
        "c2w": _pack_conv_weight(params["conv2_w"]),
        "c2b": params["conv2_b"].reshape(-1, 1).astype(ACC_DTYPE),
        # fc1 rows in oc-major (oc*25 + p) order == torch .view(-1, 800) order,
        # which is exactly the lane order the conv2 kernel emits.
        "f1w": params["fc1_w"].T.astype(MXU_DTYPE),
        "f1b": params["fc1_b"].reshape(1, -1).astype(ACC_DTYPE),
        "f2w": params["fc2_w"].T.astype(MXU_DTYPE),
        "f2b": params["fc2_b"].reshape(1, -1).astype(ACC_DTYPE),
        "f3w": f3w.astype(MXU_DTYPE),
        "f3b": f3b.astype(ACC_DTYPE),
    }


def lenet_forward(p, x, *, block_n=8, tile_m=1024):
    # x: (N, 3, 32, 32) NCHW float32 (PyTorch layout).
    N, C, H, W = x.shape
    bt = max(1, min(block_n, N))
    n_pad = pl.cdiv(N, bt) * bt

    x = x.reshape(N, C, H * W).astype(MXU_DTYPE)                   # free reshape
    c_pad = _round_up(C, 8)
    pad_n, pad_c = n_pad - N, c_pad - C
    if pad_n or pad_c:
        x = jnp.pad(x, ((0, pad_n), (0, pad_c), (0, 0)))           # batch/channel pad (zeros)

    x = conv_relu_pool(x, p["c1w"], p["c1b"], H=H, W=W, block_n=bt)          # (Np, 16, 196)
    H2, W2 = (H - 4) // 2, (W - 4) // 2
    x = conv_relu_pool(x, p["c2w"], p["c2b"], H=H2, W=W2, block_n=bt,
                       flatten_out=True)                                      # (Np, 800) lane-dense
    out = fc_stack(x, p["f1w"], p["f1b"], p["f2w"], p["f2b"], p["f3w"], p["f3b"],
                   tile_m=tile_m)                                             # (Np, 128)
    return out[:N, :NUM_CLASSES]


# ---------------------------------------------------------------------------
# Plain-XLA reference mirroring the kernels' dtype strategy (for a tight check)
# ---------------------------------------------------------------------------
def lenet_reference(params, x):
    mxu, f32 = MXU_DTYPE, ACC_DTYPE

    def conv_relu_pool_ref(x, w, b):
        y = jax.lax.conv_general_dilated(
            x.astype(mxu), w.astype(mxu), (1, 1), "VALID",
            dimension_numbers=("NCHW", "OIHW", "NCHW"),
            preferred_element_type=f32)
        y = jax.nn.relu(y + b.reshape(1, -1, 1, 1).astype(f32))
        y = jax.lax.reduce_window(y, -jnp.inf, jax.lax.max,
                                  (1, 1, 2, 2), (1, 1, 2, 2), "VALID")
        return y.astype(mxu)

    def fc_relu(h, w, b):
        y = jnp.dot(h.astype(mxu), w.T.astype(mxu), preferred_element_type=f32)
        return jax.nn.relu(y + b.astype(f32))

    x = conv_relu_pool_ref(x, params["conv1_w"], params["conv1_b"])
    x = conv_relu_pool_ref(x, params["conv2_w"], params["conv2_b"])
    h = x.reshape(x.shape[0], -1)
    h = fc_relu(h, params["fc1_w"], params["fc1_b"])
    h = fc_relu(h, params["fc2_w"], params["fc2_b"])
    h = fc_relu(h, params["fc3_w"], params["fc3_b"])
    return h


if __name__ == "__main__":
    key = jax.random.PRNGKey(0)
    pkey, xkey = jax.random.split(key)
    params = init_params(pkey)
    prepped = prep_params(params)
    # LeNet's flatten (32*5*5) pins the spatial input to 32x32; batch = 2.
    x = jax.random.normal(xkey, (2, 3, 32, 32), dtype=jnp.float32)

    out = jax.block_until_ready(jax.jit(lenet_forward)(prepped, x))
    assert out.shape == (2, NUM_CLASSES), out.shape
    assert bool(jnp.all(out >= 0.0))          # final ReLU (present in the PyTorch spec)

    # Numerics sanity check vs a plain-XLA reference using the same dtype strategy.
    ref = jax.block_until_ready(jax.jit(lenet_reference)(params, x))
    err = float(jnp.max(jnp.abs(out - ref)))
    assert err < 5e-3, f"max abs err vs reference too large: {err}"
    print("KERNEL_OK")
</pallas_src>

<mosaic_0001>
module attributes {stable_mosaic.version = 11 : i64} {
  func.func @_conv_relu_pool_kernel(%arg0: i32, %arg1: memref<2x16x196xbf16, #tpu.memory_space<vmem>>, %arg2: memref<32x400xbf16, #tpu.memory_space<vmem>>, %arg3: memref<32x1xf32, #tpu.memory_space<vmem>>, %arg4: memref<121x25xbf16, #tpu.memory_space<vmem>>, %arg5: memref<2x800xbf16, #tpu.memory_space<vmem>>, %arg6: memref<400x136xbf16, #tpu.memory_space<vmem>>, %arg7: memref<64x121xbf16, #tpu.memory_space<vmem>>) attributes {dimension_semantics = [#tpu.dimension_semantics<parallel>], iteration_bounds = array<i64: 1>, scalar_prefetch = 0 : i64, scratch_operands = 2 : i64, tpu.core_type = #tpu.core_type<tc>, window_params = [{transform_indices = @transform_0, window_bounds = array<i64: 2, 16, 196>}, {pipeline_mode = #tpu.pipeline_mode<synchronous>, transform_indices = @transform_1, window_bounds = array<i64: 32, 400>}, {pipeline_mode = #tpu.pipeline_mode<synchronous>, transform_indices = @transform_2, window_bounds = array<i64: 32, 1>}, {pipeline_mode = #tpu.pipeline_mode<synchronous>, transform_indices = @transform_3, window_bounds = array<i64: 121, 25>}, {transform_indices = @transform_4, window_bounds = array<i64: 2, 800>}]} {
    %c0 = arith.constant 0 : index
    %c0_0 = arith.constant 0 : index
    %c0_1 = arith.constant 0 : index
    %0 = vector.load %arg1[%c0, %c0_0, %c0_1] : memref<2x16x196xbf16, #tpu.memory_space<vmem>>, vector<1x16x196xbf16>
    %1 = vector.shape_cast %0 : vector<1x16x196xbf16> to vector<16x196xbf16>
    %2 = vector.extract_strided_slice %1 {offsets = [0, 0], sizes = [16, 136], strides = [1, 1]} : vector<16x196xbf16> to vector<16x136xbf16>
    %c0_2 = arith.constant 0 : index
    %c0_3 = arith.constant 0 : index
    %3 = vector.load %arg6[%c0_2, %c0_3] : memref<400x136xbf16, #tpu.memory_space<vmem>>, vector<16x136xbf16>
    tpu.vector_store %arg6[%c0_2, %c0_3], %2 {strides = array<i32>} : memref<400x136xbf16, #tpu.memory_space<vmem>>, vector<16x136xbf16>,
    %4 = vector.extract_strided_slice %1 {offsets = [0, 1], sizes = [16, 136], strides = [1, 1]} : vector<16x196xbf16> to vector<16x136xbf16>
    %c16 = arith.constant 16 : index
    %c0_4 = arith.constant 0 : index
    %5 = vector.load %arg6[%c16, %c0_4] : memref<400x136xbf16, #tpu.memory_space<vmem>>, vector<16x136xbf16>
    tpu.vector_store %arg6[%c16, %c0_4], %4 {strides = array<i32>} : memref<400x136xbf16, #tpu.memory_space<vmem>>, vector<16x136xbf16>,
    %6 = vector.extract_strided_slice %1 {offsets = [0, 2], sizes = [16, 136], strides = [1, 1]} : vector<16x196xbf16> to vector<16x136xbf16>
    %c32 = arith.constant 32 : index
    %c0_5 = arith.constant 0 : index
    %7 = vector.load %arg6[%c32, %c0_5] : memref<400x136xbf16, #tpu.memory_space<vmem>>, vector<16x136xbf16>
    tpu.vector_store %arg6[%c32, %c0_5], %6 {strides = array<i32>} : memref<400x136xbf16, #tpu.memory_space<vmem>>, vector<16x136xbf16>,
    %8 = vector.extract_strided_slice %1 {offsets = [0, 3], sizes = [16, 136], strides = [1, 1]} : vector<16x196xbf16> to vector<16x136xbf16>
    %c48 = arith.constant 48 : index
    %c0_6 = arith.constant 0 : index
    %9 = vector.load %arg6[%c48, %c0_6] : memref<400x136xbf16, #tpu.memory_space<vmem>>, vector<16x136xbf16>
    tpu.vector_store %arg6[%c48, %c0_6], %8 {strides = array<i32>} : memref<400x136xbf16, #tpu.memory_space<vmem>>, vector<16x136xbf16>,
    %10 = vector.extract_strided_slice %1 {offsets = [0, 4], sizes = [16, 136], strides = [1, 1]} : vector<16x196xbf16> to vector<16x136xbf16>
    %c64 = arith.constant 64 : index
    %c0_7 = arith.constant 0 : index
    %11 = vector.load %arg6[%c64, %c0_7] : memref<400x136xbf16, #tpu.memory_space<vmem>>, vector<16x136xbf16>
    tpu.vector_store %arg6[%c64, %c0_7], %10 {strides = array<i32>} : memref<400x136xbf16, #tpu.memory_space<vmem>>, vector<16x136xbf16>,
    %12 = vector.extract_strided_slice %1 {offsets = [0, 14], sizes = [16, 136], strides = [1, 1]} : vector<16x196xbf16> to vector<16x136xbf16>
    %c80 = arith.constant 80 : index
    %c0_8 = arith.constant 0 : index
    %13 = vector.load %arg6[%c80, %c0_8] : memref<400x136xbf16, #tpu.memory_space<vmem>>, vector<16x136xbf16>
    tpu.vector_store %arg6[%c80, %c0_8], %12 {strides = array<i32>} : memref<400x136xbf16, #tpu.memory_space<vmem>>, vector<16x136xbf16>,
    %14 = vector.extract_strided_slice %1 {offsets = [0, 15], sizes = [16, 136], strides = [1, 1]} : vector<16x196xbf16> to vector<16x136xbf16>
    %c96 = arith.constant 96 : index
    %c0_9 = arith.constant 0 : index
    %15 = vector.load %arg6[%c96, %c0_9] : memref<400x136xbf16, #tpu.memory_space<vmem>>, vector<16x136xbf16>
    tpu.vector_store %arg6[%c96, %c0_9], %14 {strides = array<i32>} : memref<400x136xbf16, #tpu.memory_space<vmem>>, vector<16x136xbf16>,
    %16 = vector.extract_strided_slice %1 {offsets = [0, 16], sizes = [16, 136], strides = [1, 1]} : vector<16x196xbf16> to vector<16x136xbf16>
    %c112 = arith.constant 112 : index
    %c0_10 = arith.constant 0 : index
    %17 = vector.load %arg6[%c112, %c0_10] : memref<400x136xbf16, #tpu.memory_space<vmem>>, vector<16x136xbf16>
    tpu.vector_store %arg6[%c112, %c0_10], %16 {strides = array<i32>} : memref<400x136xbf16, #tpu.memory_space<vmem>>, vector<16x136xbf16>,
    %18 = vector.extract_strided_slice %1 {offsets = [0, 17], sizes = [16, 136], strides = [1, 1]} : vector<16x196xbf16> to vector<16x136xbf16>
    %c128 = arith.constant 128 : index
    %c0_11 = arith.constant 0 : index
    %19 = vector.load %arg6[%c128, %c0_11] : memref<400x136xbf16, #tpu.memory_space<vmem>>, vector<16x136xbf16>
    tpu.vector_store %arg6[%c128, %c0_11], %18 {strides = array<i32>} : memref<400x136xbf16, #tpu.memory_space<vmem>>, vector<16x136xbf16>,
    %20 = vector.extract_strided_slice %1 {offsets = [0, 18], sizes = [16, 136], strides = [1, 1]} : vector<16x196xbf16> to vector<16x136xbf16>
    %c144 = arith.constant 144 : index
    %c0_12 = arith.constant 0 : index
    %21 = vector.load %arg6[%c144, %c0_12] : memref<400x136xbf16, #tpu.memory_space<vmem>>, vector<16x136xbf16>
    tpu.vector_store %arg6[%c144, %c0_12], %20 {strides = array<i32>} : memref<400x136xbf16, #tpu.memory_space<vmem>>, vector<16x136xbf16>,
    %22 = vector.extract_strided_slice %1 {offsets = [0, 28], sizes = [16, 136], strides = [1, 1]} : vector<16x196xbf16> to vector<16x136xbf16>
    %c160 = arith.constant 160 : index
    %c0_13 = arith.constant 0 : index
    %23 = vector.load %arg6[%c160, %c0_13] : memref<400x136xbf16, #tpu.memory_space<vmem>>, vector<16x136xbf16>
    tpu.vector_store %arg6[%c160, %c0_13], %22 {strides = array<i32>} : memref<400x136xbf16, #tpu.memory_space<vmem>>, vector<16x136xbf16>,
    %24 = vector.extract_strided_slice %1 {offsets = [0, 29], sizes = [16, 136], strides = [1, 1]} : vector<16x196xbf16> to vector<16x136xbf16>
    %c176 = arith.constant 176 : index
    %c0_14 = arith.constant 0 : index
    %25 = vector.load %arg6[%c176, %c0_14] : memref<400x136xbf16, #tpu.memory_space<vmem>>, vector<16x136xbf16>
    tpu.vector_store %arg6[%c176, %c0_14], %24 {strides = array<i32>} : memref<400x136xbf16, #tpu.memory_space<vmem>>, vector<16x136xbf16>,
    %26 = vector.extract_strided_slice %1 {offsets = [0, 30], sizes = [16, 136], strides = [1, 1]} : vector<16x196xbf16> to vector<16x136xbf16>
    %c192 = arith.constant 192 : index
    %c0_15 = arith.constant 0 : index
    %27 = vector.load %arg6[%c192, %c0_15] : memref<400x136xbf16, #tpu.memory_space<vmem>>, vector<16x136xbf16>
    tpu.vector_store %arg6[%c192, %c0_15], %26 {strides = array<i32>} : memref<400x136xbf16, #tpu.memory_space<vmem>>, vector<16x136xbf16>,
    %28 = vector.extract_strided_slice %1 {offsets = [0, 31], sizes = [16, 136], strides = [1, 1]} : vector<16x196xbf16> to vector<16x136xbf16>
    %c208 = arith.constant 208 : index
    %c0_16 = arith.constant 0 : index
    %29 = vector.load %arg6[%c208, %c0_16] : memref<400x136xbf16, #tpu.memory_space<vmem>>, vector<16x136xbf16>
    tpu.vector_store %arg6[%c208, %c0_16], %28 {strides = array<i32>} : memref<400x136xbf16, #tpu.memory_space<vmem>>, vector<16x136xbf16>,
    %30 = vector.extract_strided_slice %1 {offsets = [0, 32], sizes = [16, 136], strides = [1, 1]} : vector<16x196xbf16> to vector<16x136xbf16>
    %c224 = arith.constant 224 : index
    %c0_17 = arith.constant 0 : index
    %31 = vector.load %arg6[%c224, %c0_17] : memref<400x136xbf16, #tpu.memory_space<vmem>>, vector<16x136xbf16>
    tpu.vector_store %arg6[%c224, %c0_17], %30 {strides = array<i32>} : memref<400x136xbf16, #tpu.memory_space<vmem>>, vector<16x136xbf16>,
    %32 = vector.extract_strided_slice %1 {offsets = [0, 42], sizes = [16, 136], strides = [1, 1]} : vector<16x196xbf16> to vector<16x136xbf16>
    %c240 = arith.constant 240 : index
    %c0_18 = arith.constant 0 : index
    %33 = vector.load %arg6[%c240, %c0_18] : memref<400x136xbf16, #tpu.memory_space<vmem>>, vector<16x136xbf16>
    tpu.vector_store %arg6[%c240, %c0_18], %32 {strides = array<i32>} : memref<400x136xbf16, #tpu.memory_space<vmem>>, vector<16x136xbf16>,
    %34 = vector.extract_strided_slice %1 {offsets = [0, 43], sizes = [16, 136], strides = [1, 1]} : vector<16x196xbf16> to vector<16x136xbf16>
    %c256 = arith.constant 256 : index
    %c0_19 = arith.constant 0 : index
    %35 = vector.load %arg6[%c256, %c0_19] : memref<400x136xbf16, #tpu.memory_space<vmem>>, vector<16x136xbf16>
    tpu.vector_store %arg6[%c256, %c0_19], %34 {strides = array<i32>} : memref<400x136xbf16, #tpu.memory_space<vmem>>, vector<16x136xbf16>,
    %36 = vector.extract_strided_slice %1 {offsets = [0, 44], sizes = [16, 136], strides = [1, 1]} : vector<16x196xbf16> to vector<16x136xbf16>
    %c272 = arith.constant 272 : index
    %c0_20 = arith.constant 0 : index
    %37 = vector.load %arg6[%c272, %c0_20] : memref<400x136xbf16, #tpu.memory_space<vmem>>, vector<16x136xbf16>
    tpu.vector_store %arg6[%c272, %c0_20], %36 {strides = array<i32>} : memref<400x136xbf16, #tpu.memory_space<vmem>>, vector<16x136xbf16>,
    %38 = vector.extract_strided_slice %1 {offsets = [0, 45], sizes = [16, 136], strides = [1, 1]} : vector<16x196xbf16> to vector<16x136xbf16>
    %c288 = arith.constant 288 : index
    %c0_21 = arith.constant 0 : index
    %39 = vector.load %arg6[%c288, %c0_21] : memref<400x136xbf16, #tpu.memory_space<vmem>>, vector<16x136xbf16>
    tpu.vector_store %arg6[%c288, %c0_21], %38 {strides = array<i32>} : memref<400x136xbf16, #tpu.memory_space<vmem>>, vector<16x136xbf16>,
    %40 = vector.extract_strided_slice %1 {offsets = [0, 46], sizes = [16, 136], strides = [1, 1]} : vector<16x196xbf16> to vector<16x136xbf16>
    %c304 = arith.constant 304 : index
    %c0_22 = arith.constant 0 : index
    %41 = vector.load %arg6[%c304, %c0_22] : memref<400x136xbf16, #tpu.memory_space<vmem>>, vector<16x136xbf16>
    tpu.vector_store %arg6[%c304, %c0_22], %40 {strides = array<i32>} : memref<400x136xbf16, #tpu.memory_space<vmem>>, vector<16x136xbf16>,
    %42 = vector.extract_strided_slice %1 {offsets = [0, 56], sizes = [16, 136], strides = [1, 1]} : vector<16x196xbf16> to vector<16x136xbf16>
    %c320 = arith.constant 320 : index
    %c0_23 = arith.constant 0 : index
    %43 = vector.load %arg6[%c320, %c0_23] : memref<400x136xbf16, #tpu.memory_space<vmem>>, vector<16x136xbf16>
    tpu.vector_store %arg6[%c320, %c0_23], %42 {strides = array<i32>} : memref<400x136xbf16, #tpu.memory_space<vmem>>, vector<16x136xbf16>,
    %44 = vector.extract_strided_slice %1 {offsets = [0, 57], sizes = [16, 136], strides = [1, 1]} : vector<16x196xbf16> to vector<16x136xbf16>
    %c336 = arith.constant 336 : index
    %c0_24 = arith.constant 0 : index
    %45 = vector.load %arg6[%c336, %c0_24] : memref<400x136xbf16, #tpu.memory_space<vmem>>, vector<16x136xbf16>
    tpu.vector_store %arg6[%c336, %c0_24], %44 {strides = array<i32>} : memref<400x136xbf16, #tpu.memory_space<vmem>>, vector<16x136xbf16>,
    %46 = vector.extract_strided_slice %1 {offsets = [0, 58], sizes = [16, 136], strides = [1, 1]} : vector<16x196xbf16> to vector<16x136xbf16>
    %c352 = arith.constant 352 : index
    %c0_25 = arith.constant 0 : index
    %47 = vector.load %arg6[%c352, %c0_25] : memref<400x136xbf16, #tpu.memory_space<vmem>>, vector<16x136xbf16>
    tpu.vector_store %arg6[%c352, %c0_25], %46 {strides = array<i32>} : memref<400x136xbf16, #tpu.memory_space<vmem>>, vector<16x136xbf16>,
    %48 = vector.extract_strided_slice %1 {offsets = [0, 59], sizes = [16, 136], strides = [1, 1]} : vector<16x196xbf16> to vector<16x136xbf16>
    %c368 = arith.constant 368 : index
    %c0_26 = arith.constant 0 : index
    %49 = vector.load %arg6[%c368, %c0_26] : memref<400x136xbf16, #tpu.memory_space<vmem>>, vector<16x136xbf16>
    tpu.vector_store %arg6[%c368, %c0_26], %48 {strides = array<i32>} : memref<400x136xbf16, #tpu.memory_space<vmem>>, vector<16x136xbf16>,
    %50 = vector.extract_strided_slice %1 {offsets = [0, 60], sizes = [16, 136], strides = [1, 1]} : vector<16x196xbf16> to vector<16x136xbf16>
    %c384 = arith.constant 384 : index
    %c0_27 = arith.constant 0 : index
    %51 = vector.load %arg6[%c384, %c0_27] : memref<400x136xbf16, #tpu.memory_space<vmem>>, vector<16x136xbf16>
    tpu.vector_store %arg6[%c384, %c0_27], %50 {strides = array<i32>} : memref<400x136xbf16, #tpu.memory_space<vmem>>, vector<16x136xbf16>,
    %c0_28 = arith.constant 0 : index
    %c0_29 = arith.constant 0 : index
    %52 = vector.load %arg2[%c0_28, %c0_29] : memref<32x400xbf16, #tpu.memory_space<vmem>>, vector<32x400xbf16>
    %c0_30 = arith.constant 0 : index
    %c0_31 = arith.constant 0 : index
    %53 = vector.load %arg6[%c0_30, %c0_31] : memref<400x136xbf16, #tpu.memory_space<vmem>>, vector<400x136xbf16>
    %cst = arith.constant dense<0.000000e+00> : vector<32x136xf32>
    %54 = tpu.matmul %52, %53, %cst {dimension_numbers = #tpu.dot_dimension_numbers<[1], [0], [0], [1], [0, 0, 1, 1], [], []>} : vector<32x400xbf16>, vector<400x136xbf16>, vector<32x136xf32> -> vector<32x136xf32>
    %c0_32 = arith.constant 0 : index
    %c0_33 = arith.constant 0 : index
    %55 = vector.load %arg3[%c0_32, %c0_33] : memref<32x1xf32, #tpu.memory_space<vmem>>, vector<32x1xf32>
    %56 = vector.broadcast %55 : vector<32x1xf32> to vector<32x136xf32>
    %57 = arith.addf %54, %56 : vector<32x136xf32>
    %cst_34 = arith.constant 0.000000e+00 : f32
    %58 = vector.broadcast %cst_34 : f32 to vector<32x136xf32>
    %59 = arith.maximumf %57, %58 : vector<32x136xf32>
    %60 = vector.extract_strided_slice %59 {offsets = [0, 0], sizes = [32, 135], strides = [1, 1]} : vector<32x136xf32> to vector<32x135xf32>
    %61 = vector.extract_strided_slice %59 {offsets = [0, 1], sizes = [32, 135], strides = [1, 1]} : vector<32x136xf32> to vector<32x135xf32>
    %62 = arith.maximumf %60, %61 : vector<32x135xf32>
    %63 = vector.extract_strided_slice %62 {offsets = [0, 0], sizes = [32, 121], strides = [1, 1]} : vector<32x135xf32> to vector<32x121xf32>
    %64 = vector.extract_strided_slice %62 {offsets = [0, 14], sizes = [32, 121], strides = [1, 1]} : vector<32x135xf32> to vector<32x121xf32>
    %65 = arith.maximumf %63, %64 : vector<32x121xf32>
    %66 = arith.truncf %65 : vector<32x121xf32> to vector<32x121xbf16>
    %c0_35 = arith.constant 0 : index
    %c0_36 = arith.constant 0 : index
    %67 = vector.load %arg7[%c0_35, %c0_36] : memref<64x121xbf16, #tpu.memory_space<vmem>>, vector<32x121xbf16>
    tpu.vector_store %arg7[%c0_35, %c0_36], %66 {strides = array<i32>} : memref<64x121xbf16, #tpu.memory_space<vmem>>, vector<32x121xbf16>,
    %c1 = arith.constant 1 : index
    %c0_37 = arith.constant 0 : index
    %c0_38 = arith.constant 0 : index
    %68 = vector.load %arg1[%c1, %c0_37, %c0_38] : memref<2x16x196xbf16, #tpu.memory_space<vmem>>, vector<1x16x196xbf16>
    %69 = vector.shape_cast %68 : vector<1x16x196xbf16> to vector<16x196xbf16>
    %70 = vector.extract_strided_slice %69 {offsets = [0, 0], sizes = [16, 136], strides = [1, 1]} : vector<16x196xbf16> to vector<16x136xbf16>
    %c0_39 = arith.constant 0 : index
    %c0_40 = arith.constant 0 : index
    %71 = vector.load %arg6[%c0_39, %c0_40] : memref<400x136xbf16, #tpu.memory_space<vmem>>, vector<16x136xbf16>
    tpu.vector_store %arg6[%c0_39, %c0_40], %70 {strides = array<i32>} : memref<400x136xbf16, #tpu.memory_space<vmem>>, vector<16x136xbf16>,
    %72 = vector.extract_strided_slice %69 {offsets = [0, 1], sizes = [16, 136], strides = [1, 1]} : vector<16x196xbf16> to vector<16x136xbf16>
    %c16_41 = arith.constant 16 : index
    %c0_42 = arith.constant 0 : index
    %73 = vector.load %arg6[%c16_41, %c0_42] : memref<400x136xbf16, #tpu.memory_space<vmem>>, vector<16x136xbf16>
    tpu.vector_store %arg6[%c16_41, %c0_42], %72 {strides = array<i32>} : memref<400x136xbf16, #tpu.memory_space<vmem>>, vector<16x136xbf16>,
    %74 = vector.extract_strided_slice %69 {offsets = [0, 2], sizes = [16, 136], strides = [1, 1]} : vector<16x196xbf16> to vector<16x136xbf16>
    %c32_43 = arith.constant 32 : index
    %c0_44 = arith.constant 0 : index
    %75 = vector.load %arg6[%c32_43, %c0_44] : memref<400x136xbf16, #tpu.memory_space<vmem>>, vector<16x136xbf16>
    tpu.vector_store %arg6[%c32_43, %c0_44], %74 {strides = array<i32>} : memref<400x136xbf16, #tpu.memory_space<vmem>>, vector<16x136xbf16>,
    %76 = vector.extract_strided_slice %69 {offsets = [0, 3], sizes = [16, 136], strides = [1, 1]} : vector<16x196xbf16> to vector<16x136xbf16>
    %c48_45 = arith.constant 48 : index
    %c0_46 = arith.constant 0 : index
    %77 = vector.load %arg6[%c48_45, %c0_46] : memref<400x136xbf16, #tpu.memory_space<vmem>>, vector<16x136xbf16>
    tpu.vector_store %arg6[%c48_45, %c0_46], %76 {strides = array<i32>} : memref<400x136xbf16, #tpu.memory_space<vmem>>, vector<16x136xbf16>,
    %78 = vector.extract_strided_slice %69 {offsets = [0, 4], sizes = [16, 136], strides = [1, 1]} : vector<16x196xbf16> to vector<16x136xbf16>
    %c64_47 = arith.constant 64 : index
    %c0_48 = arith.constant 0 : index
    %79 = vector.load %arg6[%c64_47, %c0_48] : memref<400x136xbf16, #tpu.memory_space<vmem>>, vector<16x136xbf16>
    tpu.vector_store %arg6[%c64_47, %c0_48], %78 {strides = array<i32>} : memref<400x136xbf16, #tpu.memory_space<vmem>>, vector<16x136xbf16>,
    %80 = vector.extract_strided_slice %69 {offsets = [0, 14], sizes = [16, 136], strides = [1, 1]} : vector<16x196xbf16> to vector<16x136xbf16>
    %c80_49 = arith.constant 80 : index
    %c0_50 = arith.constant 0 : index
    %81 = vector.load %arg6[%c80_49, %c0_50] : memref<400x136xbf16, #tpu.memory_space<vmem>>, vector<16x136xbf16>
    tpu.vector_store %arg6[%c80_49, %c0_50], %80 {strides = array<i32>} : memref<400x136xbf16, #tpu.memory_space<vmem>>, vector<16x136xbf16>,
    %82 = vector.extract_strided_slice %69 {offsets = [0, 15], sizes = [16, 136], strides = [1, 1]} : vector<16x196xbf16> to vector<16x136xbf16>
    %c96_51 = arith.constant 96 : index
    %c0_52 = arith.constant 0 : index
    %83 = vector.load %arg6[%c96_51, %c0_52] : memref<400x136xbf16, #tpu.memory_space<vmem>>, vector<16x136xbf16>
    tpu.vector_store %arg6[%c96_51, %c0_52], %82 {strides = array<i32>} : memref<400x136xbf16, #tpu.memory_space<vmem>>, vector<16x136xbf16>,
    %84 = vector.extract_strided_slice %69 {offsets = [0, 16], sizes = [16, 136], strides = [1, 1]} : vector<16x196xbf16> to vector<16x136xbf16>
    %c112_53 = arith.constant 112 : index
    %c0_54 = arith.constant 0 : index
    %85 = vector.load %arg6[%c112_53, %c0_54] : memref<400x136xbf16, #tpu.memory_space<vmem>>, vector<16x136xbf16>
    tpu.vector_store %arg6[%c112_53, %c0_54], %84 {strides = array<i32>} : memref<400x136xbf16, #tpu.memory_space<vmem>>, vector<16x136xbf16>,
    %86 = vector.extract_strided_slice %69 {offsets = [0, 17], sizes = [16, 136], strides = [1, 1]} : vector<16x196xbf16> to vector<16x136xbf16>
    %c128_55 = arith.constant 128 : index
    %c0_56 = arith.constant 0 : index
    %87 = vector.load %arg6[%c128_55, %c0_56] : memref<400x136xbf16, #tpu.memory_space<vmem>>, vector<16x136xbf16>
    tpu.vector_store %arg6[%c128_55, %c0_56], %86 {strides = array<i32>} : memref<400x136xbf16, #tpu.memory_space<vmem>>, vector<16x136xbf16>,
    %88 = vector.extract_strided_slice %69 {offsets = [0, 18], sizes = [16, 136], strides = [1, 1]} : vector<16x196xbf16> to vector<16x136xbf16>
    %c144_57 = arith.constant 144 : index
    %c0_58 = arith.constant 0 : index
    %89 = vector.load %arg6[%c144_57, %c0_58] : memref<400x136xbf16, #tpu.memory_space<vmem>>, vector<16x136xbf16>
    tpu.vector_store %arg6[%c144_57, %c0_58], %88 {strides = array<i32>} : memref<400x136xbf16, #tpu.memory_space<vmem>>, vector<16x136xbf16>,
    %90 = vector.extract_strided_slice %69 {offsets = [0, 28], sizes = [16, 136], strides = [1, 1]} : vector<16x196xbf16> to vector<16x136xbf16>
    %c160_59 = arith.constant 160 : index
    %c0_60 = arith.constant 0 : index
    %91 = vector.load %arg6[%c160_59, %c0_60] : memref<400x136xbf16, #tpu.memory_space<vmem>>, vector<16x136xbf16>
    tpu.vector_store %arg6[%c160_59, %c0_60], %90 {strides = array<i32>} : memref<400x136xbf16, #tpu.memory_space<vmem>>, vector<16x136xbf16>,
    %92 = vector.extract_strided_slice %69 {offsets = [0, 29], sizes = [16, 136], strides = [1, 1]} : vector<16x196xbf16> to vector<16x136xbf16>
    %c176_61 = arith.constant 176 : index
    %c0_62 = arith.constant 0 : index
    %93 = vector.load %arg6[%c176_61, %c0_62] : memref<400x136xbf16, #tpu.memory_space<vmem>>, vector<16x136xbf16>
    tpu.vector_store %arg6[%c176_61, %c0_62], %92 {strides = array<i32>} : memref<400x136xbf16, #tpu.memory_space<vmem>>, vector<16x136xbf16>,
    %94 = vector.extract_strided_slice %69 {offsets = [0, 30], sizes = [16, 136], strides = [1, 1]} : vector<16x196xbf16> to vector<16x136xbf16>
    %c192_63 = arith.constant 192 : index
    %c0_64 = arith.constant 0 : index
    %95 = vector.load %arg6[%c192_63, %c0_64] : memref<400x136xbf16, #tpu.memory_space<vmem>>, vector<16x136xbf16>
    tpu.vector_store %arg6[%c192_63, %c0_64], %94 {strides = array<i32>} : memref<400x136xbf16, #tpu.memory_space<vmem>>, vector<16x136xbf16>,
    %96 = vector.extract_strided_slice %69 {offsets = [0, 31], sizes = [16, 136], strides = [1, 1]} : vector<16x196xbf16> to vector<16x136xbf16>
    %c208_65 = arith.constant 208 : index
    %c0_66 = arith.constant 0 : index
    %97 = vector.load %arg6[%c208_65, %c0_66] : memref<400x136xbf16, #tpu.memory_space<vmem>>, vector<16x136xbf16>
    tpu.vector_store %arg6[%c208_65, %c0_66], %96 {strides = array<i32>} : memref<400x136xbf16, #tpu.memory_space<vmem>>, vector<16x136xbf16>,
    %98 = vector.extract_strided_slice %69 {offsets = [0, 32], sizes = [16, 136], strides = [1, 1]} : vector<16x196xbf16> to vector<16x136xbf16>
    %c224_67 = arith.constant 224 : index
    %c0_68 = arith.constant 0 : index
    %99 = vector.load %arg6[%c224_67, %c0_68] : memref<400x136xbf16, #tpu.memory_space<vmem>>, vector<16x136xbf16>
    tpu.vector_store %arg6[%c224_67, %c0_68], %98 {strides = array<i32>} : memref<400x136xbf16, #tpu.memory_space<vmem>>, vector<16x136xbf16>,
    %100 = vector.extract_strided_slice %69 {offsets = [0, 42], sizes = [16, 136], strides = [1, 1]} : vector<16x196xbf16> to vector<16x136xbf16>
    %c240_69 = arith.constant 240 : index
    %c0_70 = arith.constant 0 : index
    %101 = vector.load %arg6[%c240_69, %c0_70] : memref<400x136xbf16, #tpu.memory_space<vmem>>, vector<16x136xbf16>
    tpu.vector_store %arg6[%c240_69, %c0_70], %100 {strides = array<i32>} : memref<400x136xbf16, #tpu.memory_space<vmem>>, vector<16x136xbf16>,
    %102 = vector.extract_strided_slice %69 {offsets = [0, 43], sizes = [16, 136], strides = [1, 1]} : vector<16x196xbf16> to vector<16x136xbf16>
    %c256_71 = arith.constant 256 : index
    %c0_72 = arith.constant 0 : index
    %103 = vector.load %arg6[%c256_71, %c0_72] : memref<400x136xbf16, #tpu.memory_space<vmem>>, vector<16x136xbf16>
    tpu.vector_store %arg6[%c256_71, %c0_72], %102 {strides = array<i32>} : memref<400x136xbf16, #tpu.memory_space<vmem>>, vector<16x136xbf16>,
    %104 = vector.extract_strided_slice %69 {offsets = [0, 44], sizes = [16, 136], strides = [1, 1]} : vector<16x196xbf16> to vector<16x136xbf16>
    %c272_73 = arith.constant 272 : index
    %c0_74 = arith.constant 0 : index
    %105 = vector.load %arg6[%c272_73, %c0_74] : memref<400x136xbf16, #tpu.memory_space<vmem>>, vector<16x136xbf16>
    tpu.vector_store %arg6[%c272_73, %c0_74], %104 {strides = array<i32>} : memref<400x136xbf16, #tpu.memory_space<vmem>>, vector<16x136xbf16>,
    %106 = vector.extract_strided_slice %69 {offsets = [0, 45], sizes = [16, 136], strides = [1, 1]} : vector<16x196xbf16> to vector<16x136xbf16>
    %c288_75 = arith.constant 288 : index
    %c0_76 = arith.constant 0 : index
    %107 = vector.load %arg6[%c288_75, %c0_76] : memref<400x136xbf16, #tpu.memory_space<vmem>>, vector<16x136xbf16>
    tpu.vector_store %arg6[%c288_75, %c0_76], %106 {strides = array<i32>} : memref<400x136xbf16, #tpu.memory_space<vmem>>, vector<16x136xbf16>,
    %108 = vector.extract_strided_slice %69 {offsets = [0, 46], sizes = [16, 136], strides = [1, 1]} : vector<16x196xbf16> to vector<16x136xbf16>
    %c304_77 = arith.constant 304 : index
    %c0_78 = arith.constant 0 : index
    %109 = vector.load %arg6[%c304_77, %c0_78] : memref<400x136xbf16, #tpu.memory_space<vmem>>, vector<16x136xbf16>
    tpu.vector_store %arg6[%c304_77, %c0_78], %108 {strides = array<i32>} : memref<400x136xbf16, #tpu.memory_space<vmem>>, vector<16x136xbf16>,
    %110 = vector.extract_strided_slice %69 {offsets = [0, 56], sizes = [16, 136], strides = [1, 1]} : vector<16x196xbf16> to vector<16x136xbf16>
    %c320_79 = arith.constant 320 : index
    %c0_80 = arith.constant 0 : index
    %111 = vector.load %arg6[%c320_79, %c0_80] : memref<400x136xbf16, #tpu.memory_space<vmem>>, vector<16x136xbf16>
    tpu.vector_store %arg6[%c320_79, %c0_80], %110 {strides = array<i32>} : memref<400x136xbf16, #tpu.memory_space<vmem>>, vector<16x136xbf16>,
    %112 = vector.extract_strided_slice %69 {offsets = [0, 57], sizes = [16, 136], strides = [1, 1]} : vector<16x196xbf16> to vector<16x136xbf16>
    %c336_81 = arith.constant 336 : index
    %c0_82 = arith.constant 0 : index
    %113 = vector.load %arg6[%c336_81, %c0_82] : memref<400x136xbf16, #tpu.memory_space<vmem>>, vector<16x136xbf16>
    tpu.vector_store %arg6[%c336_81, %c0_82], %112 {strides = array<i32>} : memref<400x136xbf16, #tpu.memory_space<vmem>>, vector<16x136xbf16>,
    %114 = vector.extract_strided_slice %69 {offsets = [0, 58], sizes = [16, 136], strides = [1, 1]} : vector<16x196xbf16> to vector<16x136xbf16>
    %c352_83 = arith.constant 352 : index
    %c0_84 = arith.constant 0 : index
    %115 = vector.load %arg6[%c352_83, %c0_84] : memref<400x136xbf16, #tpu.memory_space<vmem>>, vector<16x136xbf16>
    tpu.vector_store %arg6[%c352_83, %c0_84], %114 {strides = array<i32>} : memref<400x136xbf16, #tpu.memory_space<vmem>>, vector<16x136xbf16>,
    %116 = vector.extract_strided_slice %69 {offsets = [0, 59], sizes = [16, 136], strides = [1, 1]} : vector<16x196xbf16> to vector<16x136xbf16>
    %c368_85 = arith.constant 368 : index
    %c0_86 = arith.constant 0 : index
    %117 = vector.load %arg6[%c368_85, %c0_86] : memref<400x136xbf16, #tpu.memory_space<vmem>>, vector<16x136xbf16>
    tpu.vector_store %arg6[%c368_85, %c0_86], %116 {strides = array<i32>} : memref<400x136xbf16, #tpu.memory_space<vmem>>, vector<16x136xbf16>,
    %118 = vector.extract_strided_slice %69 {offsets = [0, 60], sizes = [16, 136], strides = [1, 1]} : vector<16x196xbf16> to vector<16x136xbf16>
    %c384_87 = arith.constant 384 : index
    %c0_88 = arith.constant 0 : index
    %119 = vector.load %arg6[%c384_87, %c0_88] : memref<400x136xbf16, #tpu.memory_space<vmem>>, vector<16x136xbf16>
    tpu.vector_store %arg6[%c384_87, %c0_88], %118 {strides = array<i32>} : memref<400x136xbf16, #tpu.memory_space<vmem>>, vector<16x136xbf16>,
    %c0_89 = arith.constant 0 : index
    %c0_90 = arith.constant 0 : index
    %120 = vector.load %arg2[%c0_89, %c0_90] : memref<32x400xbf16, #tpu.memory_space<vmem>>, vector<32x400xbf16>
    %c0_91 = arith.constant 0 : index
    %c0_92 = arith.constant 0 : index
    %121 = vector.load %arg6[%c0_91, %c0_92] : memref<400x136xbf16, #tpu.memory_space<vmem>>, vector<400x136xbf16>
    %cst_93 = arith.constant dense<0.000000e+00> : vector<32x136xf32>
    %122 = tpu.matmul %120, %121, %cst_93 {dimension_numbers = #tpu.dot_dimension_numbers<[1], [0], [0], [1], [0, 0, 1, 1], [], []>} : vector<32x400xbf16>, vector<400x136xbf16>, vector<32x136xf32> -> vector<32x136xf32>
    %c0_94 = arith.constant 0 : index
    %c0_95 = arith.constant 0 : index
    %123 = vector.load %arg3[%c0_94, %c0_95] : memref<32x1xf32, #tpu.memory_space<vmem>>, vector<32x1xf32>
    %124 = vector.broadcast %123 : vector<32x1xf32> to vector<32x136xf32>
    %125 = arith.addf %122, %124 : vector<32x136xf32>
    %cst_96 = arith.constant 0.000000e+00 : f32
    %126 = vector.broadcast %cst_96 : f32 to vector<32x136xf32>
    %127 = arith.maximumf %125, %126 : vector<32x136xf32>
    %128 = vector.extract_strided_slice %127 {offsets = [0, 0], sizes = [32, 135], strides = [1, 1]} : vector<32x136xf32> to vector<32x135xf32>
    %129 = vector.extract_strided_slice %127 {offsets = [0, 1], sizes = [32, 135], strides = [1, 1]} : vector<32x136xf32> to vector<32x135xf32>
    %130 = arith.maximumf %128, %129 : vector<32x135xf32>
    %131 = vector.extract_strided_slice %130 {offsets = [0, 0], sizes = [32, 121], strides = [1, 1]} : vector<32x135xf32> to vector<32x121xf32>
    %132 = vector.extract_strided_slice %130 {offsets = [0, 14], sizes = [32, 121], strides = [1, 1]} : vector<32x135xf32> to vector<32x121xf32>
    %133 = arith.maximumf %131, %132 : vector<32x121xf32>
    %134 = arith.truncf %133 : vector<32x121xf32> to vector<32x121xbf16>
    %c32_97 = arith.constant 32 : index
    %c0_98 = arith.constant 0 : index
    %135 = vector.load %arg7[%c32_97, %c0_98] : memref<64x121xbf16, #tpu.memory_space<vmem>>, vector<32x121xbf16>
    tpu.vector_store %arg7[%c32_97, %c0_98], %134 {strides = array<i32>} : memref<64x121xbf16, #tpu.memory_space<vmem>>, vector<32x121xbf16>,
    %c0_99 = arith.constant 0 : index
    %c0_100 = arith.constant 0 : index
    %136 = vector.load %arg7[%c0_99, %c0_100] : memref<64x121xbf16, #tpu.memory_space<vmem>>, vector<64x121xbf16>
    %c0_101 = arith.constant 0 : index
    %c0_102 = arith.constant 0 : index
    %137 = vector.load %arg4[%c0_101, %c0_102] : memref<121x25xbf16, #tpu.memory_space<vmem>>, vector<121x25xbf16>
    %cst_103 = arith.constant dense<0.000000e+00> : vector<64x25xf32>
    %138 = tpu.matmul %136, %137, %cst_103 {dimension_numbers = #tpu.dot_dimension_numbers<[1], [0], [0], [1], [0, 0, 1, 1], [], []>} : vector<64x121xbf16>, vector<121x25xbf16>, vector<64x25xf32> -> vector<64x25xf32>
    %139 = arith.truncf %138 : vector<64x25xf32> to vector<64x25xbf16>
    %140 = vector.extract_strided_slice %139 {offsets = [0, 0], sizes = [1, 25], strides = [1, 1]} : vector<64x25xbf16> to vector<1x25xbf16>
    %c0_104 = arith.constant 0 : index
    %c0_105 = arith.constant 0 : index
    %141 = vector.load %arg5[%c0_104, %c0_105] : memref<2x800xbf16, #tpu.memory_space<vmem>>, vector<1x25xbf16>
    tpu.vector_store %arg5[%c0_104, %c0_105], %140 {strides = array<i32>} : memref<2x800xbf16, #tpu.memory_space<vmem>>, vector<1x25xbf16>,
    %142 = vector.extract_strided_slice %139 {offsets = [1, 0], sizes = [1, 25], strides = [1, 1]} : vector<64x25xbf16> to vector<1x25xbf16>
    %c0_106 = arith.constant 0 : index
    %c25 = arith.constant 25 : index
    %143 = vector.load %arg5[%c0_106, %c25] : memref<2x800xbf16, #tpu.memory_space<vmem>>, vector<1x25xbf16>
    tpu.vector_store %arg5[%c0_106, %c25], %142 {strides = array<i32>} : memref<2x800xbf16, #tpu.memory_space<vmem>>, vector<1x25xbf16>,
    %144 = vector.extract_strided_slice %139 {offsets = [2, 0], sizes = [1, 25], strides = [1, 1]} : vector<64x25xbf16> to vector<1x25xbf16>
    %c0_107 = arith.constant 0 : index
    %c50 = arith.constant 50 : index
    %145 = vector.load %arg5[%c0_107, %c50] : memref<2x800xbf16, #tpu.memory_space<vmem>>, vector<1x25xbf16>
    tpu.vector_store %arg5[%c0_107, %c50], %144 {strides = array<i32>} : memref<2x800xbf16, #tpu.memory_space<vmem>>, vector<1x25xbf16>,
    %146 = vector.extract_strided_slice %139 {offsets = [3, 0], sizes = [1, 25], strides = [1, 1]} : vector<64x25xbf16> to vector<1x25xbf16>
    %c0_108 = arith.constant 0 : index
    %c75 = arith.constant 75 : index
    %147 = vector.load %arg5[%c0_108, %c75] : memref<2x800xbf16, #tpu.memory_space<vmem>>, vector<1x25xbf16>
    tpu.vector_store %arg5[%c0_108, %c75], %146 {strides = array<i32>} : memref<2x800xbf16, #tpu.memory_space<vmem>>, vector<1x25xbf16>,
    %148 = vector.extract_strided_slice %139 {offsets = [4, 0], sizes = [1, 25], strides = [1, 1]} : vector<64x25xbf16> to vector<1x25xbf16>
    %c0_109 = arith.constant 0 : index
    %c100 = arith.constant 100 : index
    %149 = vector.load %arg5[%c0_109, %c100] : memref<2x800xbf16, #tpu.memory_space<vmem>>, vector<1x25xbf16>
    tpu.vector_store %arg5[%c0_109, %c100], %148 {strides = array<i32>} : memref<2x800xbf16, #tpu.memory_space<vmem>>, vector<1x25xbf16>,
    %150 = vector.extract_strided_slice %139 {offsets = [5, 0], sizes = [1, 25], strides = [1, 1]} : vector<64x25xbf16> to vector<1x25xbf16>
    %c0_110 = arith.constant 0 : index
    %c125 = arith.constant 125 : index
    %151 = vector.load %arg5[%c0_110, %c125] : memref<2x800xbf16, #tpu.memory_space<vmem>>, vector<1x25xbf16>
    tpu.vector_store %arg5[%c0_110, %c125], %150 {strides = array<i32>} : memref<2x800xbf16, #tpu.memory_space<vmem>>, vector<1x25xbf16>,
    %152 = vector.extract_strided_slice %139 {offsets = [6, 0], sizes = [1, 25], strides = [1, 1]} : vector<64x25xbf16> to vector<1x25xbf16>
    %c0_111 = arith.constant 0 : index
    %c150 = arith.constant 150 : index
    %153 = vector.load %arg5[%c0_111, %c150] : memref<2x800xbf16, #tpu.memory_space<vmem>>, vector<1x25xbf16>
    tpu.vector_store %arg5[%c0_111, %c150], %152 {strides = array<i32>} : memref<2x800xbf16, #tpu.memory_space<vmem>>, vector<1x25xbf16>,
    %154 = vector.extract_strided_slice %139 {offsets = [7, 0], sizes = [1, 25], strides = [1, 1]} : vector<64x25xbf16> to vector<1x25xbf16>
    %c0_112 = arith.constant 0 : index
    %c175 = arith.constant 175 : index
    %155 = vector.load %arg5[%c0_112, %c175] : memref<2x800xbf16, #tpu.memory_space<vmem>>, vector<1x25xbf16>
    tpu.vector_store %arg5[%c0_112, %c175], %154 {strides = array<i32>} : memref<2x800xbf16, #tpu.memory_space<vmem>>, vector<1x25xbf16>,
    %156 = vector.extract_strided_slice %139 {offsets = [8, 0], sizes = [1, 25], strides = [1, 1]} : vector<64x25xbf16> to vector<1x25xbf16>
    %c0_113 = arith.constant 0 : index
    %c200 = arith.constant 200 : index
    %157 = vector.load %arg5[%c0_113, %c200] : memref<2x800xbf16, #tpu.memory_space<vmem>>, vector<1x25xbf16>
    tpu.vector_store %arg5[%c0_113, %c200], %156 {strides = array<i32>} : memref<2x800xbf16, #tpu.memory_space<vmem>>, vector<1x25xbf16>,
    %158 = vector.extract_strided_slice %139 {offsets = [9, 0], sizes = [1, 25], strides = [1, 1]} : vector<64x25xbf16> to vector<1x25xbf16>
    %c0_114 = arith.constant 0 : index
    %c225 = arith.constant 225 : index
    %159 = vector.load %arg5[%c0_114, %c225] : memref<2x800xbf16, #tpu.memory_space<vmem>>, vector<1x25xbf16>
    tpu.vector_store %arg5[%c0_114, %c225], %158 {strides = array<i32>} : memref<2x800xbf16, #tpu.memory_space<vmem>>, vector<1x25xbf16>,
    %160 = vector.extract_strided_slice %139 {offsets = [10, 0], sizes = [1, 25], strides = [1, 1]} : vector<64x25xbf16> to vector<1x25xbf16>
    %c0_115 = arith.constant 0 : index
    %c250 = arith.constant 250 : index
    %161 = vector.load %arg5[%c0_115, %c250] : memref<2x800xbf16, #tpu.memory_space<vmem>>, vector<1x25xbf16>
    tpu.vector_store %arg5[%c0_115, %c250], %160 {strides = array<i32>} : memref<2x800xbf16, #tpu.memory_space<vmem>>, vector<1x25xbf16>,
    %162 = vector.extract_strided_slice %139 {offsets = [11, 0], sizes = [1, 25], strides = [1, 1]} : vector<64x25xbf16> to vector<1x25xbf16>
    %c0_116 = arith.constant 0 : index
    %c275 = arith.constant 275 : index
    %163 = vector.load %arg5[%c0_116, %c275] : memref<2x800xbf16, #tpu.memory_space<vmem>>, vector<1x25xbf16>
    tpu.vector_store %arg5[%c0_116, %c275], %162 {strides = array<i32>} : memref<2x800xbf16, #tpu.memory_space<vmem>>, vector<1x25xbf16>,
    %164 = vector.extract_strided_slice %139 {offsets = [12, 0], sizes = [1, 25], strides = [1, 1]} : vector<64x25xbf16> to vector<1x25xbf16>
    %c0_117 = arith.constant 0 : index
    %c300 = arith.constant 300 : index
    %165 = vector.load %arg5[%c0_117, %c300] : memref<2x800xbf16, #tpu.memory_space<vmem>>, vector<1x25xbf16>
    tpu.vector_store %arg5[%c0_117, %c300], %164 {strides = array<i32>} : memref<2x800xbf16, #tpu.memory_space<vmem>>, vector<1x25xbf16>,
    %166 = vector.extract_strided_slice %139 {offsets = [13, 0], sizes = [1, 25], strides = [1, 1]} : vector<64x25xbf16> to vector<1x25xbf16>
    %c0_118 = arith.constant 0 : index
    %c325 = arith.constant 325 : index
    %167 = vector.load %arg5[%c0_118, %c325] : memref<2x800xbf16, #tpu.memory_space<vmem>>, vector<1x25xbf16>
    tpu.vector_store %arg5[%c0_118, %c325], %166 {strides = array<i32>} : memref<2x800xbf16, #tpu.memory_space<vmem>>, vector<1x25xbf16>,
    %168 = vector.extract_strided_slice %139 {offsets = [14, 0], sizes = [1, 25], strides = [1, 1]} : vector<64x25xbf16> to vector<1x25xbf16>
    %c0_119 = arith.constant 0 : index
    %c350 = arith.constant 350 : index
    %169 = vector.load %arg5[%c0_119, %c350] : memref<2x800xbf16, #tpu.memory_space<vmem>>, vector<1x25xbf16>
    tpu.vector_store %arg5[%c0_119, %c350], %168 {strides = array<i32>} : memref<2x800xbf16, #tpu.memory_space<vmem>>, vector<1x25xbf16>,
    %170 = vector.extract_strided_slice %139 {offsets = [15, 0], sizes = [1, 25], strides = [1, 1]} : vector<64x25xbf16> to vector<1x25xbf16>
    %c0_120 = arith.constant 0 : index
    %c375 = arith.constant 375 : index
    %171 = vector.load %arg5[%c0_120, %c375] : memref<2x800xbf16, #tpu.memory_space<vmem>>, vector<1x25xbf16>
    tpu.vector_store %arg5[%c0_120, %c375], %170 {strides = array<i32>} : memref<2x800xbf16, #tpu.memory_space<vmem>>, vector<1x25xbf16>,
    %172 = vector.extract_strided_slice %139 {offsets = [16, 0], sizes = [1, 25], strides = [1, 1]} : vector<64x25xbf16> to vector<1x25xbf16>
    %c0_121 = arith.constant 0 : index
    %c400 = arith.constant 400 : index
    %173 = vector.load %arg5[%c0_121, %c400] : memref<2x800xbf16, #tpu.memory_space<vmem>>, vector<1x25xbf16>
    tpu.vector_store %arg5[%c0_121, %c400], %172 {strides = array<i32>} : memref<2x800xbf16, #tpu.memory_space<vmem>>, vector<1x25xbf16>,
    %174 = vector.extract_strided_slice %139 {offsets = [17, 0], sizes = [1, 25], strides = [1, 1]} : vector<64x25xbf16> to vector<1x25xbf16>
    %c0_122 = arith.constant 0 : index
    %c425 = arith.constant 425 : index
    %175 = vector.load %arg5[%c0_122, %c425] : memref<2x800xbf16, #tpu.memory_space<vmem>>, vector<1x25xbf16>
    tpu.vector_store %arg5[%c0_122, %c425], %174 {strides = array<i32>} : memref<2x800xbf16, #tpu.memory_space<vmem>>, vector<1x25xbf16>,
    %176 = vector.extract_strided_slice %139 {offsets = [18, 0], sizes = [1, 25], strides = [1, 1]} : vector<64x25xbf16> to vector<1x25xbf16>
    %c0_123 = arith.constant 0 : index
    %c450 = arith.constant 450 : index
    %177 = vector.load %arg5[%c0_123, %c450] : memref<2x800xbf16, #tpu.memory_space<vmem>>, vector<1x25xbf16>
    tpu.vector_store %arg5[%c0_123, %c450], %176 {strides = array<i32>} : memref<2x800xbf16, #tpu.memory_space<vmem>>, vector<1x25xbf16>,
    %178 = vector.extract_strided_slice %139 {offsets = [19, 0], sizes = [1, 25], strides = [1, 1]} : vector<64x25xbf16> to vector<1x25xbf16>
    %c0_124 = arith.constant 0 : index
    %c475 = arith.constant 475 : index
    %179 = vector.load %arg5[%c0_124, %c475] : memref<2x800xbf16, #tpu.memory_space<vmem>>, vector<1x25xbf16>
    tpu.vector_store %arg5[%c0_124, %c475], %178 {strides = array<i32>} : memref<2x800xbf16, #tpu.memory_space<vmem>>, vector<1x25xbf16>,
    %180 = vector.extract_strided_slice %139 {offsets = [20, 0], sizes = [1, 25], strides = [1, 1]} : vector<64x25xbf16> to vector<1x25xbf16>
    %c0_125 = arith.constant 0 : index
    %c500 = arith.constant 500 : index
    %181 = vector.load %arg5[%c0_125, %c500] : memref<2x800xbf16, #tpu.memory_space<vmem>>, vector<1x25xbf16>
    tpu.vector_store %arg5[%c0_125, %c500], %180 {strides = array<i32>} : memref<2x800xbf16, #tpu.memory_space<vmem>>, vector<1x25xbf16>,
    %182 = vector.extract_strided_slice %139 {offsets = [21, 0], sizes = [1, 25], strides = [1, 1]} : vector<64x25xbf16> to vector<1x25xbf16>
    %c0_126 = arith.constant 0 : index
    %c525 = arith.constant 525 : index
    %183 = vector.load %arg5[%c0_126, %c525] : memref<2x800xbf16, #tpu.memory_space<vmem>>, vector<1x25xbf16>
    tpu.vector_store %arg5[%c0_126, %c525], %182 {strides = array<i32>} : memref<2x800xbf16, #tpu.memory_space<vmem>>, vector<1x25xbf16>,
    %184 = vector.extract_strided_slice %139 {offsets = [22, 0], sizes = [1, 25], strides = [1, 1]} : vector<64x25xbf16> to vector<1x25xbf16>
    %c0_127 = arith.constant 0 : index
    %c550 = arith.constant 550 : index
    %185 = vector.load %arg5[%c0_127, %c550] : memref<2x800xbf16, #tpu.memory_space<vmem>>, vector<1x25xbf16>
    tpu.vector_store %arg5[%c0_127, %c550], %184 {strides = array<i32>} : memref<2x800xbf16, #tpu.memory_space<vmem>>, vector<1x25xbf16>,
    %186 = vector.extract_strided_slice %139 {offsets = [23, 0], sizes = [1, 25], strides = [1, 1]} : vector<64x25xbf16> to vector<1x25xbf16>
    %c0_128 = arith.constant 0 : index
    %c575 = arith.constant 575 : index
    %187 = vector.load %arg5[%c0_128, %c575] : memref<2x800xbf16, #tpu.memory_space<vmem>>, vector<1x25xbf16>
    tpu.vector_store %arg5[%c0_128, %c575], %186 {strides = array<i32>} : memref<2x800xbf16, #tpu.memory_space<vmem>>, vector<1x25xbf16>,
    %188 = vector.extract_strided_slice %139 {offsets = [24, 0], sizes = [1, 25], strides = [1, 1]} : vector<64x25xbf16> to vector<1x25xbf16>
    %c0_129 = arith.constant 0 : index
    %c600 = arith.constant 600 : index
    %189 = vector.load %arg5[%c0_129, %c600] : memref<2x800xbf16, #tpu.memory_space<vmem>>, vector<1x25xbf16>
    tpu.vector_store %arg5[%c0_129, %c600], %188 {strides = array<i32>} : memref<2x800xbf16, #tpu.memory_space<vmem>>, vector<1x25xbf16>,
    %190 = vector.extract_strided_slice %139 {offsets = [25, 0], sizes = [1, 25], strides = [1, 1]} : vector<64x25xbf16> to vector<1x25xbf16>
    %c0_130 = arith.constant 0 : index
    %c625 = arith.constant 625 : index
    %191 = vector.load %arg5[%c0_130, %c625] : memref<2x800xbf16, #tpu.memory_space<vmem>>, vector<1x25xbf16>
    tpu.vector_store %arg5[%c0_130, %c625], %190 {strides = array<i32>} : memref<2x800xbf16, #tpu.memory_space<vmem>>, vector<1x25xbf16>,
    %192 = vector.extract_strided_slice %139 {offsets = [26, 0], sizes = [1, 25], strides = [1, 1]} : vector<64x25xbf16> to vector<1x25xbf16>
    %c0_131 = arith.constant 0 : index
    %c650 = arith.constant 650 : index
    %193 = vector.load %arg5[%c0_131, %c650] : memref<2x800xbf16, #tpu.memory_space<vmem>>, vector<1x25xbf16>
    tpu.vector_store %arg5[%c0_131, %c650], %192 {strides = array<i32>} : memref<2x800xbf16, #tpu.memory_space<vmem>>, vector<1x25xbf16>,
    %194 = vector.extract_strided_slice %139 {offsets = [27, 0], sizes = [1, 25], strides = [1, 1]} : vector<64x25xbf16> to vector<1x25xbf16>
    %c0_132 = arith.constant 0 : index
    %c675 = arith.constant 675 : index
    %195 = vector.load %arg5[%c0_132, %c675] : memref<2x800xbf16, #tpu.memory_space<vmem>>, vector<1x25xbf16>
    tpu.vector_store %arg5[%c0_132, %c675], %194 {strides = array<i32>} : memref<2x800xbf16, #tpu.memory_space<vmem>>, vector<1x25xbf16>,
    %196 = vector.extract_strided_slice %139 {offsets = [28, 0], sizes = [1, 25], strides = [1, 1]} : vector<64x25xbf16> to vector<1x25xbf16>
    %c0_133 = arith.constant 0 : index
    %c700 = arith.constant 700 : index
    %197 = vector.load %arg5[%c0_133, %c700] : memref<2x800xbf16, #tpu.memory_space<vmem>>, vector<1x25xbf16>
    tpu.vector_store %arg5[%c0_133, %c700], %196 {strides = array<i32>} : memref<2x800xbf16, #tpu.memory_space<vmem>>, vector<1x25xbf16>,
    %198 = vector.extract_strided_slice %139 {offsets = [29, 0], sizes = [1, 25], strides = [1, 1]} : vector<64x25xbf16> to vector<1x25xbf16>
    %c0_134 = arith.constant 0 : index
    %c725 = arith.constant 725 : index
    %199 = vector.load %arg5[%c0_134, %c725] : memref<2x800xbf16, #tpu.memory_space<vmem>>, vector<1x25xbf16>
    tpu.vector_store %arg5[%c0_134, %c725], %198 {strides = array<i32>} : memref<2x800xbf16, #tpu.memory_space<vmem>>, vector<1x25xbf16>,
    %200 = vector.extract_strided_slice %139 {offsets = [30, 0], sizes = [1, 25], strides = [1, 1]} : vector<64x25xbf16> to vector<1x25xbf16>
    %c0_135 = arith.constant 0 : index
    %c750 = arith.constant 750 : index
    %201 = vector.load %arg5[%c0_135, %c750] : memref<2x800xbf16, #tpu.memory_space<vmem>>, vector<1x25xbf16>
    tpu.vector_store %arg5[%c0_135, %c750], %200 {strides = array<i32>} : memref<2x800xbf16, #tpu.memory_space<vmem>>, vector<1x25xbf16>,
    %202 = vector.extract_strided_slice %139 {offsets = [31, 0], sizes = [1, 25], strides = [1, 1]} : vector<64x25xbf16> to vector<1x25xbf16>
    %c0_136 = arith.constant 0 : index
    %c775 = arith.constant 775 : index
    %203 = vector.load %arg5[%c0_136, %c775] : memref<2x800xbf16, #tpu.memory_space<vmem>>, vector<1x25xbf16>
    tpu.vector_store %arg5[%c0_136, %c775], %202 {strides = array<i32>} : memref<2x800xbf16, #tpu.memory_space<vmem>>, vector<1x25xbf16>,
    %204 = vector.extract_strided_slice %139 {offsets = [32, 0], sizes = [1, 25], strides = [1, 1]} : vector<64x25xbf16> to vector<1x25xbf16>
    %c1_137 = arith.constant 1 : index
    %c0_138 = arith.constant 0 : index
    %205 = vector.load %arg5[%c1_137, %c0_138] : memref<2x800xbf16, #tpu.memory_space<vmem>>, vector<1x25xbf16>
    tpu.vector_store %arg5[%c1_137, %c0_138], %204 {strides = array<i32>} : memref<2x800xbf16, #tpu.memory_space<vmem>>, vector<1x25xbf16>,
    %206 = vector.extract_strided_slice %139 {offsets = [33, 0], sizes = [1, 25], strides = [1, 1]} : vector<64x25xbf16> to vector<1x25xbf16>
    %c1_139 = arith.constant 1 : index
    %c25_140 = arith.constant 25 : index
    %207 = vector.load %arg5[%c1_139, %c25_140] : memref<2x800xbf16, #tpu.memory_space<vmem>>, vector<1x25xbf16>
    tpu.vector_store %arg5[%c1_139, %c25_140], %206 {strides = array<i32>} : memref<2x800xbf16, #tpu.memory_space<vmem>>, vector<1x25xbf16>,
    %208 = vector.extract_strided_slice %139 {offsets = [34, 0], sizes = [1, 25], strides = [1, 1]} : vector<64x25xbf16> to vector<1x25xbf16>
    %c1_141 = arith.constant 1 : index
    %c50_142 = arith.constant 50 : index
    %209 = vector.load %arg5[%c1_141, %c50_142] : memref<2x800xbf16, #tpu.memory_space<vmem>>, vector<1x25xbf16>
    tpu.vector_store %arg5[%c1_141, %c50_142], %208 {strides = array<i32>} : memref<2x800xbf16, #tpu.memory_space<vmem>>, vector<1x25xbf16>,
    %210 = vector.extract_strided_slice %139 {offsets = [35, 0], sizes = [1, 25], strides = [1, 1]} : vector<64x25xbf16> to vector<1x25xbf16>
    %c1_143 = arith.constant 1 : index
    %c75_144 = arith.constant 75 : index
    %211 = vector.load %arg5[%c1_143, %c75_144] : memref<2x800xbf16, #tpu.memory_space<vmem>>, vector<1x25xbf16>
    tpu.vector_store %arg5[%c1_143, %c75_144], %210 {strides = array<i32>} : memref<2x800xbf16, #tpu.memory_space<vmem>>, vector<1x25xbf16>,
    %212 = vector.extract_strided_slice %139 {offsets = [36, 0], sizes = [1, 25], strides = [1, 1]} : vector<64x25xbf16> to vector<1x25xbf16>
    %c1_145 = arith.constant 1 : index
    %c100_146 = arith.constant 100 : index
    %213 = vector.load %arg5[%c1_145, %c100_146] : memref<2x800xbf16, #tpu.memory_space<vmem>>, vector<1x25xbf16>
    tpu.vector_store %arg5[%c1_145, %c100_146], %212 {strides = array<i32>} : memref<2x800xbf16, #tpu.memory_space<vmem>>, vector<1x25xbf16>,
    %214 = vector.extract_strided_slice %139 {offsets = [37, 0], sizes = [1, 25], strides = [1, 1]} : vector<64x25xbf16> to vector<1x25xbf16>
    %c1_147 = arith.constant 1 : index
    %c125_148 = arith.constant 125 : index
    %215 = vector.load %arg5[%c1_147, %c125_148] : memref<2x800xbf16, #tpu.memory_space<vmem>>, vector<1x25xbf16>
    tpu.vector_store %arg5[%c1_147, %c125_148], %214 {strides = array<i32>} : memref<2x800xbf16, #tpu.memory_space<vmem>>, vector<1x25xbf16>,
    %216 = vector.extract_strided_slice %139 {offsets = [38, 0], sizes = [1, 25], strides = [1, 1]} : vector<64x25xbf16> to vector<1x25xbf16>
    %c1_149 = arith.constant 1 : index
    %c150_150 = arith.constant 150 : index
    %217 = vector.load %arg5[%c1_149, %c150_150] : memref<2x800xbf16, #tpu.memory_space<vmem>>, vector<1x25xbf16>
    tpu.vector_store %arg5[%c1_149, %c150_150], %216 {strides = array<i32>} : memref<2x800xbf16, #tpu.memory_space<vmem>>, vector<1x25xbf16>,
    %218 = vector.extract_strided_slice %139 {offsets = [39, 0], sizes = [1, 25], strides = [1, 1]} : vector<64x25xbf16> to vector<1x25xbf16>
    %c1_151 = arith.constant 1 : index
    %c175_152 = arith.constant 175 : index
    %219 = vector.load %arg5[%c1_151, %c175_152] : memref<2x800xbf16, #tpu.memory_space<vmem>>, vector<1x25xbf16>
    tpu.vector_store %arg5[%c1_151, %c175_152], %218 {strides = array<i32>} : memref<2x800xbf16, #tpu.memory_space<vmem>>, vector<1x25xbf16>,
    %220 = vector.extract_strided_slice %139 {offsets = [40, 0], sizes = [1, 25], strides = [1, 1]} : vector<64x25xbf16> to vector<1x25xbf16>
    %c1_153 = arith.constant 1 : index
    %c200_154 = arith.constant 200 : index
    %221 = vector.load %arg5[%c1_153, %c200_154] : memref<2x800xbf16, #tpu.memory_space<vmem>>, vector<1x25xbf16>
    tpu.vector_store %arg5[%c1_153, %c200_154], %220 {strides = array<i32>} : memref<2x800xbf16, #tpu.memory_space<vmem>>, vector<1x25xbf16>,
    %222 = vector.extract_strided_slice %139 {offsets = [41, 0], sizes = [1, 25], strides = [1, 1]} : vector<64x25xbf16> to vector<1x25xbf16>
    %c1_155 = arith.constant 1 : index
    %c225_156 = arith.constant 225 : index
    %223 = vector.load %arg5[%c1_155, %c225_156] : memref<2x800xbf16, #tpu.memory_space<vmem>>, vector<1x25xbf16>
    tpu.vector_store %arg5[%c1_155, %c225_156], %222 {strides = array<i32>} : memref<2x800xbf16, #tpu.memory_space<vmem>>, vector<1x25xbf16>,
    %224 = vector.extract_strided_slice %139 {offsets = [42, 0], sizes = [1, 25], strides = [1, 1]} : vector<64x25xbf16> to vector<1x25xbf16>
    %c1_157 = arith.constant 1 : index
    %c250_158 = arith.constant 250 : index
    %225 = vector.load %arg5[%c1_157, %c250_158] : memref<2x800xbf16, #tpu.memory_space<vmem>>, vector<1x25xbf16>
    tpu.vector_store %arg5[%c1_157, %c250_158], %224 {strides = array<i32>} : memref<2x800xbf16, #tpu.memory_space<vmem>>, vector<1x25xbf16>,
    %226 = vector.extract_strided_slice %139 {offsets = [43, 0], sizes = [1, 25], strides = [1, 1]} : vector<64x25xbf16> to vector<1x25xbf16>
    %c1_159 = arith.constant 1 : index
    %c275_160 = arith.constant 275 : index
    %227 = vector.load %arg5[%c1_159, %c275_160] : memref<2x800xbf16, #tpu.memory_space<vmem>>, vector<1x25xbf16>
    tpu.vector_store %arg5[%c1_159, %c275_160], %226 {strides = array<i32>} : memref<2x800xbf16, #tpu.memory_space<vmem>>, vector<1x25xbf16>,
    %228 = vector.extract_strided_slice %139 {offsets = [44, 0], sizes = [1, 25], strides = [1, 1]} : vector<64x25xbf16> to vector<1x25xbf16>
    %c1_161 = arith.constant 1 : index
    %c300_162 = arith.constant 300 : index
    %229 = vector.load %arg5[%c1_161, %c300_162] : memref<2x800xbf16, #tpu.memory_space<vmem>>, vector<1x25xbf16>
    tpu.vector_store %arg5[%c1_161, %c300_162], %228 {strides = array<i32>} : memref<2x800xbf16, #tpu.memory_space<vmem>>, vector<1x25xbf16>,
    %230 = vector.extract_strided_slice %139 {offsets = [45, 0], sizes = [1, 25], strides = [1, 1]} : vector<64x25xbf16> to vector<1x25xbf16>
    %c1_163 = arith.constant 1 : index
    %c325_164 = arith.constant 325 : index
    %231 = vector.load %arg5[%c1_163, %c325_164] : memref<2x800xbf16, #tpu.memory_space<vmem>>, vector<1x25xbf16>
    tpu.vector_store %arg5[%c1_163, %c325_164], %230 {strides = array<i32>} : memref<2x800xbf16, #tpu.memory_space<vmem>>, vector<1x25xbf16>,
    %232 = vector.extract_strided_slice %139 {offsets = [46, 0], sizes = [1, 25], strides = [1, 1]} : vector<64x25xbf16> to vector<1x25xbf16>
    %c1_165 = arith.constant 1 : index
    %c350_166 = arith.constant 350 : index
    %233 = vector.load %arg5[%c1_165, %c350_166] : memref<2x800xbf16, #tpu.memory_space<vmem>>, vector<1x25xbf16>
    tpu.vector_store %arg5[%c1_165, %c350_166], %232 {strides = array<i32>} : memref<2x800xbf16, #tpu.memory_space<vmem>>, vector<1x25xbf16>,
    %234 = vector.extract_strided_slice %139 {offsets = [47, 0], sizes = [1, 25], strides = [1, 1]} : vector<64x25xbf16> to vector<1x25xbf16>
    %c1_167 = arith.constant 1 : index
    %c375_168 = arith.constant 375 : index
    %235 = vector.load %arg5[%c1_167, %c375_168] : memref<2x800xbf16, #tpu.memory_space<vmem>>, vector<1x25xbf16>
    tpu.vector_store %arg5[%c1_167, %c375_168], %234 {strides = array<i32>} : memref<2x800xbf16, #tpu.memory_space<vmem>>, vector<1x25xbf16>,
    %236 = vector.extract_strided_slice %139 {offsets = [48, 0], sizes = [1, 25], strides = [1, 1]} : vector<64x25xbf16> to vector<1x25xbf16>
    %c1_169 = arith.constant 1 : index
    %c400_170 = arith.constant 400 : index
    %237 = vector.load %arg5[%c1_169, %c400_170] : memref<2x800xbf16, #tpu.memory_space<vmem>>, vector<1x25xbf16>
    tpu.vector_store %arg5[%c1_169, %c400_170], %236 {strides = array<i32>} : memref<2x800xbf16, #tpu.memory_space<vmem>>, vector<1x25xbf16>,
    %238 = vector.extract_strided_slice %139 {offsets = [49, 0], sizes = [1, 25], strides = [1, 1]} : vector<64x25xbf16> to vector<1x25xbf16>
    %c1_171 = arith.constant 1 : index
    %c425_172 = arith.constant 425 : index
    %239 = vector.load %arg5[%c1_171, %c425_172] : memref<2x800xbf16, #tpu.memory_space<vmem>>, vector<1x25xbf16>
    tpu.vector_store %arg5[%c1_171, %c425_172], %238 {strides = array<i32>} : memref<2x800xbf16, #tpu.memory_space<vmem>>, vector<1x25xbf16>,
    %240 = vector.extract_strided_slice %139 {offsets = [50, 0], sizes = [1, 25], strides = [1, 1]} : vector<64x25xbf16> to vector<1x25xbf16>
    %c1_173 = arith.constant 1 : index
    %c450_174 = arith.constant 450 : index
    %241 = vector.load %arg5[%c1_173, %c450_174] : memref<2x800xbf16, #tpu.memory_space<vmem>>, vector<1x25xbf16>
    tpu.vector_store %arg5[%c1_173, %c450_174], %240 {strides = array<i32>} : memref<2x800xbf16, #tpu.memory_space<vmem>>, vector<1x25xbf16>,
    %242 = vector.extract_strided_slice %139 {offsets = [51, 0], sizes = [1, 25], strides = [1, 1]} : vector<64x25xbf16> to vector<1x25xbf16>
    %c1_175 = arith.constant 1 : index
    %c475_176 = arith.constant 475 : index
    %243 = vector.load %arg5[%c1_175, %c475_176] : memref<2x800xbf16, #tpu.memory_space<vmem>>, vector<1x25xbf16>
    tpu.vector_store %arg5[%c1_175, %c475_176], %242 {strides = array<i32>} : memref<2x800xbf16, #tpu.memory_space<vmem>>, vector<1x25xbf16>,
    %244 = vector.extract_strided_slice %139 {offsets = [52, 0], sizes = [1, 25], strides = [1, 1]} : vector<64x25xbf16> to vector<1x25xbf16>
    %c1_177 = arith.constant 1 : index
    %c500_178 = arith.constant 500 : index
    %245 = vector.load %arg5[%c1_177, %c500_178] : memref<2x800xbf16, #tpu.memory_space<vmem>>, vector<1x25xbf16>
    tpu.vector_store %arg5[%c1_177, %c500_178], %244 {strides = array<i32>} : memref<2x800xbf16, #tpu.memory_space<vmem>>, vector<1x25xbf16>,
    %246 = vector.extract_strided_slice %139 {offsets = [53, 0], sizes = [1, 25], strides = [1, 1]} : vector<64x25xbf16> to vector<1x25xbf16>
    %c1_179 = arith.constant 1 : index
    %c525_180 = arith.constant 525 : index
    %247 = vector.load %arg5[%c1_179, %c525_180] : memref<2x800xbf16, #tpu.memory_space<vmem>>, vector<1x25xbf16>
    tpu.vector_store %arg5[%c1_179, %c525_180], %246 {strides = array<i32>} : memref<2x800xbf16, #tpu.memory_space<vmem>>, vector<1x25xbf16>,
    %248 = vector.extract_strided_slice %139 {offsets = [54, 0], sizes = [1, 25], strides = [1, 1]} : vector<64x25xbf16> to vector<1x25xbf16>
    %c1_181 = arith.constant 1 : index
    %c550_182 = arith.constant 550 : index
    %249 = vector.load %arg5[%c1_181, %c550_182] : memref<2x800xbf16, #tpu.memory_space<vmem>>, vector<1x25xbf16>
    tpu.vector_store %arg5[%c1_181, %c550_182], %248 {strides = array<i32>} : memref<2x800xbf16, #tpu.memory_space<vmem>>, vector<1x25xbf16>,
    %250 = vector.extract_strided_slice %139 {offsets = [55, 0], sizes = [1, 25], strides = [1, 1]} : vector<64x25xbf16> to vector<1x25xbf16>
    %c1_183 = arith.constant 1 : index
    %c575_184 = arith.constant 575 : index
    %251 = vector.load %arg5[%c1_183, %c575_184] : memref<2x800xbf16, #tpu.memory_space<vmem>>, vector<1x25xbf16>
    tpu.vector_store %arg5[%c1_183, %c575_184], %250 {strides = array<i32>} : memref<2x800xbf16, #tpu.memory_space<vmem>>, vector<1x25xbf16>,
    %252 = vector.extract_strided_slice %139 {offsets = [56, 0], sizes = [1, 25], strides = [1, 1]} : vector<64x25xbf16> to vector<1x25xbf16>
    %c1_185 = arith.constant 1 : index
    %c600_186 = arith.constant 600 : index
    %253 = vector.load %arg5[%c1_185, %c600_186] : memref<2x800xbf16, #tpu.memory_space<vmem>>, vector<1x25xbf16>
    tpu.vector_store %arg5[%c1_185, %c600_186], %252 {strides = array<i32>} : memref<2x800xbf16, #tpu.memory_space<vmem>>, vector<1x25xbf16>,
    %254 = vector.extract_strided_slice %139 {offsets = [57, 0], sizes = [1, 25], strides = [1, 1]} : vector<64x25xbf16> to vector<1x25xbf16>
    %c1_187 = arith.constant 1 : index
    %c625_188 = arith.constant 625 : index
    %255 = vector.load %arg5[%c1_187, %c625_188] : memref<2x800xbf16, #tpu.memory_space<vmem>>, vector<1x25xbf16>
    tpu.vector_store %arg5[%c1_187, %c625_188], %254 {strides = array<i32>} : memref<2x800xbf16, #tpu.memory_space<vmem>>, vector<1x25xbf16>,
    %256 = vector.extract_strided_slice %139 {offsets = [58, 0], sizes = [1, 25], strides = [1, 1]} : vector<64x25xbf16> to vector<1x25xbf16>
    %c1_189 = arith.constant 1 : index
    %c650_190 = arith.constant 650 : index
    %257 = vector.load %arg5[%c1_189, %c650_190] : memref<2x800xbf16, #tpu.memory_space<vmem>>, vector<1x25xbf16>
    tpu.vector_store %arg5[%c1_189, %c650_190], %256 {strides = array<i32>} : memref<2x800xbf16, #tpu.memory_space<vmem>>, vector<1x25xbf16>,
    %258 = vector.extract_strided_slice %139 {offsets = [59, 0], sizes = [1, 25], strides = [1, 1]} : vector<64x25xbf16> to vector<1x25xbf16>
    %c1_191 = arith.constant 1 : index
    %c675_192 = arith.constant 675 : index
    %259 = vector.load %arg5[%c1_191, %c675_192] : memref<2x800xbf16, #tpu.memory_space<vmem>>, vector<1x25xbf16>
    tpu.vector_store %arg5[%c1_191, %c675_192], %258 {strides = array<i32>} : memref<2x800xbf16, #tpu.memory_space<vmem>>, vector<1x25xbf16>,
    %260 = vector.extract_strided_slice %139 {offsets = [60, 0], sizes = [1, 25], strides = [1, 1]} : vector<64x25xbf16> to vector<1x25xbf16>
    %c1_193 = arith.constant 1 : index
    %c700_194 = arith.constant 700 : index
    %261 = vector.load %arg5[%c1_193, %c700_194] : memref<2x800xbf16, #tpu.memory_space<vmem>>, vector<1x25xbf16>
    tpu.vector_store %arg5[%c1_193, %c700_194], %260 {strides = array<i32>} : memref<2x800xbf16, #tpu.memory_space<vmem>>, vector<1x25xbf16>,
    %262 = vector.extract_strided_slice %139 {offsets = [61, 0], sizes = [1, 25], strides = [1, 1]} : vector<64x25xbf16> to vector<1x25xbf16>
    %c1_195 = arith.constant 1 : index
    %c725_196 = arith.constant 725 : index
    %263 = vector.load %arg5[%c1_195, %c725_196] : memref<2x800xbf16, #tpu.memory_space<vmem>>, vector<1x25xbf16>
    tpu.vector_store %arg5[%c1_195, %c725_196], %262 {strides = array<i32>} : memref<2x800xbf16, #tpu.memory_space<vmem>>, vector<1x25xbf16>,
    %264 = vector.extract_strided_slice %139 {offsets = [62, 0], sizes = [1, 25], strides = [1, 1]} : vector<64x25xbf16> to vector<1x25xbf16>
    %c1_197 = arith.constant 1 : index
    %c750_198 = arith.constant 750 : index
    %265 = vector.load %arg5[%c1_197, %c750_198] : memref<2x800xbf16, #tpu.memory_space<vmem>>, vector<1x25xbf16>
    tpu.vector_store %arg5[%c1_197, %c750_198], %264 {strides = array<i32>} : memref<2x800xbf16, #tpu.memory_space<vmem>>, vector<1x25xbf16>,
    %266 = vector.extract_strided_slice %139 {offsets = [63, 0], sizes = [1, 25], strides = [1, 1]} : vector<64x25xbf16> to vector<1x25xbf16>
    %c1_199 = arith.constant 1 : index
    %c775_200 = arith.constant 775 : index
    %267 = vector.load %arg5[%c1_199, %c775_200] : memref<2x800xbf16, #tpu.memory_space<vmem>>, vector<1x25xbf16>
    tpu.vector_store %arg5[%c1_199, %c775_200], %266 {strides = array<i32>} : memref<2x800xbf16, #tpu.memory_space<vmem>>, vector<1x25xbf16>,
    return
  }
  func.func @transform_0(%arg0: i32) -> (i32, i32, i32) {
    %c0_i32 = arith.constant 0 : i32
    %c0_i32_0 = arith.constant 0 : i32
    %c0_i32_1 = arith.constant 0 : i32
    return %arg0, %c0_i32, %c0_i32_0 : i32, i32, i32
  }
  func.func @transform_1(%arg0: i32) -> (i32, i32) {
    %c0_i32 = arith.constant 0 : i32
    %c0_i32_0 = arith.constant 0 : i32
    %c0_i32_1 = arith.constant 0 : i32
    return %c0_i32, %c0_i32_0 : i32, i32
  }
  func.func @transform_2(%arg0: i32) -> (i32, i32) {
    %c0_i32 = arith.constant 0 : i32
    %c0_i32_0 = arith.constant 0 : i32
    %c0_i32_1 = arith.constant 0 : i32
    return %c0_i32, %c0_i32_0 : i32, i32
  }
  func.func @transform_3(%arg0: i32) -> (i32, i32) {
    %c0_i32 = arith.constant 0 : i32
    %c0_i32_0 = arith.constant 0 : i32
    %c0_i32_1 = arith.constant 0 : i32
    return %c0_i32, %c0_i32_0 : i32, i32
  }
  func.func @transform_4(%arg0: i32) -> (i32, i32) {
    %c0_i32 = arith.constant 0 : i32
    %c0_i32_0 = arith.constant 0 : i32
    return %arg0, %c0_i32 : i32, i32
  }
}

module attributes {stable_mosaic.version = 11 : i64} {
  func.func @_conv_relu_pool_kernel(%arg0: i32, %arg1: memref<2x8x1024xbf16, #tpu.memory_space<vmem>>, %arg2: memref<16x200xbf16, #tpu.memory_space<vmem>>, %arg3: memref<16x1xf32, #tpu.memory_space<vmem>>, %arg4: memref<859x196xbf16, #tpu.memory_space<vmem>>, %arg5: memref<2x16x196xbf16, #tpu.memory_space<vmem>>, %arg6: memref<200x892xbf16, #tpu.memory_space<vmem>>, %arg7: memref<32x859xbf16, #tpu.memory_space<vmem>>) attributes {dimension_semantics = [#tpu.dimension_semantics<parallel>], iteration_bounds = array<i64: 1>, scalar_prefetch = 0 : i64, scratch_operands = 2 : i64, tpu.core_type = #tpu.core_type<tc>, window_params = [{transform_indices = @transform_0, window_bounds = array<i64: 2, 8, 1024>}, {pipeline_mode = #tpu.pipeline_mode<synchronous>, transform_indices = @transform_1, window_bounds = array<i64: 16, 200>}, {pipeline_mode = #tpu.pipeline_mode<synchronous>, transform_indices = @transform_2, window_bounds = array<i64: 16, 1>}, {pipeline_mode = #tpu.pipeline_mode<synchronous>, transform_indices = @transform_3, window_bounds = array<i64: 859, 196>}, {transform_indices = @transform_4, window_bounds = array<i64: 2, 16, 196>}]} {
    %c0 = arith.constant 0 : index
    %c0_0 = arith.constant 0 : index
    %c0_1 = arith.constant 0 : index
    %0 = vector.load %arg1[%c0, %c0_0, %c0_1] : memref<2x8x1024xbf16, #tpu.memory_space<vmem>>, vector<1x8x1024xbf16>
    %1 = vector.shape_cast %0 : vector<1x8x1024xbf16> to vector<8x1024xbf16>
    %2 = vector.extract_strided_slice %1 {offsets = [0, 0], sizes = [8, 892], strides = [1, 1]} : vector<8x1024xbf16> to vector<8x892xbf16>
    %c0_2 = arith.constant 0 : index
    %c0_3 = arith.constant 0 : index
    %3 = vector.load %arg6[%c0_2, %c0_3] : memref<200x892xbf16, #tpu.memory_space<vmem>>, vector<8x892xbf16>
    tpu.vector_store %arg6[%c0_2, %c0_3], %2 {strides = array<i32>} : memref<200x892xbf16, #tpu.memory_space<vmem>>, vector<8x892xbf16>,
    %4 = vector.extract_strided_slice %1 {offsets = [0, 1], sizes = [8, 892], strides = [1, 1]} : vector<8x1024xbf16> to vector<8x892xbf16>
    %c8 = arith.constant 8 : index
    %c0_4 = arith.constant 0 : index
    %5 = vector.load %arg6[%c8, %c0_4] : memref<200x892xbf16, #tpu.memory_space<vmem>>, vector<8x892xbf16>
    tpu.vector_store %arg6[%c8, %c0_4], %4 {strides = array<i32>} : memref<200x892xbf16, #tpu.memory_space<vmem>>, vector<8x892xbf16>,
    %6 = vector.extract_strided_slice %1 {offsets = [0, 2], sizes = [8, 892], strides = [1, 1]} : vector<8x1024xbf16> to vector<8x892xbf16>
    %c16 = arith.constant 16 : index
    %c0_5 = arith.constant 0 : index
    %7 = vector.load %arg6[%c16, %c0_5] : memref<200x892xbf16, #tpu.memory_space<vmem>>, vector<8x892xbf16>
    tpu.vector_store %arg6[%c16, %c0_5], %6 {strides = array<i32>} : memref<200x892xbf16, #tpu.memory_space<vmem>>, vector<8x892xbf16>,
    %8 = vector.extract_strided_slice %1 {offsets = [0, 3], sizes = [8, 892], strides = [1, 1]} : vector<8x1024xbf16> to vector<8x892xbf16>
    %c24 = arith.constant 24 : index
    %c0_6 = arith.constant 0 : index
    %9 = vector.load %arg6[%c24, %c0_6] : memref<200x892xbf16, #tpu.memory_space<vmem>>, vector<8x892xbf16>
    tpu.vector_store %arg6[%c24, %c0_6], %8 {strides = array<i32>} : memref<200x892xbf16, #tpu.memory_space<vmem>>, vector<8x892xbf16>,
    %10 = vector.extract_strided_slice %1 {offsets = [0, 4], sizes = [8, 892], strides = [1, 1]} : vector<8x1024xbf16> to vector<8x892xbf16>
    %c32 = arith.constant 32 : index
    %c0_7 = arith.constant 0 : index
    %11 = vector.load %arg6[%c32, %c0_7] : memref<200x892xbf16, #tpu.memory_space<vmem>>, vector<8x892xbf16>
    tpu.vector_store %arg6[%c32, %c0_7], %10 {strides = array<i32>} : memref<200x892xbf16, #tpu.memory_space<vmem>>, vector<8x892xbf16>,
    %12 = vector.extract_strided_slice %1 {offsets = [0, 32], sizes = [8, 892], strides = [1, 1]} : vector<8x1024xbf16> to vector<8x892xbf16>
    %c40 = arith.constant 40 : index
    %c0_8 = arith.constant 0 : index
    %13 = vector.load %arg6[%c40, %c0_8] : memref<200x892xbf16, #tpu.memory_space<vmem>>, vector<8x892xbf16>
    tpu.vector_store %arg6[%c40, %c0_8], %12 {strides = array<i32>} : memref<200x892xbf16, #tpu.memory_space<vmem>>, vector<8x892xbf16>,
    %14 = vector.extract_strided_slice %1 {offsets = [0, 33], sizes = [8, 892], strides = [1, 1]} : vector<8x1024xbf16> to vector<8x892xbf16>
    %c48 = arith.constant 48 : index
    %c0_9 = arith.constant 0 : index
    %15 = vector.load %arg6[%c48, %c0_9] : memref<200x892xbf16, #tpu.memory_space<vmem>>, vector<8x892xbf16>
    tpu.vector_store %arg6[%c48, %c0_9], %14 {strides = array<i32>} : memref<200x892xbf16, #tpu.memory_space<vmem>>, vector<8x892xbf16>,
    %16 = vector.extract_strided_slice %1 {offsets = [0, 34], sizes = [8, 892], strides = [1, 1]} : vector<8x1024xbf16> to vector<8x892xbf16>
    %c56 = arith.constant 56 : index
    %c0_10 = arith.constant 0 : index
    %17 = vector.load %arg6[%c56, %c0_10] : memref<200x892xbf16, #tpu.memory_space<vmem>>, vector<8x892xbf16>
    tpu.vector_store %arg6[%c56, %c0_10], %16 {strides = array<i32>} : memref<200x892xbf16, #tpu.memory_space<vmem>>, vector<8x892xbf16>,
    %18 = vector.extract_strided_slice %1 {offsets = [0, 35], sizes = [8, 892], strides = [1, 1]} : vector<8x1024xbf16> to vector<8x892xbf16>
    %c64 = arith.constant 64 : index
    %c0_11 = arith.constant 0 : index
    %19 = vector.load %arg6[%c64, %c0_11] : memref<200x892xbf16, #tpu.memory_space<vmem>>, vector<8x892xbf16>
    tpu.vector_store %arg6[%c64, %c0_11], %18 {strides = array<i32>} : memref<200x892xbf16, #tpu.memory_space<vmem>>, vector<8x892xbf16>,
    %20 = vector.extract_strided_slice %1 {offsets = [0, 36], sizes = [8, 892], strides = [1, 1]} : vector<8x1024xbf16> to vector<8x892xbf16>
    %c72 = arith.constant 72 : index
    %c0_12 = arith.constant 0 : index
    %21 = vector.load %arg6[%c72, %c0_12] : memref<200x892xbf16, #tpu.memory_space<vmem>>, vector<8x892xbf16>
    tpu.vector_store %arg6[%c72, %c0_12], %20 {strides = array<i32>} : memref<200x892xbf16, #tpu.memory_space<vmem>>, vector<8x892xbf16>,
    %22 = vector.extract_strided_slice %1 {offsets = [0, 64], sizes = [8, 892], strides = [1, 1]} : vector<8x1024xbf16> to vector<8x892xbf16>
    %c80 = arith.constant 80 : index
    %c0_13 = arith.constant 0 : index
    %23 = vector.load %arg6[%c80, %c0_13] : memref<200x892xbf16, #tpu.memory_space<vmem>>, vector<8x892xbf16>
    tpu.vector_store %arg6[%c80, %c0_13], %22 {strides = array<i32>} : memref<200x892xbf16, #tpu.memory_space<vmem>>, vector<8x892xbf16>,
    %24 = vector.extract_strided_slice %1 {offsets = [0, 65], sizes = [8, 892], strides = [1, 1]} : vector<8x1024xbf16> to vector<8x892xbf16>
    %c88 = arith.constant 88 : index
    %c0_14 = arith.constant 0 : index
    %25 = vector.load %arg6[%c88, %c0_14] : memref<200x892xbf16, #tpu.memory_space<vmem>>, vector<8x892xbf16>
    tpu.vector_store %arg6[%c88, %c0_14], %24 {strides = array<i32>} : memref<200x892xbf16, #tpu.memory_space<vmem>>, vector<8x892xbf16>,
    %26 = vector.extract_strided_slice %1 {offsets = [0, 66], sizes = [8, 892], strides = [1, 1]} : vector<8x1024xbf16> to vector<8x892xbf16>
    %c96 = arith.constant 96 : index
    %c0_15 = arith.constant 0 : index
    %27 = vector.load %arg6[%c96, %c0_15] : memref<200x892xbf16, #tpu.memory_space<vmem>>, vector<8x892xbf16>
    tpu.vector_store %arg6[%c96, %c0_15], %26 {strides = array<i32>} : memref<200x892xbf16, #tpu.memory_space<vmem>>, vector<8x892xbf16>,
    %28 = vector.extract_strided_slice %1 {offsets = [0, 67], sizes = [8, 892], strides = [1, 1]} : vector<8x1024xbf16> to vector<8x892xbf16>
    %c104 = arith.constant 104 : index
    %c0_16 = arith.constant 0 : index
    %29 = vector.load %arg6[%c104, %c0_16] : memref<200x892xbf16, #tpu.memory_space<vmem>>, vector<8x892xbf16>
    tpu.vector_store %arg6[%c104, %c0_16], %28 {strides = array<i32>} : memref<200x892xbf16, #tpu.memory_space<vmem>>, vector<8x892xbf16>,
    %30 = vector.extract_strided_slice %1 {offsets = [0, 68], sizes = [8, 892], strides = [1, 1]} : vector<8x1024xbf16> to vector<8x892xbf16>
    %c112 = arith.constant 112 : index
    %c0_17 = arith.constant 0 : index
    %31 = vector.load %arg6[%c112, %c0_17] : memref<200x892xbf16, #tpu.memory_space<vmem>>, vector<8x892xbf16>
    tpu.vector_store %arg6[%c112, %c0_17], %30 {strides = array<i32>} : memref<200x892xbf16, #tpu.memory_space<vmem>>, vector<8x892xbf16>,
    %32 = vector.extract_strided_slice %1 {offsets = [0, 96], sizes = [8, 892], strides = [1, 1]} : vector<8x1024xbf16> to vector<8x892xbf16>
    %c120 = arith.constant 120 : index
    %c0_18 = arith.constant 0 : index
    %33 = vector.load %arg6[%c120, %c0_18] : memref<200x892xbf16, #tpu.memory_space<vmem>>, vector<8x892xbf16>
    tpu.vector_store %arg6[%c120, %c0_18], %32 {strides = array<i32>} : memref<200x892xbf16, #tpu.memory_space<vmem>>, vector<8x892xbf16>,
    %34 = vector.extract_strided_slice %1 {offsets = [0, 97], sizes = [8, 892], strides = [1, 1]} : vector<8x1024xbf16> to vector<8x892xbf16>
    %c128 = arith.constant 128 : index
    %c0_19 = arith.constant 0 : index
    %35 = vector.load %arg6[%c128, %c0_19] : memref<200x892xbf16, #tpu.memory_space<vmem>>, vector<8x892xbf16>
    tpu.vector_store %arg6[%c128, %c0_19], %34 {strides = array<i32>} : memref<200x892xbf16, #tpu.memory_space<vmem>>, vector<8x892xbf16>,
    %36 = vector.extract_strided_slice %1 {offsets = [0, 98], sizes = [8, 892], strides = [1, 1]} : vector<8x1024xbf16> to vector<8x892xbf16>
    %c136 = arith.constant 136 : index
    %c0_20 = arith.constant 0 : index
    %37 = vector.load %arg6[%c136, %c0_20] : memref<200x892xbf16, #tpu.memory_space<vmem>>, vector<8x892xbf16>
    tpu.vector_store %arg6[%c136, %c0_20], %36 {strides = array<i32>} : memref<200x892xbf16, #tpu.memory_space<vmem>>, vector<8x892xbf16>,
    %38 = vector.extract_strided_slice %1 {offsets = [0, 99], sizes = [8, 892], strides = [1, 1]} : vector<8x1024xbf16> to vector<8x892xbf16>
    %c144 = arith.constant 144 : index
    %c0_21 = arith.constant 0 : index
    %39 = vector.load %arg6[%c144, %c0_21] : memref<200x892xbf16, #tpu.memory_space<vmem>>, vector<8x892xbf16>
    tpu.vector_store %arg6[%c144, %c0_21], %38 {strides = array<i32>} : memref<200x892xbf16, #tpu.memory_space<vmem>>, vector<8x892xbf16>,
    %40 = vector.extract_strided_slice %1 {offsets = [0, 100], sizes = [8, 892], strides = [1, 1]} : vector<8x1024xbf16> to vector<8x892xbf16>
    %c152 = arith.constant 152 : index
    %c0_22 = arith.constant 0 : index
    %41 = vector.load %arg6[%c152, %c0_22] : memref<200x892xbf16, #tpu.memory_space<vmem>>, vector<8x892xbf16>
    tpu.vector_store %arg6[%c152, %c0_22], %40 {strides = array<i32>} : memref<200x892xbf16, #tpu.memory_space<vmem>>, vector<8x892xbf16>,
    %42 = vector.extract_strided_slice %1 {offsets = [0, 128], sizes = [8, 892], strides = [1, 1]} : vector<8x1024xbf16> to vector<8x892xbf16>
    %c160 = arith.constant 160 : index
    %c0_23 = arith.constant 0 : index
    %43 = vector.load %arg6[%c160, %c0_23] : memref<200x892xbf16, #tpu.memory_space<vmem>>, vector<8x892xbf16>
    tpu.vector_store %arg6[%c160, %c0_23], %42 {strides = array<i32>} : memref<200x892xbf16, #tpu.memory_space<vmem>>, vector<8x892xbf16>,
    %44 = vector.extract_strided_slice %1 {offsets = [0, 129], sizes = [8, 892], strides = [1, 1]} : vector<8x1024xbf16> to vector<8x892xbf16>
    %c168 = arith.constant 168 : index
    %c0_24 = arith.constant 0 : index
    %45 = vector.load %arg6[%c168, %c0_24] : memref<200x892xbf16, #tpu.memory_space<vmem>>, vector<8x892xbf16>
    tpu.vector_store %arg6[%c168, %c0_24], %44 {strides = array<i32>} : memref<200x892xbf16, #tpu.memory_space<vmem>>, vector<8x892xbf16>,
    %46 = vector.extract_strided_slice %1 {offsets = [0, 130], sizes = [8, 892], strides = [1, 1]} : vector<8x1024xbf16> to vector<8x892xbf16>
    %c176 = arith.constant 176 : index
    %c0_25 = arith.constant 0 : index
    %47 = vector.load %arg6[%c176, %c0_25] : memref<200x892xbf16, #tpu.memory_space<vmem>>, vector<8x892xbf16>
    tpu.vector_store %arg6[%c176, %c0_25], %46 {strides = array<i32>} : memref<200x892xbf16, #tpu.memory_space<vmem>>, vector<8x892xbf16>,
    %48 = vector.extract_strided_slice %1 {offsets = [0, 131], sizes = [8, 892], strides = [1, 1]} : vector<8x1024xbf16> to vector<8x892xbf16>
    %c184 = arith.constant 184 : index
    %c0_26 = arith.constant 0 : index
    %49 = vector.load %arg6[%c184, %c0_26] : memref<200x892xbf16, #tpu.memory_space<vmem>>, vector<8x892xbf16>
    tpu.vector_store %arg6[%c184, %c0_26], %48 {strides = array<i32>} : memref<200x892xbf16, #tpu.memory_space<vmem>>, vector<8x892xbf16>,
    %50 = vector.extract_strided_slice %1 {offsets = [0, 132], sizes = [8, 892], strides = [1, 1]} : vector<8x1024xbf16> to vector<8x892xbf16>
    %c192 = arith.constant 192 : index
    %c0_27 = arith.constant 0 : index
    %51 = vector.load %arg6[%c192, %c0_27] : memref<200x892xbf16, #tpu.memory_space<vmem>>, vector<8x892xbf16>
    tpu.vector_store %arg6[%c192, %c0_27], %50 {strides = array<i32>} : memref<200x892xbf16, #tpu.memory_space<vmem>>, vector<8x892xbf16>,
    %c0_28 = arith.constant 0 : index
    %c0_29 = arith.constant 0 : index
    %52 = vector.load %arg2[%c0_28, %c0_29] : memref<16x200xbf16, #tpu.memory_space<vmem>>, vector<16x200xbf16>
    %c0_30 = arith.constant 0 : index
    %c0_31 = arith.constant 0 : index
    %53 = vector.load %arg6[%c0_30, %c0_31] : memref<200x892xbf16, #tpu.memory_space<vmem>>, vector<200x892xbf16>
    %cst = arith.constant dense<0.000000e+00> : vector<16x892xf32>
    %54 = tpu.matmul %52, %53, %cst {dimension_numbers = #tpu.dot_dimension_numbers<[1], [0], [0], [1], [0, 0, 1, 1], [], []>} : vector<16x200xbf16>, vector<200x892xbf16>, vector<16x892xf32> -> vector<16x892xf32>
    %c0_32 = arith.constant 0 : index
    %c0_33 = arith.constant 0 : index
    %55 = vector.load %arg3[%c0_32, %c0_33] : memref<16x1xf32, #tpu.memory_space<vmem>>, vector<16x1xf32>
    %56 = vector.broadcast %55 : vector<16x1xf32> to vector<16x892xf32>
    %57 = arith.addf %54, %56 : vector<16x892xf32>
    %cst_34 = arith.constant 0.000000e+00 : f32
    %58 = vector.broadcast %cst_34 : f32 to vector<16x892xf32>
    %59 = arith.maximumf %57, %58 : vector<16x892xf32>
    %60 = vector.extract_strided_slice %59 {offsets = [0, 0], sizes = [16, 891], strides = [1, 1]} : vector<16x892xf32> to vector<16x891xf32>
    %61 = vector.extract_strided_slice %59 {offsets = [0, 1], sizes = [16, 891], strides = [1, 1]} : vector<16x892xf32> to vector<16x891xf32>
    %62 = arith.maximumf %60, %61 : vector<16x891xf32>
    %63 = vector.extract_strided_slice %62 {offsets = [0, 0], sizes = [16, 859], strides = [1, 1]} : vector<16x891xf32> to vector<16x859xf32>
    %64 = vector.extract_strided_slice %62 {offsets = [0, 32], sizes = [16, 859], strides = [1, 1]} : vector<16x891xf32> to vector<16x859xf32>
    %65 = arith.maximumf %63, %64 : vector<16x859xf32>
    %66 = arith.truncf %65 : vector<16x859xf32> to vector<16x859xbf16>
    %c0_35 = arith.constant 0 : index
    %c0_36 = arith.constant 0 : index
    %67 = vector.load %arg7[%c0_35, %c0_36] : memref<32x859xbf16, #tpu.memory_space<vmem>>, vector<16x859xbf16>
    tpu.vector_store %arg7[%c0_35, %c0_36], %66 {strides = array<i32>} : memref<32x859xbf16, #tpu.memory_space<vmem>>, vector<16x859xbf16>,
    %c1 = arith.constant 1 : index
    %c0_37 = arith.constant 0 : index
    %c0_38 = arith.constant 0 : index
    %68 = vector.load %arg1[%c1, %c0_37, %c0_38] : memref<2x8x1024xbf16, #tpu.memory_space<vmem>>, vector<1x8x1024xbf16>
    %69 = vector.shape_cast %68 : vector<1x8x1024xbf16> to vector<8x1024xbf16>
    %70 = vector.extract_strided_slice %69 {offsets = [0, 0], sizes = [8, 892], strides = [1, 1]} : vector<8x1024xbf16> to vector<8x892xbf16>
    %c0_39 = arith.constant 0 : index
    %c0_40 = arith.constant 0 : index
    %71 = vector.load %arg6[%c0_39, %c0_40] : memref<200x892xbf16, #tpu.memory_space<vmem>>, vector<8x892xbf16>
    tpu.vector_store %arg6[%c0_39, %c0_40], %70 {strides = array<i32>} : memref<200x892xbf16, #tpu.memory_space<vmem>>, vector<8x892xbf16>,
    %72 = vector.extract_strided_slice %69 {offsets = [0, 1], sizes = [8, 892], strides = [1, 1]} : vector<8x1024xbf16> to vector<8x892xbf16>
    %c8_41 = arith.constant 8 : index
    %c0_42 = arith.constant 0 : index
    %73 = vector.load %arg6[%c8_41, %c0_42] : memref<200x892xbf16, #tpu.memory_space<vmem>>, vector<8x892xbf16>
    tpu.vector_store %arg6[%c8_41, %c0_42], %72 {strides = array<i32>} : memref<200x892xbf16, #tpu.memory_space<vmem>>, vector<8x892xbf16>,
    %74 = vector.extract_strided_slice %69 {offsets = [0, 2], sizes = [8, 892], strides = [1, 1]} : vector<8x1024xbf16> to vector<8x892xbf16>
    %c16_43 = arith.constant 16 : index
    %c0_44 = arith.constant 0 : index
    %75 = vector.load %arg6[%c16_43, %c0_44] : memref<200x892xbf16, #tpu.memory_space<vmem>>, vector<8x892xbf16>
    tpu.vector_store %arg6[%c16_43, %c0_44], %74 {strides = array<i32>} : memref<200x892xbf16, #tpu.memory_space<vmem>>, vector<8x892xbf16>,
    %76 = vector.extract_strided_slice %69 {offsets = [0, 3], sizes = [8, 892], strides = [1, 1]} : vector<8x1024xbf16> to vector<8x892xbf16>
    %c24_45 = arith.constant 24 : index
    %c0_46 = arith.constant 0 : index
    %77 = vector.load %arg6[%c24_45, %c0_46] : memref<200x892xbf16, #tpu.memory_space<vmem>>, vector<8x892xbf16>
    tpu.vector_store %arg6[%c24_45, %c0_46], %76 {strides = array<i32>} : memref<200x892xbf16, #tpu.memory_space<vmem>>, vector<8x892xbf16>,
    %78 = vector.extract_strided_slice %69 {offsets = [0, 4], sizes = [8, 892], strides = [1, 1]} : vector<8x1024xbf16> to vector<8x892xbf16>
    %c32_47 = arith.constant 32 : index
    %c0_48 = arith.constant 0 : index
    %79 = vector.load %arg6[%c32_47, %c0_48] : memref<200x892xbf16, #tpu.memory_space<vmem>>, vector<8x892xbf16>
    tpu.vector_store %arg6[%c32_47, %c0_48], %78 {strides = array<i32>} : memref<200x892xbf16, #tpu.memory_space<vmem>>, vector<8x892xbf16>,
    %80 = vector.extract_strided_slice %69 {offsets = [0, 32], sizes = [8, 892], strides = [1, 1]} : vector<8x1024xbf16> to vector<8x892xbf16>
    %c40_49 = arith.constant 40 : index
    %c0_50 = arith.constant 0 : index
    %81 = vector.load %arg6[%c40_49, %c0_50] : memref<200x892xbf16, #tpu.memory_space<vmem>>, vector<8x892xbf16>
    tpu.vector_store %arg6[%c40_49, %c0_50], %80 {strides = array<i32>} : memref<200x892xbf16, #tpu.memory_space<vmem>>, vector<8x892xbf16>,
    %82 = vector.extract_strided_slice %69 {offsets = [0, 33], sizes = [8, 892], strides = [1, 1]} : vector<8x1024xbf16> to vector<8x892xbf16>
    %c48_51 = arith.constant 48 : index
    %c0_52 = arith.constant 0 : index
    %83 = vector.load %arg6[%c48_51, %c0_52] : memref<200x892xbf16, #tpu.memory_space<vmem>>, vector<8x892xbf16>
    tpu.vector_store %arg6[%c48_51, %c0_52], %82 {strides = array<i32>} : memref<200x892xbf16, #tpu.memory_space<vmem>>, vector<8x892xbf16>,
    %84 = vector.extract_strided_slice %69 {offsets = [0, 34], sizes = [8, 892], strides = [1, 1]} : vector<8x1024xbf16> to vector<8x892xbf16>
    %c56_53 = arith.constant 56 : index
    %c0_54 = arith.constant 0 : index
    %85 = vector.load %arg6[%c56_53, %c0_54] : memref<200x892xbf16, #tpu.memory_space<vmem>>, vector<8x892xbf16>
    tpu.vector_store %arg6[%c56_53, %c0_54], %84 {strides = array<i32>} : memref<200x892xbf16, #tpu.memory_space<vmem>>, vector<8x892xbf16>,
    %86 = vector.extract_strided_slice %69 {offsets = [0, 35], sizes = [8, 892], strides = [1, 1]} : vector<8x1024xbf16> to vector<8x892xbf16>
    %c64_55 = arith.constant 64 : index
    %c0_56 = arith.constant 0 : index
    %87 = vector.load %arg6[%c64_55, %c0_56] : memref<200x892xbf16, #tpu.memory_space<vmem>>, vector<8x892xbf16>
    tpu.vector_store %arg6[%c64_55, %c0_56], %86 {strides = array<i32>} : memref<200x892xbf16, #tpu.memory_space<vmem>>, vector<8x892xbf16>,
    %88 = vector.extract_strided_slice %69 {offsets = [0, 36], sizes = [8, 892], strides = [1, 1]} : vector<8x1024xbf16> to vector<8x892xbf16>
    %c72_57 = arith.constant 72 : index
    %c0_58 = arith.constant 0 : index
    %89 = vector.load %arg6[%c72_57, %c0_58] : memref<200x892xbf16, #tpu.memory_space<vmem>>, vector<8x892xbf16>
    tpu.vector_store %arg6[%c72_57, %c0_58], %88 {strides = array<i32>} : memref<200x892xbf16, #tpu.memory_space<vmem>>, vector<8x892xbf16>,
    %90 = vector.extract_strided_slice %69 {offsets = [0, 64], sizes = [8, 892], strides = [1, 1]} : vector<8x1024xbf16> to vector<8x892xbf16>
    %c80_59 = arith.constant 80 : index
    %c0_60 = arith.constant 0 : index
    %91 = vector.load %arg6[%c80_59, %c0_60] : memref<200x892xbf16, #tpu.memory_space<vmem>>, vector<8x892xbf16>
    tpu.vector_store %arg6[%c80_59, %c0_60], %90 {strides = array<i32>} : memref<200x892xbf16, #tpu.memory_space<vmem>>, vector<8x892xbf16>,
    %92 = vector.extract_strided_slice %69 {offsets = [0, 65], sizes = [8, 892], strides = [1, 1]} : vector<8x1024xbf16> to vector<8x892xbf16>
    %c88_61 = arith.constant 88 : index
    %c0_62 = arith.constant 0 : index
    %93 = vector.load %arg6[%c88_61, %c0_62] : memref<200x892xbf16, #tpu.memory_space<vmem>>, vector<8x892xbf16>
    tpu.vector_store %arg6[%c88_61, %c0_62], %92 {strides = array<i32>} : memref<200x892xbf16, #tpu.memory_space<vmem>>, vector<8x892xbf16>,
    %94 = vector.extract_strided_slice %69 {offsets = [0, 66], sizes = [8, 892], strides = [1, 1]} : vector<8x1024xbf16> to vector<8x892xbf16>
    %c96_63 = arith.constant 96 : index
    %c0_64 = arith.constant 0 : index
    %95 = vector.load %arg6[%c96_63, %c0_64] : memref<200x892xbf16, #tpu.memory_space<vmem>>, vector<8x892xbf16>
    tpu.vector_store %arg6[%c96_63, %c0_64], %94 {strides = array<i32>} : memref<200x892xbf16, #tpu.memory_space<vmem>>, vector<8x892xbf16>,
    %96 = vector.extract_strided_slice %69 {offsets = [0, 67], sizes = [8, 892], strides = [1, 1]} : vector<8x1024xbf16> to vector<8x892xbf16>
    %c104_65 = arith.constant 104 : index
    %c0_66 = arith.constant 0 : index
    %97 = vector.load %arg6[%c104_65, %c0_66] : memref<200x892xbf16, #tpu.memory_space<vmem>>, vector<8x892xbf16>
    tpu.vector_store %arg6[%c104_65, %c0_66], %96 {strides = array<i32>} : memref<200x892xbf16, #tpu.memory_space<vmem>>, vector<8x892xbf16>,
    %98 = vector.extract_strided_slice %69 {offsets = [0, 68], sizes = [8, 892], strides = [1, 1]} : vector<8x1024xbf16> to vector<8x892xbf16>
    %c112_67 = arith.constant 112 : index
    %c0_68 = arith.constant 0 : index
    %99 = vector.load %arg6[%c112_67, %c0_68] : memref<200x892xbf16, #tpu.memory_space<vmem>>, vector<8x892xbf16>
    tpu.vector_store %arg6[%c112_67, %c0_68], %98 {strides = array<i32>} : memref<200x892xbf16, #tpu.memory_space<vmem>>, vector<8x892xbf16>,
    %100 = vector.extract_strided_slice %69 {offsets = [0, 96], sizes = [8, 892], strides = [1, 1]} : vector<8x1024xbf16> to vector<8x892xbf16>
    %c120_69 = arith.constant 120 : index
    %c0_70 = arith.constant 0 : index
    %101 = vector.load %arg6[%c120_69, %c0_70] : memref<200x892xbf16, #tpu.memory_space<vmem>>, vector<8x892xbf16>
    tpu.vector_store %arg6[%c120_69, %c0_70], %100 {strides = array<i32>} : memref<200x892xbf16, #tpu.memory_space<vmem>>, vector<8x892xbf16>,
    %102 = vector.extract_strided_slice %69 {offsets = [0, 97], sizes = [8, 892], strides = [1, 1]} : vector<8x1024xbf16> to vector<8x892xbf16>
    %c128_71 = arith.constant 128 : index
    %c0_72 = arith.constant 0 : index
    %103 = vector.load %arg6[%c128_71, %c0_72] : memref<200x892xbf16, #tpu.memory_space<vmem>>, vector<8x892xbf16>
    tpu.vector_store %arg6[%c128_71, %c0_72], %102 {strides = array<i32>} : memref<200x892xbf16, #tpu.memory_space<vmem>>, vector<8x892xbf16>,
    %104 = vector.extract_strided_slice %69 {offsets = [0, 98], sizes = [8, 892], strides = [1, 1]} : vector<8x1024xbf16> to vector<8x892xbf16>
    %c136_73 = arith.constant 136 : index
    %c0_74 = arith.constant 0 : index
    %105 = vector.load %arg6[%c136_73, %c0_74] : memref<200x892xbf16, #tpu.memory_space<vmem>>, vector<8x892xbf16>
    tpu.vector_store %arg6[%c136_73, %c0_74], %104 {strides = array<i32>} : memref<200x892xbf16, #tpu.memory_space<vmem>>, vector<8x892xbf16>,
    %106 = vector.extract_strided_slice %69 {offsets = [0, 99], sizes = [8, 892], strides = [1, 1]} : vector<8x1024xbf16> to vector<8x892xbf16>
    %c144_75 = arith.constant 144 : index
    %c0_76 = arith.constant 0 : index
    %107 = vector.load %arg6[%c144_75, %c0_76] : memref<200x892xbf16, #tpu.memory_space<vmem>>, vector<8x892xbf16>
    tpu.vector_store %arg6[%c144_75, %c0_76], %106 {strides = array<i32>} : memref<200x892xbf16, #tpu.memory_space<vmem>>, vector<8x892xbf16>,
    %108 = vector.extract_strided_slice %69 {offsets = [0, 100], sizes = [8, 892], strides = [1, 1]} : vector<8x1024xbf16> to vector<8x892xbf16>
    %c152_77 = arith.constant 152 : index
    %c0_78 = arith.constant 0 : index
    %109 = vector.load %arg6[%c152_77, %c0_78] : memref<200x892xbf16, #tpu.memory_space<vmem>>, vector<8x892xbf16>
    tpu.vector_store %arg6[%c152_77, %c0_78], %108 {strides = array<i32>} : memref<200x892xbf16, #tpu.memory_space<vmem>>, vector<8x892xbf16>,
    %110 = vector.extract_strided_slice %69 {offsets = [0, 128], sizes = [8, 892], strides = [1, 1]} : vector<8x1024xbf16> to vector<8x892xbf16>
    %c160_79 = arith.constant 160 : index
    %c0_80 = arith.constant 0 : index
    %111 = vector.load %arg6[%c160_79, %c0_80] : memref<200x892xbf16, #tpu.memory_space<vmem>>, vector<8x892xbf16>
    tpu.vector_store %arg6[%c160_79, %c0_80], %110 {strides = array<i32>} : memref<200x892xbf16, #tpu.memory_space<vmem>>, vector<8x892xbf16>,
    %112 = vector.extract_strided_slice %69 {offsets = [0, 129], sizes = [8, 892], strides = [1, 1]} : vector<8x1024xbf16> to vector<8x892xbf16>
    %c168_81 = arith.constant 168 : index
    %c0_82 = arith.constant 0 : index
    %113 = vector.load %arg6[%c168_81, %c0_82] : memref<200x892xbf16, #tpu.memory_space<vmem>>, vector<8x892xbf16>
    tpu.vector_store %arg6[%c168_81, %c0_82], %112 {strides = array<i32>} : memref<200x892xbf16, #tpu.memory_space<vmem>>, vector<8x892xbf16>,
    %114 = vector.extract_strided_slice %69 {offsets = [0, 130], sizes = [8, 892], strides = [1, 1]} : vector<8x1024xbf16> to vector<8x892xbf16>
    %c176_83 = arith.constant 176 : index
    %c0_84 = arith.constant 0 : index
    %115 = vector.load %arg6[%c176_83, %c0_84] : memref<200x892xbf16, #tpu.memory_space<vmem>>, vector<8x892xbf16>
    tpu.vector_store %arg6[%c176_83, %c0_84], %114 {strides = array<i32>} : memref<200x892xbf16, #tpu.memory_space<vmem>>, vector<8x892xbf16>,
    %116 = vector.extract_strided_slice %69 {offsets = [0, 131], sizes = [8, 892], strides = [1, 1]} : vector<8x1024xbf16> to vector<8x892xbf16>
    %c184_85 = arith.constant 184 : index
    %c0_86 = arith.constant 0 : index
    %117 = vector.load %arg6[%c184_85, %c0_86] : memref<200x892xbf16, #tpu.memory_space<vmem>>, vector<8x892xbf16>
    tpu.vector_store %arg6[%c184_85, %c0_86], %116 {strides = array<i32>} : memref<200x892xbf16, #tpu.memory_space<vmem>>, vector<8x892xbf16>,
    %118 = vector.extract_strided_slice %69 {offsets = [0, 132], sizes = [8, 892], strides = [1, 1]} : vector<8x1024xbf16> to vector<8x892xbf16>
    %c192_87 = arith.constant 192 : index
    %c0_88 = arith.constant 0 : index
    %119 = vector.load %arg6[%c192_87, %c0_88] : memref<200x892xbf16, #tpu.memory_space<vmem>>, vector<8x892xbf16>
    tpu.vector_store %arg6[%c192_87, %c0_88], %118 {strides = array<i32>} : memref<200x892xbf16, #tpu.memory_space<vmem>>, vector<8x892xbf16>,
    %c0_89 = arith.constant 0 : index
    %c0_90 = arith.constant 0 : index
    %120 = vector.load %arg2[%c0_89, %c0_90] : memref<16x200xbf16, #tpu.memory_space<vmem>>, vector<16x200xbf16>
    %c0_91 = arith.constant 0 : index
    %c0_92 = arith.constant 0 : index
    %121 = vector.load %arg6[%c0_91, %c0_92] : memref<200x892xbf16, #tpu.memory_space<vmem>>, vector<200x892xbf16>
    %cst_93 = arith.constant dense<0.000000e+00> : vector<16x892xf32>
    %122 = tpu.matmul %120, %121, %cst_93 {dimension_numbers = #tpu.dot_dimension_numbers<[1], [0], [0], [1], [0, 0, 1, 1], [], []>} : vector<16x200xbf16>, vector<200x892xbf16>, vector<16x892xf32> -> vector<16x892xf32>
    %c0_94 = arith.constant 0 : index
    %c0_95 = arith.constant 0 : index
    %123 = vector.load %arg3[%c0_94, %c0_95] : memref<16x1xf32, #tpu.memory_space<vmem>>, vector<16x1xf32>
    %124 = vector.broadcast %123 : vector<16x1xf32> to vector<16x892xf32>
    %125 = arith.addf %122, %124 : vector<16x892xf32>
    %cst_96 = arith.constant 0.000000e+00 : f32
    %126 = vector.broadcast %cst_96 : f32 to vector<16x892xf32>
    %127 = arith.maximumf %125, %126 : vector<16x892xf32>
    %128 = vector.extract_strided_slice %127 {offsets = [0, 0], sizes = [16, 891], strides = [1, 1]} : vector<16x892xf32> to vector<16x891xf32>
    %129 = vector.extract_strided_slice %127 {offsets = [0, 1], sizes = [16, 891], strides = [1, 1]} : vector<16x892xf32> to vector<16x891xf32>
    %130 = arith.maximumf %128, %129 : vector<16x891xf32>
    %131 = vector.extract_strided_slice %130 {offsets = [0, 0], sizes = [16, 859], strides = [1, 1]} : vector<16x891xf32> to vector<16x859xf32>
    %132 = vector.extract_strided_slice %130 {offsets = [0, 32], sizes = [16, 859], strides = [1, 1]} : vector<16x891xf32> to vector<16x859xf32>
    %133 = arith.maximumf %131, %132 : vector<16x859xf32>
    %134 = arith.truncf %133 : vector<16x859xf32> to vector<16x859xbf16>
    %c16_97 = arith.constant 16 : index
    %c0_98 = arith.constant 0 : index
    %135 = vector.load %arg7[%c16_97, %c0_98] : memref<32x859xbf16, #tpu.memory_space<vmem>>, vector<16x859xbf16>
    tpu.vector_store %arg7[%c16_97, %c0_98], %134 {strides = array<i32>} : memref<32x859xbf16, #tpu.memory_space<vmem>>, vector<16x859xbf16>,
    %c0_99 = arith.constant 0 : index
    %c0_100 = arith.constant 0 : index
    %136 = vector.load %arg7[%c0_99, %c0_100] : memref<32x859xbf16, #tpu.memory_space<vmem>>, vector<32x859xbf16>
    %c0_101 = arith.constant 0 : index
    %c0_102 = arith.constant 0 : index
    %137 = vector.load %arg4[%c0_101, %c0_102] : memref<859x196xbf16, #tpu.memory_space<vmem>>, vector<859x196xbf16>
    %cst_103 = arith.constant dense<0.000000e+00> : vector<32x196xf32>
    %138 = tpu.matmul %136, %137, %cst_103 {dimension_numbers = #tpu.dot_dimension_numbers<[1], [0], [0], [1], [0, 0, 1, 1], [], []>} : vector<32x859xbf16>, vector<859x196xbf16>, vector<32x196xf32> -> vector<32x196xf32>
    %139 = arith.truncf %138 : vector<32x196xf32> to vector<32x196xbf16>
    %140 = vector.extract_strided_slice %139 {offsets = [0, 0], sizes = [16, 196], strides = [1, 1]} : vector<32x196xbf16> to vector<16x196xbf16>
    %c0_104 = arith.constant 0 : index
    %c0_105 = arith.constant 0 : index
    %c0_106 = arith.constant 0 : index
    %141 = vector.load %arg5[%c0_104, %c0_105, %c0_106] : memref<2x16x196xbf16, #tpu.memory_space<vmem>>, vector<1x16x196xbf16>
    %142 = vector.shape_cast %141 : vector<1x16x196xbf16> to vector<16x196xbf16>
    %143 = vector.shape_cast %140 : vector<16x196xbf16> to vector<1x16x196xbf16>
    tpu.vector_store %arg5[%c0_104, %c0_105, %c0_106], %143 {strides = array<i32>} : memref<2x16x196xbf16, #tpu.memory_space<vmem>>, vector<1x16x196xbf16>,
    %144 = vector.extract_strided_slice %139 {offsets = [16, 0], sizes = [16, 196], strides = [1, 1]} : vector<32x196xbf16> to vector<16x196xbf16>
    %c1_107 = arith.constant 1 : index
    %c0_108 = arith.constant 0 : index
    %c0_109 = arith.constant 0 : index
    %145 = vector.load %arg5[%c1_107, %c0_108, %c0_109] : memref<2x16x196xbf16, #tpu.memory_space<vmem>>, vector<1x16x196xbf16>
    %146 = vector.shape_cast %145 : vector<1x16x196xbf16> to vector<16x196xbf16>
    %147 = vector.shape_cast %144 : vector<16x196xbf16> to vector<1x16x196xbf16>
    tpu.vector_store %arg5[%c1_107, %c0_108, %c0_109], %147 {strides = array<i32>} : memref<2x16x196xbf16, #tpu.memory_space<vmem>>, vector<1x16x196xbf16>,
    return
  }
  func.func @transform_0(%arg0: i32) -> (i32, i32, i32) {
    %c0_i32 = arith.constant 0 : i32
    %c0_i32_0 = arith.constant 0 : i32
    %c0_i32_1 = arith.constant 0 : i32
    return %arg0, %c0_i32, %c0_i32_0 : i32, i32, i32
  }
  func.func @transform_1(%arg0: i32) -> (i32, i32) {
    %c0_i32 = arith.constant 0 : i32
    %c0_i32_0 = arith.constant 0 : i32
    %c0_i32_1 = arith.constant 0 : i32
    return %c0_i32, %c0_i32_0 : i32, i32
  }
  func.func @transform_2(%arg0: i32) -> (i32, i32) {
    %c0_i32 = arith.constant 0 : i32
    %c0_i32_0 = arith.constant 0 : i32
    %c0_i32_1 = arith.constant 0 : i32
    return %c0_i32, %c0_i32_0 : i32, i32
  }
  func.func @transform_3(%arg0: i32) -> (i32, i32) {
    %c0_i32 = arith.constant 0 : i32
    %c0_i32_0 = arith.constant 0 : i32
    %c0_i32_1 = arith.constant 0 : i32
    return %c0_i32, %c0_i32_0 : i32, i32
  }
  func.func @transform_4(%arg0: i32) -> (i32, i32, i32) {
    %c0_i32 = arith.constant 0 : i32
    %c0_i32_0 = arith.constant 0 : i32
    %c0_i32_1 = arith.constant 0 : i32
    return %arg0, %c0_i32, %c0_i32_0 : i32, i32, i32
  }
}

module attributes {stable_mosaic.version = 11 : i64} {
  func.func @_fc_stack_kernel(%arg0: i32, %arg1: memref<2x800xbf16, #tpu.memory_space<vmem>>, %arg2: memref<800x120xbf16, #tpu.memory_space<vmem>>, %arg3: memref<1x120xf32, #tpu.memory_space<vmem>>, %arg4: memref<120x84xbf16, #tpu.memory_space<vmem>>, %arg5: memref<1x84xf32, #tpu.memory_space<vmem>>, %arg6: memref<84x128xbf16, #tpu.memory_space<vmem>>, %arg7: memref<1x128xf32, #tpu.memory_space<vmem>>, %arg8: memref<2x128xf32, #tpu.memory_space<vmem>>) attributes {dimension_semantics = [#tpu.dimension_semantics<parallel>], iteration_bounds = array<i64: 1>, scalar_prefetch = 0 : i64, scratch_operands = 0 : i64, tpu.core_type = #tpu.core_type<tc>, window_params = [{transform_indices = @transform_0, window_bounds = array<i64: 2, 800>}, {pipeline_mode = #tpu.pipeline_mode<synchronous>, transform_indices = @transform_1, window_bounds = array<i64: 800, 120>}, {pipeline_mode = #tpu.pipeline_mode<synchronous>, transform_indices = @transform_2, window_bounds = array<i64: 1, 120>}, {pipeline_mode = #tpu.pipeline_mode<synchronous>, transform_indices = @transform_3, window_bounds = array<i64: 120, 84>}, {pipeline_mode = #tpu.pipeline_mode<synchronous>, transform_indices = @transform_4, window_bounds = array<i64: 1, 84>}, {pipeline_mode = #tpu.pipeline_mode<synchronous>, transform_indices = @transform_5, window_bounds = array<i64: 84, 128>}, {pipeline_mode = #tpu.pipeline_mode<synchronous>, transform_indices = @transform_6, window_bounds = array<i64: 1, 128>}, {transform_indices = @transform_7, window_bounds = array<i64: 2, 128>}]} {
    %c0 = arith.constant 0 : index
    %c0_0 = arith.constant 0 : index
    %0 = vector.load %arg1[%c0, %c0_0] : memref<2x800xbf16, #tpu.memory_space<vmem>>, vector<2x800xbf16>
    %c0_1 = arith.constant 0 : index
    %c0_2 = arith.constant 0 : index
    %1 = vector.load %arg2[%c0_1, %c0_2] : memref<800x120xbf16, #tpu.memory_space<vmem>>, vector<800x120xbf16>
    %cst = arith.constant dense<0.000000e+00> : vector<2x120xf32>
    %2 = tpu.matmul %0, %1, %cst {dimension_numbers = #tpu.dot_dimension_numbers<[1], [0], [0], [1], [0, 0, 1, 1], [], []>} : vector<2x800xbf16>, vector<800x120xbf16>, vector<2x120xf32> -> vector<2x120xf32>
    %c0_3 = arith.constant 0 : index
    %c0_4 = arith.constant 0 : index
    %3 = vector.load %arg3[%c0_3, %c0_4] : memref<1x120xf32, #tpu.memory_space<vmem>>, vector<1x120xf32>
    %4 = vector.broadcast %3 : vector<1x120xf32> to vector<2x120xf32>
    %5 = arith.addf %2, %4 : vector<2x120xf32>
    %cst_5 = arith.constant 0.000000e+00 : f32
    %6 = vector.broadcast %cst_5 : f32 to vector<2x120xf32>
    %7 = arith.maximumf %5, %6 : vector<2x120xf32>
    %8 = arith.truncf %7 : vector<2x120xf32> to vector<2x120xbf16>
    %c0_6 = arith.constant 0 : index
    %c0_7 = arith.constant 0 : index
    %9 = vector.load %arg4[%c0_6, %c0_7] : memref<120x84xbf16, #tpu.memory_space<vmem>>, vector<120x84xbf16>
    %cst_8 = arith.constant dense<0.000000e+00> : vector<2x84xf32>
    %10 = tpu.matmul %8, %9, %cst_8 {dimension_numbers = #tpu.dot_dimension_numbers<[1], [0], [0], [1], [0, 0, 1, 1], [], []>} : vector<2x120xbf16>, vector<120x84xbf16>, vector<2x84xf32> -> vector<2x84xf32>
    %c0_9 = arith.constant 0 : index
    %c0_10 = arith.constant 0 : index
    %11 = vector.load %arg5[%c0_9, %c0_10] : memref<1x84xf32, #tpu.memory_space<vmem>>, vector<1x84xf32>
    %12 = vector.broadcast %11 : vector<1x84xf32> to vector<2x84xf32>
    %13 = arith.addf %10, %12 : vector<2x84xf32>
    %cst_11 = arith.constant 0.000000e+00 : f32
    %14 = vector.broadcast %cst_11 : f32 to vector<2x84xf32>
    %15 = arith.maximumf %13, %14 : vector<2x84xf32>
    %16 = arith.truncf %15 : vector<2x84xf32> to vector<2x84xbf16>
    %c0_12 = arith.constant 0 : index
    %c0_13 = arith.constant 0 : index
    %17 = vector.load %arg6[%c0_12, %c0_13] : memref<84x128xbf16, #tpu.memory_space<vmem>>, vector<84x128xbf16>
    %cst_14 = arith.constant dense<0.000000e+00> : vector<2x128xf32>
    %18 = tpu.matmul %16, %17, %cst_14 {dimension_numbers = #tpu.dot_dimension_numbers<[1], [0], [0], [1], [0, 0, 1, 1], [], []>} : vector<2x84xbf16>, vector<84x128xbf16>, vector<2x128xf32> -> vector<2x128xf32>
    %c0_15 = arith.constant 0 : index
    %c0_16 = arith.constant 0 : index
    %19 = vector.load %arg7[%c0_15, %c0_16] : memref<1x128xf32, #tpu.memory_space<vmem>>, vector<1x128xf32>
    %20 = vector.broadcast %19 : vector<1x128xf32> to vector<2x128xf32>
    %21 = arith.addf %18, %20 : vector<2x128xf32>
    %cst_17 = arith.constant 0.000000e+00 : f32
    %22 = vector.broadcast %cst_17 : f32 to vector<2x128xf32>
    %23 = arith.maximumf %21, %22 : vector<2x128xf32>
    %c0_18 = arith.constant 0 : index
    %c0_19 = arith.constant 0 : index
    %24 = vector.load %arg8[%c0_18, %c0_19] : memref<2x128xf32, #tpu.memory_space<vmem>>, vector<2x128xf32>
    tpu.vector_store %arg8[%c0_18, %c0_19], %23 {strides = array<i32>} : memref<2x128xf32, #tpu.memory_space<vmem>>, vector<2x128xf32>,
    return
  }
  func.func @transform_0(%arg0: i32) -> (i32, i32) {
    %c0_i32 = arith.constant 0 : i32
    %c0_i32_0 = arith.constant 0 : i32
    return %arg0, %c0_i32 : i32, i32
  }
  func.func @transform_1(%arg0: i32) -> (i32, i32) {
    %c0_i32 = arith.constant 0 : i32
    %c0_i32_0 = arith.constant 0 : i32
    %c0_i32_1 = arith.constant 0 : i32
    return %c0_i32, %c0_i32_0 : i32, i32
  }
  func.func @transform_2(%arg0: i32) -> (i32, i32) {
    %c0_i32 = arith.constant 0 : i32
    %c0_i32_0 = arith.constant 0 : i32
    %c0_i32_1 = arith.constant 0 : i32
    return %c0_i32, %c0_i32_0 : i32, i32
  }
  func.func @transform_3(%arg0: i32) -> (i32, i32) {
    %c0_i32 = arith.constant 0 : i32
    %c0_i32_0 = arith.constant 0 : i32
    %c0_i32_1 = arith.constant 0 : i32
    return %c0_i32, %c0_i32_0 : i32, i32
  }
  func.func @transform_4(%arg0: i32) -> (i32, i32) {
    %c0_i32 = arith.constant 0 : i32
    %c0_i32_0 = arith.constant 0 : i32
    %c0_i32_1 = arith.constant 0 : i32
    return %c0_i32, %c0_i32_0 : i32, i32
  }
  func.func @transform_5(%arg0: i32) -> (i32, i32) {
    %c0_i32 = arith.constant 0 : i32
    %c0_i32_0 = arith.constant 0 : i32
    %c0_i32_1 = arith.constant 0 : i32
    return %c0_i32, %c0_i32_0 : i32, i32
  }
  func.func @transform_6(%arg0: i32) -> (i32, i32) {
    %c0_i32 = arith.constant 0 : i32
    %c0_i32_0 = arith.constant 0 : i32
    %c0_i32_1 = arith.constant 0 : i32
    return %c0_i32, %c0_i32_0 : i32, i32
  }
  func.func @transform_7(%arg0: i32) -> (i32, i32) {
    %c0_i32 = arith.constant 0 : i32
    %c0_i32_0 = arith.constant 0 : i32
    return %arg0, %c0_i32 : i32, i32
  }
}

</mosaic_0001>

<llo_original>
// kernel: lenet_forward.5
$region0: #{lenet_forward.5}
  #allocation0 [shape = 'u32[]', space=smem, size = 0x4, offset = 0x4, fixed_abs, tag = 'smem constant byte address 0x4 - core index']
  #allocation1 [shape = 'u32[144,128]{1,0:T(1,128)}', space=vmem, size = 0x12000, scoped, tag = 'internal scratch']
  %s0 = inlined_call_operand.vmem [shape: bf16[2,800], index: 0, kind: input, shape index: {}]
  %s1 = inlined_call_operand.vmem [shape: bf16[800,120], index: 1, kind: input, shape index: {}]
  %s2 = inlined_call_operand.vmem [shape: f32[1,120], index: 2, kind: input, shape index: {}]
  %s3 = inlined_call_operand.vmem [shape: bf16[120,84], index: 3, kind: input, shape index: {}]
  %s4 = inlined_call_operand.vmem [shape: f32[1,84], index: 4, kind: input, shape index: {}]
  %s5 = inlined_call_operand.vmem [shape: bf16[84,128], index: 5, kind: input, shape index: {}]
  %s6 = inlined_call_operand.vmem [shape: f32[1,128], index: 6, kind: input, shape index: {}]
  %s7 = inlined_call_operand.hbm [shape: f32[2,128], index: 7, kind: output, shape index: {}]
  %s8 = sld [smem:[#allocation0]]
  $region38: #{lenet_forward.5} parent=0
    _
  %s10 = ssub.s32 1, %s8
  %s11 = scalar_select 0, %s10, %s8
  $region1: #{lenet_forward.5} parent=0
    #allocation2 [shape = 'u8[1024]{0}', space=vmem, size = 0x400, scoped, tag = 'output window, operand 0, single buffered']
    #allocation3 [shape = 's32[1]{0}', space=sflag, size = 0x4, scoped, tag = 'scoped memory for lenet_forward.5']
    %12 = vsyncpa [#allocation3], 0
    // Predicated region
    $region2: #{lenet_forward.5} parent=1 // pred_check
      _
    $region3: #{lenet_forward.5} parent=1 // pred_check_branch
      %14 = sbr.rel (0) target = $region5
    $region4: #{lenet_forward.5} parent=1 // pred_region
      _
    $region5: #{lenet_forward.5} parent=1 // pred_fallthru
      _
    // Predicated region
    $region6: #{lenet_forward.5} parent=1 // pred_check
      _
    $region7: #{lenet_forward.5} parent=1 // pred_check_branch
      %16 = sbr.rel (0) target = $region9
    $region8: #{lenet_forward.5} parent=1 // pred_region
      _
    $region9: #{lenet_forward.5} parent=1 // pred_fallthru
      _
    // Predicated region
    $region10: #{lenet_forward.5} parent=1 // pred_check
      _
    $region11: #{lenet_forward.5} parent=1 // pred_check_branch
      %18 = sbr.rel (0) target = $region13
    $region12: #{lenet_forward.5} parent=1 // pred_region
      _
    $region13: #{lenet_forward.5} parent=1 // pred_fallthru
      _
    // Predicated region
    $region14: #{lenet_forward.5} parent=1 // pred_check
      _
    $region15: #{lenet_forward.5} parent=1 // pred_check_branch
      %20 = sbr.rel (0) target = $region17
    $region16: #{lenet_forward.5} parent=1 // pred_region
      _
    $region17: #{lenet_forward.5} parent=1 // pred_fallthru
      _
    // Predicated region
    $region18: #{lenet_forward.5} parent=1 // pred_check
      _
    $region19: #{lenet_forward.5} parent=1 // pred_check_branch
      %22 = sbr.rel (0) target = $region21
    $region20: #{lenet_forward.5} parent=1 // pred_region
      _
    $region21: #{lenet_forward.5} parent=1 // pred_fallthru
      _
    // Predicated region
    $region22: #{lenet_forward.5} parent=1 // pred_check
      _
    $region23: #{lenet_forward.5} parent=1 // pred_check_branch
      %24 = sbr.rel (0) target = $region25
    $region24: #{lenet_forward.5} parent=1 // pred_region
      _
    $region25: #{lenet_forward.5} parent=1 // pred_fallthru
      _
    // Predicated region
    $region26: #{lenet_forward.5} parent=1 // pred_check
      _
    $region27: #{lenet_forward.5} parent=1 // pred_check_branch
      %26 = sbr.rel (0) target = $region29
    $region28: #{lenet_forward.5} parent=1 // pred_region
      _
    $region29: #{lenet_forward.5} parent=1 // pred_fallthru
      _
    %v28 = vld [vmem:[%s0] sm:$0x7f]
    %v29 = vld [vmem:[%s1] sm:$0xf]
    %v30 = vld [vmem:[%s1 + $0x4] sm:$0xf]
    %v31 = vld [vmem:[%s1 + $0x8] sm:$0xf]
    %v32 = vld [vmem:[%s1 + $0xc] sm:$0xf]
    %v33 = vld [vmem:[%s1 + $0x10] sm:$0xf]
    %v34 = vld [vmem:[%s1 + $0x14] sm:$0xf]
    %v35 = vld [vmem:[%s1 + $0x18] sm:$0xf]
    %v36 = vld [vmem:[%s1 + $0x1c] sm:$0xf]
    %v37 = vld [vmem:[%s1 + $0x20] sm:$0xf]
    %v38 = vld [vmem:[%s1 + $0x24] sm:$0xf]
    %v39 = vld [vmem:[%s1 + $0x28] sm:$0xf]
    %v40 = vld [vmem:[%s1 + $0x2c] sm:$0xf]
    %v41 = vld [vmem:[%s1 + $0x30] sm:$0xf]
    %v42 = vld [vmem:[%s1 + $0x34] sm:$0xf]
    %v43 = vld [vmem:[%s1 + $0x38] sm:$0xf]
    %v44 = vld [vmem:[%s1 + $0x3c] sm:$0xf]
    %v45 = vld [vmem:[%s1 + $0x40] sm:$0xf]
    %v46 = vld [vmem:[%s1 + $0x44] sm:$0xf]
    %v47 = vld [vmem:[%s1 + $0x48] sm:$0xf]
    %v48 = vld [vmem:[%s1 + $0x4c] sm:$0xf]
    %v49 = vld [vmem:[%s1 + $0x50] sm:$0xf]
    %v50 = vld [vmem:[%s1 + $0x54] sm:$0xf]
    %v51 = vld [vmem:[%s1 + $0x58] sm:$0xf]
    %v52 = vld [vmem:[%s1 + $0x5c] sm:$0xf]
    %v53 = vld [vmem:[%s1 + $0x60] sm:$0xf]
    %v54 = vld [vmem:[%s1 + $0x64] sm:$0xf]
    %v55 = vld [vmem:[%s1 + $0x68] sm:$0xf]
    %v56 = vld [vmem:[%s1 + $0x6c] sm:$0xf]
    %v57 = vld [vmem:[%s1 + $0x70] sm:$0xf]
    %v58 = vld [vmem:[%s1 + $0x74] sm:$0xf]
    %v59 = vld [vmem:[%s1 + $0x78] sm:$0xf]
    %v60 = vld [vmem:[%s1 + $0x7c] sm:$0xf]
    %v61 = vld [vmem:[%s1 + $0x80] sm:$0xf]
    %v62 = vld [vmem:[%s1 + $0x84] sm:$0xf]
    %v63 = vld [vmem:[%s1 + $0x88] sm:$0xf]
    %v64 = vld [vmem:[%s1 + $0x8c] sm:$0xf]
    %v65 = vld [vmem:[%s1 + $0x90] sm:$0xf]
    %v66 = vld [vmem:[%s1 + $0x94] sm:$0xf]
    %v67 = vld [vmem:[%s1 + $0x98] sm:$0xf]
    %v68 = vld [vmem:[%s1 + $0x9c] sm:$0xf]
    %v69 = vld [vmem:[%s1 + $0xa0] sm:$0xf]
    %v70 = vld [vmem:[%s1 + $0xa4] sm:$0xf]
    %v71 = vld [vmem:[%s1 + $0xa8] sm:$0xf]
    %v72 = vld [vmem:[%s1 + $0xac] sm:$0xf]
    %v73 = vld [vmem:[%s1 + $0xb0] sm:$0xf]
    %v74 = vld [vmem:[%s1 + $0xb4] sm:$0xf]
    %v75 = vld [vmem:[%s1 + $0xb8] sm:$0xf]
    %v76 = vld [vmem:[%s1 + $0xbc] sm:$0xf]
    %v77 = vld [vmem:[%s1 + $0xc0] sm:$0xf]
    %v78 = vld [vmem:[%s1 + $0xc4] sm:$0xf]
    %v79 = vld [vmem:[%s1 + $0xc8] sm:$0xf]
    %v80 = vld [vmem:[%s1 + $0xcc] sm:$0xf]
    %v81 = vld [vmem:[%s1 + $0xd0] sm:$0xf]
    %v82 = vld [vmem:[%s1 + $0xd4] sm:$0xf]
    %v83 = vld [vmem:[%s1 + $0xd8] sm:$0xf]
    %v84 = vld [vmem:[%s1 + $0xdc] sm:$0xf]
    %v85 = vld [vmem:[%s1 + $0xe0] sm:$0xf]
    %v86 = vld [vmem:[%s1 + $0xe4] sm:$0xf]
    %v87 = vld [vmem:[%s1 + $0xe8] sm:$0xf]
    %v88 = vld [vmem:[%s1 + $0xec] sm:$0xf]
    %v89 = vld [vmem:[%s1 + $0xf0] sm:$0xf]
    %v90 = vld [vmem:[%s1 + $0xf4] sm:$0xf]
    %v91 = vld [vmem:[%s1 + $0xf8] sm:$0xf]
    %v92 = vld [vmem:[%s1 + $0xfc] sm:$0xf]
    %v93 = vld [vmem:[%s1 + $0x100] sm:$0xf]
    %v94 = vld [vmem:[%s1 + $0x104] sm:$0xf]
    %v95 = vld [vmem:[%s1 + $0x108] sm:$0xf]
    %v96 = vld [vmem:[%s1 + $0x10c] sm:$0xf]
    %v97 = vld [vmem:[%s1 + $0x110] sm:$0xf]
    %v98 = vld [vmem:[%s1 + $0x114] sm:$0xf]
    %v99 = vld [vmem:[%s1 + $0x118] sm:$0xf]
    %v100 = vld [vmem:[%s1 + $0x11c] sm:$0xf]
    %v101 = vld [vmem:[%s1 + $0x120] sm:$0xf]
    %v102 = vld [vmem:[%s1 + $0x124] sm:$0xf]
    %v103 = vld [vmem:[%s1 + $0x128] sm:$0xf]
    %v104 = vld [vmem:[%s1 + $0x12c] sm:$0xf]
    %v105 = vld [vmem:[%s1 + $0x130] sm:$0xf]
    %v106 = vld [vmem:[%s1 + $0x134] sm:$0xf]
    %v107 = vld [vmem:[%s1 + $0x138] sm:$0xf]
    %v108 = vld [vmem:[%s1 + $0x13c] sm:$0xf]
    %v109 = vld [vmem:[%s1 + $0x140] sm:$0xf]
    %v110 = vld [vmem:[%s1 + $0x144] sm:$0xf]
    %v111 = vld [vmem:[%s1 + $0x148] sm:$0xf]
    %v112 = vld [vmem:[%s1 + $0x14c] sm:$0xf]
    %v113 = vld [vmem:[%s1 + $0x150] sm:$0xf]
    %v114 = vld [vmem:[%s1 + $0x154] sm:$0xf]
    %v115 = vld [vmem:[%s1 + $0x158] sm:$0xf]
    %v116 = vld [vmem:[%s1 + $0x15c] sm:$0xf]
    %v117 = vld [vmem:[%s1 + $0x160] sm:$0xf]
    %v118 = vld [vmem:[%s1 + $0x164] sm:$0xf]
    %v119 = vld [vmem:[%s1 + $0x168] sm:$0xf]
    %v120 = vld [vmem:[%s1 + $0x16c] sm:$0xf]
    %v121 = vld [vmem:[%s1 + $0x170] sm:$0xf]
    %v122 = vld [vmem:[%s1 + $0x174] sm:$0xf]
    %v123 = vld [vmem:[%s1 + $0x178] sm:$0xf]
    %v124 = vld [vmem:[%s1 + $0x17c] sm:$0xf]
    %v125 = vld [vmem:[%s1 + $0x180] sm:$0xf]
    %v126 = vld [vmem:[%s1 + $0x184] sm:$0xf]
    %v127 = vld [vmem:[%s1 + $0x188] sm:$0xf]
    %v128 = vld [vmem:[%s1 + $0x18c] sm:$0xf]
    %v129 = vld [vmem:[%s2] sm:$0x1]
    %v131 = vlaneseq
    %v132 = vshrl.u32 %v131, 7
    %v133 = vsub.s32 0, %v132
    %v134 = vrot.slane %v129, %v133
    %v137 = vcombine.high %v28, %v28
    %v139 = vunpack.c.l.s4 1966171168
    %v140 = vunpack.c.0.s8 %v139
    %v141 = vlaneseq
    %v142 = vshrl.u32 %v141, 7
    %v143 = vsub.s32 %v140, %v142
    %v144 = vrot.slane %v28, %v143
    %v146 = vunpack.c.l.s4 1966171168
    %v147 = vunpack.c.0.s8 %v146
    %v148 = vlaneseq
    %v149 = vshrl.u32 %v148, 7
    %v150 = vsub.s32 %v147, %v149
    %v151 = vrot.slane %v137, %v150
    %v152 = vcombine.high %v144, %v144
    %v153 = vcombine.high %v151, %v151
    %v155 = vunpack.c.l.s4 1966171168
    %v156 = vunpack.c.0.s8 %v155
    %v157 = vlaneseq
    %v158 = vshrl.u32 %v157, 7
    %v159 = vsub.s32 %v156, %v158
    %v160 = vrot.slane %v144, %v159
    %v162 = vunpack.c.l.s4 1966171168
    %v163 = vunpack.c.0.s8 %v162
    %v164 = vlaneseq
    %v165 = vshrl.u32 %v164, 7
    %v166 = vsub.s32 %v163, %v165
    %v167 = vrot.slane %v151, %v166
    %v169 = vunpack.c.l.s4 1966171168
    %v170 = vunpack.c.0.s8 %v169
    %v171 = vlaneseq
    %v172 = vshrl.u32 %v171, 7
    %v173 = vsub.s32 %v170, %v172
    %v174 = vrot.slane %v152, %v173
    %v176 = vunpack.c.l.s4 1966171168
    %v177 = vunpack.c.0.s8 %v176
    %v178 = vlaneseq
    %v179 = vshrl.u32 %v178, 7
    %v180 = vsub.s32 %v177, %v179
    %v181 = vrot.slane %v153, %v180
    %v182 = vcombine.high %v160, %v160
    %v183 = vcombine.high %v167, %v167
    %v184 = vcombine.high %v174, %v174
    %v291 = vunpack.c.l.b16 %v29
    %v292 = vunpack.c.l.b16 %v30
    %v293 = vunpack.c.l.b16 %v31
    %v294 = vunpack.c.l.b16 %v32
    %v295 = vunpack.c.l.b16 %v33
    %v296 = vunpack.c.l.b16 %v34
    %v297 = vunpack.c.l.b16 %v35
    %v298 = vunpack.c.l.b16 %v36
    %v299 = vunpack.c.l.b16 %v37
    %v300 = vunpack.c.l.b16 %v38
    %v301 = vunpack.c.l.b16 %v39
    %v302 = vunpack.c.l.b16 %v40
    %v303 = vunpack.c.l.b16 %v41
    %v304 = vunpack.c.l.b16 %v42
    %v305 = vunpack.c.l.b16 %v43
    %v306 = vunpack.c.l.b16 %v44
    %v307 = vunpack.c.l.b16 %v45
    %v308 = vunpack.c.l.b16 %v46
    %v309 = vunpack.c.l.b16 %v47
    %v310 = vunpack.c.l.b16 %v48
    %v311 = vunpack.c.l.b16 %v49
    %v312 = vunpack.c.l.b16 %v50
    %v313 = vunpack.c.l.b16 %v51
    %v314 = vunpack.c.l.b16 %v52
    %v315 = vunpack.c.l.b16 %v53
    %v316 = vunpack.c.l.b16 %v54
    %v317 = vunpack.c.l.b16 %v55
    %v318 = vunpack.c.l.b16 %v56
    %v319 = vunpack.c.l.b16 %v57
    %v320 = vunpack.c.l.b16 %v58
    %v321 = vunpack.c.l.b16 %v59
    %v322 = vunpack.c.l.b16 %v60
    %v323 = vunpack.c.l.b16 %v61
    %v324 = vunpack.c.l.b16 %v62
    %v325 = vunpack.c.l.b16 %v63
    %v326 = vunpack.c.l.b16 %v64
    %v327 = vunpack.c.l.b16 %v65
    %v328 = vunpack.c.l.b16 %v66
    %v329 = vunpack.c.l.b16 %v67
    %v330 = vunpack.c.l.b16 %v68
    %v331 = vunpack.c.l.b16 %v69
    %v332 = vunpack.c.l.b16 %v70
    %v333 = vunpack.c.l.b16 %v71
    %v334 = vunpack.c.l.b16 %v72
    %v335 = vunpack.c.l.b16 %v73
    %v336 = vunpack.c.l.b16 %v74
    %v337 = vunpack.c.l.b16 %v75
    %v338 = vunpack.c.l.b16 %v76
    %v339 = vunpack.c.l.b16 %v77
    %v340 = vunpack.c.l.b16 %v78
    %v341 = vunpack.c.l.b16 %v79
    %v342 = vunpack.c.l.b16 %v80
    %v343 = vunpack.c.l.b16 %v81
    %v344 = vunpack.c.l.b16 %v82
    %v345 = vunpack.c.l.b16 %v83
    %v346 = vunpack.c.l.b16 %v84
    %v347 = vunpack.c.l.b16 %v85
    %v348 = vunpack.c.l.b16 %v86
    %v349 = vunpack.c.l.b16 %v87
    %v350 = vunpack.c.l.b16 %v88
    %v351 = vunpack.c.l.b16 %v89
    %v352 = vunpack.c.l.b16 %v90
    %v353 = vunpack.c.l.b16 %v91
    %v354 = vunpack.c.l.b16 %v92
    %v355 = vunpack.c.l.b16 %v93
    %v356 = vunpack.c.l.b16 %v94
    %v357 = vunpack.c.l.b16 %v95
    %v358 = vunpack.c.l.b16 %v96
    %v359 = vunpack.c.l.b16 %v97
    %v360 = vunpack.c.l.b16 %v98
    %v361 = vunpack.c.l.b16 %v99
    %v362 = vunpack.c.l.b16 %v100
    %v363 = vunpack.c.l.b16 %v101
    %v364 = vunpack.c.l.b16 %v102
    %v365 = vunpack.c.l.b16 %v103
    %v366 = vunpack.c.l.b16 %v104
    %v367 = vunpack.c.l.b16 %v105
    %v368 = vunpack.c.l.b16 %v106
    %v369 = vunpack.c.l.b16 %v107
    %v370 = vunpack.c.l.b16 %v108
    %v371 = vunpack.c.l.b16 %v109
    %v372 = vunpack.c.l.b16 %v110
    %v373 = vunpack.c.l.b16 %v111
    %v374 = vunpack.c.l.b16 %v112
    %v375 = vunpack.c.l.b16 %v113
    %v376 = vunpack.c.l.b16 %v114
    %v377 = vunpack.c.l.b16 %v115
    %v378 = vunpack.c.l.b16 %v116
    %v379 = vunpack.c.l.b16 %v117
    %v380 = vunpack.c.l.b16 %v118
    %v381 = vunpack.c.l.b16 %v119
    %v382 = vunpack.c.l.b16 %v120
    %v383 = vunpack.c.l.b16 %v121
    %v384 = vunpack.c.l.b16 %v122
    %v385 = vunpack.c.l.b16 %v123
    %v386 = vunpack.c.l.b16 %v124
    %v387 = vunpack.c.l.b16 %v125
    %v388 = vunpack.c.l.b16 %v126
    %v389 = vunpack.c.l.b16 %v127
    %v390 = vunpack.c.l.b16 %v128
    %v391 = vpack.c.b16 %v292, %v291
    %v392 = vpack.c.b16 %v294, %v293
    %v393 = vpack.c.b16 %v296, %v295
    %v394 = vpack.c.b16 %v298, %v297
    %v395 = vpack.c.b16 %v300, %v299
    %v396 = vpack.c.b16 %v302, %v301
    %v397 = vpack.c.b16 %v304, %v303
    %v398 = vpack.c.b16 %v306, %v305
    %v399 = vpack.c.b16 %v308, %v307
    %v400 = vpack.c.b16 %v310, %v309
    %v401 = vpack.c.b16 %v312, %v311
    %v402 = vpack.c.b16 %v314, %v313
    %v403 = vpack.c.b16 %v316, %v315
    %v404 = vpack.c.b16 %v318, %v317
    %v405 = vpack.c.b16 %v320, %v319
    %v406 = vpack.c.b16 %v322, %v321
    %v407 = vpack.c.b16 %v324, %v323
    %v408 = vpack.c.b16 %v326, %v325
    %v409 = vpack.c.b16 %v328, %v327
    %v410 = vpack.c.b16 %v330, %v329
    %v411 = vpack.c.b16 %v332, %v331
    %v412 = vpack.c.b16 %v334, %v333
    %v413 = vpack.c.b16 %v336, %v335
    %v414 = vpack.c.b16 %v338, %v337
    %v415 = vpack.c.b16 %v340, %v339
    %v416 = vpack.c.b16 %v342, %v341
    %v417 = vpack.c.b16 %v344, %v343
    %v418 = vpack.c.b16 %v346, %v345
    %v419 = vpack.c.b16 %v348, %v347
    %v420 = vpack.c.b16 %v350, %v349
    %v421 = vpack.c.b16 %v352, %v351
    %v422 = vpack.c.b16 %v354, %v353
    %v423 = vpack.c.b16 %v356, %v355
    %v424 = vpack.c.b16 %v358, %v357
    %v425 = vpack.c.b16 %v360, %v359
    %v426 = vpack.c.b16 %v362, %v361
    %v427 = vpack.c.b16 %v364, %v363
    %v428 = vpack.c.b16 %v366, %v365
    %v429 = vpack.c.b16 %v368, %v367
    %v430 = vpack.c.b16 %v370, %v369
    %v431 = vpack.c.b16 %v372, %v371
    %v432 = vpack.c.b16 %v374, %v373
    %v433 = vpack.c.b16 %v376, %v375
    %v434 = vpack.c.b16 %v378, %v377
    %v435 = vpack.c.b16 %v380, %v379
    %v436 = vpack.c.b16 %v382, %v381
    %v437 = vpack.c.b16 %v384, %v383
    %v438 = vpack.c.b16 %v386, %v385
    %v439 = vpack.c.b16 %v388, %v387
    %v440 = vpack.c.b16 %v390, %v389
    %vm491 = vcmask 261120
    %v493 = vsel %vm491, %v183, 0
    %495 = vmatprep.subr.bf16.mxu0 0
    %496 = vmatpush1.bf16.msra.mxu0 %v391
    %497 = vmatprep.subr.bf16.mxu0 0
    %498 = vmatpush1.bf16.msra.mxu0 %v392
    %499 = vmatprep.subr.bf16.mxu0 0
    %500 = vmatpush1.bf16.msra.mxu0 %v393
    %501 = vmatprep.subr.bf16.mxu0 0
    %502 = vmatpush1.bf16.msra.mxu0 %v394
    %503 = vmatprep.subr.bf16.mxu0 0
    %504 = vmatpush1.bf16.msra.mxu0 %v395
    %505 = vmatprep.subr.bf16.mxu0 0
    %506 = vmatpush1.bf16.msra.mxu0 %v396
    %507 = vmatprep.subr.bf16.mxu0 0
    %508 = vmatpush1.bf16.msra.mxu0 %v397
    %509 = vmatprep.subr.bf16.mxu0 0
    %510 = vmatpush1.bf16.msra.mxu0 %v398
    %511 = vmatprep.subr.bf16.mxu0 0
    %512 = vmatpush1.bf16.msra.mxu0 %v399
    %513 = vmatprep.subr.bf16.mxu0 0
    %514 = vmatpush1.bf16.msra.mxu0 %v400
    %515 = vmatprep.subr.bf16.mxu0 0
    %516 = vmatpush1.bf16.msra.mxu0 %v401
    %517 = vmatprep.subr.bf16.mxu0 0
    %518 = vmatpush1.bf16.msra.mxu0 %v402
    %519 = vmatprep.subr.bf16.mxu0 0
    %520 = vmatpush1.bf16.msra.mxu0 %v403
    %521 = vmatprep.subr.bf16.mxu0 0
    %522 = vmatpush1.bf16.msra.mxu0 %v404
    %523 = vmatprep.subr.bf16.mxu0 0
    %524 = vmatpush1.bf16.msra.mxu0 %v405
    %525 = vmatprep.subr.bf16.mxu0 0
    %526 = vmatpush1.bf16.msra.mxu0 %v406
    %527 = vmatprep.mubr.bf16.mxu0 %v174
    %528 = vmatmul.mubr.bf16.gmra.mrb[0].mxu0 %v160
    %v529 = vpop.f32.mrb[0].mxu0
    %v530 = vadd.f32 %v134, %v529
    %v531 = vpop.f32.mrb[0].mxu0
    %v532 = vpop.f32.mrb[0].mxu0
    %v533 = vpop.f32.mrb[0].mxu0
    %534 = vdwg.mxu0
    %535 = vmatprep.subr.bf16.mxu0 0
    %536 = vmatpush1.bf16.msra.mxu0 %v407
    %537 = vmatprep.subr.bf16.mxu0 0
    %538 = vmatpush1.bf16.msra.mxu0 %v408
    %539 = vmatprep.subr.bf16.mxu0 0
    %540 = vmatpush1.bf16.msra.mxu0 %v409
    %541 = vmatprep.subr.bf16.mxu0 0
    %542 = vmatpush1.bf16.msra.mxu0 %v410
    %543 = vmatprep.subr.bf16.mxu0 0
    %544 = vmatpush1.bf16.msra.mxu0 %v411
    %545 = vmatprep.subr.bf16.mxu0 0
    %546 = vmatpush1.bf16.msra.mxu0 %v412
    %547 = vmatprep.subr.bf16.mxu0 0
    %548 = vmatpush1.bf16.msra.mxu0 %v413
    %549 = vmatprep.subr.bf16.mxu0 0
    %550 = vmatpush1.bf16.msra.mxu0 %v414
    %551 = vmatprep.subr.bf16.mxu0 0
    %552 = vmatpush1.bf16.msra.mxu0 %v415
    %553 = vmatprep.subr.bf16.mxu0 0
    %554 = vmatpush1.bf16.msra.mxu0 %v416
    %555 = vmatprep.subr.bf16.mxu0 0
    %556 = vmatpush1.bf16.msra.mxu0 %v417
    %557 = vmatprep.subr.bf16.mxu0 0
    %558 = vmatpush1.bf16.msra.mxu0 %v418
    %559 = vmatprep.subr.bf16.mxu0 0
    %560 = vmatpush1.bf16.msra.mxu0 %v419
    %561 = vmatprep.subr.bf16.mxu0 0
    %562 = vmatpush1.bf16.msra.mxu0 %v420
    %563 = vmatprep.subr.bf16.mxu0 0
    %564 = vmatpush1.bf16.msra.mxu0 %v421
    %565 = vmatprep.subr.bf16.mxu0 0
    %566 = vmatpush1.bf16.msra.mxu0 %v422
    %567 = vmatprep.mubr.bf16.mxu0 %v184
    %568 = vmatmul.mubr.bf16.gmra.mrb[0].mxu0 %v182
    %v569 = vpop.f32.mrb[0].mxu0
    %v570 = vadd.f32 %v530, %v569
    %v571 = vpop.f32.mrb[0].mxu0
    %v572 = vpop.f32.mrb[0].mxu0
    %v573 = vpop.f32.mrb[0].mxu0
    %574 = vdwg.mxu0
    %575 = vmatprep.subr.bf16.mxu0 0
    %576 = vmatpush1.bf16.msra.mxu0 %v423
    %577 = vmatprep.subr.bf16.mxu0 0
    %578 = vmatpush1.bf16.msra.mxu0 %v424
    %579 = vmatprep.subr.bf16.mxu0 0
    %580 = vmatpush1.bf16.msra.mxu0 %v425
    %581 = vmatprep.subr.bf16.mxu0 0
    %582 = vmatpush1.bf16.msra.mxu0 %v426
    %583 = vmatprep.subr.bf16.mxu0 0
    %584 = vmatpush1.bf16.msra.mxu0 %v427
    %585 = vmatprep.subr.bf16.mxu0 0
    %586 = vmatpush1.bf16.msra.mxu0 %v428
    %587 = vmatprep.subr.bf16.mxu0 0
    %588 = vmatpush1.bf16.msra.mxu0 %v429
    %589 = vmatprep.subr.bf16.mxu0 0
    %590 = vmatpush1.bf16.msra.mxu0 %v430
    %591 = vmatprep.subr.bf16.mxu0 0
    %592 = vmatpush1.bf16.msra.mxu0 %v431
    %593 = vmatprep.subr.bf16.mxu0 0
    %594 = vmatpush1.bf16.msra.mxu0 %v432
    %595 = vmatprep.subr.bf16.mxu0 0
    %596 = vmatpush1.bf16.msra.mxu0 %v433
    %597 = vmatprep.subr.bf16.mxu0 0
    %598 = vmatpush1.bf16.msra.mxu0 %v434
    %599 = vmatprep.subr.bf16.mxu0 0
    %600 = vmatpush1.bf16.msra.mxu0 %v435
    %601 = vmatprep.subr.bf16.mxu0 0
    %602 = vmatpush1.bf16.msra.mxu0 %v436
    %603 = vmatprep.subr.bf16.mxu0 0
    %604 = vmatpush1.bf16.msra.mxu0 %v437
    %605 = vmatprep.subr.bf16.mxu0 0
    %606 = vmatpush1.bf16.msra.mxu0 %v438
    %607 = vmatprep.mubr.bf16.mxu0 %v181
    %608 = vmatmul.mubr.bf16.gmra.mrb[0].mxu0 %v167
    %v609 = vpop.f32.mrb[0].mxu0
    %v610 = vadd.f32 %v570, %v609
    %v611 = vpop.f32.mrb[0].mxu0
    %v612 = vpop.f32.mrb[0].mxu0
    %v613 = vpop.f32.mrb[0].mxu0
    %614 = vdwg.mxu0
    %615 = vmatprep.subr.bf16.mxu0 0
    %616 = vmatpush1.bf16.msra.mxu0 %v439
    %617 = vmatprep.subr.bf16.mxu0 0
    %618 = vmatpush1.bf16.msra.mxu0 %v440
    %619 = vmatprep.subr.bf16.mxu0 0
    %620 = vmatpush1.bf16.msra.mxu0 0
    %621 = vmatprep.subr.bf16.mxu0 0
    %622 = vmatpush1.bf16.msra.mxu0 0
    %623 = vmatprep.subr.bf16.mxu0 0
    %624 = vmatpush1.bf16.msra.mxu0 0
    %625 = vmatprep.subr.bf16.mxu0 0
    %626 = vmatpush1.bf16.msra.mxu0 0
    %627 = vmatprep.subr.bf16.mxu0 0
    %628 = vmatpush1.bf16.msra.mxu0 0
    %629 = vmatprep.subr.bf16.mxu0 0
    %630 = vmatpush1.bf16.msra.mxu0 0
    %631 = vmatprep.subr.bf16.mxu0 0
    %632 = vmatpush1.bf16.msra.mxu0 0
    %633 = vmatprep.subr.bf16.mxu0 0
    %634 = vmatpush1.bf16.msra.mxu0 0
    %635 = vmatprep.subr.bf16.mxu0 0
    %636 = vmatpush1.bf16.msra.mxu0 0
    %637 = vmatprep.subr.bf16.mxu0 0
    %638 = vmatpush1.bf16.msra.mxu0 0
    %639 = vmatprep.subr.bf16.mxu0 0
    %640 = vmatpush1.bf16.msra.mxu0 0
    %641 = vmatprep.subr.bf16.mxu0 0
    %642 = vmatpush1.bf16.msra.mxu0 0
    %643 = vmatprep.subr.bf16.mxu0 0
    %644 = vmatpush1.bf16.msra.mxu0 0
    %645 = vmatprep.subr.bf16.mxu0 0
    %646 = vmatpush1.bf16.msra.mxu0 0
    %647 = vmatprep.mubr.bf16.mxu0 0
    %648 = vmatmul.mubr.bf16.gmra.mrb[0].mxu0 %v493
    %v649 = vpop.f32.mrb[0].mxu0
    %v650 = vadd.f32 %v610, %v649
    %v651 = vpop.f32.mrb[0].mxu0
    %v652 = vpop.f32.mrb[0].mxu0
    %v653 = vpop.f32.mrb[0].mxu0
    %654 = vdwg.mxu0
    %v655 = vmax.f32 %v650, 0.0
    %v656 = vpack.c.bf16 %v655, %v655
    %v657 = vld [vmem:[%s3] sm:$0xf]
    %v658 = vld [vmem:[%s3 + $0x4] sm:$0xf]
    %v659 = vld [vmem:[%s3 + $0x8] sm:$0xf]
    %v660 = vld [vmem:[%s3 + $0xc] sm:$0xf]
    %v661 = vld [vmem:[%s3 + $0x10] sm:$0xf]
    %v662 = vld [vmem:[%s3 + $0x14] sm:$0xf]
    %v663 = vld [vmem:[%s3 + $0x18] sm:$0xf]
    %v664 = vld [vmem:[%s3 + $0x1c] sm:$0xf]
    %v665 = vld [vmem:[%s3 + $0x20] sm:$0xf]
    %v666 = vld [vmem:[%s3 + $0x24] sm:$0xf]
    %v667 = vld [vmem:[%s3 + $0x28] sm:$0xf]
    %v668 = vld [vmem:[%s3 + $0x2c] sm:$0xf]
    %v669 = vld [vmem:[%s3 + $0x30] sm:$0xf]
    %v670 = vld [vmem:[%s3 + $0x34] sm:$0xf]
    %v671 = vld [vmem:[%s3 + $0x38] sm:$0xf]
    %v672 = vld [vmem:[%s4] sm:$0x1]
    %v674 = vlaneseq
    %v675 = vshrl.u32 %v674, 7
    %v676 = vsub.s32 0, %v675
    %v677 = vrot.slane %v672, %v676
    %v694 = vunpack.c.l.b16 %v657
    %v695 = vunpack.c.l.b16 %v658
    %v696 = vunpack.c.l.b16 %v659
    %v697 = vunpack.c.l.b16 %v660
    %v698 = vunpack.c.l.b16 %v661
    %v699 = vunpack.c.l.b16 %v662
    %v700 = vunpack.c.l.b16 %v663
    %v701 = vunpack.c.l.b16 %v664
    %v702 = vunpack.c.l.b16 %v665
    %v703 = vunpack.c.l.b16 %v666
    %v704 = vunpack.c.l.b16 %v667
    %v705 = vunpack.c.l.b16 %v668
    %v706 = vunpack.c.l.b16 %v669
    %v707 = vunpack.c.l.b16 %v670
    %v708 = vunpack.c.l.b16 %v671
    %v709 = vpack.c.b16 %v695, %v694
    %v710 = vpack.c.b16 %v697, %v696
    %v711 = vpack.c.b16 %v699, %v698
    %v712 = vpack.c.b16 %v701, %v700
    %v713 = vpack.c.b16 %v703, %v702
    %v714 = vpack.c.b16 %v705, %v704
    %v715 = vpack.c.b16 %v707, %v706
    %v716 = vpack.c.b16 %v708, %v708
    %vm724 = vcmask 982016
    %v726 = vsel %vm724, %v656, 0
    %vm728 = vcmask 1043456
    %v730 = vsel %vm728, %v716, 0
    %732 = vmatprep.subr.bf16.mxu0 0
    %733 = vmatpush1.bf16.msra.mxu0 %v709
    %734 = vmatprep.subr.bf16.mxu0 0
    %735 = vmatpush1.bf16.msra.mxu0 %v710
    %736 = vmatprep.subr.bf16.mxu0 0
    %737 = vmatpush1.bf16.msra.mxu0 %v711
    %738 = vmatprep.subr.bf16.mxu0 0
    %739 = vmatpush1.bf16.msra.mxu0 %v712
    %740 = vmatprep.subr.bf16.mxu0 0
    %741 = vmatpush1.bf16.msra.mxu0 %v713
    %742 = vmatprep.subr.bf16.mxu0 0
    %743 = vmatpush1.bf16.msra.mxu0 %v714
    %744 = vmatprep.subr.bf16.mxu0 0
    %745 = vmatpush1.bf16.msra.mxu0 %v715
    %746 = vmatprep.subr.bf16.mxu0 0
    %747 = vmatpush1.bf16.msra.mxu0 %v730
    %748 = vmatprep.subr.bf16.mxu0 0
    %749 = vmatpush1.bf16.msra.mxu0 0
    %750 = vmatprep.subr.bf16.mxu0 0
    %751 = vmatpush1.bf16.msra.mxu0 0
    %752 = vmatprep.subr.bf16.mxu0 0
    %753 = vmatpush1.bf16.msra.mxu0 0
    %754 = vmatprep.subr.bf16.mxu0 0
    %755 = vmatpush1.bf16.msra.mxu0 0
    %756 = vmatprep.subr.bf16.mxu0 0
    %757 = vmatpush1.bf16.msra.mxu0 0
    %758 = vmatprep.subr.bf16.mxu0 0
    %759 = vmatpush1.bf16.msra.mxu0 0
    %760 = vmatprep.subr.bf16.mxu0 0
    %761 = vmatpush1.bf16.msra.mxu0 0
    %762 = vmatprep.subr.bf16.mxu0 0
    %763 = vmatpush1.bf16.msra.mxu0 0
    %764 = vmatprep.mubr.bf16.mxu0 0
    %765 = vmatmul.mubr.bf16.gmra.mrb[0].mxu0 %v726
    %v766 = vpop.f32.mrb[0].mxu0
    %v767 = vadd.f32 %v677, %v766
    %v768 = vpop.f32.mrb[0].mxu0
    %v769 = vpop.f32.mrb[0].mxu0
    %v770 = vpop.f32.mrb[0].mxu0
    %771 = vdwg.mxu0
    %v772 = vmax.f32 %v767, 0.0
    %v773 = vpack.c.bf16 %v772, %v772
    %v774 = vld [vmem:[%s5] sm:$0xf]
    %v775 = vld [vmem:[%s5 + $0x4] sm:$0xf]
    %v776 = vld [vmem:[%s5 + $0x8] sm:$0xf]
    %v777 = vld [vmem:[%s5 + $0xc] sm:$0xf]
    %v778 = vld [vmem:[%s5 + $0x10] sm:$0xf]
    %v779 = vld [vmem:[%s5 + $0x14] sm:$0xf]
    %v780 = vld [vmem:[%s5 + $0x18] sm:$0xf]
    %v781 = vld [vmem:[%s5 + $0x1c] sm:$0xf]
    %v782 = vld [vmem:[%s5 + $0x20] sm:$0xf]
    %v783 = vld [vmem:[%s5 + $0x24] sm:$0xf]
    %v784 = vld [vmem:[%s5 + $0x28] sm:$0x3]
    %v785 = vld [vmem:[%s6] sm:$0x1]
    %v787 = vlaneseq
    %v788 = vshrl.u32 %v787, 7
    %v789 = vsub.s32 0, %v788
    %v790 = vrot.slane %v785, %v789
    %v803 = vunpack.c.l.b16 %v774
    %v804 = vunpack.c.l.b16 %v775
    %v805 = vunpack.c.l.b16 %v776
    %v806 = vunpack.c.l.b16 %v777
    %v807 = vunpack.c.l.b16 %v778
    %v808 = vunpack.c.l.b16 %v779
    %v809 = vunpack.c.l.b16 %v780
    %v810 = vunpack.c.l.b16 %v781
    %v811 = vunpack.c.l.b16 %v782
    %v812 = vunpack.c.l.b16 %v783
    %v813 = vunpack.c.l.b16 %v784
    %v814 = vpack.c.b16 %v804, %v803
    %v815 = vpack.c.b16 %v806, %v805
    %v816 = vpack.c.b16 %v808, %v807
    %v817 = vpack.c.b16 %v810, %v809
    %v818 = vpack.c.b16 %v812, %v811
    %v819 = vpack.c.b16 %v813, %v813
    %vm825 = vcmask 687104
    %v827 = vsel %vm825, %v773, 0
    %vm829 = vcmask 1041408
    %v831 = vsel %vm829, %v819, 0
    %833 = vmatprep.subr.bf16.mxu0 0
    %834 = vmatpush1.bf16.msra.mxu0 %v814
    %835 = vmatprep.subr.bf16.mxu0 0
    %836 = vmatpush1.bf16.msra.mxu0 %v815
    %837 = vmatprep.subr.bf16.mxu0 0
    %838 = vmatpush1.bf16.msra.mxu0 %v816
    %839 = vmatprep.subr.bf16.mxu0 0
    %840 = vmatpush1.bf16.msra.mxu0 %v817
    %841 = vmatprep.subr.bf16.mxu0 0
    %842 = vmatpush1.bf16.msra.mxu0 %v818
    %843 = vmatprep.subr.bf16.mxu0 0
    %844 = vmatpush1.bf16.msra.mxu0 %v831
    %845 = vmatprep.subr.bf16.mxu0 0
    %846 = vmatpush1.bf16.msra.mxu0 0
    %847 = vmatprep.subr.bf16.mxu0 0
    %848 = vmatpush1.bf16.msra.mxu0 0
    %849 = vmatprep.subr.bf16.mxu0 0
    %850 = vmatpush1.bf16.msra.mxu0 0
    %851 = vmatprep.subr.bf16.mxu0 0
    %852 = vmatpush1.bf16.msra.mxu0 0
    %853 = vmatprep.subr.bf16.mxu0 0
    %854 = vmatpush1.bf16.msra.mxu0 0
    %855 = vmatprep.subr.bf16.mxu0 0
    %856 = vmatpush1.bf16.msra.mxu0 0
    %857 = vmatprep.subr.bf16.mxu0 0
    %858 = vmatpush1.bf16.msra.mxu0 0
    %859 = vmatprep.subr.bf16.mxu0 0
    %860 = vmatpush1.bf16.msra.mxu0 0
    %861 = vmatprep.subr.bf16.mxu0 0
    %862 = vmatpush1.bf16.msra.mxu0 0
    %863 = vmatprep.subr.bf16.mxu0 0
    %864 = vmatpush1.bf16.msra.mxu0 0
    %865 = vmatprep.mubr.bf16.mxu0 0
    %866 = vmatmul.mubr.bf16.gmra.mrb[0].mxu0 %v827
    %v867 = vpop.f32.mrb[0].mxu0
    %v868 = vadd.f32 %v790, %v867
    %v869 = vpop.f32.mrb[0].mxu0
    %v870 = vpop.f32.mrb[0].mxu0
    %v871 = vpop.f32.mrb[0].mxu0
    %872 = vdwg.mxu0
    %v873 = vmax.f32 %v868, 0.0
    %874 = vst [vmem:[#allocation2] sm:$0x3] %v873
    // Predicated region
    $region30: #{lenet_forward.5} parent=1 // pred_check
      _
    $region31: #{lenet_forward.5} parent=1 // pred_check_branch
      %876 = sbr.rel (0) target = $region33
    $region32: #{lenet_forward.5} parent=1 // pred_region
      %s878 = ssub.s32 32, 32
      %879 = vsyncadd [#allocation3], %s878
      %s881 = sshll.u32 [#allocation2], 4
      %s882 = int_to_ptr.vmem [resolvable:$true] %s881
      %884 = dma.vmem_to_hbm [thread:$0]  %s882, 32, %s7, [#allocation3]
    $region33: #{lenet_forward.5} parent=1 // pred_fallthru
      _
    // Predicated region
    $region34: #{lenet_forward.5} parent=1 // pred_check
      _
    $region35: #{lenet_forward.5} parent=1 // pred_check_branch
      %886 = sbr.rel (0) target = $region37
    $region36: #{lenet_forward.5} parent=1 // pred_region
      %887 = dma.done [#allocation3], 32
    $region37: #{lenet_forward.5} parent=1 // pred_fallthru
      _
    %888 = vsyncpa [#allocation3], 1

// kernel: lenet_forward.4
$region0: #{lenet_forward.4}
  #allocation0 [shape = 'u32[]', space=smem, size = 0x4, offset = 0x4, fixed_abs, tag = 'smem constant byte address 0x4 - core index']
  #allocation1 [shape = 'u32[144,128]{1,0:T(1,128)}', space=vmem, size = 0x12000, scoped, tag = 'internal scratch']
  #allocation2 [shape = 'bf16[400,136]{1,0:T(16,128)(2,1)}', space=vmem, size = 0x32000, scoped, tag = 'scratch operand']
  #allocation3 [shape = 'bf16[64,121]{1,0:T(16,128)(2,1)}', space=vmem, size = 0x4000, scoped, tag = 'scratch operand']
  %s0 = inlined_call_operand.vmem [shape: bf16[2,16,196], index: 0, kind: input, shape index: {}]
  %s1 = inlined_call_operand.vmem [shape: bf16[32,400], index: 1, kind: input, shape index: {}]
  %s2 = inlined_call_operand.vmem [shape: f32[32,1], index: 2, kind: input, shape index: {}]
  %s3 = inlined_call_operand.vmem [shape: bf16[121,25], index: 3, kind: input, shape index: {}]
  %s4 = inlined_call_operand.vmem [shape: bf16[2,800], index: 4, kind: output, shape index: {}]
  %s5 = sld [smem:[#allocation0]]
  $region26: #{lenet_forward.4} parent=0
    _
  %s7 = ssub.s32 1, %s5
  %s8 = scalar_select 0, %s7, %s5
  // Predicated region
  $region2: #{lenet_forward.4} parent=0 // pred_check
    _
  $region3: #{lenet_forward.4} parent=0 // pred_check_branch
    %10 = sbr.rel (0) target = $region5
  $region4: #{lenet_forward.4} parent=0 // pred_region
    _
  $region5: #{lenet_forward.4} parent=0 // pred_fallthru
    _
  // Predicated region
  $region6: #{lenet_forward.4} parent=0 // pred_check
    _
  $region7: #{lenet_forward.4} parent=0 // pred_check_branch
    %12 = sbr.rel (0) target = $region9
  $region8: #{lenet_forward.4} parent=0 // pred_region
    _
  $region9: #{lenet_forward.4} parent=0 // pred_fallthru
    _
  // Predicated region
  $region10: #{lenet_forward.4} parent=0 // pred_check
    _
  $region11: #{lenet_forward.4} parent=0 // pred_check_branch
    %14 = sbr.rel (0) target = $region13
  $region12: #{lenet_forward.4} parent=0 // pred_region
    _
  $region13: #{lenet_forward.4} parent=0 // pred_fallthru
    _
  // Predicated region
  $region14: #{lenet_forward.4} parent=0 // pred_check
    _
  $region15: #{lenet_forward.4} parent=0 // pred_check_branch
    %16 = sbr.rel (0) target = $region17
  $region16: #{lenet_forward.4} parent=0 // pred_region
    _
  $region17: #{lenet_forward.4} parent=0 // pred_fallthru
    _
  %v18 = vld [vmem:[%s0] sm:$0xff]
  %v19 = vld [vmem:[%s0 + $0x8] sm:$0xff]
  %v22 = vunpack.c.l.b16 %v18
  %v23 = vunpack.c.h.b16 %v18
  %v24 = vunpack.c.l.b16 %v19
  %v25 = vunpack.c.h.b16 %v19
  %v26 = vpack.c.b16 %v24, %v22
  %v27 = vpack.c.b16 %v25, %v23
  %30 = vst [vmem:[#allocation2] sm:$0xff] %v26
  %vm31 = vcmask 64512
  %32 = vst.msk [vmem:[#allocation2 + $0x8] sm:$0xff] %vm31, %v27
  %33 = vrot.lane.b32.xlu0 %v26, 127
  %v34 = vpop.permute.xlu0 %33
  %35 = vrot.lane.b32.xlu0 %v27, 127
  %v36 = vpop.permute.xlu0 %35
  %vm37 = vcmask 1039360
  %v38 = vsel %vm37, %v34, %v36
  %41 = vst [vmem:[#allocation2 + $0x10] sm:$0xff] %v38
  %42 = vst.msk [vmem:[#allocation2 + $0x18] sm:$0xff] %vm31, %v36
  %43 = vrot.lane.b32.xlu0 %v26, 126
  %v44 = vpop.permute.xlu0 %43
  %45 = vrot.lane.b32.xlu0 %v27, 126
  %v46 = vpop.permute.xlu0 %45
  %vm47 = vcmask 1031168
  %v48 = vsel %vm47, %v44, %v46
  %51 = vst [vmem:[#allocation2 + $0x20] sm:$0xff] %v48
  %52 = vst.msk [vmem:[#allocation2 + $0x28] sm:$0xff] %vm31, %v46
  %53 = vrot.lane.b32.xlu0 %v26, 125
  %v54 = vpop.permute.xlu0 %53
  %55 = vrot.lane.b32.xlu0 %v27, 125
  %v56 = vpop.permute.xlu0 %55
  %vm57 = vcmask 1022976
  %v58 = vsel %vm57, %v54, %v56
  %61 = vst [vmem:[#allocation2 + $0x30] sm:$0xff] %v58
  %62 = vst.msk [vmem:[#allocation2 + $0x38] sm:$0xff] %vm31, %v56
  %63 = vrot.lane.b32.xlu0 %v26, 124
  %v64 = vpop.permute.xlu0 %63
  %65 = vrot.lane.b32.xlu0 %v27, 124
  %v66 = vpop.permute.xlu0 %65
  %vm67 = vcmask 1014784
  %v68 = vsel %vm67, %v64, %v66
  %71 = vst [vmem:[#allocation2 + $0x40] sm:$0xff] %v68
  %72 = vst.msk [vmem:[#allocation2 + $0x48] sm:$0xff] %vm31, %v66
  %73 = vrot.lane.b32.xlu0 %v26, 114
  %v74 = vpop.permute.xlu0 %73
  %75 = vrot.lane.b32.xlu0 %v27, 114
  %v76 = vpop.permute.xlu0 %75
  %vm77 = vcmask 932864
  %v78 = vsel %vm77, %v74, %v76
  %81 = vst [vmem:[#allocation2 + $0x50] sm:$0xff] %v78
  %82 = vst.msk [vmem:[#allocation2 + $0x58] sm:$0xff] %vm31, %v76
  %83 = vrot.lane.b32.xlu0 %v26, 113
  %v84 = vpop.permute.xlu0 %83
  %85 = vrot.lane.b32.xlu0 %v27, 113
  %v86 = vpop.permute.xlu0 %85
  %vm87 = vcmask 924672
  %v88 = vsel %vm87, %v84, %v86
  %91 = vst [vmem:[#allocation2 + $0x60] sm:$0xff] %v88
  %92 = vst.msk [vmem:[#allocation2 + $0x68] sm:$0xff] %vm31, %v86
  %93 = vrot.lane.b32.xlu0 %v26, 112
  %v94 = vpop.permute.xlu0 %93
  %95 = vrot.lane.b32.xlu0 %v27, 112
  %v96 = vpop.permute.xlu0 %95
  %vm97 = vcmask 916480
  %v98 = vsel %vm97, %v94, %v96
  %101 = vst [vmem:[#allocation2 + $0x70] sm:$0xff] %v98
  %102 = vst.msk [vmem:[#allocation2 + $0x78] sm:$0xff] %vm31, %v96
  %103 = vrot.lane.b32.xlu0 %v26, 111
  %v104 = vpop.permute.xlu0 %103
  %105 = vrot.lane.b32.xlu0 %v27, 111
  %v106 = vpop.permute.xlu0 %105
  %vm107 = vcmask 908288
  %v108 = vsel %vm107, %v104, %v106
  %111 = vst [vmem:[#allocation2 + $0x80] sm:$0xff] %v108
  %112 = vst.msk [vmem:[#allocation2 + $0x88] sm:$0xff] %vm31, %v106
  %113 = vrot.lane.b32.xlu0 %v26, 110
  %v114 = vpop.permute.xlu0 %113
  %115 = vrot.lane.b32.xlu0 %v27, 110
  %v116 = vpop.permute.xlu0 %115
  %vm117 = vcmask 900096
  %v118 = vsel %vm117, %v114, %v116
  %121 = vst [vmem:[#allocation2 + $0x90] sm:$0xff] %v118
  %122 = vst.msk [vmem:[#allocation2 + $0x98] sm:$0xff] %vm31, %v116
  %123 = vrot.lane.b32.xlu0 %v26, 100
  %v124 = vpop.permute.xlu0 %123
  %125 = vrot.lane.b32.xlu0 %v27, 100
  %v126 = vpop.permute.xlu0 %125
  %vm127 = vcmask 818176
  %v128 = vsel %vm127, %v124, %v126
  %131 = vst [vmem:[#allocation2 + $0xa0] sm:$0xff] %v128
  %132 = vst.msk [vmem:[#allocation2 + $0xa8] sm:$0xff] %vm31, %v126
  %133 = vrot.lane.b32.xlu0 %v26, 99
  %v134 = vpop.permute.xlu0 %133
  %135 = vrot.lane.b32.xlu0 %v27, 99
  %v136 = vpop.permute.xlu0 %135
  %vm137 = vcmask 809984
  %v138 = vsel %vm137, %v134, %v136
  %141 = vst [vmem:[#allocation2 + $0xb0] sm:$0xff] %v138
  %142 = vst.msk [vmem:[#allocation2 + $0xb8] sm:$0xff] %vm31, %v136
  %143 = vrot.lane.b32.xlu0 %v26, 98
  %v144 = vpop.permute.xlu0 %143
  %145 = vrot.lane.b32.xlu0 %v27, 98
  %v146 = vpop.permute.xlu0 %145
  %vm147 = vcmask 801792
  %v148 = vsel %vm147, %v144, %v146
  %151 = vst [vmem:[#allocation2 + $0xc0] sm:$0xff] %v148
  %152 = vst.msk [vmem:[#allocation2 + $0xc8] sm:$0xff] %vm31, %v146
  %153 = vrot.lane.b32.xlu0 %v26, 97
  %v154 = vpop.permute.xlu0 %153
  %155 = vrot.lane.b32.xlu0 %v27, 97
  %v156 = vpop.permute.xlu0 %155
  %vm157 = vcmask 793600
  %v158 = vsel %vm157, %v154, %v156
  %161 = vst [vmem:[#allocation2 + $0xd0] sm:$0xff] %v158
  %162 = vst.msk [vmem:[#allocation2 + $0xd8] sm:$0xff] %vm31, %v156
  %163 = vrot.lane.b32.xlu0 %v26, 96
  %v164 = vpop.permute.xlu0 %163
  %165 = vrot.lane.b32.xlu0 %v27, 96
  %v166 = vpop.permute.xlu0 %165
  %vm167 = vcmask 785408
  %v168 = vsel %vm167, %v164, %v166
  %171 = vst [vmem:[#allocation2 + $0xe0] sm:$0xff] %v168
  %172 = vst.msk [vmem:[#allocation2 + $0xe8] sm:$0xff] %vm31, %v166
  %173 = vrot.lane.b32.xlu0 %v26, 86
  %v174 = vpop.permute.xlu0 %173
  %175 = vrot.lane.b32.xlu0 %v27, 86
  %v176 = vpop.permute.xlu0 %175
  %vm177 = vcmask 703488
  %v178 = vsel %vm177, %v174, %v176
  %181 = vst [vmem:[#allocation2 + $0xf0] sm:$0xff] %v178
  %182 = vst.msk [vmem:[#allocation2 + $0xf8] sm:$0xff] %vm31, %v176
  %183 = vrot.lane.b32.xlu0 %v26, 85
  %v184 = vpop.permute.xlu0 %183
  %185 = vrot.lane.b32.xlu0 %v27, 85
  %v186 = vpop.permute.xlu0 %185
  %vm187 = vcmask 695296
  %v188 = vsel %vm187, %v184, %v186
  %191 = vst [vmem:[#allocation2 + $0x100] sm:$0xff] %v188
  %192 = vst.msk [vmem:[#allocation2 + $0x108] sm:$0xff] %vm31, %v186
  %193 = vrot.lane.b32.xlu0 %v26, 84
  %v194 = vpop.permute.xlu0 %193
  %195 = vrot.lane.b32.xlu0 %v27, 84
  %v196 = vpop.permute.xlu0 %195
  %vm197 = vcmask 687104
  %v198 = vsel %vm197, %v194, %v196
  %201 = vst [vmem:[#allocation2 + $0x110] sm:$0xff] %v198
  %202 = vst.msk [vmem:[#allocation2 + $0x118] sm:$0xff] %vm31, %v196
  %203 = vrot.lane.b32.xlu0 %v26, 83
  %v204 = vpop.permute.xlu0 %203
  %205 = vrot.lane.b32.xlu0 %v27, 83
  %v206 = vpop.permute.xlu0 %205
  %vm207 = vcmask 678912
  %v208 = vsel %vm207, %v204, %v206
  %211 = vst [vmem:[#allocation2 + $0x120] sm:$0xff] %v208
  %212 = vst.msk [vmem:[#allocation2 + $0x128] sm:$0xff] %vm31, %v206
  %213 = vrot.lane.b32.xlu0 %v26, 82
  %v214 = vpop.permute.xlu0 %213
  %215 = vrot.lane.b32.xlu0 %v27, 82
  %v216 = vpop.permute.xlu0 %215
  %vm217 = vcmask 670720
  %v218 = vsel %vm217, %v214, %v216
  %221 = vst [vmem:[#allocation2 + $0x130] sm:$0xff] %v218
  %222 = vst.msk [vmem:[#allocation2 + $0x138] sm:$0xff] %vm31, %v216
  %223 = vrot.lane.b32.xlu0 %v26, 72
  %v224 = vpop.permute.xlu0 %223
  %225 = vrot.lane.b32.xlu0 %v27, 72
  %v226 = vpop.permute.xlu0 %225
  %vm227 = vcmask 588800
  %v228 = vsel %vm227, %v224, %v226
  %231 = vst [vmem:[#allocation2 + $0x140] sm:$0xff] %v228
  %232 = vst.msk [vmem:[#allocation2 + $0x148] sm:$0xff] %vm31, %v226
  %233 = vrot.lane.b32.xlu0 %v26, 71
  %v234 = vpop.permute.xlu0 %233
  %235 = vrot.lane.b32.xlu0 %v27, 71
  %v236 = vpop.permute.xlu0 %235
  %vm237 = vcmask 580608
  %v238 = vsel %vm237, %v234, %v236
  %241 = vst [vmem:[#allocation2 + $0x150] sm:$0xff] %v238
  %242 = vst.msk [vmem:[#allocation2 + $0x158] sm:$0xff] %vm31, %v236
  %243 = vrot.lane.b32.xlu0 %v26, 70
  %v244 = vpop.permute.xlu0 %243
  %245 = vrot.lane.b32.xlu0 %v27, 70
  %v246 = vpop.permute.xlu0 %245
  %vm247 = vcmask 572416
  %v248 = vsel %vm247, %v244, %v246
  %251 = vst [vmem:[#allocation2 + $0x160] sm:$0xff] %v248
  %252 = vst.msk [vmem:[#allocation2 + $0x168] sm:$0xff] %vm31, %v246
  %253 = vrot.lane.b32.xlu0 %v26, 69
  %v254 = vpop.permute.xlu0 %253
  %255 = vrot.lane.b32.xlu0 %v27, 69
  %v256 = vpop.permute.xlu0 %255
  %vm257 = vcmask 564224
  %v258 = vsel %vm257, %v254, %v256
  %261 = vst [vmem:[#allocation2 + $0x170] sm:$0xff] %v258
  %262 = vst.msk [vmem:[#allocation2 + $0x178] sm:$0xff] %vm31, %v256
  %263 = vrot.lane.b32.xlu0 %v26, 68
  %v264 = vpop.permute.xlu0 %263
  %265 = vrot.lane.b32.xlu0 %v27, 68
  %v266 = vpop.permute.xlu0 %265
  %vm267 = vcmask 556032
  %v268 = vsel %vm267, %v264, %v266
  %271 = vst [vmem:[#allocation2 + $0x180] sm:$0xff] %v268
  %272 = vst.msk [vmem:[#allocation2 + $0x188] sm:$0xff] %vm31, %v266
  %v273 = vld [vmem:[%s1] sm:$0xff]
  %v274 = vld [vmem:[%s1 + $0x8] sm:$0xff]
  %v275 = vld [vmem:[%s1 + $0x10] sm:$0xff]
  %v276 = vld [vmem:[%s1 + $0x18] sm:$0xff]
  %v277 = vld [vmem:[%s1 + $0x20] sm:$0xff]
  %v278 = vld [vmem:[%s1 + $0x28] sm:$0xff]
  %v279 = vld [vmem:[%s1 + $0x30] sm:$0xff]
  %v280 = vld [vmem:[%s1 + $0x38] sm:$0xff]
  %v281 = vld [vmem:[#allocation2] sm:$0xff]
  %v282 = vld [vmem:[#allocation2 + $0x8] sm:$0xff]
  %v283 = vld [vmem:[#allocation2 + $0x10] sm:$0xff]
  %v284 = vld [vmem:[#allocation2 + $0x18] sm:$0xff]
  %v285 = vld [vmem:[#allocation2 + $0x20] sm:$0xff]
  %v286 = vld [vmem:[#allocation2 + $0x28] sm:$0xff]
  %v287 = vld [vmem:[#allocation2 + $0x30] sm:$0xff]
  %v288 = vld [vmem:[#allocation2 + $0x38] sm:$0xff]
  %v289 = vld [vmem:[#allocation2 + $0x40] sm:$0xff]
  %v290 = vld [vmem:[#allocation2 + $0x48] sm:$0xff]
  %v291 = vld [vmem:[#allocation2 + $0x50] sm:$0xff]
  %v292 = vld [vmem:[#allocation2 + $0x58] sm:$0xff]
  %v293 = vld [vmem:[#allocation2 + $0x60] sm:$0xff]
  %v294 = vld [vmem:[#allocation2 + $0x68] sm:$0xff]
  %v295 = vld [vmem:[#allocation2 + $0x70] sm:$0xff]
  %v296 = vld [vmem:[#allocation2 + $0x78] sm:$0xff]
  %v297 = vld [vmem:[#allocation2 + $0x80] sm:$0xff]
  %v298 = vld [vmem:[#allocation2 + $0x88] sm:$0xff]
  %v299 = vld [vmem:[#allocation2 + $0x90] sm:$0xff]
  %v300 = vld [vmem:[#allocation2 + $0x98] sm:$0xff]
  %v301 = vld [vmem:[#allocation2 + $0xa0] sm:$0xff]
  %v302 = vld [vmem:[#allocation2 + $0xa8] sm:$0xff]
  %v303 = vld [vmem:[#allocation2 + $0xb0] sm:$0xff]
  %v304 = vld [vmem:[#allocation2 + $0xb8] sm:$0xff]
  %v305 = vld [vmem:[#allocation2 + $0xc0] sm:$0xff]
  %v306 = vld [vmem:[#allocation2 + $0xc8] sm:$0xff]
  %v307 = vld [vmem:[#allocation2 + $0xd0] sm:$0xff]
  %v308 = vld [vmem:[#allocation2 + $0xd8] sm:$0xff]
  %v309 = vld [vmem:[#allocation2 + $0xe0] sm:$0xff]
  %v310 = vld [vmem:[#allocation2 + $0xe8] sm:$0xff]
  %v311 = vld [vmem:[#allocation2 + $0xf0] sm:$0xff]
  %v312 = vld [vmem:[#allocation2 + $0xf8] sm:$0xff]
  %v313 = vld [vmem:[#allocation2 + $0x100] sm:$0xff]
  %v314 = vld [vmem:[#allocation2 + $0x108] sm:$0xff]
  %v315 = vld [vmem:[#allocation2 + $0x110] sm:$0xff]
  %v316 = vld [vmem:[#allocation2 + $0x118] sm:$0xff]
  %v317 = vld [vmem:[#allocation2 + $0x120] sm:$0xff]
  %v318 = vld [vmem:[#allocation2 + $0x128] sm:$0xff]
  %v319 = vld [vmem:[#allocation2 + $0x130] sm:$0xff]
  %v320 = vld [vmem:[#allocation2 + $0x138] sm:$0xff]
  %v321 = vld [vmem:[#allocation2 + $0x140] sm:$0xff]
  %v322 = vld [vmem:[#allocation2 + $0x148] sm:$0xff]
  %v323 = vld [vmem:[#allocation2 + $0x150] sm:$0xff]
  %v324 = vld [vmem:[#allocation2 + $0x158] sm:$0xff]
  %v325 = vld [vmem:[#allocation2 + $0x160] sm:$0xff]
  %v326 = vld [vmem:[#allocation2 + $0x168] sm:$0xff]
  %v327 = vld [vmem:[#allocation2 + $0x170] sm:$0xff]
  %v328 = vld [vmem:[#allocation2 + $0x178] sm:$0xff]
  %v329 = vld [vmem:[#allocation2 + $0x180] sm:$0xff]
  %v330 = vld [vmem:[#allocation2 + $0x188] sm:$0xff]
  %v331 = vld [vmem:[%s2] sm:$0xff]
  %v332 = vld [vmem:[%s2 + $0x8] sm:$0xff]
  %v333 = vld [vmem:[%s2 + $0x10] sm:$0xff]
  %v334 = vld [vmem:[%s2 + $0x18] sm:$0xff]
  %336 = vset.pattern.permute.xlu0 0
  %337 = vperm.xlu0 %336, %v331
  %v338 = vpop.permute.xlu0 %337
  %341 = vset.pattern.permute.xlu0 0
  %342 = vperm.xlu0 %341, %v332
  %v343 = vpop.permute.xlu0 %342
  %346 = vset.pattern.permute.xlu0 0
  %347 = vperm.xlu0 %346, %v333
  %v348 = vpop.permute.xlu0 %347
  %351 = vset.pattern.permute.xlu0 0
  %352 = vperm.xlu0 %351, %v334
  %v353 = vpop.permute.xlu0 %352
  %v363 = vunpack.c.l.b16 %v273
  %v364 = vunpack.c.h.b16 %v273
  %v365 = vunpack.c.l.b16 %v274
  %v366 = vunpack.c.h.b16 %v274
  %v367 = vunpack.c.l.b16 %v275
  %v368 = vunpack.c.h.b16 %v275
  %v369 = vunpack.c.l.b16 %v276
  %v370 = vunpack.c.h.b16 %v276
  %v371 = vunpack.c.l.b16 %v277
  %v372 = vunpack.c.h.b16 %v277
  %v373 = vunpack.c.l.b16 %v278
  %v374 = vunpack.c.h.b16 %v278
  %v375 = vunpack.c.l.b16 %v279
  %v376 = vunpack.c.h.b16 %v279
  %v377 = vunpack.c.l.b16 %v280
  %v378 = vunpack.c.h.b16 %v280
  %v379 = vpack.c.b16 %v367, %v363
  %v380 = vpack.c.b16 %v368, %v364
  %v381 = vpack.c.b16 %v369, %v365
  %v382 = vpack.c.b16 %v370, %v366
  %v383 = vpack.c.b16 %v375, %v371
  %v384 = vpack.c.b16 %v376, %v372
  %v385 = vpack.c.b16 %v377, %v373
  %v386 = vpack.c.b16 %v378, %v374
  %vm393 = vcmask 130048
  %v395 = vsel %vm393, %v382, 0
  %v398 = vsel %vm393, %v386, 0
  %400 = vmatprep.subr.bf16.mxu0 %v282
  %401 = vmatpush1.bf16.msra.mxu0 %v281
  %402 = vmatprep.subr.bf16.mxu0 %v284
  %403 = vmatpush1.bf16.msra.mxu0 %v283
  %404 = vmatprep.subr.bf16.mxu0 %v286
  %405 = vmatpush1.bf16.msra.mxu0 %v285
  %406 = vmatprep.subr.bf16.mxu0 %v288
  %407 = vmatpush1.bf16.msra.mxu0 %v287
  %408 = vmatprep.subr.bf16.mxu0 %v290
  %409 = vmatpush1.bf16.msra.mxu0 %v289
  %410 = vmatprep.subr.bf16.mxu0 %v292
  %411 = vmatpush1.bf16.msra.mxu0 %v291
  %412 = vmatprep.subr.bf16.mxu0 %v294
  %413 = vmatpush1.bf16.msra.mxu0 %v293
  %414 = vmatprep.subr.bf16.mxu0 %v296
  %415 = vmatpush1.bf16.msra.mxu0 %v295
  %416 = vmatprep.subr.bf16.mxu0 %v298
  %417 = vmatpush1.bf16.msra.mxu0 %v297
  %418 = vmatprep.subr.bf16.mxu0 %v300
  %419 = vmatpush1.bf16.msra.mxu0 %v299
  %420 = vmatprep.subr.bf16.mxu0 %v302
  %421 = vmatpush1.bf16.msra.mxu0 %v301
  %422 = vmatprep.subr.bf16.mxu0 %v304
  %423 = vmatpush1.bf16.msra.mxu0 %v303
  %424 = vmatprep.subr.bf16.mxu0 %v306
  %425 = vmatpush1.bf16.msra.mxu0 %v305
  %426 = vmatprep.subr.bf16.mxu0 %v308
  %427 = vmatpush1.bf16.msra.mxu0 %v307
  %428 = vmatprep.subr.bf16.mxu0 %v310
  %429 = vmatpush1.bf16.msra.mxu0 %v309
  %430 = vmatprep.subr.bf16.mxu0 %v312
  %431 = vmatpush1.bf16.msra.mxu0 %v311
  %432 = vmatprep.mubr.bf16.mxu0 %v380
  %433 = vmatmul.mubr.bf16.gmra.mrb[0].mxu0 %v379
  %v434 = vpop.f32.mrb[0].mxu0
  %v435 = vadd.f32 %v338, %v434
  %v436 = vpop.f32.mrb[0].mxu0
  %v437 = vadd.f32 %v338, %v436
  %v438 = vpop.f32.mrb[0].mxu0
  %v439 = vadd.f32 %v343, %v438
  %v440 = vpop.f32.mrb[0].mxu0
  %v441 = vadd.f32 %v343, %v440
  %442 = vmatprep.mubr.bf16.mxu0 %v384
  %443 = vmatmul.mubr.bf16.gmra.mrb[0].mxu0 %v383
  %v444 = vpop.f32.mrb[0].mxu0
  %v445 = vadd.f32 %v348, %v444
  %v446 = vpop.f32.mrb[0].mxu0
  %v447 = vadd.f32 %v348, %v446
  %v448 = vpop.f32.mrb[0].mxu0
  %v449 = vadd.f32 %v353, %v448
  %v450 = vpop.f32.mrb[0].mxu0
  %v451 = vadd.f32 %v353, %v450
  %452 = vdwg.mxu0
  %453 = vmatprep.subr.bf16.mxu0 %v314
  %454 = vmatpush1.bf16.msra.mxu0 %v313
  %455 = vmatprep.subr.bf16.mxu0 %v316
  %456 = vmatpush1.bf16.msra.mxu0 %v315
  %457 = vmatprep.subr.bf16.mxu0 %v318
  %458 = vmatpush1.bf16.msra.mxu0 %v317
  %459 = vmatprep.subr.bf16.mxu0 %v320
  %460 = vmatpush1.bf16.msra.mxu0 %v319
  %461 = vmatprep.subr.bf16.mxu0 %v322
  %462 = vmatpush1.bf16.msra.mxu0 %v321
  %463 = vmatprep.subr.bf16.mxu0 %v324
  %464 = vmatpush1.bf16.msra.mxu0 %v323
  %465 = vmatprep.subr.bf16.mxu0 %v326
  %466 = vmatpush1.bf16.msra.mxu0 %v325
  %467 = vmatprep.subr.bf16.mxu0 %v328
  %468 = vmatpush1.bf16.msra.mxu0 %v327
  %469 = vmatprep.subr.bf16.mxu0 %v330
  %470 = vmatpush1.bf16.msra.mxu0 %v329
  %471 = vmatprep.subr.bf16.mxu0 0
  %472 = vmatpush1.bf16.msra.mxu0 0
  %473 = vmatprep.subr.bf16.mxu0 0
  %474 = vmatpush1.bf16.msra.mxu0 0
  %475 = vmatprep.subr.bf16.mxu0 0
  %476 = vmatpush1.bf16.msra.mxu0 0
  %477 = vmatprep.subr.bf16.mxu0 0
  %478 = vmatpush1.bf16.msra.mxu0 0
  %479 = vmatprep.subr.bf16.mxu0 0
  %480 = vmatpush1.bf16.msra.mxu0 0
  %481 = vmatprep.subr.bf16.mxu0 0
  %482 = vmatpush1.bf16.msra.mxu0 0
  %483 = vmatprep.subr.bf16.mxu0 0
  %484 = vmatpush1.bf16.msra.mxu0 0
  %485 = vmatprep.mubr.bf16.mxu0 %v395
  %486 = vmatmul.mubr.bf16.gmra.mrb[0].mxu0 %v381
  %v487 = vpop.f32.mrb[0].mxu0
  %v488 = vadd.f32 %v435, %v487
  %v489 = vpop.f32.mrb[0].mxu0
  %v490 = vadd.f32 %v437, %v489
  %v491 = vpop.f32.mrb[0].mxu0
  %v492 = vadd.f32 %v439, %v491
  %v493 = vpop.f32.mrb[0].mxu0
  %v494 = vadd.f32 %v441, %v493
  %495 = vmatprep.mubr.bf16.mxu0 %v398
  %496 = vmatmul.mubr.bf16.gmra.mrb[0].mxu0 %v385
  %v497 = vpop.f32.mrb[0].mxu0
  %v498 = vadd.f32 %v445, %v497
  %v499 = vpop.f32.mrb[0].mxu0
  %v500 = vadd.f32 %v447, %v499
  %v501 = vpop.f32.mrb[0].mxu0
  %v502 = vadd.f32 %v449, %v501
  %v503 = vpop.f32.mrb[0].mxu0
  %v504 = vadd.f32 %v451, %v503
  %505 = vdwg.mxu0
  %v506 = vmax.f32 %v488, 0.0
  %v507 = vmax.f32 %v490, 0.0
  %v508 = vmax.f32 %v492, 0.0
  %v509 = vmax.f32 %v494, 0.0
  %v510 = vmax.f32 %v498, 0.0
  %v511 = vmax.f32 %v500, 0.0
  %v512 = vmax.f32 %v502, 0.0
  %v513 = vmax.f32 %v504, 0.0
  %522 = vrot.lane.b32.xlu0 %v506, 127
  %v523 = vpop.permute.xlu0 %522
  %524 = vrot.lane.b32.xlu0 %v507, 127
  %v525 = vpop.permute.xlu0 %524
  %526 = vrot.lane.b32.xlu0 %v508, 127
  %v527 = vpop.permute.xlu0 %526
  %528 = vrot.lane.b32.xlu0 %v509, 127
  %v529 = vpop.permute.xlu0 %528
  %530 = vrot.lane.b32.xlu0 %v510, 127
  %v531 = vpop.permute.xlu0 %530
  %532 = vrot.lane.b32.xlu0 %v511, 127
  %v533 = vpop.permute.xlu0 %532
  %534 = vrot.lane.b32.xlu0 %v512, 127
  %v535 = vpop.permute.xlu0 %534
  %536 = vrot.lane.b32.xlu0 %v513, 127
  %v537 = vpop.permute.xlu0 %536
  %vm538 = vcmask 1039360
  %v539 = vsel %vm538, %v523, %v525
  %v540 = vsel %vm538, %v527, %v529
  %v541 = vsel %vm538, %v531, %v533
  %v542 = vsel %vm538, %v535, %v537
  %v551 = vmax.f32 %v506, %v539
  %v552 = vmax.f32 %v507, %v525
  %v553 = vmax.f32 %v508, %v540
  %v554 = vmax.f32 %v509, %v529
  %v555 = vmax.f32 %v510, %v541
  %v556 = vmax.f32 %v511, %v533
  %v557 = vmax.f32 %v512, %v542
  %v558 = vmax.f32 %v513, %v537
  %567 = vrot.lane.b32.xlu0 %v551, 114
  %v568 = vpop.permute.xlu0 %567
  %569 = vrot.lane.b32.xlu0 %v552, 114
  %v570 = vpop.permute.xlu0 %569
  %571 = vrot.lane.b32.xlu0 %v553, 114
  %v572 = vpop.permute.xlu0 %571
  %573 = vrot.lane.b32.xlu0 %v554, 114
  %v574 = vpop.permute.xlu0 %573
  %575 = vrot.lane.b32.xlu0 %v555, 114
  %v576 = vpop.permute.xlu0 %575
  %577 = vrot.lane.b32.xlu0 %v556, 114
  %v578 = vpop.permute.xlu0 %577
  %579 = vrot.lane.b32.xlu0 %v557, 114
  %v580 = vpop.permute.xlu0 %579
  %581 = vrot.lane.b32.xlu0 %v558, 114
  %v582 = vpop.permute.xlu0 %581
  %vm583 = vcmask 932864
  %v584 = vsel %vm583, %v568, %v570
  %v585 = vsel %vm583, %v572, %v574
  %v586 = vsel %vm583, %v576, %v578
  %v587 = vsel %vm583, %v580, %v582
  %v592 = vmax.f32 %v551, %v584
  %v593 = vmax.f32 %v553, %v585
  %v594 = vmax.f32 %v555, %v586
  %v595 = vmax.f32 %v557, %v587
  %v596 = vpack.c.bf16 %v593, %v592
  %v597 = vpack.c.bf16 %v595, %v594
  %vm598 = vcmask 990208
  %599 = vst.msk [vmem:[#allocation3] sm:$0xff] %vm598, %v596
  %600 = vst.msk [vmem:[#allocation3 + $0x8] sm:$0xff] %vm598, %v597
  %s601 = scalar_lea.vmem %s0, 16
  %v602 = vld [vmem:[%s601] sm:$0xff]
  %v603 = vld [vmem:[%s601 + $0x8] sm:$0xff]
  %v606 = vunpack.c.l.b16 %v602
  %v607 = vunpack.c.h.b16 %v602
  %v608 = vunpack.c.l.b16 %v603
  %v609 = vunpack.c.h.b16 %v603
  %v610 = vpack.c.b16 %v608, %v606
  %v611 = vpack.c.b16 %v609, %v607
  %614 = vst [vmem:[#allocation2] sm:$0xff] %v610
  %615 = vst.msk [vmem:[#allocation2 + $0x8] sm:$0xff] %vm31, %v611
  %616 = vrot.lane.b32.xlu0 %v610, 127
  %v617 = vpop.permute.xlu0 %616
  %618 = vrot.lane.b32.xlu0 %v611, 127
  %v619 = vpop.permute.xlu0 %618
  %v620 = vsel %vm37, %v617, %v619
  %623 = vst [vmem:[#allocation2 + $0x10] sm:$0xff] %v620
  %624 = vst.msk [vmem:[#allocation2 + $0x18] sm:$0xff] %vm31, %v619
  %625 = vrot.lane.b32.xlu0 %v610, 126
  %v626 = vpop.permute.xlu0 %625
  %627 = vrot.lane.b32.xlu0 %v611, 126
  %v628 = vpop.permute.xlu0 %627
  %v629 = vsel %vm47, %v626, %v628
  %632 = vst [vmem:[#allocation2 + $0x20] sm:$0xff] %v629
  %633 = vst.msk [vmem:[#allocation2 + $0x28] sm:$0xff] %vm31, %v628
  %634 = vrot.lane.b32.xlu0 %v610, 125
  %v635 = vpop.permute.xlu0 %634
  %636 = vrot.lane.b32.xlu0 %v611, 125
  %v637 = vpop.permute.xlu0 %636
  %v638 = vsel %vm57, %v635, %v637
  %641 = vst [vmem:[#allocation2 + $0x30] sm:$0xff] %v638
  %642 = vst.msk [vmem:[#allocation2 + $0x38] sm:$0xff] %vm31, %v637
  %643 = vrot.lane.b32.xlu0 %v610, 124
  %v644 = vpop.permute.xlu0 %643
  %645 = vrot.lane.b32.xlu0 %v611, 124
  %v646 = vpop.permute.xlu0 %645
  %v647 = vsel %vm67, %v644, %v646
  %650 = vst [vmem:[#allocation2 + $0x40] sm:$0xff] %v647
  %651 = vst.msk [vmem:[#allocation2 + $0x48] sm:$0xff] %vm31, %v646
  %652 = vrot.lane.b32.xlu0 %v610, 114
  %v653 = vpop.permute.xlu0 %652
  %654 = vrot.lane.b32.xlu0 %v611, 114
  %v655 = vpop.permute.xlu0 %654
  %v656 = vsel %vm77, %v653, %v655
  %659 = vst [vmem:[#allocation2 + $0x50] sm:$0xff] %v656
  %660 = vst.msk [vmem:[#allocation2 + $0x58] sm:$0xff] %vm31, %v655
  %661 = vrot.lane.b32.xlu0 %v610, 113
  %v662 = vpop.permute.xlu0 %661
  %663 = vrot.lane.b32.xlu0 %v611, 113
  %v664 = vpop.permute.xlu0 %663
  %v665 = vsel %vm87, %v662, %v664
  %668 = vst [vmem:[#allocation2 + $0x60] sm:$0xff] %v665
  %669 = vst.msk [vmem:[#allocation2 + $0x68] sm:$0xff] %vm31, %v664
  %670 = vrot.lane.b32.xlu0 %v610, 112
  %v671 = vpop.permute.xlu0 %670
  %672 = vrot.lane.b32.xlu0 %v611, 112
  %v673 = vpop.permute.xlu0 %672
  %v674 = vsel %vm97, %v671, %v673
  %677 = vst [vmem:[#allocation2 + $0x70] sm:$0xff] %v674
  %678 = vst.msk [vmem:[#allocation2 + $0x78] sm:$0xff] %vm31, %v673
  %679 = vrot.lane.b32.xlu0 %v610, 111
  %v680 = vpop.permute.xlu0 %679
  %681 = vrot.lane.b32.xlu0 %v611, 111
  %v682 = vpop.permute.xlu0 %681
  %v683 = vsel %vm107, %v680, %v682
  %686 = vst [vmem:[#allocation2 + $0x80] sm:$0xff] %v683
  %687 = vst.msk [vmem:[#allocation2 + $0x88] sm:$0xff] %vm31, %v682
  %688 = vrot.lane.b32.xlu0 %v610, 110
  %v689 = vpop.permute.xlu0 %688
  %690 = vrot.lane.b32.xlu0 %v611, 110
  %v691 = vpop.permute.xlu0 %690
  %v692 = vsel %vm117, %v689, %v691
  %695 = vst [vmem:[#allocation2 + $0x90] sm:$0xff] %v692
  %696 = vst.msk [vmem:[#allocation2 + $0x98] sm:$0xff] %vm31, %v691
  %697 = vrot.lane.b32.xlu0 %v610, 100
  %v698 = vpop.permute.xlu0 %697
  %699 = vrot.lane.b32.xlu0 %v611, 100
  %v700 = vpop.permute.xlu0 %699
  %v701 = vsel %vm127, %v698, %v700
  %704 = vst [vmem:[#allocation2 + $0xa0] sm:$0xff] %v701
  %705 = vst.msk [vmem:[#allocation2 + $0xa8] sm:$0xff] %vm31, %v700
  %706 = vrot.lane.b32.xlu0 %v610, 99
  %v707 = vpop.permute.xlu0 %706
  %708 = vrot.lane.b32.xlu0 %v611, 99
  %v709 = vpop.permute.xlu0 %708
  %v710 = vsel %vm137, %v707, %v709
  %713 = vst [vmem:[#allocation2 + $0xb0] sm:$0xff] %v710
  %714 = vst.msk [vmem:[#allocation2 + $0xb8] sm:$0xff] %vm31, %v709
  %715 = vrot.lane.b32.xlu0 %v610, 98
  %v716 = vpop.permute.xlu0 %715
  %717 = vrot.lane.b32.xlu0 %v611, 98
  %v718 = vpop.permute.xlu0 %717
  %v719 = vsel %vm147, %v716, %v718
  %722 = vst [vmem:[#allocation2 + $0xc0] sm:$0xff] %v719
  %723 = vst.msk [vmem:[#allocation2 + $0xc8] sm:$0xff] %vm31, %v718
  %724 = vrot.lane.b32.xlu0 %v610, 97
  %v725 = vpop.permute.xlu0 %724
  %726 = vrot.lane.b32.xlu0 %v611, 97
  %v727 = vpop.permute.xlu0 %726
  %v728 = vsel %vm157, %v725, %v727
  %731 = vst [vmem:[#allocation2 + $0xd0] sm:$0xff] %v728
  %732 = vst.msk [vmem:[#allocation2 + $0xd8] sm:$0xff] %vm31, %v727
  %733 = vrot.lane.b32.xlu0 %v610, 96
  %v734 = vpop.permute.xlu0 %733
  %735 = vrot.lane.b32.xlu0 %v611, 96
  %v736 = vpop.permute.xlu0 %735
  %v737 = vsel %vm167, %v734, %v736
  %740 = vst [vmem:[#allocation2 + $0xe0] sm:$0xff] %v737
  %741 = vst.msk [vmem:[#allocation2 + $0xe8] sm:$0xff] %vm31, %v736
  %742 = vrot.lane.b32.xlu0 %v610, 86
  %v743 = vpop.permute.xlu0 %742
  %744 = vrot.lane.b32.xlu0 %v611, 86
  %v745 = vpop.permute.xlu0 %744
  %v746 = vsel %vm177, %v743, %v745
  %749 = vst [vmem:[#allocation2 + $0xf0] sm:$0xff] %v746
  %750 = vst.msk [vmem:[#allocation2 + $0xf8] sm:$0xff] %vm31, %v745
  %751 = vrot.lane.b32.xlu0 %v610, 85
  %v752 = vpop.permute.xlu0 %751
  %753 = vrot.lane.b32.xlu0 %v611, 85
  %v754 = vpop.permute.xlu0 %753
  %v755 = vsel %vm187, %v752, %v754
  %758 = vst [vmem:[#allocation2 + $0x100] sm:$0xff] %v755
  %759 = vst.msk [vmem:[#allocation2 + $0x108] sm:$0xff] %vm31, %v754
  %760 = vrot.lane.b32.xlu0 %v610, 84
  %v761 = vpop.permute.xlu0 %760
  %762 = vrot.lane.b32.xlu0 %v611, 84
  %v763 = vpop.permute.xlu0 %762
  %v764 = vsel %vm197, %v761, %v763
  %767 = vst [vmem:[#allocation2 + $0x110] sm:$0xff] %v764
  %768 = vst.msk [vmem:[#allocation2 + $0x118] sm:$0xff] %vm31, %v763
  %769 = vrot.lane.b32.xlu0 %v610, 83
  %v770 = vpop.permute.xlu0 %769
  %771 = vrot.lane.b32.xlu0 %v611, 83
  %v772 = vpop.permute.xlu0 %771
  %v773 = vsel %vm207, %v770, %v772
  %776 = vst [vmem:[#allocation2 + $0x120] sm:$0xff] %v773
  %777 = vst.msk [vmem:[#allocation2 + $0x128] sm:$0xff] %vm31, %v772
  %778 = vrot.lane.b32.xlu0 %v610, 82
  %v779 = vpop.permute.xlu0 %778
  %780 = vrot.lane.b32.xlu0 %v611, 82
  %v781 = vpop.permute.xlu0 %780
  %v782 = vsel %vm217, %v779, %v781
  %785 = vst [vmem:[#allocation2 + $0x130] sm:$0xff] %v782
  %786 = vst.msk [vmem:[#allocation2 + $0x138] sm:$0xff] %vm31, %v781
  %787 = vrot.lane.b32.xlu0 %v610, 72
  %v788 = vpop.permute.xlu0 %787
  %789 = vrot.lane.b32.xlu0 %v611, 72
  %v790 = vpop.permute.xlu0 %789
  %v791 = vsel %vm227, %v788, %v790
  %794 = vst [vmem:[#allocation2 + $0x140] sm:$0xff] %v791
  %795 = vst.msk [vmem:[#allocation2 + $0x148] sm:$0xff] %vm31, %v790
  %796 = vrot.lane.b32.xlu0 %v610, 71
  %v797 = vpop.permute.xlu0 %796
  %798 = vrot.lane.b32.xlu0 %v611, 71
  %v799 = vpop.permute.xlu0 %798
  %v800 = vsel %vm237, %v797, %v799
  %803 = vst [vmem:[#allocation2 + $0x150] sm:$0xff] %v800
  %804 = vst.msk [vmem:[#allocation2 + $0x158] sm:$0xff] %vm31, %v799
  %805 = vrot.lane.b32.xlu0 %v610, 70
  %v806 = vpop.permute.xlu0 %805
  %807 = vrot.lane.b32.xlu0 %v611, 70
  %v808 = vpop.permute.xlu0 %807
  %v809 = vsel %vm247, %v806, %v808
  %812 = vst [vmem:[#allocation2 + $0x160] sm:$0xff] %v809
  %813 = vst.msk [vmem:[#allocation2 + $0x168] sm:$0xff] %vm31, %v808
  %814 = vrot.lane.b32.xlu0 %v610, 69
  %v815 = vpop.permute.xlu0 %814
  %816 = vrot.lane.b32.xlu0 %v611, 69
  %v817 = vpop.permute.xlu0 %816
  %v818 = vsel %vm257, %v815, %v817
  %821 = vst [vmem:[#allocation2 + $0x170] sm:$0xff] %v818
  %822 = vst.msk [vmem:[#allocation2 + $0x178] sm:$0xff] %vm31, %v817
  %823 = vrot.lane.b32.xlu0 %v610, 68
  %v824 = vpop.permute.xlu0 %823
  %825 = vrot.lane.b32.xlu0 %v611, 68
  %v826 = vpop.permute.xlu0 %825
  %v827 = vsel %vm267, %v824, %v826
  %830 = vst [vmem:[#allocation2 + $0x180] sm:$0xff] %v827
  %831 = vst.msk [vmem:[#allocation2 + $0x188] sm:$0xff] %vm31, %v826
  %v832 = vld [vmem:[%s1] sm:$0xff]
  %v833 = vld [vmem:[%s1 + $0x8] sm:$0xff]
  %v834 = vld [vmem:[%s1 + $0x10] sm:$0xff]
  %v835 = vld [vmem:[%s1 + $0x18] sm:$0xff]
  %v836 = vld [vmem:[%s1 + $0x20] sm:$0xff]
  %v837 = vld [vmem:[%s1 + $0x28] sm:$0xff]
  %v838 = vld [vmem:[%s1 + $0x30] sm:$0xff]
  %v839 = vld [vmem:[%s1 + $0x38] sm:$0xff]
  %v840 = vld [vmem:[#allocation2] sm:$0xff]
  %v841 = vld [vmem:[#allocation2 + $0x8] sm:$0xff]
  %v842 = vld [vmem:[#allocation2 + $0x10] sm:$0xff]
  %v843 = vld [vmem:[#allocation2 + $0x18] sm:$0xff]
  %v844 = vld [vmem:[#allocation2 + $0x20] sm:$0xff]
  %v845 = vld [vmem:[#allocation2 + $0x28] sm:$0xff]
  %v846 = vld [vmem:[#allocation2 + $0x30] sm:$0xff]
  %v847 = vld [vmem:[#allocation2 + $0x38] sm:$0xff]
  %v848 = vld [vmem:[#allocation2 + $0x40] sm:$0xff]
  %v849 = vld [vmem:[#allocation2 + $0x48] sm:$0xff]
  %v850 = vld [vmem:[#allocation2 + $0x50] sm:$0xff]
  %v851 = vld [vmem:[#allocation2 + $0x58] sm:$0xff]
  %v852 = vld [vmem:[#allocation2 + $0x60] sm:$0xff]
  %v853 = vld [vmem:[#allocation2 + $0x68] sm:$0xff]
  %v854 = vld [vmem:[#allocation2 + $0x70] sm:$0xff]
  %v855 = vld [vmem:[#allocation2 + $0x78] sm:$0xff]
  %v856 = vld [vmem:[#allocation2 + $0x80] sm:$0xff]
  %v857 = vld [vmem:[#allocation2 + $0x88] sm:$0xff]
  %v858 = vld [vmem:[#allocation2 + $0x90] sm:$0xff]
  %v859 = vld [vmem:[#allocation2 + $0x98] sm:$0xff]
  %v860 = vld [vmem:[#allocation2 + $0xa0] sm:$0xff]
  %v861 = vld [vmem:[#allocation2 + $0xa8] sm:$0xff]
  %v862 = vld [vmem:[#allocation2 + $0xb0] sm:$0xff]
  %v863 = vld [vmem:[#allocation2 + $0xb8] sm:$0xff]
  %v864 = vld [vmem:[#allocation2 + $0xc0] sm:$0xff]
  %v865 = vld [vmem:[#allocation2 + $0xc8] sm:$0xff]
  %v866 = vld [vmem:[#allocation2 + $0xd0] sm:$0xff]
  %v867 = vld [vmem:[#allocation2 + $0xd8] sm:$0xff]
  %v868 = vld [vmem:[#allocation2 + $0xe0] sm:$0xff]
  %v869 = vld [vmem:[#allocation2 + $0xe8] sm:$0xff]
  %v870 = vld [vmem:[#allocation2 + $0xf0] sm:$0xff]
  %v871 = vld [vmem:[#allocation2 + $0xf8] sm:$0xff]
  %v872 = vld [vmem:[#allocation2 + $0x100] sm:$0xff]
  %v873 = vld [vmem:[#allocation2 + $0x108] sm:$0xff]
  %v874 = vld [vmem:[#allocation2 + $0x110] sm:$0xff]
  %v875 = vld [vmem:[#allocation2 + $0x118] sm:$0xff]
  %v876 = vld [vmem:[#allocation2 + $0x120] sm:$0xff]
  %v877 = vld [vmem:[#allocation2 + $0x128] sm:$0xff]
  %v878 = vld [vmem:[#allocation2 + $0x130] sm:$0xff]
  %v879 = vld [vmem:[#allocation2 + $0x138] sm:$0xff]
  %v880 = vld [vmem:[#allocation2 + $0x140] sm:$0xff]
  %v881 = vld [vmem:[#allocation2 + $0x148] sm:$0xff]
  %v882 = vld [vmem:[#allocation2 + $0x150] sm:$0xff]
  %v883 = vld [vmem:[#allocation2 + $0x158] sm:$0xff]
  %v884 = vld [vmem:[#allocation2 + $0x160] sm:$0xff]
  %v885 = vld [vmem:[#allocation2 + $0x168] sm:$0xff]
  %v886 = vld [vmem:[#allocation2 + $0x170] sm:$0xff]
  %v887 = vld [vmem:[#allocation2 + $0x178] sm:$0xff]
  %v888 = vld [vmem:[#allocation2 + $0x180] sm:$0xff]
  %v889 = vld [vmem:[#allocation2 + $0x188] sm:$0xff]
  %v890 = vld [vmem:[%s2] sm:$0xff]
  %v891 = vld [vmem:[%s2 + $0x8] sm:$0xff]
  %v892 = vld [vmem:[%s2 + $0x10] sm:$0xff]
  %v893 = vld [vmem:[%s2 + $0x18] sm:$0xff]
  %895 = vset.pattern.permute.xlu0 0
  %896 = vperm.xlu0 %895, %v890
  %v897 = vpop.permute.xlu0 %896
  %900 = vset.pattern.permute.xlu0 0
  %901 = vperm.xlu0 %900, %v891
  %v902 = vpop.permute.xlu0 %901
  %905 = vset.pattern.permute.xlu0 0
  %906 = vperm.xlu0 %905, %v892
  %v907 = vpop.permute.xlu0 %906
  %910 = vset.pattern.permute.xlu0 0
  %911 = vperm.xlu0 %910, %v893
  %v912 = vpop.permute.xlu0 %911
  %v922 = vunpack.c.l.b16 %v832
  %v923 = vunpack.c.h.b16 %v832
  %v924 = vunpack.c.l.b16 %v833
  %v925 = vunpack.c.h.b16 %v833
  %v926 = vunpack.c.l.b16 %v834
  %v927 = vunpack.c.h.b16 %v834
  %v928 = vunpack.c.l.b16 %v835
  %v929 = vunpack.c.h.b16 %v835
  %v930 = vunpack.c.l.b16 %v836
  %v931 = vunpack.c.h.b16 %v836
  %v932 = vunpack.c.l.b16 %v837
  %v933 = vunpack.c.h.b16 %v837
  %v934 = vunpack.c.l.b16 %v838
  %v935 = vunpack.c.h.b16 %v838
  %v936 = vunpack.c.l.b16 %v839
  %v937 = vunpack.c.h.b16 %v839
  %v938 = vpack.c.b16 %v926, %v922
  %v939 = vpack.c.b16 %v927, %v923
  %v940 = vpack.c.b16 %v928, %v924
  %v941 = vpack.c.b16 %v929, %v925
  %v942 = vpack.c.b16 %v934, %v930
  %v943 = vpack.c.b16 %v935, %v931
  %v944 = vpack.c.b16 %v936, %v932
  %v945 = vpack.c.b16 %v937, %v933
  %v953 = vsel %vm393, %v941, 0
  %v956 = vsel %vm393, %v945, 0
  %958 = vmatprep.subr.bf16.mxu0 %v841
  %959 = vmatpush1.bf16.msra.mxu0 %v840
  %960 = vmatprep.subr.bf16.mxu0 %v843
  %961 = vmatpush1.bf16.msra.mxu0 %v842
  %962 = vmatprep.subr.bf16.mxu0 %v845
  %963 = vmatpush1.bf16.msra.mxu0 %v844
  %964 = vmatprep.subr.bf16.mxu0 %v847
  %965 = vmatpush1.bf16.msra.mxu0 %v846
  %966 = vmatprep.subr.bf16.mxu0 %v849
  %967 = vmatpush1.bf16.msra.mxu0 %v848
  %968 = vmatprep.subr.bf16.mxu0 %v851
  %969 = vmatpush1.bf16.msra.mxu0 %v850
  %970 = vmatprep.subr.bf16.mxu0 %v853
  %971 = vmatpush1.bf16.msra.mxu0 %v852
  %972 = vmatprep.subr.bf16.mxu0 %v855
  %973 = vmatpush1.bf16.msra.mxu0 %v854
  %974 = vmatprep.subr.bf16.mxu0 %v857
  %975 = vmatpush1.bf16.msra.mxu0 %v856
  %976 = vmatprep.subr.bf16.mxu0 %v859
  %977 = vmatpush1.bf16.msra.mxu0 %v858
  %978 = vmatprep.subr.bf16.mxu0 %v861
  %979 = vmatpush1.bf16.msra.mxu0 %v860
  %980 = vmatprep.subr.bf16.mxu0 %v863
  %981 = vmatpush1.bf16.msra.mxu0 %v862
  %982 = vmatprep.subr.bf16.mxu0 %v865
  %983 = vmatpush1.bf16.msra.mxu0 %v864
  %984 = vmatprep.subr.bf16.mxu0 %v867
  %985 = vmatpush1.bf16.msra.mxu0 %v866
  %986 = vmatprep.subr.bf16.mxu0 %v869
  %987 = vmatpush1.bf16.msra.mxu0 %v868
  %988 = vmatprep.subr.bf16.mxu0 %v871
  %989 = vmatpush1.bf16.msra.mxu0 %v870
  %990 = vmatprep.mubr.bf16.mxu0 %v939
  %991 = vmatmul.mubr.bf16.gmra.mrb[0].mxu0 %v938
  %v992 = vpop.f32.mrb[0].mxu0
  %v993 = vadd.f32 %v897, %v992
  %v994 = vpop.f32.mrb[0].mxu0
  %v995 = vadd.f32 %v897, %v994
  %v996 = vpop.f32.mrb[0].mxu0
  %v997 = vadd.f32 %v902, %v996
  %v998 = vpop.f32.mrb[0].mxu0
  %v999 = vadd.f32 %v902, %v998
  %1000 = vmatprep.mubr.bf16.mxu0 %v943
  %1001 = vmatmul.mubr.bf16.gmra.mrb[0].mxu0 %v942
  %v1002 = vpop.f32.mrb[0].mxu0
  %v1003 = vadd.f32 %v907, %v1002
  %v1004 = vpop.f32.mrb[0].mxu0
  %v1005 = vadd.f32 %v907, %v1004
  %v1006 = vpop.f32.mrb[0].mxu0
  %v1007 = vadd.f32 %v912, %v1006
  %v1008 = vpop.f32.mrb[0].mxu0
  %v1009 = vadd.f32 %v912, %v1008
  %1010 = vdwg.mxu0
  %1011 = vmatprep.subr.bf16.mxu0 %v873
  %1012 = vmatpush1.bf16.msra.mxu0 %v872
  %1013 = vmatprep.subr.bf16.mxu0 %v875
  %1014 = vmatpush1.bf16.msra.mxu0 %v874
  %1015 = vmatprep.subr.bf16.mxu0 %v877
  %1016 = vmatpush1.bf16.msra.mxu0 %v876
  %1017 = vmatprep.subr.bf16.mxu0 %v879
  %1018 = vmatpush1.bf16.msra.mxu0 %v878
  %1019 = vmatprep.subr.bf16.mxu0 %v881
  %1020 = vmatpush1.bf16.msra.mxu0 %v880
  %1021 = vmatprep.subr.bf16.mxu0 %v883
  %1022 = vmatpush1.bf16.msra.mxu0 %v882
  %1023 = vmatprep.subr.bf16.mxu0 %v885
  %1024 = vmatpush1.bf16.msra.mxu0 %v884
  %1025 = vmatprep.subr.bf16.mxu0 %v887
  %1026 = vmatpush1.bf16.msra.mxu0 %v886
  %1027 = vmatprep.subr.bf16.mxu0 %v889
  %1028 = vmatpush1.bf16.msra.mxu0 %v888
  %1029 = vmatprep.subr.bf16.mxu0 0
  %1030 = vmatpush1.bf16.msra.mxu0 0
  %1031 = vmatprep.subr.bf16.mxu0 0
  %1032 = vmatpush1.bf16.msra.mxu0 0
  %1033 = vmatprep.subr.bf16.mxu0 0
  %1034 = vmatpush1.bf16.msra.mxu0 0
  %1035 = vmatprep.subr.bf16.mxu0 0
  %1036 = vmatpush1.bf16.msra.mxu0 0
  %1037 = vmatprep.subr.bf16.mxu0 0
  %1038 = vmatpush1.bf16.msra.mxu0 0
  %1039 = vmatprep.subr.bf16.mxu0 0
  %1040 = vmatpush1.bf16.msra.mxu0 0
  %1041 = vmatprep.subr.bf16.mxu0 0
  %1042 = vmatpush1.bf16.msra.mxu0 0
  %1043 = vmatprep.mubr.bf16.mxu0 %v953
  %1044 = vmatmul.mubr.bf16.gmra.mrb[0].mxu0 %v940
  %v1045 = vpop.f32.mrb[0].mxu0
  %v1046 = vadd.f32 %v993, %v1045
  %v1047 = vpop.f32.mrb[0].mxu0
  %v1048 = vadd.f32 %v995, %v1047
  %v1049 = vpop.f32.mrb[0].mxu0
  %v1050 = vadd.f32 %v997, %v1049
  %v1051 = vpop.f32.mrb[0].mxu0
  %v1052 = vadd.f32 %v999, %v1051
  %1053 = vmatprep.mubr.bf16.mxu0 %v956
  %1054 = vmatmul.mubr.bf16.gmra.mrb[0].mxu0 %v944
  %v1055 = vpop.f32.mrb[0].mxu0
  %v1056 = vadd.f32 %v1003, %v1055
  %v1057 = vpop.f32.mrb[0].mxu0
  %v1058 = vadd.f32 %v1005, %v1057
  %v1059 = vpop.f32.mrb[0].mxu0
  %v1060 = vadd.f32 %v1007, %v1059
  %v1061 = vpop.f32.mrb[0].mxu0
  %v1062 = vadd.f32 %v1009, %v1061
  %1063 = vdwg.mxu0
  %v1064 = vmax.f32 %v1046, 0.0
  %v1065 = vmax.f32 %v1048, 0.0
  %v1066 = vmax.f32 %v1050, 0.0
  %v1067 = vmax.f32 %v1052, 0.0
  %v1068 = vmax.f32 %v1056, 0.0
  %v1069 = vmax.f32 %v1058, 0.0
  %v1070 = vmax.f32 %v1060, 0.0
  %v1071 = vmax.f32 %v1062, 0.0
  %1080 = vrot.lane.b32.xlu0 %v1064, 127
  %v1081 = vpop.permute.xlu0 %1080
  %1082 = vrot.lane.b32.xlu0 %v1065, 127
  %v1083 = vpop.permute.xlu0 %1082
  %1084 = vrot.lane.b32.xlu0 %v1066, 127
  %v1085 = vpop.permute.xlu0 %1084
  %1086 = vrot.lane.b32.xlu0 %v1067, 127
  %v1087 = vpop.permute.xlu0 %1086
  %1088 = vrot.lane.b32.xlu0 %v1068, 127
  %v1089 = vpop.permute.xlu0 %1088
  %1090 = vrot.lane.b32.xlu0 %v1069, 127
  %v1091 = vpop.permute.xlu0 %1090
  %1092 = vrot.lane.b32.xlu0 %v1070, 127
  %v1093 = vpop.permute.xlu0 %1092
  %1094 = vrot.lane.b32.xlu0 %v1071, 127
  %v1095 = vpop.permute.xlu0 %1094
  %v1096 = vsel %vm538, %v1081, %v1083
  %v1097 = vsel %vm538, %v1085, %v1087
  %v1098 = vsel %vm538, %v1089, %v1091
  %v1099 = vsel %vm538, %v1093, %v1095
  %v1108 = vmax.f32 %v1064, %v1096
  %v1109 = vmax.f32 %v1065, %v1083
  %v1110 = vmax.f32 %v1066, %v1097
  %v1111 = vmax.f32 %v1067, %v1087
  %v1112 = vmax.f32 %v1068, %v1098
  %v1113 = vmax.f32 %v1069, %v1091
  %v1114 = vmax.f32 %v1070, %v1099
  %v1115 = vmax.f32 %v1071, %v1095
  %1124 = vrot.lane.b32.xlu0 %v1108, 114
  %v1125 = vpop.permute.xlu0 %1124
  %1126 = vrot.lane.b32.xlu0 %v1109, 114
  %v1127 = vpop.permute.xlu0 %1126
  %1128 = vrot.lane.b32.xlu0 %v1110, 114
  %v1129 = vpop.permute.xlu0 %1128
  %1130 = vrot.lane.b32.xlu0 %v1111, 114
  %v1131 = vpop.permute.xlu0 %1130
  %1132 = vrot.lane.b32.xlu0 %v1112, 114
  %v1133 = vpop.permute.xlu0 %1132
  %1134 = vrot.lane.b32.xlu0 %v1113, 114
  %v1135 = vpop.permute.xlu0 %1134
  %1136 = vrot.lane.b32.xlu0 %v1114, 114
  %v1137 = vpop.permute.xlu0 %1136
  %1138 = vrot.lane.b32.xlu0 %v1115, 114
  %v1139 = vpop.permute.xlu0 %1138
  %v1140 = vsel %vm583, %v1125, %v1127
  %v1141 = vsel %vm583, %v1129, %v1131
  %v1142 = vsel %vm583, %v1133, %v1135
  %v1143 = vsel %vm583, %v1137, %v1139
  %v1148 = vmax.f32 %v1108, %v1140
  %v1149 = vmax.f32 %v1110, %v1141
  %v1150 = vmax.f32 %v1112, %v1142
  %v1151 = vmax.f32 %v1114, %v1143
  %v1152 = vpack.c.bf16 %v1149, %v1148
  %v1153 = vpack.c.bf16 %v1151, %v1150
  %1154 = vst.msk [vmem:[#allocation3 + $0x10] sm:$0xff] %vm598, %v1152
  %1155 = vst.msk [vmem:[#allocation3 + $0x18] sm:$0xff] %vm598, %v1153
  %v1156 = vld [vmem:[#allocation3] sm:$0xff]
  %v1157 = vld [vmem:[#allocation3 + $0x8] sm:$0xff]
  %v1158 = vld [vmem:[#allocation3 + $0x10] sm:$0xff]
  %v1159 = vld [vmem:[#allocation3 + $0x18] sm:$0xff]
  %v1160 = vld [vmem:[%s3] sm:$0xf]
  %v1161 = vld [vmem:[%s3 + $0x4] sm:$0xf]
  %v1162 = vld [vmem:[%s3 + $0x8] sm:$0xf]
  %v1163 = vld [vmem:[%s3 + $0xc] sm:$0xf]
  %v1164 = vld [vmem:[%s3 + $0x10] sm:$0xf]
  %v1165 = vld [vmem:[%s3 + $0x14] sm:$0xf]
  %v1166 = vld [vmem:[%s3 + $0x18] sm:$0xf]
  %v1167 = vld [vmem:[%s3 + $0x1c] sm:$0xf]
  %v1168 = vld [vmem:[%s3 + $0x20] sm:$0xf]
  %v1169 = vld [vmem:[%s3 + $0x24] sm:$0xf]
  %v1170 = vld [vmem:[%s3 + $0x28] sm:$0xf]
  %v1171 = vld [vmem:[%s3 + $0x2c] sm:$0xf]
  %v1172 = vld [vmem:[%s3 + $0x30] sm:$0xf]
  %v1173 = vld [vmem:[%s3 + $0x34] sm:$0xf]
  %v1174 = vld [vmem:[%s3 + $0x38] sm:$0xf]
  %v1175 = vld [vmem:[%s3 + $0x3c] sm:$0x1]
  %v1192 = vunpack.c.l.b16 %v1160
  %v1193 = vunpack.c.l.b16 %v1161
  %v1194 = vunpack.c.l.b16 %v1162
  %v1195 = vunpack.c.l.b16 %v1163
  %v1196 = vunpack.c.l.b16 %v1164
  %v1197 = vunpack.c.l.b16 %v1165
  %v1198 = vunpack.c.l.b16 %v1166
  %v1199 = vunpack.c.l.b16 %v1167
  %v1200 = vunpack.c.l.b16 %v1168
  %v1201 = vunpack.c.l.b16 %v1169
  %v1202 = vunpack.c.l.b16 %v1170
  %v1203 = vunpack.c.l.b16 %v1171
  %v1204 = vunpack.c.l.b16 %v1172
  %v1205 = vunpack.c.l.b16 %v1173
  %v1206 = vunpack.c.l.b16 %v1174
  %v1207 = vunpack.c.l.b16 %v1175
  %v1208 = vpack.c.b16 %v1193, %v1192
  %v1209 = vpack.c.b16 %v1195, %v1194
  %v1210 = vpack.c.b16 %v1197, %v1196
  %v1211 = vpack.c.b16 %v1199, %v1198
  %v1212 = vpack.c.b16 %v1201, %v1200
  %v1213 = vpack.c.b16 %v1203, %v1202
  %v1214 = vpack.c.b16 %v1205, %v1204
  %v1215 = vpack.c.b16 %v1207, %v1206
  %v1224 = vsel %vm598, %v1156, 0
  %v1227 = vsel %vm598, %v1157, 0
  %v1230 = vsel %vm598, %v1158, 0
  %v1233 = vsel %vm598, %v1159, 0
  %vm1235 = vcmask 1043456
  %vm1236 = vcmask 1044480
  %v1237 = vsel %vm1235, 4294967295, 65535
  %v1238 = vsel %vm1236, %v1237, 0
  %v1240 = vand.u32 %v1215, %v1238
  %1242 = vmatprep.subr.bf16.mxu0 0
  %1243 = vmatpush1.bf16.msra.mxu0 %v1208
  %1244 = vmatprep.subr.bf16.mxu0 0
  %1245 = vmatpush1.bf16.msra.mxu0 %v1209
  %1246 = vmatprep.subr.bf16.mxu0 0
  %1247 = vmatpush1.bf16.msra.mxu0 %v1210
  %1248 = vmatprep.subr.bf16.mxu0 0
  %1249 = vmatpush1.bf16.msra.mxu0 %v1211
  %1250 = vmatprep.subr.bf16.mxu0 0
  %1251 = vmatpush1.bf16.msra.mxu0 %v1212
  %1252 = vmatprep.subr.bf16.mxu0 0
  %1253 = vmatpush1.bf16.msra.mxu0 %v1213
  %1254 = vmatprep.subr.bf16.mxu0 0
  %1255 = vmatpush1.bf16.msra.mxu0 %v1214
  %1256 = vmatprep.subr.bf16.mxu0 0
  %1257 = vmatpush1.bf16.msra.mxu0 %v1240
  %1258 = vmatprep.subr.bf16.mxu0 0
  %1259 = vmatpush1.bf16.msra.mxu0 0
  %1260 = vmatprep.subr.bf16.mxu0 0
  %1261 = vmatpush1.bf16.msra.mxu0 0
  %1262 = vmatprep.subr.bf16.mxu0 0
  %1263 = vmatpush1.bf16.msra.mxu0 0
  %1264 = vmatprep.subr.bf16.mxu0 0
  %1265 = vmatpush1.bf16.msra.mxu0 0
  %1266 = vmatprep.subr.bf16.mxu0 0
  %1267 = vmatpush1.bf16.msra.mxu0 0
  %1268 = vmatprep.subr.bf16.mxu0 0
  %1269 = vmatpush1.bf16.msra.mxu0 0
  %1270 = vmatprep.subr.bf16.mxu0 0
  %1271 = vmatpush1.bf16.msra.mxu0 0
  %1272 = vmatprep.subr.bf16.mxu0 0
  %1273 = vmatpush1.bf16.msra.mxu0 0
  %1274 = vmatprep.mubr.bf16.mxu0 0
  %1275 = vmatmul.mubr.bf16.gmra.mrb[0].mxu0 %v1224
  %v1276 = vpop.f32.mrb[0].mxu0
  %v1277 = vadd.f32 0.0, %v1276
  %v1278 = vpop.f32.mrb[0].mxu0
  %v1279 = vpop.f32.mrb[0].mxu0
  %v1280 = vadd.f32 0.0, %v1279
  %v1281 = vpop.f32.mrb[0].mxu0
  %1282 = vmatprep.mubr.bf16.mxu0 0
  %1283 = vmatmul.mubr.bf16.gmra.mrb[0].mxu0 %v1227
  %v1284 = vpop.f32.mrb[0].mxu0
  %v1285 = vadd.f32 0.0, %v1284
  %v1286 = vpop.f32.mrb[0].mxu0
  %v1287 = vpop.f32.mrb[0].mxu0
  %v1288 = vadd.f32 0.0, %v1287
  %v1289 = vpop.f32.mrb[0].mxu0
  %1290 = vmatprep.mubr.bf16.mxu0 0
  %1291 = vmatmul.mubr.bf16.gmra.mrb[0].mxu0 %v1230
  %v1292 = vpop.f32.mrb[0].mxu0
  %v1293 = vadd.f32 0.0, %v1292
  %v1294 = vpop.f32.mrb[0].mxu0
  %v1295 = vpop.f32.mrb[0].mxu0
  %v1296 = vadd.f32 0.0, %v1295
  %v1297 = vpop.f32.mrb[0].mxu0
  %1298 = vmatprep.mubr.bf16.mxu0 0
  %1299 = vmatmul.mubr.bf16.gmra.mrb[0].mxu0 %v1233
  %v1300 = vpop.f32.mrb[0].mxu0
  %v1301 = vadd.f32 0.0, %v1300
  %v1302 = vpop.f32.mrb[0].mxu0
  %v1303 = vpop.f32.mrb[0].mxu0
  %v1304 = vadd.f32 0.0, %v1303
  %v1305 = vpop.f32.mrb[0].mxu0
  %1306 = vdwg.mxu0
  %v1307 = vpack.c.bf16 %v1280, %v1277
  %v1308 = vpack.c.bf16 %v1288, %v1285
  %v1309 = vpack.c.bf16 %v1296, %v1293
  %v1310 = vpack.c.bf16 %v1304, %v1301
  %vm1311 = vcmask 196608
  %vm1312 = vsmask.f32 256
  %vm1313 = vmand %vm1311, %vm1312
  %v1314 = vld [vmem:[%s4] sm:$0x1]
  %v1315 = vsel %vm1313, %v1307, %v1314
  %1316 = vst [vmem:[%s4] sm:$0x1] %v1315
  %v1319 = vunpack.c.l.s4 1966171168
  %v1320 = vunpack.c.0.s8 %v1319
  %v1321 = vlaneseq
  %v1322 = vshrl.u32 %v1321, 7
  %v1323 = vsub.s32 %v1320, %v1322
  %v1324 = vrot.slane %v1307, %v1323
  %v1326 = vunpack.c.l.s4 1966171168
  %v1327 = vunpack.c.0.s8 %v1326
  %v1328 = vlaneseq
  %v1329 = vshrl.u32 %v1328, 7
  %v1330 = vsub.s32 %v1327, %v1329
  %v1331 = vrot.slane %v1324, %v1330
  %v1333 = vshrl.u32 %v1331, 16
  %v1335 = vrot.slane %v1333, 7
  %v1336 = vrot.slane %v1335, 1
  %1337 = vrot.lane.b32.xlu0 %v1336, 25
  %v1338 = vpop.permute.xlu0 %1337
  %vm1340 = vcmask 401608
  %vm1341 = vmand %vm1340, %vm1312
  %v1342 = vld [vmem:[%s4] sm:$0x1]
  %v1343 = vsel %vm1341, %v1338, %v1342
  %1344 = vst [vmem:[%s4] sm:$0x1] %v1343
  %v1345 = vcombine.high %v1324, %v1324
  %v1347 = vunpack.c.l.s4 1966171168
  %v1348 = vunpack.c.0.s8 %v1347
  %v1349 = vlaneseq
  %v1350 = vshrl.u32 %v1349, 7
  %v1351 = vsub.s32 %v1348, %v1350
  %v1352 = vrot.slane %v1345, %v1351
  %1353 = vrot.lane.b32.xlu0 %v1352, 50
  %v1354 = vpop.permute.xlu0 %1353
  %vm1356 = vcmask 606608
  %vm1357 = vmand %vm1356, %vm1312
  %v1358 = vld [vmem:[%s4] sm:$0x1]
  %v1359 = vsel %vm1357, %v1354, %v1358
  %1360 = vst [vmem:[%s4] sm:$0x1] %v1359
  %v1362 = vshrl.u32 %v1352, 16
  %v1364 = vrot.slane %v1362, 7
  %v1365 = vrot.slane %v1364, 1
  %1366 = vrot.lane.b32.xlu0 %v1365, 75
  %v1367 = vpop.permute.xlu0 %1366
  %vm1369 = vcmask 811608
  %vm1370 = vmand %vm1369, %vm1312
  %v1371 = vld [vmem:[%s4] sm:$0x1]
  %v1372 = vsel %vm1370, %v1367, %v1371
  %1373 = vst [vmem:[%s4] sm:$0x1] %v1372
  %v1374 = vcombine.high %v1331, %v1331
  %1375 = vrot.lane.b32.xlu0 %v1374, 100
  %v1376 = vpop.permute.xlu0 %1375
  %vm1378 = vcmask 1016608
  %vm1379 = vmand %vm1378, %vm1312
  %v1380 = vld [vmem:[%s4] sm:$0x1]
  %v1381 = vsel %vm1379, %v1376, %v1380
  %1382 = vst [vmem:[%s4] sm:$0x1] %v1381
  %v1384 = vshrl.u32 %v1374, 16
  %v1386 = vrot.slane %v1384, 7
  %v1387 = vrot.slane %v1386, 1
  %1388 = vrot.lane.b32.xlu0 %v1387, 125
  %v1389 = vpop.permute.xlu0 %1388
  %v1390 = vrot.slane %v1389, 7
  %v1391 = vsel %vm57, %v1390, %v1389
  %vm1393 = vcmask 1041384
  %vm1394 = vmand %vm1393, %vm1312
  %vm1395 = vcmask 173057
  %vm1396 = vsmask.f32 1280
  %vm1397 = vmand %vm1395, %vm1396
  %vm1398 = vmor %vm1397, %vm1394
  %v1399 = vld [vmem:[%s4] sm:$0x3]
  %v1400 = vsel %vm1398, %v1391, %v1399
  %1401 = vst [vmem:[%s4] sm:$0x3] %v1400
  %v1402 = vcombine.high %v1352, %v1352
  %1403 = vrot.lane.b32.xlu0 %v1402, 22
  %v1404 = vpop.permute.xlu0 %1403
  %vm1406 = vcmask 377008
  %vm1407 = vmand %vm1406, %vm1312
  %v1408 = vld [vmem:[%s4 + $0x1] sm:$0x1]
  %v1409 = vsel %vm1407, %v1404, %v1408
  %1410 = vst [vmem:[%s4 + $0x1] sm:$0x1] %v1409
  %v1412 = vshrl.u32 %v1402, 16
  %v1414 = vrot.slane %v1412, 7
  %v1415 = vrot.slane %v1414, 1
  %1416 = vrot.lane.b32.xlu0 %v1415, 47
  %v1417 = vpop.permute.xlu0 %1416
  %vm1419 = vcmask 582008
  %vm1420 = vmand %vm1419, %vm1312
  %v1421 = vld [vmem:[%s4 + $0x1] sm:$0x1]
  %v1422 = vsel %vm1420, %v1417, %v1421
  %1423 = vst [vmem:[%s4 + $0x1] sm:$0x1] %v1422
  %v1424 = vcombine.high %v1307, %v1307
  %v1426 = vunpack.c.l.s4 1966171168
  %v1427 = vunpack.c.0.s8 %v1426
  %v1428 = vlaneseq
  %v1429 = vshrl.u32 %v1428, 7
  %v1430 = vsub.s32 %v1427, %v1429
  %v1431 = vrot.slane %v1424, %v1430
  %v1433 = vunpack.c.l.s4 1966171168
  %v1434 = vunpack.c.0.s8 %v1433
  %v1435 = vlaneseq
  %v1436 = vshrl.u32 %v1435, 7
  %v1437 = vsub.s32 %v1434, %v1436
  %v1438 = vrot.slane %v1431, %v1437
  %1439 = vrot.lane.b32.xlu0 %v1438, 72
  %v1440 = vpop.permute.xlu0 %1439
  %vm1442 = vcmask 787008
  %vm1443 = vmand %vm1442, %vm1312
  %v1444 = vld [vmem:[%s4 + $0x1] sm:$0x1]
  %v1445 = vsel %vm1443, %v1440, %v1444
  %1446 = vst [vmem:[%s4 + $0x1] sm:$0x1] %v1445
  %v1448 = vshrl.u32 %v1438, 16
  %v1450 = vrot.slane %v1448, 7
  %v1451 = vrot.slane %v1450, 1
  %1452 = vrot.lane.b32.xlu0 %v1451, 97
  %v1453 = vpop.permute.xlu0 %1452
  %vm1455 = vcmask 992008
  %vm1456 = vmand %vm1455, %vm1312
  %v1457 = vld [vmem:[%s4 + $0x1] sm:$0x1]
  %v1458 = vsel %vm1456, %v1453, %v1457
  %1459 = vst [vmem:[%s4 + $0x1] sm:$0x1] %v1458
  %v1460 = vcombine.high %v1431, %v1431
  %v1462 = vunpack.c.l.s4 1966171168
  %v1463 = vunpack.c.0.s8 %v1462
  %v1464 = vlaneseq
  %v1465 = vshrl.u32 %v1464, 7
  %v1466 = vsub.s32 %v1463, %v1465
  %v1467 = vrot.slane %v1460, %v1466
  %1468 = vrot.lane.b32.xlu0 %v1467, 122
  %v1469 = vpop.permute.xlu0 %1468
  %v1470 = vrot.slane %v1469, 7
  %vm1471 = vcmask 998400
  %v1472 = vsel %vm1471, %v1470, %v1469
  %vm1474 = vcmask 1041360
  %vm1475 = vmand %vm1474, %vm1312
  %vm1476 = vcmask 148481
  %vm1477 = vmand %vm1476, %vm1396
  %vm1478 = vmor %vm1477, %vm1475
  %v1479 = vld [vmem:[%s4 + $0x1] sm:$0x3]
  %v1480 = vsel %vm1478, %v1472, %v1479
  %1481 = vst [vmem:[%s4 + $0x1] sm:$0x3] %v1480
  %v1483 = vshrl.u32 %v1467, 16
  %v1485 = vrot.slane %v1483, 7
  %v1486 = vrot.slane %v1485, 1
  %1487 = vrot.lane.b32.xlu0 %v1486, 19
  %v1488 = vpop.permute.xlu0 %1487
  %vm1490 = vcmask 352408
  %vm1491 = vmand %vm1490, %vm1312
  %v1492 = vld [vmem:[%s4 + $0x2] sm:$0x1]
  %v1493 = vsel %vm1491, %v1488, %v1492
  %1494 = vst [vmem:[%s4 + $0x2] sm:$0x1] %v1493
  %v1495 = vcombine.high %v1438, %v1438
  %1496 = vrot.lane.b32.xlu0 %v1495, 44
  %v1497 = vpop.permute.xlu0 %1496
  %vm1499 = vcmask 557408
  %vm1500 = vmand %vm1499, %vm1312
  %v1501 = vld [vmem:[%s4 + $0x2] sm:$0x1]
  %v1502 = vsel %vm1500, %v1497, %v1501
  %1503 = vst [vmem:[%s4 + $0x2] sm:$0x1] %v1502
  %v1505 = vshrl.u32 %v1495, 16
  %v1507 = vrot.slane %v1505, 7
  %v1508 = vrot.slane %v1507, 1
  %1509 = vrot.lane.b32.xlu0 %v1508, 69
  %v1510 = vpop.permute.xlu0 %1509
  %vm1512 = vcmask 762408
  %vm1513 = vmand %vm1512, %vm1312
  %v1514 = vld [vmem:[%s4 + $0x2] sm:$0x1]
  %v1515 = vsel %vm1513, %v1510, %v1514
  %1516 = vst [vmem:[%s4 + $0x2] sm:$0x1] %v1515
  %v1517 = vcombine.high %v1467, %v1467
  %1518 = vrot.lane.b32.xlu0 %v1517, 94
  %v1519 = vpop.permute.xlu0 %1518
  %vm1521 = vcmask 967408
  %vm1522 = vmand %vm1521, %vm1312
  %v1523 = vld [vmem:[%s4 + $0x2] sm:$0x1]
  %v1524 = vsel %vm1522, %v1519, %v1523
  %1525 = vst [vmem:[%s4 + $0x2] sm:$0x1] %v1524
  %v1527 = vshrl.u32 %v1517, 16
  %v1529 = vrot.slane %v1527, 7
  %v1530 = vrot.slane %v1529, 1
  %1531 = vrot.lane.b32.xlu0 %v1530, 119
  %v1532 = vpop.permute.xlu0 %1531
  %v1533 = vrot.slane %v1532, 7
  %vm1534 = vcmask 973824
  %v1535 = vsel %vm1534, %v1533, %v1532
  %vm1537 = vcmask 1041336
  %vm1538 = vmand %vm1537, %vm1312
  %vm1539 = vcmask 123905
  %vm1540 = vmand %vm1539, %vm1396
  %vm1541 = vmor %vm1540, %vm1538
  %v1542 = vld [vmem:[%s4 + $0x2] sm:$0x3]
  %v1543 = vsel %vm1541, %v1535, %v1542
  %1544 = vst [vmem:[%s4 + $0x2] sm:$0x3] %v1543
  %v1547 = vunpack.c.l.s4 1966171168
  %v1548 = vunpack.c.0.s8 %v1547
  %v1549 = vlaneseq
  %v1550 = vshrl.u32 %v1549, 7
  %v1551 = vsub.s32 %v1548, %v1550
  %v1552 = vrot.slane %v1308, %v1551
  %v1554 = vunpack.c.l.s4 1966171168
  %v1555 = vunpack.c.0.s8 %v1554
  %v1556 = vlaneseq
  %v1557 = vshrl.u32 %v1556, 7
  %v1558 = vsub.s32 %v1555, %v1557
  %v1559 = vrot.slane %v1552, %v1558
  %1560 = vrot.lane.b32.xlu0 %v1559, 16
  %v1561 = vpop.permute.xlu0 %1560
  %vm1563 = vcmask 327808
  %vm1564 = vmand %vm1563, %vm1312
  %v1565 = vld [vmem:[%s4 + $0x3] sm:$0x1]
  %v1566 = vsel %vm1564, %v1561, %v1565
  %1567 = vst [vmem:[%s4 + $0x3] sm:$0x1] %v1566
  %v1569 = vshrl.u32 %v1559, 16
  %v1571 = vrot.slane %v1569, 7
  %v1572 = vrot.slane %v1571, 1
  %1573 = vrot.lane.b32.xlu0 %v1572, 41
  %v1574 = vpop.permute.xlu0 %1573
  %vm1576 = vcmask 532808
  %vm1577 = vmand %vm1576, %vm1312
  %v1578 = vld [vmem:[%s4 + $0x3] sm:$0x1]
  %v1579 = vsel %vm1577, %v1574, %v1578
  %1580 = vst [vmem:[%s4 + $0x3] sm:$0x1] %v1579
  %v1581 = vcombine.high %v1552, %v1552
  %v1583 = vunpack.c.l.s4 1966171168
  %v1584 = vunpack.c.0.s8 %v1583
  %v1585 = vlaneseq
  %v1586 = vshrl.u32 %v1585, 7
  %v1587 = vsub.s32 %v1584, %v1586
  %v1588 = vrot.slane %v1581, %v1587
  %1589 = vrot.lane.b32.xlu0 %v1588, 66
  %v1590 = vpop.permute.xlu0 %1589
  %vm1592 = vcmask 737808
  %vm1593 = vmand %vm1592, %vm1312
  %v1594 = vld [vmem:[%s4 + $0x3] sm:$0x1]
  %v1595 = vsel %vm1593, %v1590, %v1594
  %1596 = vst [vmem:[%s4 + $0x3] sm:$0x1] %v1595
  %v1598 = vshrl.u32 %v1588, 16
  %v1600 = vrot.slane %v1598, 7
  %v1601 = vrot.slane %v1600, 1
  %1602 = vrot.lane.b32.xlu0 %v1601, 91
  %v1603 = vpop.permute.xlu0 %1602
  %vm1605 = vcmask 942808
  %vm1606 = vmand %vm1605, %vm1312
  %v1607 = vld [vmem:[%s4 + $0x3] sm:$0x1]
  %v1608 = vsel %vm1606, %v1603, %v1607
  %1609 = vst [vmem:[%s4 + $0x3] sm:$0x1] %v1608
  %v1610 = vcombine.high %v1559, %v1559
  %1611 = vrot.lane.b32.xlu0 %v1610, 116
  %v1612 = vpop.permute.xlu0 %1611
  %v1613 = vrot.slane %v1612, 7
  %vm1614 = vcmask 949248
  %v1615 = vsel %vm1614, %v1613, %v1612
  %vm1617 = vcmask 1041312
  %vm1618 = vmand %vm1617, %vm1312
  %vm1619 = vcmask 99329
  %vm1620 = vmand %vm1619, %vm1396
  %vm1621 = vmor %vm1620, %vm1618
  %v1622 = vld [vmem:[%s4 + $0x3] sm:$0x3]
  %v1623 = vsel %vm1621, %v1615, %v1622
  %1624 = vst [vmem:[%s4 + $0x3] sm:$0x3] %v1623
  %v1626 = vshrl.u32 %v1610, 16
  %v1628 = vrot.slane %v1626, 7
  %v1629 = vrot.slane %v1628, 1
  %1630 = vrot.lane.b32.xlu0 %v1629, 13
  %v1631 = vpop.permute.xlu0 %1630
  %vm1633 = vcmask 303208
  %vm1634 = vmand %vm1633, %vm1312
  %v1635 = vld [vmem:[%s4 + $0x4] sm:$0x1]
  %v1636 = vsel %vm1634, %v1631, %v1635
  %1637 = vst [vmem:[%s4 + $0x4] sm:$0x1] %v1636
  %v1638 = vcombine.high %v1588, %v1588
  %1639 = vrot.lane.b32.xlu0 %v1638, 38
  %v1640 = vpop.permute.xlu0 %1639
  %vm1642 = vcmask 508208
  %vm1643 = vmand %vm1642, %vm1312
  %v1644 = vld [vmem:[%s4 + $0x4] sm:$0x1]
  %v1645 = vsel %vm1643, %v1640, %v1644
  %1646 = vst [vmem:[%s4 + $0x4] sm:$0x1] %v1645
  %v1648 = vshrl.u32 %v1638, 16
  %v1650 = vrot.slane %v1648, 7
  %v1651 = vrot.slane %v1650, 1
  %1652 = vrot.lane.b32.xlu0 %v1651, 63
  %v1653 = vpop.permute.xlu0 %1652
  %vm1655 = vcmask 713208
  %vm1656 = vmand %vm1655, %vm1312
  %v1657 = vld [vmem:[%s4 + $0x4] sm:$0x1]
  %v1658 = vsel %vm1656, %v1653, %v1657
  %1659 = vst [vmem:[%s4 + $0x4] sm:$0x1] %v1658
  %v1660 = vcombine.high %v1308, %v1308
  %v1662 = vunpack.c.l.s4 1966171168
  %v1663 = vunpack.c.0.s8 %v1662
  %v1664 = vlaneseq
  %v1665 = vshrl.u32 %v1664, 7
  %v1666 = vsub.s32 %v1663, %v1665
  %v1667 = vrot.slane %v1660, %v1666
  %v1669 = vunpack.c.l.s4 1966171168
  %v1670 = vunpack.c.0.s8 %v1669
  %v1671 = vlaneseq
  %v1672 = vshrl.u32 %v1671, 7
  %v1673 = vsub.s32 %v1670, %v1672
  %v1674 = vrot.slane %v1667, %v1673
  %1675 = vrot.lane.b32.xlu0 %v1674, 88
  %v1676 = vpop.permute.xlu0 %1675
  %vm1678 = vcmask 918208
  %vm1679 = vmand %vm1678, %vm1312
  %v1680 = vld [vmem:[%s4 + $0x4] sm:$0x1]
  %v1681 = vsel %vm1679, %v1676, %v1680
  %1682 = vst [vmem:[%s4 + $0x4] sm:$0x1] %v1681
  %v1684 = vshrl.u32 %v1674, 16
  %v1686 = vrot.slane %v1684, 7
  %v1687 = vrot.slane %v1686, 1
  %1688 = vrot.lane.b32.xlu0 %v1687, 113
  %v1689 = vpop.permute.xlu0 %1688
  %v1690 = vrot.slane %v1689, 7
  %v1691 = vsel %vm87, %v1690, %v1689
  %vm1693 = vcmask 1041288
  %vm1694 = vmand %vm1693, %vm1312
  %vm1695 = vcmask 74753
  %vm1696 = vmand %vm1695, %vm1396
  %vm1697 = vmor %vm1696, %vm1694
  %v1698 = vld [vmem:[%s4 + $0x4] sm:$0x3]
  %v1699 = vsel %vm1697, %v1691, %v1698
  %1700 = vst [vmem:[%s4 + $0x4] sm:$0x3] %v1699
  %v1701 = vcombine.high %v1667, %v1667
  %v1703 = vunpack.c.l.s4 1966171168
  %v1704 = vunpack.c.0.s8 %v1703
  %v1705 = vlaneseq
  %v1706 = vshrl.u32 %v1705, 7
  %v1707 = vsub.s32 %v1704, %v1706
  %v1708 = vrot.slane %v1701, %v1707
  %1709 = vrot.lane.b32.xlu0 %v1708, 10
  %v1710 = vpop.permute.xlu0 %1709
  %vm1712 = vcmask 278608
  %vm1713 = vmand %vm1712, %vm1312
  %v1714 = vld [vmem:[%s4 + $0x5] sm:$0x1]
  %v1715 = vsel %vm1713, %v1710, %v1714
  %1716 = vst [vmem:[%s4 + $0x5] sm:$0x1] %v1715
  %v1718 = vshrl.u32 %v1708, 16
  %v1720 = vrot.slane %v1718, 7
  %v1721 = vrot.slane %v1720, 1
  %1722 = vrot.lane.b32.xlu0 %v1721, 35
  %v1723 = vpop.permute.xlu0 %1722
  %vm1725 = vcmask 483608
  %vm1726 = vmand %vm1725, %vm1312
  %v1727 = vld [vmem:[%s4 + $0x5] sm:$0x1]
  %v1728 = vsel %vm1726, %v1723, %v1727
  %1729 = vst [vmem:[%s4 + $0x5] sm:$0x1] %v1728
  %v1730 = vcombine.high %v1674, %v1674
  %1731 = vrot.lane.b32.xlu0 %v1730, 60
  %v1732 = vpop.permute.xlu0 %1731
  %vm1734 = vcmask 688608
  %vm1735 = vmand %vm1734, %vm1312
  %v1736 = vld [vmem:[%s4 + $0x5] sm:$0x1]
  %v1737 = vsel %vm1735, %v1732, %v1736
  %1738 = vst [vmem:[%s4 + $0x5] sm:$0x1] %v1737
  %v1740 = vshrl.u32 %v1730, 16
  %v1742 = vrot.slane %v1740, 7
  %v1743 = vrot.slane %v1742, 1
  %1744 = vrot.lane.b32.xlu0 %v1743, 85
  %v1745 = vpop.permute.xlu0 %1744
  %vm1747 = vcmask 893608
  %vm1748 = vmand %vm1747, %vm1312
  %v1749 = vld [vmem:[%s4 + $0x5] sm:$0x1]
  %v1750 = vsel %vm1748, %v1745, %v1749
  %1751 = vst [vmem:[%s4 + $0x5] sm:$0x1] %v1750
  %v1752 = vcombine.high %v1708, %v1708
  %1753 = vrot.lane.b32.xlu0 %v1752, 110
  %v1754 = vpop.permute.xlu0 %1753
  %v1755 = vrot.slane %v1754, 7
  %v1756 = vsel %vm117, %v1755, %v1754
  %vm1758 = vcmask 1041264
  %vm1759 = vmand %vm1758, %vm1312
  %vm1760 = vcmask 50177
  %vm1761 = vmand %vm1760, %vm1396
  %vm1762 = vmor %vm1761, %vm1759
  %v1763 = vld [vmem:[%s4 + $0x5] sm:$0x3]
  %v1764 = vsel %vm1762, %v1756, %v1763
  %1765 = vst [vmem:[%s4 + $0x5] sm:$0x3] %v1764
  %v1767 = vshrl.u32 %v1752, 16
  %v1769 = vrot.slane %v1767, 7
  %v1770 = vrot.slane %v1769, 1
  %1771 = vrot.lane.b32.xlu0 %v1770, 7
  %v1772 = vpop.permute.xlu0 %1771
  %vm1774 = vcmask 254008
  %vm1775 = vmand %vm1774, %vm1312
  %v1776 = vld [vmem:[%s4 + $0x6] sm:$0x1]
  %v1777 = vsel %vm1775, %v1772, %v1776
  %1778 = vst [vmem:[%s4 + $0x6] sm:$0x1] %v1777
  %v1781 = vunpack.c.l.s4 1966171168
  %v1782 = vunpack.c.0.s8 %v1781
  %v1783 = vlaneseq
  %v1784 = vshrl.u32 %v1783, 7
  %v1785 = vsub.s32 %v1782, %v1784
  %v1786 = vrot.slane %v1309, %v1785
  %v1788 = vunpack.c.l.s4 1966171168
  %v1789 = vunpack.c.0.s8 %v1788
  %v1790 = vlaneseq
  %v1791 = vshrl.u32 %v1790, 7
  %v1792 = vsub.s32 %v1789, %v1791
  %v1793 = vrot.slane %v1786, %v1792
  %v1795 = vshll.u32 %v1793, 16
  %vm1798 = vsmask.f32 7938
  %vm1799 = vmand %vm1311, %vm1798
  %v1800 = vld [vmem:[%s4] sm:$0x1]
  %v1801 = vsel %vm1799, %v1795, %v1800
  %1802 = vst [vmem:[%s4] sm:$0x1] %v1801
  %1803 = vrot.lane.b32.xlu0 %v1793, 25
  %v1804 = vpop.permute.xlu0 %1803
  %vm1806 = vmand %vm1340, %vm1798
  %v1807 = vld [vmem:[%s4] sm:$0x1]
  %v1808 = vsel %vm1806, %v1804, %v1807
  %1809 = vst [vmem:[%s4] sm:$0x1] %v1808
  %v1810 = vcombine.high %v1786, %v1786
  %v1812 = vunpack.c.l.s4 1966171168
  %v1813 = vunpack.c.0.s8 %v1812
  %v1814 = vlaneseq
  %v1815 = vshrl.u32 %v1814, 7
  %v1816 = vsub.s32 %v1813, %v1815
  %v1817 = vrot.slane %v1810, %v1816
  %v1819 = vshll.u32 %v1817, 16
  %1821 = vrot.lane.b32.xlu0 %v1819, 50
  %v1822 = vpop.permute.xlu0 %1821
  %vm1824 = vmand %vm1356, %vm1798
  %v1825 = vld [vmem:[%s4] sm:$0x1]
  %v1826 = vsel %vm1824, %v1822, %v1825
  %1827 = vst [vmem:[%s4] sm:$0x1] %v1826
  %1828 = vrot.lane.b32.xlu0 %v1817, 75
  %v1829 = vpop.permute.xlu0 %1828
  %vm1831 = vmand %vm1369, %vm1798
  %v1832 = vld [vmem:[%s4] sm:$0x1]
  %v1833 = vsel %vm1831, %v1829, %v1832
  %1834 = vst [vmem:[%s4] sm:$0x1] %v1833
  %v1835 = vcombine.high %v1793, %v1793
  %v1837 = vshll.u32 %v1835, 16
  %1839 = vrot.lane.b32.xlu0 %v1837, 100
  %v1840 = vpop.permute.xlu0 %1839
  %vm1842 = vmand %vm1378, %vm1798
  %v1843 = vld [vmem:[%s4] sm:$0x1]
  %v1844 = vsel %vm1842, %v1840, %v1843
  %1845 = vst [vmem:[%s4] sm:$0x1] %v1844
  %1846 = vrot.lane.b32.xlu0 %v1835, 125
  %v1847 = vpop.permute.xlu0 %1846
  %v1848 = vrot.slane %v1847, 7
  %v1849 = vsel %vm57, %v1848, %v1847
  %vm1851 = vmand %vm1393, %vm1798
  %vm1852 = vsmask.f32 7942
  %vm1853 = vmand %vm1395, %vm1852
  %vm1854 = vmor %vm1853, %vm1851
  %v1855 = vld [vmem:[%s4] sm:$0x3]
  %v1856 = vsel %vm1854, %v1849, %v1855
  %1857 = vst [vmem:[%s4] sm:$0x3] %v1856
  %v1858 = vcombine.high %v1817, %v1817
  %v1860 = vshll.u32 %v1858, 16
  %1862 = vrot.lane.b32.xlu0 %v1860, 22
  %v1863 = vpop.permute.xlu0 %1862
  %vm1865 = vmand %vm1406, %vm1798
  %v1866 = vld [vmem:[%s4 + $0x1] sm:$0x1]
  %v1867 = vsel %vm1865, %v1863, %v1866
  %1868 = vst [vmem:[%s4 + $0x1] sm:$0x1] %v1867
  %1869 = vrot.lane.b32.xlu0 %v1858, 47
  %v1870 = vpop.permute.xlu0 %1869
  %vm1872 = vmand %vm1419, %vm1798
  %v1873 = vld [vmem:[%s4 + $0x1] sm:$0x1]
  %v1874 = vsel %vm1872, %v1870, %v1873
  %1875 = vst [vmem:[%s4 + $0x1] sm:$0x1] %v1874
  %v1876 = vcombine.high %v1309, %v1309
  %v1878 = vunpack.c.l.s4 1966171168
  %v1879 = vunpack.c.0.s8 %v1878
  %v1880 = vlaneseq
  %v1881 = vshrl.u32 %v1880, 7
  %v1882 = vsub.s32 %v1879, %v1881
  %v1883 = vrot.slane %v1876, %v1882
  %v1885 = vunpack.c.l.s4 1966171168
  %v1886 = vunpack.c.0.s8 %v1885
  %v1887 = vlaneseq
  %v1888 = vshrl.u32 %v1887, 7
  %v1889 = vsub.s32 %v1886, %v1888
  %v1890 = vrot.slane %v1883, %v1889
  %v1892 = vshll.u32 %v1890, 16
  %1894 = vrot.lane.b32.xlu0 %v1892, 72
  %v1895 = vpop.permute.xlu0 %1894
  %vm1897 = vmand %vm1442, %vm1798
  %v1898 = vld [vmem:[%s4 + $0x1] sm:$0x1]
  %v1899 = vsel %vm1897, %v1895, %v1898
  %1900 = vst [vmem:[%s4 + $0x1] sm:$0x1] %v1899
  %1901 = vrot.lane.b32.xlu0 %v1890, 97
  %v1902 = vpop.permute.xlu0 %1901
  %vm1904 = vmand %vm1455, %vm1798
  %v1905 = vld [vmem:[%s4 + $0x1] sm:$0x1]
  %v1906 = vsel %vm1904, %v1902, %v1905
  %1907 = vst [vmem:[%s4 + $0x1] sm:$0x1] %v1906
  %v1908 = vcombine.high %v1883, %v1883
  %v1910 = vunpack.c.l.s4 1966171168
  %v1911 = vunpack.c.0.s8 %v1910
  %v1912 = vlaneseq
  %v1913 = vshrl.u32 %v1912, 7
  %v1914 = vsub.s32 %v1911, %v1913
  %v1915 = vrot.slane %v1908, %v1914
  %v1917 = vshll.u32 %v1915, 16
  %1919 = vrot.lane.b32.xlu0 %v1917, 122
  %v1920 = vpop.permute.xlu0 %1919
  %v1921 = vrot.slane %v1920, 7
  %v1922 = vsel %vm1471, %v1921, %v1920
  %vm1924 = vmand %vm1474, %vm1798
  %vm1925 = vmand %vm1476, %vm1852
  %vm1926 = vmor %vm1925, %vm1924
  %v1927 = vld [vmem:[%s4 + $0x1] sm:$0x3]
  %v1928 = vsel %vm1926, %v1922, %v1927
  %1929 = vst [vmem:[%s4 + $0x1] sm:$0x3] %v1928
  %1930 = vrot.lane.b32.xlu0 %v1915, 19
  %v1931 = vpop.permute.xlu0 %1930
  %vm1933 = vmand %vm1490, %vm1798
  %v1934 = vld [vmem:[%s4 + $0x2] sm:$0x1]
  %v1935 = vsel %vm1933, %v1931, %v1934
  %1936 = vst [vmem:[%s4 + $0x2] sm:$0x1] %v1935
  %v1937 = vcombine.high %v1890, %v1890
  %v1939 = vshll.u32 %v1937, 16
  %1941 = vrot.lane.b32.xlu0 %v1939, 44
  %v1942 = vpop.permute.xlu0 %1941
  %vm1944 = vmand %vm1499, %vm1798
  %v1945 = vld [vmem:[%s4 + $0x2] sm:$0x1]
  %v1946 = vsel %vm1944, %v1942, %v1945
  %1947 = vst [vmem:[%s4 + $0x2] sm:$0x1] %v1946
  %1948 = vrot.lane.b32.xlu0 %v1937, 69
  %v1949 = vpop.permute.xlu0 %1948
  %vm1951 = vmand %vm1512, %vm1798
  %v1952 = vld [vmem:[%s4 + $0x2] sm:$0x1]
  %v1953 = vsel %vm1951, %v1949, %v1952
  %1954 = vst [vmem:[%s4 + $0x2] sm:$0x1] %v1953
  %v1955 = vcombine.high %v1915, %v1915
  %v1957 = vshll.u32 %v1955, 16
  %1959 = vrot.lane.b32.xlu0 %v1957, 94
  %v1960 = vpop.permute.xlu0 %1959
  %vm1962 = vmand %vm1521, %vm1798
  %v1963 = vld [vmem:[%s4 + $0x2] sm:$0x1]
  %v1964 = vsel %vm1962, %v1960, %v1963
  %1965 = vst [vmem:[%s4 + $0x2] sm:$0x1] %v1964
  %1966 = vrot.lane.b32.xlu0 %v1955, 119
  %v1967 = vpop.permute.xlu0 %1966
  %v1968 = vrot.slane %v1967, 7
  %v1969 = vsel %vm1534, %v1968, %v1967
  %vm1971 = vmand %vm1537, %vm1798
  %vm1972 = vmand %vm1539, %vm1852
  %vm1973 = vmor %vm1972, %vm1971
  %v1974 = vld [vmem:[%s4 + $0x2] sm:$0x3]
  %v1975 = vsel %vm1973, %v1969, %v1974
  %1976 = vst [vmem:[%s4 + $0x2] sm:$0x3] %v1975
  %v1979 = vunpack.c.l.s4 1966171168
  %v1980 = vunpack.c.0.s8 %v1979
  %v1981 = vlaneseq
  %v1982 = vshrl.u32 %v1981, 7
  %v1983 = vsub.s32 %v1980, %v1982
  %v1984 = vrot.slane %v1310, %v1983
  %v1986 = vunpack.c.l.s4 1966171168
  %v1987 = vunpack.c.0.s8 %v1986
  %v1988 = vlaneseq
  %v1989 = vshrl.u32 %v1988, 7
  %v1990 = vsub.s32 %v1987, %v1989
  %v1991 = vrot.slane %v1984, %v1990
  %v1993 = vshll.u32 %v1991, 16
  %1995 = vrot.lane.b32.xlu0 %v1993, 16
  %v1996 = vpop.permute.xlu0 %1995
  %vm1998 = vmand %vm1563, %vm1798
  %v1999 = vld [vmem:[%s4 + $0x3] sm:$0x1]
  %v2000 = vsel %vm1998, %v1996, %v1999
  %2001 = vst [vmem:[%s4 + $0x3] sm:$0x1] %v2000
  %2002 = vrot.lane.b32.xlu0 %v1991, 41
  %v2003 = vpop.permute.xlu0 %2002
  %vm2005 = vmand %vm1576, %vm1798
  %v2006 = vld [vmem:[%s4 + $0x3] sm:$0x1]
  %v2007 = vsel %vm2005, %v2003, %v2006
  %2008 = vst [vmem:[%s4 + $0x3] sm:$0x1] %v2007
  %v2009 = vcombine.high %v1984, %v1984
  %v2011 = vunpack.c.l.s4 1966171168
  %v2012 = vunpack.c.0.s8 %v2011
  %v2013 = vlaneseq
  %v2014 = vshrl.u32 %v2013, 7
  %v2015 = vsub.s32 %v2012, %v2014
  %v2016 = vrot.slane %v2009, %v2015
  %v2018 = vshll.u32 %v2016, 16
  %2020 = vrot.lane.b32.xlu0 %v2018, 66
  %v2021 = vpop.permute.xlu0 %2020
  %vm2023 = vmand %vm1592, %vm1798
  %v2024 = vld [vmem:[%s4 + $0x3] sm:$0x1]
  %v2025 = vsel %vm2023, %v2021, %v2024
  %2026 = vst [vmem:[%s4 + $0x3] sm:$0x1] %v2025
  %2027 = vrot.lane.b32.xlu0 %v2016, 91
  %v2028 = vpop.permute.xlu0 %2027
  %vm2030 = vmand %vm1605, %vm1798
  %v2031 = vld [vmem:[%s4 + $0x3] sm:$0x1]
  %v2032 = vsel %vm2030, %v2028, %v2031
  %2033 = vst [vmem:[%s4 + $0x3] sm:$0x1] %v2032
  %v2034 = vcombine.high %v1991, %v1991
  %v2036 = vshll.u32 %v2034, 16
  %2038 = vrot.lane.b32.xlu0 %v2036, 116
  %v2039 = vpop.permute.xlu0 %2038
  %v2040 = vrot.slane %v2039, 7
  %v2041 = vsel %vm1614, %v2040, %v2039
  %vm2043 = vmand %vm1617, %vm1798
  %vm2044 = vmand %vm1619, %vm1852
  %vm2045 = vmor %vm2044, %vm2043
  %v2046 = vld [vmem:[%s4 + $0x3] sm:$0x3]
  %v2047 = vsel %vm2045, %v2041, %v2046
  %2048 = vst [vmem:[%s4 + $0x3] sm:$0x3] %v2047
  %2049 = vrot.lane.b32.xlu0 %v2034, 13
  %v2050 = vpop.permute.xlu0 %2049
  %vm2052 = vmand %vm1633, %vm1798
  %v2053 = vld [vmem:[%s4 + $0x4] sm:$0x1]
  %v2054 = vsel %vm2052, %v2050, %v2053
  %2055 = vst [vmem:[%s4 + $0x4] sm:$0x1] %v2054
  %v2056 = vcombine.high %v2016, %v2016
  %v2058 = vshll.u32 %v2056, 16
  %2060 = vrot.lane.b32.xlu0 %v2058, 38
  %v2061 = vpop.permute.xlu0 %2060
  %vm2063 = vmand %vm1642, %vm1798
  %v2064 = vld [vmem:[%s4 + $0x4] sm:$0x1]
  %v2065 = vsel %vm2063, %v2061, %v2064
  %2066 = vst [vmem:[%s4 + $0x4] sm:$0x1] %v2065
  %2067 = vrot.lane.b32.xlu0 %v2056, 63
  %v2068 = vpop.permute.xlu0 %2067
  %vm2070 = vmand %vm1655, %vm1798
  %v2071 = vld [vmem:[%s4 + $0x4] sm:$0x1]
  %v2072 = vsel %vm2070, %v2068, %v2071
  %2073 = vst [vmem:[%s4 + $0x4] sm:$0x1] %v2072
  %v2074 = vcombine.high %v1310, %v1310
  %v2076 = vunpack.c.l.s4 1966171168
  %v2077 = vunpack.c.0.s8 %v2076
  %v2078 = vlaneseq
  %v2079 = vshrl.u32 %v2078, 7
  %v2080 = vsub.s32 %v2077, %v2079
  %v2081 = vrot.slane %v2074, %v2080
  %v2083 = vunpack.c.l.s4 1966171168
  %v2084 = vunpack.c.0.s8 %v2083
  %v2085 = vlaneseq
  %v2086 = vshrl.u32 %v2085, 7
  %v2087 = vsub.s32 %v2084, %v2086
  %v2088 = vrot.slane %v2081, %v2087
  %v2090 = vshll.u32 %v2088, 16
  %2092 = vrot.lane.b32.xlu0 %v2090, 88
  %v2093 = vpop.permute.xlu0 %2092
  %vm2095 = vmand %vm1678, %vm1798
  %v2096 = vld [vmem:[%s4 + $0x4] sm:$0x1]
  %v2097 = vsel %vm2095, %v2093, %v2096
  %2098 = vst [vmem:[%s4 + $0x4] sm:$0x1] %v2097
  %2099 = vrot.lane.b32.xlu0 %v2088, 113
  %v2100 = vpop.permute.xlu0 %2099
  %v2101 = vrot.slane %v2100, 7
  %v2102 = vsel %vm87, %v2101, %v2100
  %vm2104 = vmand %vm1693, %vm1798
  %vm2105 = vmand %vm1695, %vm1852
  %vm2106 = vmor %vm2105, %vm2104
  %v2107 = vld [vmem:[%s4 + $0x4] sm:$0x3]
  %v2108 = vsel %vm2106, %v2102, %v2107
  %2109 = vst [vmem:[%s4 + $0x4] sm:$0x3] %v2108
  %v2110 = vcombine.high %v2081, %v2081
  %v2112 = vunpack.c.l.s4 1966171168
  %v2113 = vunpack.c.0.s8 %v2112
  %v2114 = vlaneseq
  %v2115 = vshrl.u32 %v2114, 7
  %v2116 = vsub.s32 %v2113, %v2115
  %v2117 = vrot.slane %v2110, %v2116
  %v2119 = vshll.u32 %v2117, 16
  %2121 = vrot.lane.b32.xlu0 %v2119, 10
  %v2122 = vpop.permute.xlu0 %2121
  %vm2124 = vmand %vm1712, %vm1798
  %v2125 = vld [vmem:[%s4 + $0x5] sm:$0x1]
  %v2126 = vsel %vm2124, %v2122, %v2125
  %2127 = vst [vmem:[%s4 + $0x5] sm:$0x1] %v2126
  %2128 = vrot.lane.b32.xlu0 %v2117, 35
  %v2129 = vpop.permute.xlu0 %2128
  %vm2131 = vmand %vm1725, %vm1798
  %v2132 = vld [vmem:[%s4 + $0x5] sm:$0x1]
  %v2133 = vsel %vm2131, %v2129, %v2132
  %2134 = vst [vmem:[%s4 + $0x5] sm:$0x1] %v2133
  %v2135 = vcombine.high %v2088, %v2088
  %v2137 = vshll.u32 %v2135, 16
  %2139 = vrot.lane.b32.xlu0 %v2137, 60
  %v2140 = vpop.permute.xlu0 %2139
  %vm2142 = vmand %vm1734, %vm1798
  %v2143 = vld [vmem:[%s4 + $0x5] sm:$0x1]
  %v2144 = vsel %vm2142, %v2140, %v2143
  %2145 = vst [vmem:[%s4 + $0x5] sm:$0x1] %v2144
  %2146 = vrot.lane.b32.xlu0 %v2135, 85
  %v2147 = vpop.permute.xlu0 %2146
  %vm2149 = vmand %vm1747, %vm1798
  %v2150 = vld [vmem:[%s4 + $0x5] sm:$0x1]
  %v2151 = vsel %vm2149, %v2147, %v2150
  %2152 = vst [vmem:[%s4 + $0x5] sm:$0x1] %v2151
  %v2153 = vcombine.high %v2117, %v2117
  %v2155 = vshll.u32 %v2153, 16
  %2157 = vrot.lane.b32.xlu0 %v2155, 110
  %v2158 = vpop.permute.xlu0 %2157
  %v2159 = vrot.slane %v2158, 7
  %v2160 = vsel %vm117, %v2159, %v2158
  %vm2162 = vmand %vm1758, %vm1798
  %vm2163 = vmand %vm1760, %vm1852
  %vm2164 = vmor %vm2163, %vm2162
  %v2165 = vld [vmem:[%s4 + $0x5] sm:$0x3]
  %v2166 = vsel %vm2164, %v2160, %v2165
  %2167 = vst [vmem:[%s4 + $0x5] sm:$0x3] %v2166
  %2168 = vrot.lane.b32.xlu0 %v2153, 7
  %v2169 = vpop.permute.xlu0 %2168
  %vm2171 = vmand %vm1774, %vm1798
  %v2172 = vld [vmem:[%s4 + $0x6] sm:$0x1]
  %v2173 = vsel %vm2171, %v2169, %v2172
  %2174 = vst [vmem:[%s4 + $0x6] sm:$0x1] %v2173
  // Predicated region
  $region18: #{lenet_forward.4} parent=0 // pred_check
    _
  $region19: #{lenet_forward.4} parent=0 // pred_check_branch
    %2176 = sbr.rel (0) target = $region21
  $region20: #{lenet_forward.4} parent=0 // pred_region
    _
  $region21: #{lenet_forward.4} parent=0 // pred_fallthru
    _
  // Predicated region
  $region22: #{lenet_forward.4} parent=0 // pred_check
    _
  $region23: #{lenet_forward.4} parent=0 // pred_check_branch
    %2178 = sbr.rel (0) target = $region25
  $region24: #{lenet_forward.4} parent=0 // pred_region
    _
  $region25: #{lenet_forward.4} parent=0 // pred_fallthru
    _

// kernel: lenet_forward.3
$region0: #{lenet_forward.3}
  #allocation0 [shape = 'u32[]', space=smem, size = 0x4, offset = 0x4, fixed_abs, tag = 'smem constant byte address 0x4 - core index']
  #allocation1 [shape = 'u32[144,128]{1,0:T(1,128)}', space=vmem, size = 0x12000, scoped, tag = 'internal scratch']
  #allocation2 [shape = 'bf16[200,892]{1,0:T(8,128)(2,1)}', space=vmem, size = 0x57800, scoped, tag = 'scratch operand']
  #allocation3 [shape = 'bf16[32,859]{1,0:T(16,128)(2,1)}', space=vmem, size = 0xe000, scoped, tag = 'scratch operand']
  %s0 = inlined_call_operand.vmem [shape: bf16[2,8,1024], index: 0, kind: input, shape index: {}]
  %s1 = inlined_call_operand.vmem [shape: bf16[16,200], index: 1, kind: input, shape index: {}]
  %s2 = inlined_call_operand.vmem [shape: f32[16,1], index: 2, kind: input, shape index: {}]
  %s3 = inlined_call_operand.hbm [shape: bf16[859,196], index: 3, kind: input, shape index: {}]
  %s4 = inlined_call_operand.vmem [shape: bf16[2,16,196], index: 4, kind: output, shape index: {}]
  %s5 = sld [smem:[#allocation0]]
  $region30: #{lenet_forward.3} parent=0
    _
  %s7 = ssub.s32 1, %s5
  %s8 = scalar_select 0, %s7, %s5
  $region1: #{lenet_forward.3} parent=0
    #allocation4 [shape = 'u8[442368]{0}', space=vmem, size = 0x6c000, scoped, tag = 'input window, operand 3, single buffered']
    #allocation5 [shape = 's32[1]{0}', space=sflag, size = 0x4, scoped, tag = 'scoped memory for lenet_forward.3']
    %9 = vsyncpa [#allocation5], 0
    // Predicated region
    $region2: #{lenet_forward.3} parent=1 // pred_check
      _
    $region3: #{lenet_forward.3} parent=1 // pred_check_branch
      %11 = sbr.rel (0) target = $region5
    $region4: #{lenet_forward.3} parent=1 // pred_region
      _
    $region5: #{lenet_forward.3} parent=1 // pred_fallthru
      _
    // Predicated region
    $region6: #{lenet_forward.3} parent=1 // pred_check
      _
    $region7: #{lenet_forward.3} parent=1 // pred_check_branch
      %13 = sbr.rel (0) target = $region9
    $region8: #{lenet_forward.3} parent=1 // pred_region
      _
    $region9: #{lenet_forward.3} parent=1 // pred_fallthru
      _
    // Predicated region
    $region10: #{lenet_forward.3} parent=1 // pred_check
      _
    $region11: #{lenet_forward.3} parent=1 // pred_check_branch
      %15 = sbr.rel (0) target = $region13
    $region12: #{lenet_forward.3} parent=1 // pred_region
      _
    $region13: #{lenet_forward.3} parent=1 // pred_fallthru
      _
    // Predicated region
    $region14: #{lenet_forward.3} parent=1 // pred_check
      _
    $region15: #{lenet_forward.3} parent=1 // pred_check_branch
      %17 = sbr.rel (0) target = $region17
    $region16: #{lenet_forward.3} parent=1 // pred_region
      %s19 = ssub.s32 13824, 13824
      %20 = vsyncadd [#allocation5], %s19
      %s21 = sshll.u32 [#allocation4], 4
      %s22 = int_to_ptr.vmem [resolvable:$true] %s21
      %27 = dma.hbm_to_vmem [thread:$0]  %s3, 13824, %s22, [#allocation5], 128, 128, 8
    $region17: #{lenet_forward.3} parent=1 // pred_fallthru
      _
    // Predicated region
    $region18: #{lenet_forward.3} parent=1 // pred_check
      _
    $region19: #{lenet_forward.3} parent=1 // pred_check_branch
      %29 = sbr.rel (0) target = $region21
    $region20: #{lenet_forward.3} parent=1 // pred_region
      %30 = dma.done [#allocation5], 13824
    $region21: #{lenet_forward.3} parent=1 // pred_fallthru
      _
    %v32 = vld [vmem:[%s0] sm:$0xff]
    %v33 = vld [vmem:[%s0 + $0x8] sm:$0xff]
    %v34 = vld [vmem:[%s0 + $0x10] sm:$0xff]
    %v35 = vld [vmem:[%s0 + $0x18] sm:$0xff]
    %36 = vst [vmem:[#allocation2] sm:$0xff] %v32
    %37 = vst [vmem:[#allocation2 + $0x8] sm:$0xff] %v33
    %38 = vst [vmem:[#allocation2 + $0x10] sm:$0xff] %v34
    %vm39 = vcmask 1010688
    %40 = vst.msk [vmem:[#allocation2 + $0x18] sm:$0xf] %vm39, %v35
    %45 = vrot.lane.b32.xlu0 %v32, 127
    %v46 = vpop.permute.xlu0 %45
    %47 = vrot.lane.b32.xlu0 %v33, 127
    %v48 = vpop.permute.xlu0 %47
    %49 = vrot.lane.b32.xlu0 %v34, 127
    %v50 = vpop.permute.xlu0 %49
    %51 = vrot.lane.b32.xlu0 %v35, 127
    %v52 = vpop.permute.xlu0 %51
    %v53 = vrot.slane %v46, 4
    %v54 = vrot.slane %v48, 4
    %v55 = vrot.slane %v50, 4
    %v56 = vrot.slane %v52, 4
    %vm57 = vcmask 1043456
    %v58 = vsel %vm57, %v53, %v54
    %vm59 = vcmask 1039360
    %v60 = vsel %vm59, %v46, %v58
    %v61 = vsel %vm57, %v54, %v55
    %v62 = vsel %vm59, %v48, %v61
    %v63 = vsel %vm57, %v55, %v56
    %v64 = vsel %vm59, %v50, %v63
    %69 = vst [vmem:[#allocation2 + $0x1c] sm:$0xff] %v60
    %70 = vst [vmem:[#allocation2 + $0x24] sm:$0xff] %v62
    %71 = vst [vmem:[#allocation2 + $0x2c] sm:$0xff] %v64
    %72 = vst.msk [vmem:[#allocation2 + $0x34] sm:$0xf] %vm39, %v52
    %73 = vrot.lane.b32.xlu0 %v32, 126
    %v74 = vpop.permute.xlu0 %73
    %75 = vrot.lane.b32.xlu0 %v33, 126
    %v76 = vpop.permute.xlu0 %75
    %77 = vrot.lane.b32.xlu0 %v34, 126
    %v78 = vpop.permute.xlu0 %77
    %79 = vrot.lane.b32.xlu0 %v35, 126
    %v80 = vpop.permute.xlu0 %79
    %v81 = vrot.slane %v74, 4
    %v82 = vrot.slane %v76, 4
    %v83 = vrot.slane %v78, 4
    %v84 = vrot.slane %v80, 4
    %v85 = vsel %vm57, %v81, %v82
    %vm86 = vcmask 1031168
    %v87 = vsel %vm86, %v74, %v85
    %v88 = vsel %vm57, %v82, %v83
    %v89 = vsel %vm86, %v76, %v88
    %v90 = vsel %vm57, %v83, %v84
    %v91 = vsel %vm86, %v78, %v90
    %96 = vst [vmem:[#allocation2 + $0x38] sm:$0xff] %v87
    %97 = vst [vmem:[#allocation2 + $0x40] sm:$0xff] %v89
    %98 = vst [vmem:[#allocation2 + $0x48] sm:$0xff] %v91
    %99 = vst.msk [vmem:[#allocation2 + $0x50] sm:$0xf] %vm39, %v80
    %100 = vrot.lane.b32.xlu0 %v32, 125
    %v101 = vpop.permute.xlu0 %100
    %102 = vrot.lane.b32.xlu0 %v33, 125
    %v103 = vpop.permute.xlu0 %102
    %104 = vrot.lane.b32.xlu0 %v34, 125
    %v105 = vpop.permute.xlu0 %104
    %106 = vrot.lane.b32.xlu0 %v35, 125
    %v107 = vpop.permute.xlu0 %106
    %v108 = vrot.slane %v101, 4
    %v109 = vrot.slane %v103, 4
    %v110 = vrot.slane %v105, 4
    %v111 = vrot.slane %v107, 4
    %v112 = vsel %vm57, %v108, %v109
    %vm113 = vcmask 1022976
    %v114 = vsel %vm113, %v101, %v112
    %v115 = vsel %vm57, %v109, %v110
    %v116 = vsel %vm113, %v103, %v115
    %v117 = vsel %vm57, %v110, %v111
    %v118 = vsel %vm113, %v105, %v117
    %123 = vst [vmem:[#allocation2 + $0x54] sm:$0xff] %v114
    %124 = vst [vmem:[#allocation2 + $0x5c] sm:$0xff] %v116
    %125 = vst [vmem:[#allocation2 + $0x64] sm:$0xff] %v118
    %126 = vst.msk [vmem:[#allocation2 + $0x6c] sm:$0xf] %vm39, %v107
    %127 = vrot.lane.b32.xlu0 %v32, 124
    %v128 = vpop.permute.xlu0 %127
    %129 = vrot.lane.b32.xlu0 %v33, 124
    %v130 = vpop.permute.xlu0 %129
    %131 = vrot.lane.b32.xlu0 %v34, 124
    %v132 = vpop.permute.xlu0 %131
    %133 = vrot.lane.b32.xlu0 %v35, 124
    %v134 = vpop.permute.xlu0 %133
    %v135 = vrot.slane %v128, 4
    %v136 = vrot.slane %v130, 4
    %v137 = vrot.slane %v132, 4
    %v138 = vrot.slane %v134, 4
    %v139 = vsel %vm57, %v135, %v136
    %vm140 = vcmask 1014784
    %v141 = vsel %vm140, %v128, %v139
    %v142 = vsel %vm57, %v136, %v137
    %v143 = vsel %vm140, %v130, %v142
    %v144 = vsel %vm57, %v137, %v138
    %v145 = vsel %vm140, %v132, %v144
    %150 = vst [vmem:[#allocation2 + $0x70] sm:$0xff] %v141
    %151 = vst [vmem:[#allocation2 + $0x78] sm:$0xff] %v143
    %152 = vst [vmem:[#allocation2 + $0x80] sm:$0xff] %v145
    %153 = vst.msk [vmem:[#allocation2 + $0x88] sm:$0xf] %vm39, %v134
    %154 = vrot.lane.b32.xlu0 %v32, 96
    %v155 = vpop.permute.xlu0 %154
    %156 = vrot.lane.b32.xlu0 %v33, 96
    %v157 = vpop.permute.xlu0 %156
    %158 = vrot.lane.b32.xlu0 %v34, 96
    %v159 = vpop.permute.xlu0 %158
    %160 = vrot.lane.b32.xlu0 %v35, 96
    %v161 = vpop.permute.xlu0 %160
    %v162 = vrot.slane %v155, 4
    %v163 = vrot.slane %v157, 4
    %v164 = vrot.slane %v159, 4
    %v165 = vrot.slane %v161, 4
    %v166 = vsel %vm57, %v162, %v163
    %vm167 = vcmask 785408
    %v168 = vsel %vm167, %v155, %v166
    %v169 = vsel %vm57, %v163, %v164
    %v170 = vsel %vm167, %v157, %v169
    %v171 = vsel %vm57, %v164, %v165
    %v172 = vsel %vm167, %v159, %v171
    %v173 = vsel %vm167, %v161, %v165
    %178 = vst [vmem:[#allocation2 + $0x8c] sm:$0xff] %v168
    %179 = vst [vmem:[#allocation2 + $0x94] sm:$0xff] %v170
    %180 = vst [vmem:[#allocation2 + $0x9c] sm:$0xff] %v172
    %181 = vst.msk [vmem:[#allocation2 + $0xa4] sm:$0xf] %vm39, %v173
    %182 = vrot.lane.b32.xlu0 %v32, 95
    %v183 = vpop.permute.xlu0 %182
    %184 = vrot.lane.b32.xlu0 %v33, 95
    %v185 = vpop.permute.xlu0 %184
    %186 = vrot.lane.b32.xlu0 %v34, 95
    %v187 = vpop.permute.xlu0 %186
    %188 = vrot.lane.b32.xlu0 %v35, 95
    %v189 = vpop.permute.xlu0 %188
    %v190 = vrot.slane %v183, 4
    %v191 = vrot.slane %v185, 4
    %v192 = vrot.slane %v187, 4
    %v193 = vrot.slane %v189, 4
    %v194 = vsel %vm57, %v190, %v191
    %vm195 = vcmask 777216
    %v196 = vsel %vm195, %v183, %v194
    %v197 = vsel %vm57, %v191, %v192
    %v198 = vsel %vm195, %v185, %v197
    %v199 = vsel %vm57, %v192, %v193
    %v200 = vsel %vm195, %v187, %v199
    %v201 = vsel %vm195, %v189, %v193
    %206 = vst [vmem:[#allocation2 + $0xa8] sm:$0xff] %v196
    %207 = vst [vmem:[#allocation2 + $0xb0] sm:$0xff] %v198
    %208 = vst [vmem:[#allocation2 + $0xb8] sm:$0xff] %v200
    %209 = vst.msk [vmem:[#allocation2 + $0xc0] sm:$0xf] %vm39, %v201
    %210 = vrot.lane.b32.xlu0 %v32, 94
    %v211 = vpop.permute.xlu0 %210
    %212 = vrot.lane.b32.xlu0 %v33, 94
    %v213 = vpop.permute.xlu0 %212
    %214 = vrot.lane.b32.xlu0 %v34, 94
    %v215 = vpop.permute.xlu0 %214
    %216 = vrot.lane.b32.xlu0 %v35, 94
    %v217 = vpop.permute.xlu0 %216
    %v218 = vrot.slane %v211, 4
    %v219 = vrot.slane %v213, 4
    %v220 = vrot.slane %v215, 4
    %v221 = vrot.slane %v217, 4
    %v222 = vsel %vm57, %v218, %v219
    %vm223 = vcmask 769024
    %v224 = vsel %vm223, %v211, %v222
    %v225 = vsel %vm57, %v219, %v220
    %v226 = vsel %vm223, %v213, %v225
    %v227 = vsel %vm57, %v220, %v221
    %v228 = vsel %vm223, %v215, %v227
    %v229 = vsel %vm223, %v217, %v221
    %234 = vst [vmem:[#allocation2 + $0xc4] sm:$0xff] %v224
    %235 = vst [vmem:[#allocation2 + $0xcc] sm:$0xff] %v226
    %236 = vst [vmem:[#allocation2 + $0xd4] sm:$0xff] %v228
    %237 = vst.msk [vmem:[#allocation2 + $0xdc] sm:$0xf] %vm39, %v229
    %238 = vrot.lane.b32.xlu0 %v32, 93
    %v239 = vpop.permute.xlu0 %238
    %240 = vrot.lane.b32.xlu0 %v33, 93
    %v241 = vpop.permute.xlu0 %240
    %242 = vrot.lane.b32.xlu0 %v34, 93
    %v243 = vpop.permute.xlu0 %242
    %244 = vrot.lane.b32.xlu0 %v35, 93
    %v245 = vpop.permute.xlu0 %244
    %v246 = vrot.slane %v239, 4
    %v247 = vrot.slane %v241, 4
    %v248 = vrot.slane %v243, 4
    %v249 = vrot.slane %v245, 4
    %v250 = vsel %vm57, %v246, %v247
    %vm251 = vcmask 760832
    %v252 = vsel %vm251, %v239, %v250
    %v253 = vsel %vm57, %v247, %v248
    %v254 = vsel %vm251, %v241, %v253
    %v255 = vsel %vm57, %v248, %v249
    %v256 = vsel %vm251, %v243, %v255
    %v257 = vsel %vm251, %v245, %v249
    %262 = vst [vmem:[#allocation2 + $0xe0] sm:$0xff] %v252
    %263 = vst [vmem:[#allocation2 + $0xe8] sm:$0xff] %v254
    %264 = vst [vmem:[#allocation2 + $0xf0] sm:$0xff] %v256
    %265 = vst.msk [vmem:[#allocation2 + $0xf8] sm:$0xf] %vm39, %v257
    %266 = vrot.lane.b32.xlu0 %v32, 92
    %v267 = vpop.permute.xlu0 %266
    %268 = vrot.lane.b32.xlu0 %v33, 92
    %v269 = vpop.permute.xlu0 %268
    %270 = vrot.lane.b32.xlu0 %v34, 92
    %v271 = vpop.permute.xlu0 %270
    %272 = vrot.lane.b32.xlu0 %v35, 92
    %v273 = vpop.permute.xlu0 %272
    %v274 = vrot.slane %v267, 4
    %v275 = vrot.slane %v269, 4
    %v276 = vrot.slane %v271, 4
    %v277 = vrot.slane %v273, 4
    %v278 = vsel %vm57, %v274, %v275
    %vm279 = vcmask 752640
    %v280 = vsel %vm279, %v267, %v278
    %v281 = vsel %vm57, %v275, %v276
    %v282 = vsel %vm279, %v269, %v281
    %v283 = vsel %vm57, %v276, %v277
    %v284 = vsel %vm279, %v271, %v283
    %v285 = vsel %vm279, %v273, %v277
    %290 = vst [vmem:[#allocation2 + $0xfc] sm:$0xff] %v280
    %291 = vst [vmem:[#allocation2 + $0x104] sm:$0xff] %v282
    %292 = vst [vmem:[#allocation2 + $0x10c] sm:$0xff] %v284
    %293 = vst.msk [vmem:[#allocation2 + $0x114] sm:$0xf] %vm39, %v285
    %294 = vrot.lane.b32.xlu0 %v32, 64
    %v295 = vpop.permute.xlu0 %294
    %296 = vrot.lane.b32.xlu0 %v33, 64
    %v297 = vpop.permute.xlu0 %296
    %298 = vrot.lane.b32.xlu0 %v34, 64
    %v299 = vpop.permute.xlu0 %298
    %300 = vrot.lane.b32.xlu0 %v35, 64
    %v301 = vpop.permute.xlu0 %300
    %v302 = vrot.slane %v295, 4
    %v303 = vrot.slane %v297, 4
    %v304 = vrot.slane %v299, 4
    %v305 = vrot.slane %v301, 4
    %v306 = vsel %vm57, %v302, %v303
    %vm307 = vcmask 523264
    %v308 = vsel %vm307, %v295, %v306
    %v309 = vsel %vm57, %v303, %v304
    %v310 = vsel %vm307, %v297, %v309
    %v311 = vsel %vm57, %v304, %v305
    %v312 = vsel %vm307, %v299, %v311
    %v313 = vsel %vm307, %v301, %v305
    %318 = vst [vmem:[#allocation2 + $0x118] sm:$0xff] %v308
    %319 = vst [vmem:[#allocation2 + $0x120] sm:$0xff] %v310
    %320 = vst [vmem:[#allocation2 + $0x128] sm:$0xff] %v312
    %321 = vst.msk [vmem:[#allocation2 + $0x130] sm:$0xf] %vm39, %v313
    %322 = vrot.lane.b32.xlu0 %v32, 63
    %v323 = vpop.permute.xlu0 %322
    %324 = vrot.lane.b32.xlu0 %v33, 63
    %v325 = vpop.permute.xlu0 %324
    %326 = vrot.lane.b32.xlu0 %v34, 63
    %v327 = vpop.permute.xlu0 %326
    %328 = vrot.lane.b32.xlu0 %v35, 63
    %v329 = vpop.permute.xlu0 %328
    %v330 = vrot.slane %v323, 4
    %v331 = vrot.slane %v325, 4
    %v332 = vrot.slane %v327, 4
    %v333 = vrot.slane %v329, 4
    %v334 = vsel %vm57, %v330, %v331
    %vm335 = vcmask 515072
    %v336 = vsel %vm335, %v323, %v334
    %v337 = vsel %vm57, %v331, %v332
    %v338 = vsel %vm335, %v325, %v337
    %v339 = vsel %vm57, %v332, %v333
    %v340 = vsel %vm335, %v327, %v339
    %v341 = vsel %vm335, %v329, %v333
    %346 = vst [vmem:[#allocation2 + $0x134] sm:$0xff] %v336
    %347 = vst [vmem:[#allocation2 + $0x13c] sm:$0xff] %v338
    %348 = vst [vmem:[#allocation2 + $0x144] sm:$0xff] %v340
    %349 = vst.msk [vmem:[#allocation2 + $0x14c] sm:$0xf] %vm39, %v341
    %350 = vrot.lane.b32.xlu0 %v32, 62
    %v351 = vpop.permute.xlu0 %350
    %352 = vrot.lane.b32.xlu0 %v33, 62
    %v353 = vpop.permute.xlu0 %352
    %354 = vrot.lane.b32.xlu0 %v34, 62
    %v355 = vpop.permute.xlu0 %354
    %356 = vrot.lane.b32.xlu0 %v35, 62
    %v357 = vpop.permute.xlu0 %356
    %v358 = vrot.slane %v351, 4
    %v359 = vrot.slane %v353, 4
    %v360 = vrot.slane %v355, 4
    %v361 = vrot.slane %v357, 4
    %v362 = vsel %vm57, %v358, %v359
    %vm363 = vcmask 506880
    %v364 = vsel %vm363, %v351, %v362
    %v365 = vsel %vm57, %v359, %v360
    %v366 = vsel %vm363, %v353, %v365
    %v367 = vsel %vm57, %v360, %v361
    %v368 = vsel %vm363, %v355, %v367
    %v369 = vsel %vm363, %v357, %v361
    %374 = vst [vmem:[#allocation2 + $0x150] sm:$0xff] %v364
    %375 = vst [vmem:[#allocation2 + $0x158] sm:$0xff] %v366
    %376 = vst [vmem:[#allocation2 + $0x160] sm:$0xff] %v368
    %377 = vst.msk [vmem:[#allocation2 + $0x168] sm:$0xf] %vm39, %v369
    %378 = vrot.lane.b32.xlu0 %v32, 61
    %v379 = vpop.permute.xlu0 %378
    %380 = vrot.lane.b32.xlu0 %v33, 61
    %v381 = vpop.permute.xlu0 %380
    %382 = vrot.lane.b32.xlu0 %v34, 61
    %v383 = vpop.permute.xlu0 %382
    %384 = vrot.lane.b32.xlu0 %v35, 61
    %v385 = vpop.permute.xlu0 %384
    %v386 = vrot.slane %v379, 4
    %v387 = vrot.slane %v381, 4
    %v388 = vrot.slane %v383, 4
    %v389 = vrot.slane %v385, 4
    %v390 = vsel %vm57, %v386, %v387
    %vm391 = vcmask 498688
    %v392 = vsel %vm391, %v379, %v390
    %v393 = vsel %vm57, %v387, %v388
    %v394 = vsel %vm391, %v381, %v393
    %v395 = vsel %vm57, %v388, %v389
    %v396 = vsel %vm391, %v383, %v395
    %v397 = vsel %vm391, %v385, %v389
    %402 = vst [vmem:[#allocation2 + $0x16c] sm:$0xff] %v392
    %403 = vst [vmem:[#allocation2 + $0x174] sm:$0xff] %v394
    %404 = vst [vmem:[#allocation2 + $0x17c] sm:$0xff] %v396
    %405 = vst.msk [vmem:[#allocation2 + $0x184] sm:$0xf] %vm39, %v397
    %406 = vrot.lane.b32.xlu0 %v32, 60
    %v407 = vpop.permute.xlu0 %406
    %408 = vrot.lane.b32.xlu0 %v33, 60
    %v409 = vpop.permute.xlu0 %408
    %410 = vrot.lane.b32.xlu0 %v34, 60
    %v411 = vpop.permute.xlu0 %410
    %412 = vrot.lane.b32.xlu0 %v35, 60
    %v413 = vpop.permute.xlu0 %412
    %v414 = vrot.slane %v407, 4
    %v415 = vrot.slane %v409, 4
    %v416 = vrot.slane %v411, 4
    %v417 = vrot.slane %v413, 4
    %v418 = vsel %vm57, %v414, %v415
    %vm419 = vcmask 490496
    %v420 = vsel %vm419, %v407, %v418
    %v421 = vsel %vm57, %v415, %v416
    %v422 = vsel %vm419, %v409, %v421
    %v423 = vsel %vm57, %v416, %v417
    %v424 = vsel %vm419, %v411, %v423
    %v425 = vsel %vm419, %v413, %v417
    %430 = vst [vmem:[#allocation2 + $0x188] sm:$0xff] %v420
    %431 = vst [vmem:[#allocation2 + $0x190] sm:$0xff] %v422
    %432 = vst [vmem:[#allocation2 + $0x198] sm:$0xff] %v424
    %433 = vst.msk [vmem:[#allocation2 + $0x1a0] sm:$0xf] %vm39, %v425
    %434 = vrot.lane.b32.xlu0 %v32, 32
    %v435 = vpop.permute.xlu0 %434
    %436 = vrot.lane.b32.xlu0 %v33, 32
    %v437 = vpop.permute.xlu0 %436
    %438 = vrot.lane.b32.xlu0 %v34, 32
    %v439 = vpop.permute.xlu0 %438
    %440 = vrot.lane.b32.xlu0 %v35, 32
    %v441 = vpop.permute.xlu0 %440
    %v442 = vrot.slane %v435, 4
    %v443 = vrot.slane %v437, 4
    %v444 = vrot.slane %v439, 4
    %v445 = vrot.slane %v441, 4
    %v446 = vsel %vm57, %v442, %v443
    %vm447 = vcmask 261120
    %v448 = vsel %vm447, %v435, %v446
    %v449 = vsel %vm57, %v443, %v444
    %v450 = vsel %vm447, %v437, %v449
    %v451 = vsel %vm57, %v444, %v445
    %v452 = vsel %vm447, %v439, %v451
    %v453 = vsel %vm447, %v441, %v445
    %458 = vst [vmem:[#allocation2 + $0x1a4] sm:$0xff] %v448
    %459 = vst [vmem:[#allocation2 + $0x1ac] sm:$0xff] %v450
    %460 = vst [vmem:[#allocation2 + $0x1b4] sm:$0xff] %v452
    %461 = vst.msk [vmem:[#allocation2 + $0x1bc] sm:$0xf] %vm39, %v453
    %462 = vrot.lane.b32.xlu0 %v32, 31
    %v463 = vpop.permute.xlu0 %462
    %464 = vrot.lane.b32.xlu0 %v33, 31
    %v465 = vpop.permute.xlu0 %464
    %466 = vrot.lane.b32.xlu0 %v34, 31
    %v467 = vpop.permute.xlu0 %466
    %468 = vrot.lane.b32.xlu0 %v35, 31
    %v469 = vpop.permute.xlu0 %468
    %v470 = vrot.slane %v463, 4
    %v471 = vrot.slane %v465, 4
    %v472 = vrot.slane %v467, 4
    %v473 = vrot.slane %v469, 4
    %v474 = vsel %vm57, %v470, %v471
    %vm475 = vcmask 252928
    %v476 = vsel %vm475, %v463, %v474
    %v477 = vsel %vm57, %v471, %v472
    %v478 = vsel %vm475, %v465, %v477
    %v479 = vsel %vm57, %v472, %v473
    %v480 = vsel %vm475, %v467, %v479
    %v481 = vsel %vm475, %v469, %v473
    %486 = vst [vmem:[#allocation2 + $0x1c0] sm:$0xff] %v476
    %487 = vst [vmem:[#allocation2 + $0x1c8] sm:$0xff] %v478
    %488 = vst [vmem:[#allocation2 + $0x1d0] sm:$0xff] %v480
    %489 = vst.msk [vmem:[#allocation2 + $0x1d8] sm:$0xf] %vm39, %v481
    %490 = vrot.lane.b32.xlu0 %v32, 30
    %v491 = vpop.permute.xlu0 %490
    %492 = vrot.lane.b32.xlu0 %v33, 30
    %v493 = vpop.permute.xlu0 %492
    %494 = vrot.lane.b32.xlu0 %v34, 30
    %v495 = vpop.permute.xlu0 %494
    %496 = vrot.lane.b32.xlu0 %v35, 30
    %v497 = vpop.permute.xlu0 %496
    %v498 = vrot.slane %v491, 4
    %v499 = vrot.slane %v493, 4
    %v500 = vrot.slane %v495, 4
    %v501 = vrot.slane %v497, 4
    %v502 = vsel %vm57, %v498, %v499
    %vm503 = vcmask 244736
    %v504 = vsel %vm503, %v491, %v502
    %v505 = vsel %vm57, %v499, %v500
    %v506 = vsel %vm503, %v493, %v505
    %v507 = vsel %vm57, %v500, %v501
    %v508 = vsel %vm503, %v495, %v507
    %v509 = vsel %vm503, %v497, %v501
    %514 = vst [vmem:[#allocation2 + $0x1dc] sm:$0xff] %v504
    %515 = vst [vmem:[#allocation2 + $0x1e4] sm:$0xff] %v506
    %516 = vst [vmem:[#allocation2 + $0x1ec] sm:$0xff] %v508
    %517 = vst.msk [vmem:[#allocation2 + $0x1f4] sm:$0xf] %vm39, %v509
    %518 = vrot.lane.b32.xlu0 %v32, 29
    %v519 = vpop.permute.xlu0 %518
    %520 = vrot.lane.b32.xlu0 %v33, 29
    %v521 = vpop.permute.xlu0 %520
    %522 = vrot.lane.b32.xlu0 %v34, 29
    %v523 = vpop.permute.xlu0 %522
    %524 = vrot.lane.b32.xlu0 %v35, 29
    %v525 = vpop.permute.xlu0 %524
    %v526 = vrot.slane %v519, 4
    %v527 = vrot.slane %v521, 4
    %v528 = vrot.slane %v523, 4
    %v529 = vrot.slane %v525, 4
    %v530 = vsel %vm57, %v526, %v527
    %vm531 = vcmask 236544
    %v532 = vsel %vm531, %v519, %v530
    %v533 = vsel %vm57, %v527, %v528
    %v534 = vsel %vm531, %v521, %v533
    %v535 = vsel %vm57, %v528, %v529
    %v536 = vsel %vm531, %v523, %v535
    %v537 = vsel %vm531, %v525, %v529
    %542 = vst [vmem:[#allocation2 + $0x1f8] sm:$0xff] %v532
    %543 = vst [vmem:[#allocation2 + $0x200] sm:$0xff] %v534
    %544 = vst [vmem:[#allocation2 + $0x208] sm:$0xff] %v536
    %545 = vst.msk [vmem:[#allocation2 + $0x210] sm:$0xf] %vm39, %v537
    %546 = vrot.lane.b32.xlu0 %v32, 28
    %v547 = vpop.permute.xlu0 %546
    %548 = vrot.lane.b32.xlu0 %v33, 28
    %v549 = vpop.permute.xlu0 %548
    %550 = vrot.lane.b32.xlu0 %v34, 28
    %v551 = vpop.permute.xlu0 %550
    %552 = vrot.lane.b32.xlu0 %v35, 28
    %v553 = vpop.permute.xlu0 %552
    %v554 = vrot.slane %v547, 4
    %v555 = vrot.slane %v549, 4
    %v556 = vrot.slane %v551, 4
    %v557 = vrot.slane %v553, 4
    %v558 = vsel %vm57, %v554, %v555
    %vm559 = vcmask 228352
    %v560 = vsel %vm559, %v547, %v558
    %v561 = vsel %vm57, %v555, %v556
    %v562 = vsel %vm559, %v549, %v561
    %v563 = vsel %vm57, %v556, %v557
    %v564 = vsel %vm559, %v551, %v563
    %v565 = vsel %vm559, %v553, %v557
    %570 = vst [vmem:[#allocation2 + $0x214] sm:$0xff] %v560
    %571 = vst [vmem:[#allocation2 + $0x21c] sm:$0xff] %v562
    %572 = vst [vmem:[#allocation2 + $0x224] sm:$0xff] %v564
    %573 = vst.msk [vmem:[#allocation2 + $0x22c] sm:$0xf] %vm39, %v565
    %v574 = vrot.slane %v32, 4
    %v575 = vrot.slane %v33, 4
    %v576 = vrot.slane %v34, 4
    %v577 = vrot.slane %v35, 4
    %v578 = vsel %vm57, %v574, %v575
    %v579 = vsel %vm57, %v575, %v576
    %v580 = vsel %vm57, %v576, %v577
    %585 = vst [vmem:[#allocation2 + $0x230] sm:$0xff] %v578
    %586 = vst [vmem:[#allocation2 + $0x238] sm:$0xff] %v579
    %587 = vst [vmem:[#allocation2 + $0x240] sm:$0xff] %v580
    %588 = vst.msk [vmem:[#allocation2 + $0x248] sm:$0xf] %vm39, %v577
    %v589 = vsel %vm59, %v58, %v48
    %v590 = vsel %vm59, %v61, %v50
    %v591 = vsel %vm59, %v63, %v52
    %596 = vst [vmem:[#allocation2 + $0x24c] sm:$0xff] %v589
    %597 = vst [vmem:[#allocation2 + $0x254] sm:$0xff] %v590
    %598 = vst [vmem:[#allocation2 + $0x25c] sm:$0xff] %v591
    %599 = vst.msk [vmem:[#allocation2 + $0x264] sm:$0xf] %vm39, %v56
    %v600 = vsel %vm86, %v85, %v76
    %v601 = vsel %vm86, %v88, %v78
    %v602 = vsel %vm86, %v90, %v80
    %607 = vst [vmem:[#allocation2 + $0x268] sm:$0xff] %v600
    %608 = vst [vmem:[#allocation2 + $0x270] sm:$0xff] %v601
    %609 = vst [vmem:[#allocation2 + $0x278] sm:$0xff] %v602
    %610 = vst.msk [vmem:[#allocation2 + $0x280] sm:$0xf] %vm39, %v84
    %v611 = vsel %vm113, %v112, %v103
    %v612 = vsel %vm113, %v115, %v105
    %v613 = vsel %vm113, %v117, %v107
    %618 = vst [vmem:[#allocation2 + $0x284] sm:$0xff] %v611
    %619 = vst [vmem:[#allocation2 + $0x28c] sm:$0xff] %v612
    %620 = vst [vmem:[#allocation2 + $0x294] sm:$0xff] %v613
    %621 = vst.msk [vmem:[#allocation2 + $0x29c] sm:$0xf] %vm39, %v111
    %v622 = vsel %vm140, %v139, %v130
    %v623 = vsel %vm140, %v142, %v132
    %v624 = vsel %vm140, %v144, %v134
    %629 = vst [vmem:[#allocation2 + $0x2a0] sm:$0xff] %v622
    %630 = vst [vmem:[#allocation2 + $0x2a8] sm:$0xff] %v623
    %631 = vst [vmem:[#allocation2 + $0x2b0] sm:$0xff] %v624
    %632 = vst.msk [vmem:[#allocation2 + $0x2b8] sm:$0xf] %vm39, %v138
    %v633 = vld [vmem:[%s1] sm:$0xff]
    %v634 = vld [vmem:[%s1 + $0x8] sm:$0xff]
    %v635 = vld [vmem:[#allocation2] sm:$0xff]
    %v636 = vld [vmem:[#allocation2 + $0x8] sm:$0xff]
    %v637 = vld [vmem:[#allocation2 + $0x10] sm:$0xff]
    %v638 = vld [vmem:[#allocation2 + $0x18] sm:$0xf]
    %v639 = vld [vmem:[#allocation2 + $0x1c] sm:$0xff]
    %v640 = vld [vmem:[#allocation2 + $0x24] sm:$0xff]
    %v641 = vld [vmem:[#allocation2 + $0x2c] sm:$0xff]
    %v642 = vld [vmem:[#allocation2 + $0x34] sm:$0xf]
    %v643 = vld [vmem:[#allocation2 + $0x38] sm:$0xff]
    %v644 = vld [vmem:[#allocation2 + $0x40] sm:$0xff]
    %v645 = vld [vmem:[#allocation2 + $0x48] sm:$0xff]
    %v646 = vld [vmem:[#allocation2 + $0x50] sm:$0xf]
    %v647 = vld [vmem:[#allocation2 + $0x54] sm:$0xff]
    %v648 = vld [vmem:[#allocation2 + $0x5c] sm:$0xff]
    %v649 = vld [vmem:[#allocation2 + $0x64] sm:$0xff]
    %v650 = vld [vmem:[#allocation2 + $0x6c] sm:$0xf]
    %v651 = vld [vmem:[#allocation2 + $0x70] sm:$0xff]
    %v652 = vld [vmem:[#allocation2 + $0x78] sm:$0xff]
    %v653 = vld [vmem:[#allocation2 + $0x80] sm:$0xff]
    %v654 = vld [vmem:[#allocation2 + $0x88] sm:$0xf]
    %v655 = vld [vmem:[#allocation2 + $0x8c] sm:$0xff]
    %v656 = vld [vmem:[#allocation2 + $0x94] sm:$0xff]
    %v657 = vld [vmem:[#allocation2 + $0x9c] sm:$0xff]
    %v658 = vld [vmem:[#allocation2 + $0xa4] sm:$0xf]
    %v659 = vld [vmem:[#allocation2 + $0xa8] sm:$0xff]
    %v660 = vld [vmem:[#allocation2 + $0xb0] sm:$0xff]
    %v661 = vld [vmem:[#allocation2 + $0xb8] sm:$0xff]
    %v662 = vld [vmem:[#allocation2 + $0xc0] sm:$0xf]
    %v663 = vld [vmem:[#allocation2 + $0xc4] sm:$0xff]
    %v664 = vld [vmem:[#allocation2 + $0xcc] sm:$0xff]
    %v665 = vld [vmem:[#allocation2 + $0xd4] sm:$0xff]
    %v666 = vld [vmem:[#allocation2 + $0xdc] sm:$0xf]
    %v667 = vld [vmem:[#allocation2 + $0xe0] sm:$0xff]
    %v668 = vld [vmem:[#allocation2 + $0xe8] sm:$0xff]
    %v669 = vld [vmem:[#allocation2 + $0xf0] sm:$0xff]
    %v670 = vld [vmem:[#allocation2 + $0xf8] sm:$0xf]
    %v671 = vld [vmem:[#allocation2 + $0xfc] sm:$0xff]
    %v672 = vld [vmem:[#allocation2 + $0x104] sm:$0xff]
    %v673 = vld [vmem:[#allocation2 + $0x10c] sm:$0xff]
    %v674 = vld [vmem:[#allocation2 + $0x114] sm:$0xf]
    %v675 = vld [vmem:[#allocation2 + $0x118] sm:$0xff]
    %v676 = vld [vmem:[#allocation2 + $0x120] sm:$0xff]
    %v677 = vld [vmem:[#allocation2 + $0x128] sm:$0xff]
    %v678 = vld [vmem:[#allocation2 + $0x130] sm:$0xf]
    %v679 = vld [vmem:[#allocation2 + $0x134] sm:$0xff]
    %v680 = vld [vmem:[#allocation2 + $0x13c] sm:$0xff]
    %v681 = vld [vmem:[#allocation2 + $0x144] sm:$0xff]
    %v682 = vld [vmem:[#allocation2 + $0x14c] sm:$0xf]
    %v683 = vld [vmem:[#allocation2 + $0x150] sm:$0xff]
    %v684 = vld [vmem:[#allocation2 + $0x158] sm:$0xff]
    %v685 = vld [vmem:[#allocation2 + $0x160] sm:$0xff]
    %v686 = vld [vmem:[#allocation2 + $0x168] sm:$0xf]
    %v687 = vld [vmem:[#allocation2 + $0x16c] sm:$0xff]
    %v688 = vld [vmem:[#allocation2 + $0x174] sm:$0xff]
    %v689 = vld [vmem:[#allocation2 + $0x17c] sm:$0xff]
    %v690 = vld [vmem:[#allocation2 + $0x184] sm:$0xf]
    %v691 = vld [vmem:[#allocation2 + $0x188] sm:$0xff]
    %v692 = vld [vmem:[#allocation2 + $0x190] sm:$0xff]
    %v693 = vld [vmem:[#allocation2 + $0x198] sm:$0xff]
    %v694 = vld [vmem:[#allocation2 + $0x1a0] sm:$0xf]
    %v695 = vld [vmem:[#allocation2 + $0x1a4] sm:$0xff]
    %v696 = vld [vmem:[#allocation2 + $0x1ac] sm:$0xff]
    %v697 = vld [vmem:[#allocation2 + $0x1b4] sm:$0xff]
    %v698 = vld [vmem:[#allocation2 + $0x1bc] sm:$0xf]
    %v699 = vld [vmem:[#allocation2 + $0x1c0] sm:$0xff]
    %v700 = vld [vmem:[#allocation2 + $0x1c8] sm:$0xff]
    %v701 = vld [vmem:[#allocation2 + $0x1d0] sm:$0xff]
    %v702 = vld [vmem:[#allocation2 + $0x1d8] sm:$0xf]
    %v703 = vld [vmem:[#allocation2 + $0x1dc] sm:$0xff]
    %v704 = vld [vmem:[#allocation2 + $0x1e4] sm:$0xff]
    %v705 = vld [vmem:[#allocation2 + $0x1ec] sm:$0xff]
    %v706 = vld [vmem:[#allocation2 + $0x1f4] sm:$0xf]
    %v707 = vld [vmem:[#allocation2 + $0x1f8] sm:$0xff]
    %v708 = vld [vmem:[#allocation2 + $0x200] sm:$0xff]
    %v709 = vld [vmem:[#allocation2 + $0x208] sm:$0xff]
    %v710 = vld [vmem:[#allocation2 + $0x210] sm:$0xf]
    %v711 = vld [vmem:[#allocation2 + $0x214] sm:$0xff]
    %v712 = vld [vmem:[#allocation2 + $0x21c] sm:$0xff]
    %v713 = vld [vmem:[#allocation2 + $0x224] sm:$0xff]
    %v714 = vld [vmem:[#allocation2 + $0x22c] sm:$0xf]
    %v715 = vld [vmem:[#allocation2 + $0x230] sm:$0xff]
    %v716 = vld [vmem:[#allocation2 + $0x238] sm:$0xff]
    %v717 = vld [vmem:[#allocation2 + $0x240] sm:$0xff]
    %v718 = vld [vmem:[#allocation2 + $0x248] sm:$0xf]
    %v719 = vld [vmem:[#allocation2 + $0x24c] sm:$0xff]
    %v720 = vld [vmem:[#allocation2 + $0x254] sm:$0xff]
    %v721 = vld [vmem:[#allocation2 + $0x25c] sm:$0xff]
    %v722 = vld [vmem:[#allocation2 + $0x264] sm:$0xf]
    %v723 = vld [vmem:[#allocation2 + $0x268] sm:$0xff]
    %v724 = vld [vmem:[#allocation2 + $0x270] sm:$0xff]
    %v725 = vld [vmem:[#allocation2 + $0x278] sm:$0xff]
    %v726 = vld [vmem:[#allocation2 + $0x280] sm:$0xf]
    %v727 = vld [vmem:[#allocation2 + $0x284] sm:$0xff]
    %v728 = vld [vmem:[#allocation2 + $0x28c] sm:$0xff]
    %v729 = vld [vmem:[#allocation2 + $0x294] sm:$0xff]
    %v730 = vld [vmem:[#allocation2 + $0x29c] sm:$0xf]
    %v731 = vld [vmem:[#allocation2 + $0x2a0] sm:$0xff]
    %v732 = vld [vmem:[#allocation2 + $0x2a8] sm:$0xff]
    %v733 = vld [vmem:[#allocation2 + $0x2b0] sm:$0xff]
    %v734 = vld [vmem:[#allocation2 + $0x2b8] sm:$0xf]
    %v735 = vld [vmem:[%s2] sm:$0xff]
    %v736 = vld [vmem:[%s2 + $0x8] sm:$0xff]
    %738 = vset.pattern.permute.xlu0 0
    %739 = vperm.xlu0 %738, %v735
    %v740 = vpop.permute.xlu0 %739
    %743 = vset.pattern.permute.xlu0 0
    %744 = vperm.xlu0 %743, %v736
    %v745 = vpop.permute.xlu0 %744
    %v749 = vunpack.c.l.b16 %v633
    %v750 = vunpack.c.h.b16 %v633
    %v751 = vunpack.c.l.b16 %v634
    %v752 = vunpack.c.h.b16 %v634
    %v753 = vpack.c.b16 %v751, %v749
    %v754 = vpack.c.b16 %v752, %v750
    %v856 = vunpack.c.l.b16 %v635
    %v857 = vunpack.c.h.b16 %v635
    %v858 = vunpack.c.l.b16 %v636
    %v859 = vunpack.c.h.b16 %v636
    %v860 = vunpack.c.l.b16 %v637
    %v861 = vunpack.c.h.b16 %v637
    %v862 = vunpack.c.l.b16 %v638
    %v863 = vunpack.c.l.b16 %v639
    %v864 = vunpack.c.h.b16 %v639
    %v865 = vunpack.c.l.b16 %v640
    %v866 = vunpack.c.h.b16 %v640
    %v867 = vunpack.c.l.b16 %v641
    %v868 = vunpack.c.h.b16 %v641
    %v869 = vunpack.c.l.b16 %v642
    %v870 = vunpack.c.l.b16 %v643
    %v871 = vunpack.c.h.b16 %v643
    %v872 = vunpack.c.l.b16 %v644
    %v873 = vunpack.c.h.b16 %v644
    %v874 = vunpack.c.l.b16 %v645
    %v875 = vunpack.c.h.b16 %v645
    %v876 = vunpack.c.l.b16 %v646
    %v877 = vunpack.c.l.b16 %v647
    %v878 = vunpack.c.h.b16 %v647
    %v879 = vunpack.c.l.b16 %v648
    %v880 = vunpack.c.h.b16 %v648
    %v881 = vunpack.c.l.b16 %v649
    %v882 = vunpack.c.h.b16 %v649
    %v883 = vunpack.c.l.b16 %v650
    %v884 = vunpack.c.l.b16 %v651
    %v885 = vunpack.c.h.b16 %v651
    %v886 = vunpack.c.l.b16 %v652
    %v887 = vunpack.c.h.b16 %v652
    %v888 = vunpack.c.l.b16 %v653
    %v889 = vunpack.c.h.b16 %v653
    %v890 = vunpack.c.l.b16 %v654
    %v891 = vunpack.c.l.b16 %v655
    %v892 = vunpack.c.h.b16 %v655
    %v893 = vunpack.c.l.b16 %v656
    %v894 = vunpack.c.h.b16 %v656
    %v895 = vunpack.c.l.b16 %v657
    %v896 = vunpack.c.h.b16 %v657
    %v897 = vunpack.c.l.b16 %v658
    %v898 = vunpack.c.l.b16 %v659
    %v899 = vunpack.c.h.b16 %v659
    %v900 = vunpack.c.l.b16 %v660
    %v901 = vunpack.c.h.b16 %v660
    %v902 = vunpack.c.l.b16 %v661
    %v903 = vunpack.c.h.b16 %v661
    %v904 = vunpack.c.l.b16 %v662
    %v905 = vunpack.c.l.b16 %v663
    %v906 = vunpack.c.h.b16 %v663
    %v907 = vunpack.c.l.b16 %v664
    %v908 = vunpack.c.h.b16 %v664
    %v909 = vunpack.c.l.b16 %v665
    %v910 = vunpack.c.h.b16 %v665
    %v911 = vunpack.c.l.b16 %v666
    %v912 = vunpack.c.l.b16 %v667
    %v913 = vunpack.c.h.b16 %v667
    %v914 = vunpack.c.l.b16 %v668
    %v915 = vunpack.c.h.b16 %v668
    %v916 = vunpack.c.l.b16 %v669
    %v917 = vunpack.c.h.b16 %v669
    %v918 = vunpack.c.l.b16 %v670
    %v919 = vunpack.c.l.b16 %v671
    %v920 = vunpack.c.h.b16 %v671
    %v921 = vunpack.c.l.b16 %v672
    %v922 = vunpack.c.h.b16 %v672
    %v923 = vunpack.c.l.b16 %v673
    %v924 = vunpack.c.h.b16 %v673
    %v925 = vunpack.c.l.b16 %v674
    %v926 = vunpack.c.l.b16 %v675
    %v927 = vunpack.c.h.b16 %v675
    %v928 = vunpack.c.l.b16 %v676
    %v929 = vunpack.c.h.b16 %v676
    %v930 = vunpack.c.l.b16 %v677
    %v931 = vunpack.c.h.b16 %v677
    %v932 = vunpack.c.l.b16 %v678
    %v933 = vunpack.c.l.b16 %v679
    %v934 = vunpack.c.h.b16 %v679
    %v935 = vunpack.c.l.b16 %v680
    %v936 = vunpack.c.h.b16 %v680
    %v937 = vunpack.c.l.b16 %v681
    %v938 = vunpack.c.h.b16 %v681
    %v939 = vunpack.c.l.b16 %v682
    %v940 = vunpack.c.l.b16 %v683
    %v941 = vunpack.c.h.b16 %v683
    %v942 = vunpack.c.l.b16 %v684
    %v943 = vunpack.c.h.b16 %v684
    %v944 = vunpack.c.l.b16 %v685
    %v945 = vunpack.c.h.b16 %v685
    %v946 = vunpack.c.l.b16 %v686
    %v947 = vunpack.c.l.b16 %v687
    %v948 = vunpack.c.h.b16 %v687
    %v949 = vunpack.c.l.b16 %v688
    %v950 = vunpack.c.h.b16 %v688
    %v951 = vunpack.c.l.b16 %v689
    %v952 = vunpack.c.h.b16 %v689
    %v953 = vunpack.c.l.b16 %v690
    %v954 = vunpack.c.l.b16 %v691
    %v955 = vunpack.c.h.b16 %v691
    %v956 = vunpack.c.l.b16 %v692
    %v957 = vunpack.c.h.b16 %v692
    %v958 = vunpack.c.l.b16 %v693
    %v959 = vunpack.c.h.b16 %v693
    %v960 = vunpack.c.l.b16 %v694
    %v961 = vunpack.c.l.b16 %v695
    %v962 = vunpack.c.h.b16 %v695
    %v963 = vunpack.c.l.b16 %v696
    %v964 = vunpack.c.h.b16 %v696
    %v965 = vunpack.c.l.b16 %v697
    %v966 = vunpack.c.h.b16 %v697
    %v967 = vunpack.c.l.b16 %v698
    %v968 = vunpack.c.l.b16 %v699
    %v969 = vunpack.c.h.b16 %v699
    %v970 = vunpack.c.l.b16 %v700
    %v971 = vunpack.c.h.b16 %v700
    %v972 = vunpack.c.l.b16 %v701
    %v973 = vunpack.c.h.b16 %v701
    %v974 = vunpack.c.l.b16 %v702
    %v975 = vunpack.c.l.b16 %v703
    %v976 = vunpack.c.h.b16 %v703
    %v977 = vunpack.c.l.b16 %v704
    %v978 = vunpack.c.h.b16 %v704
    %v979 = vunpack.c.l.b16 %v705
    %v980 = vunpack.c.h.b16 %v705
    %v981 = vunpack.c.l.b16 %v706
    %v982 = vunpack.c.l.b16 %v707
    %v983 = vunpack.c.h.b16 %v707
    %v984 = vunpack.c.l.b16 %v708
    %v985 = vunpack.c.h.b16 %v708
    %v986 = vunpack.c.l.b16 %v709
    %v987 = vunpack.c.h.b16 %v709
    %v988 = vunpack.c.l.b16 %v710
    %v989 = vunpack.c.l.b16 %v711
    %v990 = vunpack.c.h.b16 %v711
    %v991 = vunpack.c.l.b16 %v712
    %v992 = vunpack.c.h.b16 %v712
    %v993 = vunpack.c.l.b16 %v713
    %v994 = vunpack.c.h.b16 %v713
    %v995 = vunpack.c.l.b16 %v714
    %v996 = vunpack.c.l.b16 %v715
    %v997 = vunpack.c.h.b16 %v715
    %v998 = vunpack.c.l.b16 %v716
    %v999 = vunpack.c.h.b16 %v716
    %v1000 = vunpack.c.l.b16 %v717
    %v1001 = vunpack.c.h.b16 %v717
    %v1002 = vunpack.c.l.b16 %v718
    %v1003 = vunpack.c.l.b16 %v719
    %v1004 = vunpack.c.h.b16 %v719
    %v1005 = vunpack.c.l.b16 %v720
    %v1006 = vunpack.c.h.b16 %v720
    %v1007 = vunpack.c.l.b16 %v721
    %v1008 = vunpack.c.h.b16 %v721
    %v1009 = vunpack.c.l.b16 %v722
    %v1010 = vunpack.c.l.b16 %v723
    %v1011 = vunpack.c.h.b16 %v723
    %v1012 = vunpack.c.l.b16 %v724
    %v1013 = vunpack.c.h.b16 %v724
    %v1014 = vunpack.c.l.b16 %v725
    %v1015 = vunpack.c.h.b16 %v725
    %v1016 = vunpack.c.l.b16 %v726
    %v1017 = vunpack.c.l.b16 %v727
    %v1018 = vunpack.c.h.b16 %v727
    %v1019 = vunpack.c.l.b16 %v728
    %v1020 = vunpack.c.h.b16 %v728
    %v1021 = vunpack.c.l.b16 %v729
    %v1022 = vunpack.c.h.b16 %v729
    %v1023 = vunpack.c.l.b16 %v730
    %v1024 = vunpack.c.l.b16 %v731
    %v1025 = vunpack.c.h.b16 %v731
    %v1026 = vunpack.c.l.b16 %v732
    %v1027 = vunpack.c.h.b16 %v732
    %v1028 = vunpack.c.l.b16 %v733
    %v1029 = vunpack.c.h.b16 %v733
    %v1030 = vunpack.c.l.b16 %v734
    %v1031 = vpack.c.b16 %v863, %v856
    %v1032 = vpack.c.b16 %v864, %v857
    %v1033 = vpack.c.b16 %v865, %v858
    %v1034 = vpack.c.b16 %v866, %v859
    %v1035 = vpack.c.b16 %v867, %v860
    %v1036 = vpack.c.b16 %v868, %v861
    %v1037 = vpack.c.b16 %v869, %v862
    %v1038 = vpack.c.b16 %v877, %v870
    %v1039 = vpack.c.b16 %v878, %v871
    %v1040 = vpack.c.b16 %v879, %v872
    %v1041 = vpack.c.b16 %v880, %v873
    %v1042 = vpack.c.b16 %v881, %v874
    %v1043 = vpack.c.b16 %v882, %v875
    %v1044 = vpack.c.b16 %v883, %v876
    %v1045 = vpack.c.b16 %v891, %v884
    %v1046 = vpack.c.b16 %v892, %v885
    %v1047 = vpack.c.b16 %v893, %v886
    %v1048 = vpack.c.b16 %v894, %v887
    %v1049 = vpack.c.b16 %v895, %v888
    %v1050 = vpack.c.b16 %v896, %v889
    %v1051 = vpack.c.b16 %v897, %v890
    %v1052 = vpack.c.b16 %v905, %v898
    %v1053 = vpack.c.b16 %v906, %v899
    %v1054 = vpack.c.b16 %v907, %v900
    %v1055 = vpack.c.b16 %v908, %v901
    %v1056 = vpack.c.b16 %v909, %v902
    %v1057 = vpack.c.b16 %v910, %v903
    %v1058 = vpack.c.b16 %v911, %v904
    %v1059 = vpack.c.b16 %v919, %v912
    %v1060 = vpack.c.b16 %v920, %v913
    %v1061 = vpack.c.b16 %v921, %v914
    %v1062 = vpack.c.b16 %v922, %v915
    %v1063 = vpack.c.b16 %v923, %v916
    %v1064 = vpack.c.b16 %v924, %v917
    %v1065 = vpack.c.b16 %v925, %v918
    %v1066 = vpack.c.b16 %v933, %v926
    %v1067 = vpack.c.b16 %v934, %v927
    %v1068 = vpack.c.b16 %v935, %v928
    %v1069 = vpack.c.b16 %v936, %v929
    %v1070 = vpack.c.b16 %v937, %v930
    %v1071 = vpack.c.b16 %v938, %v931
    %v1072 = vpack.c.b16 %v939, %v932
    %v1073 = vpack.c.b16 %v947, %v940
    %v1074 = vpack.c.b16 %v948, %v941
    %v1075 = vpack.c.b16 %v949, %v942
    %v1076 = vpack.c.b16 %v950, %v943
    %v1077 = vpack.c.b16 %v951, %v944
    %v1078 = vpack.c.b16 %v952, %v945
    %v1079 = vpack.c.b16 %v953, %v946
    %v1080 = vpack.c.b16 %v961, %v954
    %v1081 = vpack.c.b16 %v962, %v955
    %v1082 = vpack.c.b16 %v963, %v956
    %v1083 = vpack.c.b16 %v964, %v957
    %v1084 = vpack.c.b16 %v965, %v958
    %v1085 = vpack.c.b16 %v966, %v959
    %v1086 = vpack.c.b16 %v967, %v960
    %v1087 = vpack.c.b16 %v975, %v968
    %v1088 = vpack.c.b16 %v976, %v969
    %v1089 = vpack.c.b16 %v977, %v970
    %v1090 = vpack.c.b16 %v978, %v971
    %v1091 = vpack.c.b16 %v979, %v972
    %v1092 = vpack.c.b16 %v980, %v973
    %v1093 = vpack.c.b16 %v981, %v974
    %v1094 = vpack.c.b16 %v989, %v982
    %v1095 = vpack.c.b16 %v990, %v983
    %v1096 = vpack.c.b16 %v991, %v984
    %v1097 = vpack.c.b16 %v992, %v985
    %v1098 = vpack.c.b16 %v993, %v986
    %v1099 = vpack.c.b16 %v994, %v987
    %v1100 = vpack.c.b16 %v995, %v988
    %v1101 = vpack.c.b16 %v1003, %v996
    %v1102 = vpack.c.b16 %v1004, %v997
    %v1103 = vpack.c.b16 %v1005, %v998
    %v1104 = vpack.c.b16 %v1006, %v999
    %v1105 = vpack.c.b16 %v1007, %v1000
    %v1106 = vpack.c.b16 %v1008, %v1001
    %v1107 = vpack.c.b16 %v1009, %v1002
    %v1108 = vpack.c.b16 %v1017, %v1010
    %v1109 = vpack.c.b16 %v1018, %v1011
    %v1110 = vpack.c.b16 %v1019, %v1012
    %v1111 = vpack.c.b16 %v1020, %v1013
    %v1112 = vpack.c.b16 %v1021, %v1014
    %v1113 = vpack.c.b16 %v1022, %v1015
    %v1114 = vpack.c.b16 %v1023, %v1016
    %v1115 = vpack.c.b16 %v1024, %v1024
    %v1116 = vpack.c.b16 %v1025, %v1025
    %v1117 = vpack.c.b16 %v1026, %v1026
    %v1118 = vpack.c.b16 %v1027, %v1027
    %v1119 = vpack.c.b16 %v1028, %v1028
    %v1120 = vpack.c.b16 %v1029, %v1029
    %v1121 = vpack.c.b16 %v1030, %v1030
    %vm1206 = vcmask 588800
    %v1208 = vsel %vm1206, %v754, 0
    %vm1210 = vcmask 1043456
    %v1212 = vsel %vm1210, %v1115, 0
    %v1215 = vsel %vm1210, %v1116, 0
    %v1218 = vsel %vm1210, %v1117, 0
    %v1221 = vsel %vm1210, %v1118, 0
    %v1224 = vsel %vm1210, %v1119, 0
    %v1227 = vsel %vm1210, %v1120, 0
    %v1230 = vsel %vm1210, %v1121, 0
    %1232 = vmatprep.subr.bf16.mxu0 %v1032
    %1233 = vmatpush1.bf16.msra.mxu0 %v1031
    %1234 = vmatprep.subr.bf16.mxu0 %v1039
    %1235 = vmatpush1.bf16.msra.mxu0 %v1038
    %1236 = vmatprep.subr.bf16.mxu0 %v1046
    %1237 = vmatpush1.bf16.msra.mxu0 %v1045
    %1238 = vmatprep.subr.bf16.mxu0 %v1053
    %1239 = vmatpush1.bf16.msra.mxu0 %v1052
    %1240 = vmatprep.subr.bf16.mxu0 %v1060
    %1241 = vmatpush1.bf16.msra.mxu0 %v1059
    %1242 = vmatprep.subr.bf16.mxu0 %v1067
    %1243 = vmatpush1.bf16.msra.mxu0 %v1066
    %1244 = vmatprep.subr.bf16.mxu0 %v1074
    %1245 = vmatpush1.bf16.msra.mxu0 %v1073
    %1246 = vmatprep.subr.bf16.mxu0 %v1081
    %1247 = vmatpush1.bf16.msra.mxu0 %v1080
    %1248 = vmatprep.subr.bf16.mxu0 %v1088
    %1249 = vmatpush1.bf16.msra.mxu0 %v1087
    %1250 = vmatprep.subr.bf16.mxu0 %v1095
    %1251 = vmatpush1.bf16.msra.mxu0 %v1094
    %1252 = vmatprep.subr.bf16.mxu0 %v1102
    %1253 = vmatpush1.bf16.msra.mxu0 %v1101
    %1254 = vmatprep.subr.bf16.mxu0 %v1109
    %1255 = vmatpush1.bf16.msra.mxu0 %v1108
    %1256 = vmatprep.subr.bf16.mxu0 %v1215
    %1257 = vmatpush1.bf16.msra.mxu0 %v1212
    %1258 = vmatprep.subr.bf16.mxu0 0
    %1259 = vmatpush1.bf16.msra.mxu0 0
    %1260 = vmatprep.subr.bf16.mxu0 0
    %1261 = vmatpush1.bf16.msra.mxu0 0
    %1262 = vmatprep.subr.bf16.mxu0 0
    %1263 = vmatpush1.bf16.msra.mxu0 0
    %1264 = vmatprep.mubr.bf16.mxu0 %v1208
    %1265 = vmatmul.mubr.bf16.gmra.mrb[0].mxu0 %v753
    %v1266 = vpop.f32.mrb[0].mxu0
    %v1267 = vadd.f32 %v740, %v1266
    %v1268 = vpop.f32.mrb[0].mxu0
    %v1269 = vadd.f32 %v740, %v1268
    %v1270 = vpop.f32.mrb[0].mxu0
    %v1271 = vadd.f32 %v745, %v1270
    %v1272 = vpop.f32.mrb[0].mxu0
    %v1273 = vadd.f32 %v745, %v1272
    %1274 = vdwg.mxu0
    %1275 = vmatprep.subr.bf16.mxu0 %v1034
    %1276 = vmatpush1.bf16.msra.mxu0 %v1033
    %1277 = vmatprep.subr.bf16.mxu0 %v1041
    %1278 = vmatpush1.bf16.msra.mxu0 %v1040
    %1279 = vmatprep.subr.bf16.mxu0 %v1048
    %1280 = vmatpush1.bf16.msra.mxu0 %v1047
    %1281 = vmatprep.subr.bf16.mxu0 %v1055
    %1282 = vmatpush1.bf16.msra.mxu0 %v1054
    %1283 = vmatprep.subr.bf16.mxu0 %v1062
    %1284 = vmatpush1.bf16.msra.mxu0 %v1061
    %1285 = vmatprep.subr.bf16.mxu0 %v1069
    %1286 = vmatpush1.bf16.msra.mxu0 %v1068
    %1287 = vmatprep.subr.bf16.mxu0 %v1076
    %1288 = vmatpush1.bf16.msra.mxu0 %v1075
    %1289 = vmatprep.subr.bf16.mxu0 %v1083
    %1290 = vmatpush1.bf16.msra.mxu0 %v1082
    %1291 = vmatprep.subr.bf16.mxu0 %v1090
    %1292 = vmatpush1.bf16.msra.mxu0 %v1089
    %1293 = vmatprep.subr.bf16.mxu0 %v1097
    %1294 = vmatpush1.bf16.msra.mxu0 %v1096
    %1295 = vmatprep.subr.bf16.mxu0 %v1104
    %1296 = vmatpush1.bf16.msra.mxu0 %v1103
    %1297 = vmatprep.subr.bf16.mxu0 %v1111
    %1298 = vmatpush1.bf16.msra.mxu0 %v1110
    %1299 = vmatprep.subr.bf16.mxu0 %v1221
    %1300 = vmatpush1.bf16.msra.mxu0 %v1218
    %1301 = vmatprep.subr.bf16.mxu0 0
    %1302 = vmatpush1.bf16.msra.mxu0 0
    %1303 = vmatprep.subr.bf16.mxu0 0
    %1304 = vmatpush1.bf16.msra.mxu0 0
    %1305 = vmatprep.subr.bf16.mxu0 0
    %1306 = vmatpush1.bf16.msra.mxu0 0
    %1307 = vmatprep.mubr.bf16.mxu0 %v1208
    %1308 = vmatmul.mubr.bf16.gmra.mrb[0].mxu0 %v753
    %v1309 = vpop.f32.mrb[0].mxu0
    %v1310 = vadd.f32 %v740, %v1309
    %v1311 = vpop.f32.mrb[0].mxu0
    %v1312 = vadd.f32 %v740, %v1311
    %v1313 = vpop.f32.mrb[0].mxu0
    %v1314 = vadd.f32 %v745, %v1313
    %v1315 = vpop.f32.mrb[0].mxu0
    %v1316 = vadd.f32 %v745, %v1315
    %1317 = vdwg.mxu0
    %1318 = vmatprep.subr.bf16.mxu0 %v1036
    %1319 = vmatpush1.bf16.msra.mxu0 %v1035
    %1320 = vmatprep.subr.bf16.mxu0 %v1043
    %1321 = vmatpush1.bf16.msra.mxu0 %v1042
    %1322 = vmatprep.subr.bf16.mxu0 %v1050
    %1323 = vmatpush1.bf16.msra.mxu0 %v1049
    %1324 = vmatprep.subr.bf16.mxu0 %v1057
    %1325 = vmatpush1.bf16.msra.mxu0 %v1056
    %1326 = vmatprep.subr.bf16.mxu0 %v1064
    %1327 = vmatpush1.bf16.msra.mxu0 %v1063
    %1328 = vmatprep.subr.bf16.mxu0 %v1071
    %1329 = vmatpush1.bf16.msra.mxu0 %v1070
    %1330 = vmatprep.subr.bf16.mxu0 %v1078
    %1331 = vmatpush1.bf16.msra.mxu0 %v1077
    %1332 = vmatprep.subr.bf16.mxu0 %v1085
    %1333 = vmatpush1.bf16.msra.mxu0 %v1084
    %1334 = vmatprep.subr.bf16.mxu0 %v1092
    %1335 = vmatpush1.bf16.msra.mxu0 %v1091
    %1336 = vmatprep.subr.bf16.mxu0 %v1099
    %1337 = vmatpush1.bf16.msra.mxu0 %v1098
    %1338 = vmatprep.subr.bf16.mxu0 %v1106
    %1339 = vmatpush1.bf16.msra.mxu0 %v1105
    %1340 = vmatprep.subr.bf16.mxu0 %v1113
    %1341 = vmatpush1.bf16.msra.mxu0 %v1112
    %1342 = vmatprep.subr.bf16.mxu0 %v1227
    %1343 = vmatpush1.bf16.msra.mxu0 %v1224
    %1344 = vmatprep.subr.bf16.mxu0 0
    %1345 = vmatpush1.bf16.msra.mxu0 0
    %1346 = vmatprep.subr.bf16.mxu0 0
    %1347 = vmatpush1.bf16.msra.mxu0 0
    %1348 = vmatprep.subr.bf16.mxu0 0
    %1349 = vmatpush1.bf16.msra.mxu0 0
    %1350 = vmatprep.mubr.bf16.mxu0 %v1208
    %1351 = vmatmul.mubr.bf16.gmra.mrb[0].mxu0 %v753
    %v1352 = vpop.f32.mrb[0].mxu0
    %v1353 = vadd.f32 %v740, %v1352
    %v1354 = vpop.f32.mrb[0].mxu0
    %v1355 = vadd.f32 %v740, %v1354
    %v1356 = vpop.f32.mrb[0].mxu0
    %v1357 = vadd.f32 %v745, %v1356
    %v1358 = vpop.f32.mrb[0].mxu0
    %v1359 = vadd.f32 %v745, %v1358
    %1360 = vdwg.mxu0
    %1361 = vmatprep.subr.bf16.mxu0 0
    %1362 = vmatpush1.bf16.msra.mxu0 %v1037
    %1363 = vmatprep.subr.bf16.mxu0 0
    %1364 = vmatpush1.bf16.msra.mxu0 %v1044
    %1365 = vmatprep.subr.bf16.mxu0 0
    %1366 = vmatpush1.bf16.msra.mxu0 %v1051
    %1367 = vmatprep.subr.bf16.mxu0 0
    %1368 = vmatpush1.bf16.msra.mxu0 %v1058
    %1369 = vmatprep.subr.bf16.mxu0 0
    %1370 = vmatpush1.bf16.msra.mxu0 %v1065
    %1371 = vmatprep.subr.bf16.mxu0 0
    %1372 = vmatpush1.bf16.msra.mxu0 %v1072
    %1373 = vmatprep.subr.bf16.mxu0 0
    %1374 = vmatpush1.bf16.msra.mxu0 %v1079
    %1375 = vmatprep.subr.bf16.mxu0 0
    %1376 = vmatpush1.bf16.msra.mxu0 %v1086
    %1377 = vmatprep.subr.bf16.mxu0 0
    %1378 = vmatpush1.bf16.msra.mxu0 %v1093
    %1379 = vmatprep.subr.bf16.mxu0 0
    %1380 = vmatpush1.bf16.msra.mxu0 %v1100
    %1381 = vmatprep.subr.bf16.mxu0 0
    %1382 = vmatpush1.bf16.msra.mxu0 %v1107
    %1383 = vmatprep.subr.bf16.mxu0 0
    %1384 = vmatpush1.bf16.msra.mxu0 %v1114
    %1385 = vmatprep.subr.bf16.mxu0 0
    %1386 = vmatpush1.bf16.msra.mxu0 %v1230
    %1387 = vmatprep.subr.bf16.mxu0 0
    %1388 = vmatpush1.bf16.msra.mxu0 0
    %1389 = vmatprep.subr.bf16.mxu0 0
    %1390 = vmatpush1.bf16.msra.mxu0 0
    %1391 = vmatprep.subr.bf16.mxu0 0
    %1392 = vmatpush1.bf16.msra.mxu0 0
    %1393 = vmatprep.mubr.bf16.mxu0 %v1208
    %1394 = vmatmul.mubr.bf16.gmra.mrb[0].mxu0 %v753
    %v1395 = vpop.f32.mrb[0].mxu0
    %v1396 = vadd.f32 %v740, %v1395
    %v1397 = vpop.f32.mrb[0].mxu0
    %v1398 = vpop.f32.mrb[0].mxu0
    %v1399 = vadd.f32 %v745, %v1398
    %v1400 = vpop.f32.mrb[0].mxu0
    %1401 = vdwg.mxu0
    %v1402 = vmax.f32 %v1267, 0.0
    %v1403 = vmax.f32 %v1269, 0.0
    %v1404 = vmax.f32 %v1310, 0.0
    %v1405 = vmax.f32 %v1312, 0.0
    %v1406 = vmax.f32 %v1353, 0.0
    %v1407 = vmax.f32 %v1355, 0.0
    %v1408 = vmax.f32 %v1396, 0.0
    %v1409 = vmax.f32 %v1271, 0.0
    %v1410 = vmax.f32 %v1273, 0.0
    %v1411 = vmax.f32 %v1314, 0.0
    %v1412 = vmax.f32 %v1316, 0.0
    %v1413 = vmax.f32 %v1357, 0.0
    %v1414 = vmax.f32 %v1359, 0.0
    %v1415 = vmax.f32 %v1399, 0.0
    %1430 = vrot.lane.b32.xlu0 %v1402, 127
    %v1431 = vpop.permute.xlu0 %1430
    %1432 = vrot.lane.b32.xlu0 %v1403, 127
    %v1433 = vpop.permute.xlu0 %1432
    %1434 = vrot.lane.b32.xlu0 %v1404, 127
    %v1435 = vpop.permute.xlu0 %1434
    %1436 = vrot.lane.b32.xlu0 %v1405, 127
    %v1437 = vpop.permute.xlu0 %1436
    %1438 = vrot.lane.b32.xlu0 %v1406, 127
    %v1439 = vpop.permute.xlu0 %1438
    %1440 = vrot.lane.b32.xlu0 %v1407, 127
    %v1441 = vpop.permute.xlu0 %1440
    %1442 = vrot.lane.b32.xlu0 %v1408, 127
    %v1443 = vpop.permute.xlu0 %1442
    %1444 = vrot.lane.b32.xlu0 %v1409, 127
    %v1445 = vpop.permute.xlu0 %1444
    %1446 = vrot.lane.b32.xlu0 %v1410, 127
    %v1447 = vpop.permute.xlu0 %1446
    %1448 = vrot.lane.b32.xlu0 %v1411, 127
    %v1449 = vpop.permute.xlu0 %1448
    %1450 = vrot.lane.b32.xlu0 %v1412, 127
    %v1451 = vpop.permute.xlu0 %1450
    %1452 = vrot.lane.b32.xlu0 %v1413, 127
    %v1453 = vpop.permute.xlu0 %1452
    %1454 = vrot.lane.b32.xlu0 %v1414, 127
    %v1455 = vpop.permute.xlu0 %1454
    %1456 = vrot.lane.b32.xlu0 %v1415, 127
    %v1457 = vpop.permute.xlu0 %1456
    %vm1458 = vcmask 1039360
    %v1459 = vsel %vm1458, %v1431, %v1433
    %v1460 = vsel %vm1458, %v1433, %v1435
    %v1461 = vsel %vm1458, %v1435, %v1437
    %v1462 = vsel %vm1458, %v1437, %v1439
    %v1463 = vsel %vm1458, %v1439, %v1441
    %v1464 = vsel %vm1458, %v1441, %v1443
    %v1465 = vsel %vm1458, %v1445, %v1447
    %v1466 = vsel %vm1458, %v1447, %v1449
    %v1467 = vsel %vm1458, %v1449, %v1451
    %v1468 = vsel %vm1458, %v1451, %v1453
    %v1469 = vsel %vm1458, %v1453, %v1455
    %v1470 = vsel %vm1458, %v1455, %v1457
    %v1485 = vmax.f32 %v1402, %v1459
    %v1486 = vmax.f32 %v1403, %v1460
    %v1487 = vmax.f32 %v1404, %v1461
    %v1488 = vmax.f32 %v1405, %v1462
    %v1489 = vmax.f32 %v1406, %v1463
    %v1490 = vmax.f32 %v1407, %v1464
    %v1491 = vmax.f32 %v1408, %v1443
    %v1492 = vmax.f32 %v1409, %v1465
    %v1493 = vmax.f32 %v1410, %v1466
    %v1494 = vmax.f32 %v1411, %v1467
    %v1495 = vmax.f32 %v1412, %v1468
    %v1496 = vmax.f32 %v1413, %v1469
    %v1497 = vmax.f32 %v1414, %v1470
    %v1498 = vmax.f32 %v1415, %v1457
    %1513 = vrot.lane.b32.xlu0 %v1485, 96
    %v1514 = vpop.permute.xlu0 %1513
    %1515 = vrot.lane.b32.xlu0 %v1486, 96
    %v1516 = vpop.permute.xlu0 %1515
    %1517 = vrot.lane.b32.xlu0 %v1487, 96
    %v1518 = vpop.permute.xlu0 %1517
    %1519 = vrot.lane.b32.xlu0 %v1488, 96
    %v1520 = vpop.permute.xlu0 %1519
    %1521 = vrot.lane.b32.xlu0 %v1489, 96
    %v1522 = vpop.permute.xlu0 %1521
    %1523 = vrot.lane.b32.xlu0 %v1490, 96
    %v1524 = vpop.permute.xlu0 %1523
    %1525 = vrot.lane.b32.xlu0 %v1491, 96
    %v1526 = vpop.permute.xlu0 %1525
    %1527 = vrot.lane.b32.xlu0 %v1492, 96
    %v1528 = vpop.permute.xlu0 %1527
    %1529 = vrot.lane.b32.xlu0 %v1493, 96
    %v1530 = vpop.permute.xlu0 %1529
    %1531 = vrot.lane.b32.xlu0 %v1494, 96
    %v1532 = vpop.permute.xlu0 %1531
    %1533 = vrot.lane.b32.xlu0 %v1495, 96
    %v1534 = vpop.permute.xlu0 %1533
    %1535 = vrot.lane.b32.xlu0 %v1496, 96
    %v1536 = vpop.permute.xlu0 %1535
    %1537 = vrot.lane.b32.xlu0 %v1497, 96
    %v1538 = vpop.permute.xlu0 %1537
    %1539 = vrot.lane.b32.xlu0 %v1498, 96
    %v1540 = vpop.permute.xlu0 %1539
    %vm1541 = vcmask 785408
    %v1542 = vsel %vm1541, %v1514, %v1516
    %v1543 = vsel %vm1541, %v1516, %v1518
    %v1544 = vsel %vm1541, %v1518, %v1520
    %v1545 = vsel %vm1541, %v1520, %v1522
    %v1546 = vsel %vm1541, %v1522, %v1524
    %v1547 = vsel %vm1541, %v1524, %v1526
    %v1548 = vsel %vm1541, %v1528, %v1530
    %v1549 = vsel %vm1541, %v1530, %v1532
    %v1550 = vsel %vm1541, %v1532, %v1534
    %v1551 = vsel %vm1541, %v1534, %v1536
    %v1552 = vsel %vm1541, %v1536, %v1538
    %v1553 = vsel %vm1541, %v1538, %v1540
    %v1568 = vmax.f32 %v1485, %v1542
    %v1569 = vmax.f32 %v1486, %v1543
    %v1570 = vmax.f32 %v1487, %v1544
    %v1571 = vmax.f32 %v1488, %v1545
    %v1572 = vmax.f32 %v1489, %v1546
    %v1573 = vmax.f32 %v1490, %v1547
    %v1574 = vmax.f32 %v1491, %v1526
    %v1575 = vmax.f32 %v1492, %v1548
    %v1576 = vmax.f32 %v1493, %v1549
    %v1577 = vmax.f32 %v1494, %v1550
    %v1578 = vmax.f32 %v1495, %v1551
    %v1579 = vmax.f32 %v1496, %v1552
    %v1580 = vmax.f32 %v1497, %v1553
    %v1581 = vmax.f32 %v1498, %v1540
    %v1582 = vpack.c.bf16 %v1575, %v1568
    %v1583 = vpack.c.bf16 %v1576, %v1569
    %v1584 = vpack.c.bf16 %v1577, %v1570
    %v1585 = vpack.c.bf16 %v1578, %v1571
    %v1586 = vpack.c.bf16 %v1579, %v1572
    %v1587 = vpack.c.bf16 %v1580, %v1573
    %v1588 = vpack.c.bf16 %v1581, %v1574
    %1589 = vst [vmem:[#allocation3] sm:$0xff] %v1582
    %1590 = vst [vmem:[#allocation3 + $0x8] sm:$0xff] %v1583
    %1591 = vst [vmem:[#allocation3 + $0x10] sm:$0xff] %v1584
    %1592 = vst [vmem:[#allocation3 + $0x18] sm:$0xff] %v1585
    %1593 = vst [vmem:[#allocation3 + $0x20] sm:$0xff] %v1586
    %1594 = vst [vmem:[#allocation3 + $0x28] sm:$0xff] %v1587
    %vm1595 = vcmask 744448
    %1596 = vst.msk [vmem:[#allocation3 + $0x30] sm:$0xff] %vm1595, %v1588
    %s1597 = scalar_lea.vmem %s0, 32
    %v1598 = vld [vmem:[%s1597] sm:$0xff]
    %v1599 = vld [vmem:[%s1597 + $0x8] sm:$0xff]
    %v1600 = vld [vmem:[%s1597 + $0x10] sm:$0xff]
    %v1601 = vld [vmem:[%s1597 + $0x18] sm:$0xff]
    %1602 = vst [vmem:[#allocation2] sm:$0xff] %v1598
    %1603 = vst [vmem:[#allocation2 + $0x8] sm:$0xff] %v1599
    %1604 = vst [vmem:[#allocation2 + $0x10] sm:$0xff] %v1600
    %1605 = vst.msk [vmem:[#allocation2 + $0x18] sm:$0xf] %vm39, %v1601
    %1610 = vrot.lane.b32.xlu0 %v1598, 127
    %v1611 = vpop.permute.xlu0 %1610
    %1612 = vrot.lane.b32.xlu0 %v1599, 127
    %v1613 = vpop.permute.xlu0 %1612
    %1614 = vrot.lane.b32.xlu0 %v1600, 127
    %v1615 = vpop.permute.xlu0 %1614
    %1616 = vrot.lane.b32.xlu0 %v1601, 127
    %v1617 = vpop.permute.xlu0 %1616
    %v1618 = vrot.slane %v1611, 4
    %v1619 = vrot.slane %v1613, 4
    %v1620 = vrot.slane %v1615, 4
    %v1621 = vrot.slane %v1617, 4
    %v1622 = vsel %vm57, %v1618, %v1619
    %v1623 = vsel %vm59, %v1611, %v1622
    %v1624 = vsel %vm57, %v1619, %v1620
    %v1625 = vsel %vm59, %v1613, %v1624
    %v1626 = vsel %vm57, %v1620, %v1621
    %v1627 = vsel %vm59, %v1615, %v1626
    %1632 = vst [vmem:[#allocation2 + $0x1c] sm:$0xff] %v1623
    %1633 = vst [vmem:[#allocation2 + $0x24] sm:$0xff] %v1625
    %1634 = vst [vmem:[#allocation2 + $0x2c] sm:$0xff] %v1627
    %1635 = vst.msk [vmem:[#allocation2 + $0x34] sm:$0xf] %vm39, %v1617
    %1636 = vrot.lane.b32.xlu0 %v1598, 126
    %v1637 = vpop.permute.xlu0 %1636
    %1638 = vrot.lane.b32.xlu0 %v1599, 126
    %v1639 = vpop.permute.xlu0 %1638
    %1640 = vrot.lane.b32.xlu0 %v1600, 126
    %v1641 = vpop.permute.xlu0 %1640
    %1642 = vrot.lane.b32.xlu0 %v1601, 126
    %v1643 = vpop.permute.xlu0 %1642
    %v1644 = vrot.slane %v1637, 4
    %v1645 = vrot.slane %v1639, 4
    %v1646 = vrot.slane %v1641, 4
    %v1647 = vrot.slane %v1643, 4
    %v1648 = vsel %vm57, %v1644, %v1645
    %v1649 = vsel %vm86, %v1637, %v1648
    %v1650 = vsel %vm57, %v1645, %v1646
    %v1651 = vsel %vm86, %v1639, %v1650
    %v1652 = vsel %vm57, %v1646, %v1647
    %v1653 = vsel %vm86, %v1641, %v1652
    %1658 = vst [vmem:[#allocation2 + $0x38] sm:$0xff] %v1649
    %1659 = vst [vmem:[#allocation2 + $0x40] sm:$0xff] %v1651
    %1660 = vst [vmem:[#allocation2 + $0x48] sm:$0xff] %v1653
    %1661 = vst.msk [vmem:[#allocation2 + $0x50] sm:$0xf] %vm39, %v1643
    %1662 = vrot.lane.b32.xlu0 %v1598, 125
    %v1663 = vpop.permute.xlu0 %1662
    %1664 = vrot.lane.b32.xlu0 %v1599, 125
    %v1665 = vpop.permute.xlu0 %1664
    %1666 = vrot.lane.b32.xlu0 %v1600, 125
    %v1667 = vpop.permute.xlu0 %1666
    %1668 = vrot.lane.b32.xlu0 %v1601, 125
    %v1669 = vpop.permute.xlu0 %1668
    %v1670 = vrot.slane %v1663, 4
    %v1671 = vrot.slane %v1665, 4
    %v1672 = vrot.slane %v1667, 4
    %v1673 = vrot.slane %v1669, 4
    %v1674 = vsel %vm57, %v1670, %v1671
    %v1675 = vsel %vm113, %v1663, %v1674
    %v1676 = vsel %vm57, %v1671, %v1672
    %v1677 = vsel %vm113, %v1665, %v1676
    %v1678 = vsel %vm57, %v1672, %v1673
    %v1679 = vsel %vm113, %v1667, %v1678
    %1684 = vst [vmem:[#allocation2 + $0x54] sm:$0xff] %v1675
    %1685 = vst [vmem:[#allocation2 + $0x5c] sm:$0xff] %v1677
    %1686 = vst [vmem:[#allocation2 + $0x64] sm:$0xff] %v1679
    %1687 = vst.msk [vmem:[#allocation2 + $0x6c] sm:$0xf] %vm39, %v1669
    %1688 = vrot.lane.b32.xlu0 %v1598, 124
    %v1689 = vpop.permute.xlu0 %1688
    %1690 = vrot.lane.b32.xlu0 %v1599, 124
    %v1691 = vpop.permute.xlu0 %1690
    %1692 = vrot.lane.b32.xlu0 %v1600, 124
    %v1693 = vpop.permute.xlu0 %1692
    %1694 = vrot.lane.b32.xlu0 %v1601, 124
    %v1695 = vpop.permute.xlu0 %1694
    %v1696 = vrot.slane %v1689, 4
    %v1697 = vrot.slane %v1691, 4
    %v1698 = vrot.slane %v1693, 4
    %v1699 = vrot.slane %v1695, 4
    %v1700 = vsel %vm57, %v1696, %v1697
    %v1701 = vsel %vm140, %v1689, %v1700
    %v1702 = vsel %vm57, %v1697, %v1698
    %v1703 = vsel %vm140, %v1691, %v1702
    %v1704 = vsel %vm57, %v1698, %v1699
    %v1705 = vsel %vm140, %v1693, %v1704
    %1710 = vst [vmem:[#allocation2 + $0x70] sm:$0xff] %v1701
    %1711 = vst [vmem:[#allocation2 + $0x78] sm:$0xff] %v1703
    %1712 = vst [vmem:[#allocation2 + $0x80] sm:$0xff] %v1705
    %1713 = vst.msk [vmem:[#allocation2 + $0x88] sm:$0xf] %vm39, %v1695
    %1714 = vrot.lane.b32.xlu0 %v1598, 96
    %v1715 = vpop.permute.xlu0 %1714
    %1716 = vrot.lane.b32.xlu0 %v1599, 96
    %v1717 = vpop.permute.xlu0 %1716
    %1718 = vrot.lane.b32.xlu0 %v1600, 96
    %v1719 = vpop.permute.xlu0 %1718
    %1720 = vrot.lane.b32.xlu0 %v1601, 96
    %v1721 = vpop.permute.xlu0 %1720
    %v1722 = vrot.slane %v1715, 4
    %v1723 = vrot.slane %v1717, 4
    %v1724 = vrot.slane %v1719, 4
    %v1725 = vrot.slane %v1721, 4
    %v1726 = vsel %vm57, %v1722, %v1723
    %v1727 = vsel %vm167, %v1715, %v1726
    %v1728 = vsel %vm57, %v1723, %v1724
    %v1729 = vsel %vm167, %v1717, %v1728
    %v1730 = vsel %vm57, %v1724, %v1725
    %v1731 = vsel %vm167, %v1719, %v1730
    %v1732 = vsel %vm167, %v1721, %v1725
    %1737 = vst [vmem:[#allocation2 + $0x8c] sm:$0xff] %v1727
    %1738 = vst [vmem:[#allocation2 + $0x94] sm:$0xff] %v1729
    %1739 = vst [vmem:[#allocation2 + $0x9c] sm:$0xff] %v1731
    %1740 = vst.msk [vmem:[#allocation2 + $0xa4] sm:$0xf] %vm39, %v1732
    %1741 = vrot.lane.b32.xlu0 %v1598, 95
    %v1742 = vpop.permute.xlu0 %1741
    %1743 = vrot.lane.b32.xlu0 %v1599, 95
    %v1744 = vpop.permute.xlu0 %1743
    %1745 = vrot.lane.b32.xlu0 %v1600, 95
    %v1746 = vpop.permute.xlu0 %1745
    %1747 = vrot.lane.b32.xlu0 %v1601, 95
    %v1748 = vpop.permute.xlu0 %1747
    %v1749 = vrot.slane %v1742, 4
    %v1750 = vrot.slane %v1744, 4
    %v1751 = vrot.slane %v1746, 4
    %v1752 = vrot.slane %v1748, 4
    %v1753 = vsel %vm57, %v1749, %v1750
    %v1754 = vsel %vm195, %v1742, %v1753
    %v1755 = vsel %vm57, %v1750, %v1751
    %v1756 = vsel %vm195, %v1744, %v1755
    %v1757 = vsel %vm57, %v1751, %v1752
    %v1758 = vsel %vm195, %v1746, %v1757
    %v1759 = vsel %vm195, %v1748, %v1752
    %1764 = vst [vmem:[#allocation2 + $0xa8] sm:$0xff] %v1754
    %1765 = vst [vmem:[#allocation2 + $0xb0] sm:$0xff] %v1756
    %1766 = vst [vmem:[#allocation2 + $0xb8] sm:$0xff] %v1758
    %1767 = vst.msk [vmem:[#allocation2 + $0xc0] sm:$0xf] %vm39, %v1759
    %1768 = vrot.lane.b32.xlu0 %v1598, 94
    %v1769 = vpop.permute.xlu0 %1768
    %1770 = vrot.lane.b32.xlu0 %v1599, 94
    %v1771 = vpop.permute.xlu0 %1770
    %1772 = vrot.lane.b32.xlu0 %v1600, 94
    %v1773 = vpop.permute.xlu0 %1772
    %1774 = vrot.lane.b32.xlu0 %v1601, 94
    %v1775 = vpop.permute.xlu0 %1774
    %v1776 = vrot.slane %v1769, 4
    %v1777 = vrot.slane %v1771, 4
    %v1778 = vrot.slane %v1773, 4
    %v1779 = vrot.slane %v1775, 4
    %v1780 = vsel %vm57, %v1776, %v1777
    %v1781 = vsel %vm223, %v1769, %v1780
    %v1782 = vsel %vm57, %v1777, %v1778
    %v1783 = vsel %vm223, %v1771, %v1782
    %v1784 = vsel %vm57, %v1778, %v1779
    %v1785 = vsel %vm223, %v1773, %v1784
    %v1786 = vsel %vm223, %v1775, %v1779
    %1791 = vst [vmem:[#allocation2 + $0xc4] sm:$0xff] %v1781
    %1792 = vst [vmem:[#allocation2 + $0xcc] sm:$0xff] %v1783
    %1793 = vst [vmem:[#allocation2 + $0xd4] sm:$0xff] %v1785
    %1794 = vst.msk [vmem:[#allocation2 + $0xdc] sm:$0xf] %vm39, %v1786
    %1795 = vrot.lane.b32.xlu0 %v1598, 93
    %v1796 = vpop.permute.xlu0 %1795
    %1797 = vrot.lane.b32.xlu0 %v1599, 93
    %v1798 = vpop.permute.xlu0 %1797
    %1799 = vrot.lane.b32.xlu0 %v1600, 93
    %v1800 = vpop.permute.xlu0 %1799
    %1801 = vrot.lane.b32.xlu0 %v1601, 93
    %v1802 = vpop.permute.xlu0 %1801
    %v1803 = vrot.slane %v1796, 4
    %v1804 = vrot.slane %v1798, 4
    %v1805 = vrot.slane %v1800, 4
    %v1806 = vrot.slane %v1802, 4
    %v1807 = vsel %vm57, %v1803, %v1804
    %v1808 = vsel %vm251, %v1796, %v1807
    %v1809 = vsel %vm57, %v1804, %v1805
    %v1810 = vsel %vm251, %v1798, %v1809
    %v1811 = vsel %vm57, %v1805, %v1806
    %v1812 = vsel %vm251, %v1800, %v1811
    %v1813 = vsel %vm251, %v1802, %v1806
    %1818 = vst [vmem:[#allocation2 + $0xe0] sm:$0xff] %v1808
    %1819 = vst [vmem:[#allocation2 + $0xe8] sm:$0xff] %v1810
    %1820 = vst [vmem:[#allocation2 + $0xf0] sm:$0xff] %v1812
    %1821 = vst.msk [vmem:[#allocation2 + $0xf8] sm:$0xf] %vm39, %v1813
    %1822 = vrot.lane.b32.xlu0 %v1598, 92
    %v1823 = vpop.permute.xlu0 %1822
    %1824 = vrot.lane.b32.xlu0 %v1599, 92
    %v1825 = vpop.permute.xlu0 %1824
    %1826 = vrot.lane.b32.xlu0 %v1600, 92
    %v1827 = vpop.permute.xlu0 %1826
    %1828 = vrot.lane.b32.xlu0 %v1601, 92
    %v1829 = vpop.permute.xlu0 %1828
    %v1830 = vrot.slane %v1823, 4
    %v1831 = vrot.slane %v1825, 4
    %v1832 = vrot.slane %v1827, 4
    %v1833 = vrot.slane %v1829, 4
    %v1834 = vsel %vm57, %v1830, %v1831
    %v1835 = vsel %vm279, %v1823, %v1834
    %v1836 = vsel %vm57, %v1831, %v1832
    %v1837 = vsel %vm279, %v1825, %v1836
    %v1838 = vsel %vm57, %v1832, %v1833
    %v1839 = vsel %vm279, %v1827, %v1838
    %v1840 = vsel %vm279, %v1829, %v1833
    %1845 = vst [vmem:[#allocation2 + $0xfc] sm:$0xff] %v1835
    %1846 = vst [vmem:[#allocation2 + $0x104] sm:$0xff] %v1837
    %1847 = vst [vmem:[#allocation2 + $0x10c] sm:$0xff] %v1839
    %1848 = vst.msk [vmem:[#allocation2 + $0x114] sm:$0xf] %vm39, %v1840
    %1849 = vrot.lane.b32.xlu0 %v1598, 64
    %v1850 = vpop.permute.xlu0 %1849
    %1851 = vrot.lane.b32.xlu0 %v1599, 64
    %v1852 = vpop.permute.xlu0 %1851
    %1853 = vrot.lane.b32.xlu0 %v1600, 64
    %v1854 = vpop.permute.xlu0 %1853
    %1855 = vrot.lane.b32.xlu0 %v1601, 64
    %v1856 = vpop.permute.xlu0 %1855
    %v1857 = vrot.slane %v1850, 4
    %v1858 = vrot.slane %v1852, 4
    %v1859 = vrot.slane %v1854, 4
    %v1860 = vrot.slane %v1856, 4
    %v1861 = vsel %vm57, %v1857, %v1858
    %v1862 = vsel %vm307, %v1850, %v1861
    %v1863 = vsel %vm57, %v1858, %v1859
    %v1864 = vsel %vm307, %v1852, %v1863
    %v1865 = vsel %vm57, %v1859, %v1860
    %v1866 = vsel %vm307, %v1854, %v1865
    %v1867 = vsel %vm307, %v1856, %v1860
    %1872 = vst [vmem:[#allocation2 + $0x118] sm:$0xff] %v1862
    %1873 = vst [vmem:[#allocation2 + $0x120] sm:$0xff] %v1864
    %1874 = vst [vmem:[#allocation2 + $0x128] sm:$0xff] %v1866
    %1875 = vst.msk [vmem:[#allocation2 + $0x130] sm:$0xf] %vm39, %v1867
    %1876 = vrot.lane.b32.xlu0 %v1598, 63
    %v1877 = vpop.permute.xlu0 %1876
    %1878 = vrot.lane.b32.xlu0 %v1599, 63
    %v1879 = vpop.permute.xlu0 %1878
    %1880 = vrot.lane.b32.xlu0 %v1600, 63
    %v1881 = vpop.permute.xlu0 %1880
    %1882 = vrot.lane.b32.xlu0 %v1601, 63
    %v1883 = vpop.permute.xlu0 %1882
    %v1884 = vrot.slane %v1877, 4
    %v1885 = vrot.slane %v1879, 4
    %v1886 = vrot.slane %v1881, 4
    %v1887 = vrot.slane %v1883, 4
    %v1888 = vsel %vm57, %v1884, %v1885
    %v1889 = vsel %vm335, %v1877, %v1888
    %v1890 = vsel %vm57, %v1885, %v1886
    %v1891 = vsel %vm335, %v1879, %v1890
    %v1892 = vsel %vm57, %v1886, %v1887
    %v1893 = vsel %vm335, %v1881, %v1892
    %v1894 = vsel %vm335, %v1883, %v1887
    %1899 = vst [vmem:[#allocation2 + $0x134] sm:$0xff] %v1889
    %1900 = vst [vmem:[#allocation2 + $0x13c] sm:$0xff] %v1891
    %1901 = vst [vmem:[#allocation2 + $0x144] sm:$0xff] %v1893
    %1902 = vst.msk [vmem:[#allocation2 + $0x14c] sm:$0xf] %vm39, %v1894
    %1903 = vrot.lane.b32.xlu0 %v1598, 62
    %v1904 = vpop.permute.xlu0 %1903
    %1905 = vrot.lane.b32.xlu0 %v1599, 62
    %v1906 = vpop.permute.xlu0 %1905
    %1907 = vrot.lane.b32.xlu0 %v1600, 62
    %v1908 = vpop.permute.xlu0 %1907
    %1909 = vrot.lane.b32.xlu0 %v1601, 62
    %v1910 = vpop.permute.xlu0 %1909
    %v1911 = vrot.slane %v1904, 4
    %v1912 = vrot.slane %v1906, 4
    %v1913 = vrot.slane %v1908, 4
    %v1914 = vrot.slane %v1910, 4
    %v1915 = vsel %vm57, %v1911, %v1912
    %v1916 = vsel %vm363, %v1904, %v1915
    %v1917 = vsel %vm57, %v1912, %v1913
    %v1918 = vsel %vm363, %v1906, %v1917
    %v1919 = vsel %vm57, %v1913, %v1914
    %v1920 = vsel %vm363, %v1908, %v1919
    %v1921 = vsel %vm363, %v1910, %v1914
    %1926 = vst [vmem:[#allocation2 + $0x150] sm:$0xff] %v1916
    %1927 = vst [vmem:[#allocation2 + $0x158] sm:$0xff] %v1918
    %1928 = vst [vmem:[#allocation2 + $0x160] sm:$0xff] %v1920
    %1929 = vst.msk [vmem:[#allocation2 + $0x168] sm:$0xf] %vm39, %v1921
    %1930 = vrot.lane.b32.xlu0 %v1598, 61
    %v1931 = vpop.permute.xlu0 %1930
    %1932 = vrot.lane.b32.xlu0 %v1599, 61
    %v1933 = vpop.permute.xlu0 %1932
    %1934 = vrot.lane.b32.xlu0 %v1600, 61
    %v1935 = vpop.permute.xlu0 %1934
    %1936 = vrot.lane.b32.xlu0 %v1601, 61
    %v1937 = vpop.permute.xlu0 %1936
    %v1938 = vrot.slane %v1931, 4
    %v1939 = vrot.slane %v1933, 4
    %v1940 = vrot.slane %v1935, 4
    %v1941 = vrot.slane %v1937, 4
    %v1942 = vsel %vm57, %v1938, %v1939
    %v1943 = vsel %vm391, %v1931, %v1942
    %v1944 = vsel %vm57, %v1939, %v1940
    %v1945 = vsel %vm391, %v1933, %v1944
    %v1946 = vsel %vm57, %v1940, %v1941
    %v1947 = vsel %vm391, %v1935, %v1946
    %v1948 = vsel %vm391, %v1937, %v1941
    %1953 = vst [vmem:[#allocation2 + $0x16c] sm:$0xff] %v1943
    %1954 = vst [vmem:[#allocation2 + $0x174] sm:$0xff] %v1945
    %1955 = vst [vmem:[#allocation2 + $0x17c] sm:$0xff] %v1947
    %1956 = vst.msk [vmem:[#allocation2 + $0x184] sm:$0xf] %vm39, %v1948
    %1957 = vrot.lane.b32.xlu0 %v1598, 60
    %v1958 = vpop.permute.xlu0 %1957
    %1959 = vrot.lane.b32.xlu0 %v1599, 60
    %v1960 = vpop.permute.xlu0 %1959
    %1961 = vrot.lane.b32.xlu0 %v1600, 60
    %v1962 = vpop.permute.xlu0 %1961
    %1963 = vrot.lane.b32.xlu0 %v1601, 60
    %v1964 = vpop.permute.xlu0 %1963
    %v1965 = vrot.slane %v1958, 4
    %v1966 = vrot.slane %v1960, 4
    %v1967 = vrot.slane %v1962, 4
    %v1968 = vrot.slane %v1964, 4
    %v1969 = vsel %vm57, %v1965, %v1966
    %v1970 = vsel %vm419, %v1958, %v1969
    %v1971 = vsel %vm57, %v1966, %v1967
    %v1972 = vsel %vm419, %v1960, %v1971
    %v1973 = vsel %vm57, %v1967, %v1968
    %v1974 = vsel %vm419, %v1962, %v1973
    %v1975 = vsel %vm419, %v1964, %v1968
    %1980 = vst [vmem:[#allocation2 + $0x188] sm:$0xff] %v1970
    %1981 = vst [vmem:[#allocation2 + $0x190] sm:$0xff] %v1972
    %1982 = vst [vmem:[#allocation2 + $0x198] sm:$0xff] %v1974
    %1983 = vst.msk [vmem:[#allocation2 + $0x1a0] sm:$0xf] %vm39, %v1975
    %1984 = vrot.lane.b32.xlu0 %v1598, 32
    %v1985 = vpop.permute.xlu0 %1984
    %1986 = vrot.lane.b32.xlu0 %v1599, 32
    %v1987 = vpop.permute.xlu0 %1986
    %1988 = vrot.lane.b32.xlu0 %v1600, 32
    %v1989 = vpop.permute.xlu0 %1988
    %1990 = vrot.lane.b32.xlu0 %v1601, 32
    %v1991 = vpop.permute.xlu0 %1990
    %v1992 = vrot.slane %v1985, 4
    %v1993 = vrot.slane %v1987, 4
    %v1994 = vrot.slane %v1989, 4
    %v1995 = vrot.slane %v1991, 4
    %v1996 = vsel %vm57, %v1992, %v1993
    %v1997 = vsel %vm447, %v1985, %v1996
    %v1998 = vsel %vm57, %v1993, %v1994
    %v1999 = vsel %vm447, %v1987, %v1998
    %v2000 = vsel %vm57, %v1994, %v1995
    %v2001 = vsel %vm447, %v1989, %v2000
    %v2002 = vsel %vm447, %v1991, %v1995
    %2007 = vst [vmem:[#allocation2 + $0x1a4] sm:$0xff] %v1997
    %2008 = vst [vmem:[#allocation2 + $0x1ac] sm:$0xff] %v1999
    %2009 = vst [vmem:[#allocation2 + $0x1b4] sm:$0xff] %v2001
    %2010 = vst.msk [vmem:[#allocation2 + $0x1bc] sm:$0xf] %vm39, %v2002
    %2011 = vrot.lane.b32.xlu0 %v1598, 31
    %v2012 = vpop.permute.xlu0 %2011
    %2013 = vrot.lane.b32.xlu0 %v1599, 31
    %v2014 = vpop.permute.xlu0 %2013
    %2015 = vrot.lane.b32.xlu0 %v1600, 31
    %v2016 = vpop.permute.xlu0 %2015
    %2017 = vrot.lane.b32.xlu0 %v1601, 31
    %v2018 = vpop.permute.xlu0 %2017
    %v2019 = vrot.slane %v2012, 4
    %v2020 = vrot.slane %v2014, 4
    %v2021 = vrot.slane %v2016, 4
    %v2022 = vrot.slane %v2018, 4
    %v2023 = vsel %vm57, %v2019, %v2020
    %v2024 = vsel %vm475, %v2012, %v2023
    %v2025 = vsel %vm57, %v2020, %v2021
    %v2026 = vsel %vm475, %v2014, %v2025
    %v2027 = vsel %vm57, %v2021, %v2022
    %v2028 = vsel %vm475, %v2016, %v2027
    %v2029 = vsel %vm475, %v2018, %v2022
    %2034 = vst [vmem:[#allocation2 + $0x1c0] sm:$0xff] %v2024
    %2035 = vst [vmem:[#allocation2 + $0x1c8] sm:$0xff] %v2026
    %2036 = vst [vmem:[#allocation2 + $0x1d0] sm:$0xff] %v2028
    %2037 = vst.msk [vmem:[#allocation2 + $0x1d8] sm:$0xf] %vm39, %v2029
    %2038 = vrot.lane.b32.xlu0 %v1598, 30
    %v2039 = vpop.permute.xlu0 %2038
    %2040 = vrot.lane.b32.xlu0 %v1599, 30
    %v2041 = vpop.permute.xlu0 %2040
    %2042 = vrot.lane.b32.xlu0 %v1600, 30
    %v2043 = vpop.permute.xlu0 %2042
    %2044 = vrot.lane.b32.xlu0 %v1601, 30
    %v2045 = vpop.permute.xlu0 %2044
    %v2046 = vrot.slane %v2039, 4
    %v2047 = vrot.slane %v2041, 4
    %v2048 = vrot.slane %v2043, 4
    %v2049 = vrot.slane %v2045, 4
    %v2050 = vsel %vm57, %v2046, %v2047
    %v2051 = vsel %vm503, %v2039, %v2050
    %v2052 = vsel %vm57, %v2047, %v2048
    %v2053 = vsel %vm503, %v2041, %v2052
    %v2054 = vsel %vm57, %v2048, %v2049
    %v2055 = vsel %vm503, %v2043, %v2054
    %v2056 = vsel %vm503, %v2045, %v2049
    %2061 = vst [vmem:[#allocation2 + $0x1dc] sm:$0xff] %v2051
    %2062 = vst [vmem:[#allocation2 + $0x1e4] sm:$0xff] %v2053
    %2063 = vst [vmem:[#allocation2 + $0x1ec] sm:$0xff] %v2055
    %2064 = vst.msk [vmem:[#allocation2 + $0x1f4] sm:$0xf] %vm39, %v2056
    %2065 = vrot.lane.b32.xlu0 %v1598, 29
    %v2066 = vpop.permute.xlu0 %2065
    %2067 = vrot.lane.b32.xlu0 %v1599, 29
    %v2068 = vpop.permute.xlu0 %2067
    %2069 = vrot.lane.b32.xlu0 %v1600, 29
    %v2070 = vpop.permute.xlu0 %2069
    %2071 = vrot.lane.b32.xlu0 %v1601, 29
    %v2072 = vpop.permute.xlu0 %2071
    %v2073 = vrot.slane %v2066, 4
    %v2074 = vrot.slane %v2068, 4
    %v2075 = vrot.slane %v2070, 4
    %v2076 = vrot.slane %v2072, 4
    %v2077 = vsel %vm57, %v2073, %v2074
    %v2078 = vsel %vm531, %v2066, %v2077
    %v2079 = vsel %vm57, %v2074, %v2075
    %v2080 = vsel %vm531, %v2068, %v2079
    %v2081 = vsel %vm57, %v2075, %v2076
    %v2082 = vsel %vm531, %v2070, %v2081
    %v2083 = vsel %vm531, %v2072, %v2076
    %2088 = vst [vmem:[#allocation2 + $0x1f8] sm:$0xff] %v2078
    %2089 = vst [vmem:[#allocation2 + $0x200] sm:$0xff] %v2080
    %2090 = vst [vmem:[#allocation2 + $0x208] sm:$0xff] %v2082
    %2091 = vst.msk [vmem:[#allocation2 + $0x210] sm:$0xf] %vm39, %v2083
    %2092 = vrot.lane.b32.xlu0 %v1598, 28
    %v2093 = vpop.permute.xlu0 %2092
    %2094 = vrot.lane.b32.xlu0 %v1599, 28
    %v2095 = vpop.permute.xlu0 %2094
    %2096 = vrot.lane.b32.xlu0 %v1600, 28
    %v2097 = vpop.permute.xlu0 %2096
    %2098 = vrot.lane.b32.xlu0 %v1601, 28
    %v2099 = vpop.permute.xlu0 %2098
    %v2100 = vrot.slane %v2093, 4
    %v2101 = vrot.slane %v2095, 4
    %v2102 = vrot.slane %v2097, 4
    %v2103 = vrot.slane %v2099, 4
    %v2104 = vsel %vm57, %v2100, %v2101
    %v2105 = vsel %vm559, %v2093, %v2104
    %v2106 = vsel %vm57, %v2101, %v2102
    %v2107 = vsel %vm559, %v2095, %v2106
    %v2108 = vsel %vm57, %v2102, %v2103
    %v2109 = vsel %vm559, %v2097, %v2108
    %v2110 = vsel %vm559, %v2099, %v2103
    %2115 = vst [vmem:[#allocation2 + $0x214] sm:$0xff] %v2105
    %2116 = vst [vmem:[#allocation2 + $0x21c] sm:$0xff] %v2107
    %2117 = vst [vmem:[#allocation2 + $0x224] sm:$0xff] %v2109
    %2118 = vst.msk [vmem:[#allocation2 + $0x22c] sm:$0xf] %vm39, %v2110
    %v2119 = vrot.slane %v1598, 4
    %v2120 = vrot.slane %v1599, 4
    %v2121 = vrot.slane %v1600, 4
    %v2122 = vrot.slane %v1601, 4
    %v2123 = vsel %vm57, %v2119, %v2120
    %v2124 = vsel %vm57, %v2120, %v2121
    %v2125 = vsel %vm57, %v2121, %v2122
    %2130 = vst [vmem:[#allocation2 + $0x230] sm:$0xff] %v2123
    %2131 = vst [vmem:[#allocation2 + $0x238] sm:$0xff] %v2124
    %2132 = vst [vmem:[#allocation2 + $0x240] sm:$0xff] %v2125
    %2133 = vst.msk [vmem:[#allocation2 + $0x248] sm:$0xf] %vm39, %v2122
    %v2134 = vsel %vm59, %v1622, %v1613
    %v2135 = vsel %vm59, %v1624, %v1615
    %v2136 = vsel %vm59, %v1626, %v1617
    %2141 = vst [vmem:[#allocation2 + $0x24c] sm:$0xff] %v2134
    %2142 = vst [vmem:[#allocation2 + $0x254] sm:$0xff] %v2135
    %2143 = vst [vmem:[#allocation2 + $0x25c] sm:$0xff] %v2136
    %2144 = vst.msk [vmem:[#allocation2 + $0x264] sm:$0xf] %vm39, %v1621
    %v2145 = vsel %vm86, %v1648, %v1639
    %v2146 = vsel %vm86, %v1650, %v1641
    %v2147 = vsel %vm86, %v1652, %v1643
    %2152 = vst [vmem:[#allocation2 + $0x268] sm:$0xff] %v2145
    %2153 = vst [vmem:[#allocation2 + $0x270] sm:$0xff] %v2146
    %2154 = vst [vmem:[#allocation2 + $0x278] sm:$0xff] %v2147
    %2155 = vst.msk [vmem:[#allocation2 + $0x280] sm:$0xf] %vm39, %v1647
    %v2156 = vsel %vm113, %v1674, %v1665
    %v2157 = vsel %vm113, %v1676, %v1667
    %v2158 = vsel %vm113, %v1678, %v1669
    %2163 = vst [vmem:[#allocation2 + $0x284] sm:$0xff] %v2156
    %2164 = vst [vmem:[#allocation2 + $0x28c] sm:$0xff] %v2157
    %2165 = vst [vmem:[#allocation2 + $0x294] sm:$0xff] %v2158
    %2166 = vst.msk [vmem:[#allocation2 + $0x29c] sm:$0xf] %vm39, %v1673
    %v2167 = vsel %vm140, %v1700, %v1691
    %v2168 = vsel %vm140, %v1702, %v1693
    %v2169 = vsel %vm140, %v1704, %v1695
    %2174 = vst [vmem:[#allocation2 + $0x2a0] sm:$0xff] %v2167
    %2175 = vst [vmem:[#allocation2 + $0x2a8] sm:$0xff] %v2168
    %2176 = vst [vmem:[#allocation2 + $0x2b0] sm:$0xff] %v2169
    %2177 = vst.msk [vmem:[#allocation2 + $0x2b8] sm:$0xf] %vm39, %v1699
    %v2178 = vld [vmem:[%s1] sm:$0xff]
    %v2179 = vld [vmem:[%s1 + $0x8] sm:$0xff]
    %v2180 = vld [vmem:[#allocation2] sm:$0xff]
    %v2181 = vld [vmem:[#allocation2 + $0x8] sm:$0xff]
    %v2182 = vld [vmem:[#allocation2 + $0x10] sm:$0xff]
    %v2183 = vld [vmem:[#allocation2 + $0x18] sm:$0xf]
    %v2184 = vld [vmem:[#allocation2 + $0x1c] sm:$0xff]
    %v2185 = vld [vmem:[#allocation2 + $0x24] sm:$0xff]
    %v2186 = vld [vmem:[#allocation2 + $0x2c] sm:$0xff]
    %v2187 = vld [vmem:[#allocation2 + $0x34] sm:$0xf]
    %v2188 = vld [vmem:[#allocation2 + $0x38] sm:$0xff]
    %v2189 = vld [vmem:[#allocation2 + $0x40] sm:$0xff]
    %v2190 = vld [vmem:[#allocation2 + $0x48] sm:$0xff]
    %v2191 = vld [vmem:[#allocation2 + $0x50] sm:$0xf]
    %v2192 = vld [vmem:[#allocation2 + $0x54] sm:$0xff]
    %v2193 = vld [vmem:[#allocation2 + $0x5c] sm:$0xff]
    %v2194 = vld [vmem:[#allocation2 + $0x64] sm:$0xff]
    %v2195 = vld [vmem:[#allocation2 + $0x6c] sm:$0xf]
    %v2196 = vld [vmem:[#allocation2 + $0x70] sm:$0xff]
    %v2197 = vld [vmem:[#allocation2 + $0x78] sm:$0xff]
    %v2198 = vld [vmem:[#allocation2 + $0x80] sm:$0xff]
    %v2199 = vld [vmem:[#allocation2 + $0x88] sm:$0xf]
    %v2200 = vld [vmem:[#allocation2 + $0x8c] sm:$0xff]
    %v2201 = vld [vmem:[#allocation2 + $0x94] sm:$0xff]
    %v2202 = vld [vmem:[#allocation2 + $0x9c] sm:$0xff]
    %v2203 = vld [vmem:[#allocation2 + $0xa4] sm:$0xf]
    %v2204 = vld [vmem:[#allocation2 + $0xa8] sm:$0xff]
    %v2205 = vld [vmem:[#allocation2 + $0xb0] sm:$0xff]
    %v2206 = vld [vmem:[#allocation2 + $0xb8] sm:$0xff]
    %v2207 = vld [vmem:[#allocation2 + $0xc0] sm:$0xf]
    %v2208 = vld [vmem:[#allocation2 + $0xc4] sm:$0xff]
    %v2209 = vld [vmem:[#allocation2 + $0xcc] sm:$0xff]
    %v2210 = vld [vmem:[#allocation2 + $0xd4] sm:$0xff]
    %v2211 = vld [vmem:[#allocation2 + $0xdc] sm:$0xf]
    %v2212 = vld [vmem:[#allocation2 + $0xe0] sm:$0xff]
    %v2213 = vld [vmem:[#allocation2 + $0xe8] sm:$0xff]
    %v2214 = vld [vmem:[#allocation2 + $0xf0] sm:$0xff]
    %v2215 = vld [vmem:[#allocation2 + $0xf8] sm:$0xf]
    %v2216 = vld [vmem:[#allocation2 + $0xfc] sm:$0xff]
    %v2217 = vld [vmem:[#allocation2 + $0x104] sm:$0xff]
    %v2218 = vld [vmem:[#allocation2 + $0x10c] sm:$0xff]
    %v2219 = vld [vmem:[#allocation2 + $0x114] sm:$0xf]
    %v2220 = vld [vmem:[#allocation2 + $0x118] sm:$0xff]
    %v2221 = vld [vmem:[#allocation2 + $0x120] sm:$0xff]
    %v2222 = vld [vmem:[#allocation2 + $0x128] sm:$0xff]
    %v2223 = vld [vmem:[#allocation2 + $0x130] sm:$0xf]
    %v2224 = vld [vmem:[#allocation2 + $0x134] sm:$0xff]
    %v2225 = vld [vmem:[#allocation2 + $0x13c] sm:$0xff]
    %v2226 = vld [vmem:[#allocation2 + $0x144] sm:$0xff]
    %v2227 = vld [vmem:[#allocation2 + $0x14c] sm:$0xf]
    %v2228 = vld [vmem:[#allocation2 + $0x150] sm:$0xff]
    %v2229 = vld [vmem:[#allocation2 + $0x158] sm:$0xff]
    %v2230 = vld [vmem:[#allocation2 + $0x160] sm:$0xff]
    %v2231 = vld [vmem:[#allocation2 + $0x168] sm:$0xf]
    %v2232 = vld [vmem:[#allocation2 + $0x16c] sm:$0xff]
    %v2233 = vld [vmem:[#allocation2 + $0x174] sm:$0xff]
    %v2234 = vld [vmem:[#allocation2 + $0x17c] sm:$0xff]
    %v2235 = vld [vmem:[#allocation2 + $0x184] sm:$0xf]
    %v2236 = vld [vmem:[#allocation2 + $0x188] sm:$0xff]
    %v2237 = vld [vmem:[#allocation2 + $0x190] sm:$0xff]
    %v2238 = vld [vmem:[#allocation2 + $0x198] sm:$0xff]
    %v2239 = vld [vmem:[#allocation2 + $0x1a0] sm:$0xf]
    %v2240 = vld [vmem:[#allocation2 + $0x1a4] sm:$0xff]
    %v2241 = vld [vmem:[#allocation2 + $0x1ac] sm:$0xff]
    %v2242 = vld [vmem:[#allocation2 + $0x1b4] sm:$0xff]
    %v2243 = vld [vmem:[#allocation2 + $0x1bc] sm:$0xf]
    %v2244 = vld [vmem:[#allocation2 + $0x1c0] sm:$0xff]
    %v2245 = vld [vmem:[#allocation2 + $0x1c8] sm:$0xff]
    %v2246 = vld [vmem:[#allocation2 + $0x1d0] sm:$0xff]
    %v2247 = vld [vmem:[#allocation2 + $0x1d8] sm:$0xf]
    %v2248 = vld [vmem:[#allocation2 + $0x1dc] sm:$0xff]
    %v2249 = vld [vmem:[#allocation2 + $0x1e4] sm:$0xff]
    %v2250 = vld [vmem:[#allocation2 + $0x1ec] sm:$0xff]
    %v2251 = vld [vmem:[#allocation2 + $0x1f4] sm:$0xf]
    %v2252 = vld [vmem:[#allocation2 + $0x1f8] sm:$0xff]
    %v2253 = vld [vmem:[#allocation2 + $0x200] sm:$0xff]
    %v2254 = vld [vmem:[#allocation2 + $0x208] sm:$0xff]
    %v2255 = vld [vmem:[#allocation2 + $0x210] sm:$0xf]
    %v2256 = vld [vmem:[#allocation2 + $0x214] sm:$0xff]
    %v2257 = vld [vmem:[#allocation2 + $0x21c] sm:$0xff]
    %v2258 = vld [vmem:[#allocation2 + $0x224] sm:$0xff]
    %v2259 = vld [vmem:[#allocation2 + $0x22c] sm:$0xf]
    %v2260 = vld [vmem:[#allocation2 + $0x230] sm:$0xff]
    %v2261 = vld [vmem:[#allocation2 + $0x238] sm:$0xff]
    %v2262 = vld [vmem:[#allocation2 + $0x240] sm:$0xff]
    %v2263 = vld [vmem:[#allocation2 + $0x248] sm:$0xf]
    %v2264 = vld [vmem:[#allocation2 + $0x24c] sm:$0xff]
    %v2265 = vld [vmem:[#allocation2 + $0x254] sm:$0xff]
    %v2266 = vld [vmem:[#allocation2 + $0x25c] sm:$0xff]
    %v2267 = vld [vmem:[#allocation2 + $0x264] sm:$0xf]
    %v2268 = vld [vmem:[#allocation2 + $0x268] sm:$0xff]
    %v2269 = vld [vmem:[#allocation2 + $0x270] sm:$0xff]
    %v2270 = vld [vmem:[#allocation2 + $0x278] sm:$0xff]
    %v2271 = vld [vmem:[#allocation2 + $0x280] sm:$0xf]
    %v2272 = vld [vmem:[#allocation2 + $0x284] sm:$0xff]
    %v2273 = vld [vmem:[#allocation2 + $0x28c] sm:$0xff]
    %v2274 = vld [vmem:[#allocation2 + $0x294] sm:$0xff]
    %v2275 = vld [vmem:[#allocation2 + $0x29c] sm:$0xf]
    %v2276 = vld [vmem:[#allocation2 + $0x2a0] sm:$0xff]
    %v2277 = vld [vmem:[#allocation2 + $0x2a8] sm:$0xff]
    %v2278 = vld [vmem:[#allocation2 + $0x2b0] sm:$0xff]
    %v2279 = vld [vmem:[#allocation2 + $0x2b8] sm:$0xf]
    %v2280 = vld [vmem:[%s2] sm:$0xff]
    %v2281 = vld [vmem:[%s2 + $0x8] sm:$0xff]
    %2283 = vset.pattern.permute.xlu0 0
    %2284 = vperm.xlu0 %2283, %v2280
    %v2285 = vpop.permute.xlu0 %2284
    %2288 = vset.pattern.permute.xlu0 0
    %2289 = vperm.xlu0 %2288, %v2281
    %v2290 = vpop.permute.xlu0 %2289
    %v2294 = vunpack.c.l.b16 %v2178
    %v2295 = vunpack.c.h.b16 %v2178
    %v2296 = vunpack.c.l.b16 %v2179
    %v2297 = vunpack.c.h.b16 %v2179
    %v2298 = vpack.c.b16 %v2296, %v2294
    %v2299 = vpack.c.b16 %v2297, %v2295
    %v2401 = vunpack.c.l.b16 %v2180
    %v2402 = vunpack.c.h.b16 %v2180
    %v2403 = vunpack.c.l.b16 %v2181
    %v2404 = vunpack.c.h.b16 %v2181
    %v2405 = vunpack.c.l.b16 %v2182
    %v2406 = vunpack.c.h.b16 %v2182
    %v2407 = vunpack.c.l.b16 %v2183
    %v2408 = vunpack.c.l.b16 %v2184
    %v2409 = vunpack.c.h.b16 %v2184
    %v2410 = vunpack.c.l.b16 %v2185
    %v2411 = vunpack.c.h.b16 %v2185
    %v2412 = vunpack.c.l.b16 %v2186
    %v2413 = vunpack.c.h.b16 %v2186
    %v2414 = vunpack.c.l.b16 %v2187
    %v2415 = vunpack.c.l.b16 %v2188
    %v2416 = vunpack.c.h.b16 %v2188
    %v2417 = vunpack.c.l.b16 %v2189
    %v2418 = vunpack.c.h.b16 %v2189
    %v2419 = vunpack.c.l.b16 %v2190
    %v2420 = vunpack.c.h.b16 %v2190
    %v2421 = vunpack.c.l.b16 %v2191
    %v2422 = vunpack.c.l.b16 %v2192
    %v2423 = vunpack.c.h.b16 %v2192
    %v2424 = vunpack.c.l.b16 %v2193
    %v2425 = vunpack.c.h.b16 %v2193
    %v2426 = vunpack.c.l.b16 %v2194
    %v2427 = vunpack.c.h.b16 %v2194
    %v2428 = vunpack.c.l.b16 %v2195
    %v2429 = vunpack.c.l.b16 %v2196
    %v2430 = vunpack.c.h.b16 %v2196
    %v2431 = vunpack.c.l.b16 %v2197
    %v2432 = vunpack.c.h.b16 %v2197
    %v2433 = vunpack.c.l.b16 %v2198
    %v2434 = vunpack.c.h.b16 %v2198
    %v2435 = vunpack.c.l.b16 %v2199
    %v2436 = vunpack.c.l.b16 %v2200
    %v2437 = vunpack.c.h.b16 %v2200
    %v2438 = vunpack.c.l.b16 %v2201
    %v2439 = vunpack.c.h.b16 %v2201
    %v2440 = vunpack.c.l.b16 %v2202
    %v2441 = vunpack.c.h.b16 %v2202
    %v2442 = vunpack.c.l.b16 %v2203
    %v2443 = vunpack.c.l.b16 %v2204
    %v2444 = vunpack.c.h.b16 %v2204
    %v2445 = vunpack.c.l.b16 %v2205
    %v2446 = vunpack.c.h.b16 %v2205
    %v2447 = vunpack.c.l.b16 %v2206
    %v2448 = vunpack.c.h.b16 %v2206
    %v2449 = vunpack.c.l.b16 %v2207
    %v2450 = vunpack.c.l.b16 %v2208
    %v2451 = vunpack.c.h.b16 %v2208
    %v2452 = vunpack.c.l.b16 %v2209
    %v2453 = vunpack.c.h.b16 %v2209
    %v2454 = vunpack.c.l.b16 %v2210
    %v2455 = vunpack.c.h.b16 %v2210
    %v2456 = vunpack.c.l.b16 %v2211
    %v2457 = vunpack.c.l.b16 %v2212
    %v2458 = vunpack.c.h.b16 %v2212
    %v2459 = vunpack.c.l.b16 %v2213
    %v2460 = vunpack.c.h.b16 %v2213
    %v2461 = vunpack.c.l.b16 %v2214
    %v2462 = vunpack.c.h.b16 %v2214
    %v2463 = vunpack.c.l.b16 %v2215
    %v2464 = vunpack.c.l.b16 %v2216
    %v2465 = vunpack.c.h.b16 %v2216
    %v2466 = vunpack.c.l.b16 %v2217
    %v2467 = vunpack.c.h.b16 %v2217
    %v2468 = vunpack.c.l.b16 %v2218
    %v2469 = vunpack.c.h.b16 %v2218
    %v2470 = vunpack.c.l.b16 %v2219
    %v2471 = vunpack.c.l.b16 %v2220
    %v2472 = vunpack.c.h.b16 %v2220
    %v2473 = vunpack.c.l.b16 %v2221
    %v2474 = vunpack.c.h.b16 %v2221
    %v2475 = vunpack.c.l.b16 %v2222
    %v2476 = vunpack.c.h.b16 %v2222
    %v2477 = vunpack.c.l.b16 %v2223
    %v2478 = vunpack.c.l.b16 %v2224
    %v2479 = vunpack.c.h.b16 %v2224
    %v2480 = vunpack.c.l.b16 %v2225
    %v2481 = vunpack.c.h.b16 %v2225
    %v2482 = vunpack.c.l.b16 %v2226
    %v2483 = vunpack.c.h.b16 %v2226
    %v2484 = vunpack.c.l.b16 %v2227
    %v2485 = vunpack.c.l.b16 %v2228
    %v2486 = vunpack.c.h.b16 %v2228
    %v2487 = vunpack.c.l.b16 %v2229
    %v2488 = vunpack.c.h.b16 %v2229
    %v2489 = vunpack.c.l.b16 %v2230
    %v2490 = vunpack.c.h.b16 %v2230
    %v2491 = vunpack.c.l.b16 %v2231
    %v2492 = vunpack.c.l.b16 %v2232
    %v2493 = vunpack.c.h.b16 %v2232
    %v2494 = vunpack.c.l.b16 %v2233
    %v2495 = vunpack.c.h.b16 %v2233
    %v2496 = vunpack.c.l.b16 %v2234
    %v2497 = vunpack.c.h.b16 %v2234
    %v2498 = vunpack.c.l.b16 %v2235
    %v2499 = vunpack.c.l.b16 %v2236
    %v2500 = vunpack.c.h.b16 %v2236
    %v2501 = vunpack.c.l.b16 %v2237
    %v2502 = vunpack.c.h.b16 %v2237
    %v2503 = vunpack.c.l.b16 %v2238
    %v2504 = vunpack.c.h.b16 %v2238
    %v2505 = vunpack.c.l.b16 %v2239
    %v2506 = vunpack.c.l.b16 %v2240
    %v2507 = vunpack.c.h.b16 %v2240
    %v2508 = vunpack.c.l.b16 %v2241
    %v2509 = vunpack.c.h.b16 %v2241
    %v2510 = vunpack.c.l.b16 %v2242
    %v2511 = vunpack.c.h.b16 %v2242
    %v2512 = vunpack.c.l.b16 %v2243
    %v2513 = vunpack.c.l.b16 %v2244
    %v2514 = vunpack.c.h.b16 %v2244
    %v2515 = vunpack.c.l.b16 %v2245
    %v2516 = vunpack.c.h.b16 %v2245
    %v2517 = vunpack.c.l.b16 %v2246
    %v2518 = vunpack.c.h.b16 %v2246
    %v2519 = vunpack.c.l.b16 %v2247
    %v2520 = vunpack.c.l.b16 %v2248
    %v2521 = vunpack.c.h.b16 %v2248
    %v2522 = vunpack.c.l.b16 %v2249
    %v2523 = vunpack.c.h.b16 %v2249
    %v2524 = vunpack.c.l.b16 %v2250
    %v2525 = vunpack.c.h.b16 %v2250
    %v2526 = vunpack.c.l.b16 %v2251
    %v2527 = vunpack.c.l.b16 %v2252
    %v2528 = vunpack.c.h.b16 %v2252
    %v2529 = vunpack.c.l.b16 %v2253
    %v2530 = vunpack.c.h.b16 %v2253
    %v2531 = vunpack.c.l.b16 %v2254
    %v2532 = vunpack.c.h.b16 %v2254
    %v2533 = vunpack.c.l.b16 %v2255
    %v2534 = vunpack.c.l.b16 %v2256
    %v2535 = vunpack.c.h.b16 %v2256
    %v2536 = vunpack.c.l.b16 %v2257
    %v2537 = vunpack.c.h.b16 %v2257
    %v2538 = vunpack.c.l.b16 %v2258
    %v2539 = vunpack.c.h.b16 %v2258
    %v2540 = vunpack.c.l.b16 %v2259
    %v2541 = vunpack.c.l.b16 %v2260
    %v2542 = vunpack.c.h.b16 %v2260
    %v2543 = vunpack.c.l.b16 %v2261
    %v2544 = vunpack.c.h.b16 %v2261
    %v2545 = vunpack.c.l.b16 %v2262
    %v2546 = vunpack.c.h.b16 %v2262
    %v2547 = vunpack.c.l.b16 %v2263
    %v2548 = vunpack.c.l.b16 %v2264
    %v2549 = vunpack.c.h.b16 %v2264
    %v2550 = vunpack.c.l.b16 %v2265
    %v2551 = vunpack.c.h.b16 %v2265
    %v2552 = vunpack.c.l.b16 %v2266
    %v2553 = vunpack.c.h.b16 %v2266
    %v2554 = vunpack.c.l.b16 %v2267
    %v2555 = vunpack.c.l.b16 %v2268
    %v2556 = vunpack.c.h.b16 %v2268
    %v2557 = vunpack.c.l.b16 %v2269
    %v2558 = vunpack.c.h.b16 %v2269
    %v2559 = vunpack.c.l.b16 %v2270
    %v2560 = vunpack.c.h.b16 %v2270
    %v2561 = vunpack.c.l.b16 %v2271
    %v2562 = vunpack.c.l.b16 %v2272
    %v2563 = vunpack.c.h.b16 %v2272
    %v2564 = vunpack.c.l.b16 %v2273
    %v2565 = vunpack.c.h.b16 %v2273
    %v2566 = vunpack.c.l.b16 %v2274
    %v2567 = vunpack.c.h.b16 %v2274
    %v2568 = vunpack.c.l.b16 %v2275
    %v2569 = vunpack.c.l.b16 %v2276
    %v2570 = vunpack.c.h.b16 %v2276
    %v2571 = vunpack.c.l.b16 %v2277
    %v2572 = vunpack.c.h.b16 %v2277
    %v2573 = vunpack.c.l.b16 %v2278
    %v2574 = vunpack.c.h.b16 %v2278
    %v2575 = vunpack.c.l.b16 %v2279
    %v2576 = vpack.c.b16 %v2408, %v2401
    %v2577 = vpack.c.b16 %v2409, %v2402
    %v2578 = vpack.c.b16 %v2410, %v2403
    %v2579 = vpack.c.b16 %v2411, %v2404
    %v2580 = vpack.c.b16 %v2412, %v2405
    %v2581 = vpack.c.b16 %v2413, %v2406
    %v2582 = vpack.c.b16 %v2414, %v2407
    %v2583 = vpack.c.b16 %v2422, %v2415
    %v2584 = vpack.c.b16 %v2423, %v2416
    %v2585 = vpack.c.b16 %v2424, %v2417
    %v2586 = vpack.c.b16 %v2425, %v2418
    %v2587 = vpack.c.b16 %v2426, %v2419
    %v2588 = vpack.c.b16 %v2427, %v2420
    %v2589 = vpack.c.b16 %v2428, %v2421
    %v2590 = vpack.c.b16 %v2436, %v2429
    %v2591 = vpack.c.b16 %v2437, %v2430
    %v2592 = vpack.c.b16 %v2438, %v2431
    %v2593 = vpack.c.b16 %v2439, %v2432
    %v2594 = vpack.c.b16 %v2440, %v2433
    %v2595 = vpack.c.b16 %v2441, %v2434
    %v2596 = vpack.c.b16 %v2442, %v2435
    %v2597 = vpack.c.b16 %v2450, %v2443
    %v2598 = vpack.c.b16 %v2451, %v2444
    %v2599 = vpack.c.b16 %v2452, %v2445
    %v2600 = vpack.c.b16 %v2453, %v2446
    %v2601 = vpack.c.b16 %v2454, %v2447
    %v2602 = vpack.c.b16 %v2455, %v2448
    %v2603 = vpack.c.b16 %v2456, %v2449
    %v2604 = vpack.c.b16 %v2464, %v2457
    %v2605 = vpack.c.b16 %v2465, %v2458
    %v2606 = vpack.c.b16 %v2466, %v2459
    %v2607 = vpack.c.b16 %v2467, %v2460
    %v2608 = vpack.c.b16 %v2468, %v2461
    %v2609 = vpack.c.b16 %v2469, %v2462
    %v2610 = vpack.c.b16 %v2470, %v2463
    %v2611 = vpack.c.b16 %v2478, %v2471
    %v2612 = vpack.c.b16 %v2479, %v2472
    %v2613 = vpack.c.b16 %v2480, %v2473
    %v2614 = vpack.c.b16 %v2481, %v2474
    %v2615 = vpack.c.b16 %v2482, %v2475
    %v2616 = vpack.c.b16 %v2483, %v2476
    %v2617 = vpack.c.b16 %v2484, %v2477
    %v2618 = vpack.c.b16 %v2492, %v2485
    %v2619 = vpack.c.b16 %v2493, %v2486
    %v2620 = vpack.c.b16 %v2494, %v2487
    %v2621 = vpack.c.b16 %v2495, %v2488
    %v2622 = vpack.c.b16 %v2496, %v2489
    %v2623 = vpack.c.b16 %v2497, %v2490
    %v2624 = vpack.c.b16 %v2498, %v2491
    %v2625 = vpack.c.b16 %v2506, %v2499
    %v2626 = vpack.c.b16 %v2507, %v2500
    %v2627 = vpack.c.b16 %v2508, %v2501
    %v2628 = vpack.c.b16 %v2509, %v2502
    %v2629 = vpack.c.b16 %v2510, %v2503
    %v2630 = vpack.c.b16 %v2511, %v2504
    %v2631 = vpack.c.b16 %v2512, %v2505
    %v2632 = vpack.c.b16 %v2520, %v2513
    %v2633 = vpack.c.b16 %v2521, %v2514
    %v2634 = vpack.c.b16 %v2522, %v2515
    %v2635 = vpack.c.b16 %v2523, %v2516
    %v2636 = vpack.c.b16 %v2524, %v2517
    %v2637 = vpack.c.b16 %v2525, %v2518
    %v2638 = vpack.c.b16 %v2526, %v2519
    %v2639 = vpack.c.b16 %v2534, %v2527
    %v2640 = vpack.c.b16 %v2535, %v2528
    %v2641 = vpack.c.b16 %v2536, %v2529
    %v2642 = vpack.c.b16 %v2537, %v2530
    %v2643 = vpack.c.b16 %v2538, %v2531
    %v2644 = vpack.c.b16 %v2539, %v2532
    %v2645 = vpack.c.b16 %v2540, %v2533
    %v2646 = vpack.c.b16 %v2548, %v2541
    %v2647 = vpack.c.b16 %v2549, %v2542
    %v2648 = vpack.c.b16 %v2550, %v2543
    %v2649 = vpack.c.b16 %v2551, %v2544
    %v2650 = vpack.c.b16 %v2552, %v2545
    %v2651 = vpack.c.b16 %v2553, %v2546
    %v2652 = vpack.c.b16 %v2554, %v2547
    %v2653 = vpack.c.b16 %v2562, %v2555
    %v2654 = vpack.c.b16 %v2563, %v2556
    %v2655 = vpack.c.b16 %v2564, %v2557
    %v2656 = vpack.c.b16 %v2565, %v2558
    %v2657 = vpack.c.b16 %v2566, %v2559
    %v2658 = vpack.c.b16 %v2567, %v2560
    %v2659 = vpack.c.b16 %v2568, %v2561
    %v2660 = vpack.c.b16 %v2569, %v2569
    %v2661 = vpack.c.b16 %v2570, %v2570
    %v2662 = vpack.c.b16 %v2571, %v2571
    %v2663 = vpack.c.b16 %v2572, %v2572
    %v2664 = vpack.c.b16 %v2573, %v2573
    %v2665 = vpack.c.b16 %v2574, %v2574
    %v2666 = vpack.c.b16 %v2575, %v2575
    %v2752 = vsel %vm1206, %v2299, 0
    %v2755 = vsel %vm1210, %v2660, 0
    %v2758 = vsel %vm1210, %v2661, 0
    %v2761 = vsel %vm1210, %v2662, 0
    %v2764 = vsel %vm1210, %v2663, 0
    %v2767 = vsel %vm1210, %v2664, 0
    %v2770 = vsel %vm1210, %v2665, 0
    %v2773 = vsel %vm1210, %v2666, 0
    %2775 = vmatprep.subr.bf16.mxu0 %v2577
    %2776 = vmatpush1.bf16.msra.mxu0 %v2576
    %2777 = vmatprep.subr.bf16.mxu0 %v2584
    %2778 = vmatpush1.bf16.msra.mxu0 %v2583
    %2779 = vmatprep.subr.bf16.mxu0 %v2591
    %2780 = vmatpush1.bf16.msra.mxu0 %v2590
    %2781 = vmatprep.subr.bf16.mxu0 %v2598
    %2782 = vmatpush1.bf16.msra.mxu0 %v2597
    %2783 = vmatprep.subr.bf16.mxu0 %v2605
    %2784 = vmatpush1.bf16.msra.mxu0 %v2604
    %2785 = vmatprep.subr.bf16.mxu0 %v2612
    %2786 = vmatpush1.bf16.msra.mxu0 %v2611
    %2787 = vmatprep.subr.bf16.mxu0 %v2619
    %2788 = vmatpush1.bf16.msra.mxu0 %v2618
    %2789 = vmatprep.subr.bf16.mxu0 %v2626
    %2790 = vmatpush1.bf16.msra.mxu0 %v2625
    %2791 = vmatprep.subr.bf16.mxu0 %v2633
    %2792 = vmatpush1.bf16.msra.mxu0 %v2632
    %2793 = vmatprep.subr.bf16.mxu0 %v2640
    %2794 = vmatpush1.bf16.msra.mxu0 %v2639
    %2795 = vmatprep.subr.bf16.mxu0 %v2647
    %2796 = vmatpush1.bf16.msra.mxu0 %v2646
    %2797 = vmatprep.subr.bf16.mxu0 %v2654
    %2798 = vmatpush1.bf16.msra.mxu0 %v2653
    %2799 = vmatprep.subr.bf16.mxu0 %v2758
    %2800 = vmatpush1.bf16.msra.mxu0 %v2755
    %2801 = vmatprep.subr.bf16.mxu0 0
    %2802 = vmatpush1.bf16.msra.mxu0 0
    %2803 = vmatprep.subr.bf16.mxu0 0
    %2804 = vmatpush1.bf16.msra.mxu0 0
    %2805 = vmatprep.subr.bf16.mxu0 0
    %2806 = vmatpush1.bf16.msra.mxu0 0
    %2807 = vmatprep.mubr.bf16.mxu0 %v2752
    %2808 = vmatmul.mubr.bf16.gmra.mrb[0].mxu0 %v2298
    %v2809 = vpop.f32.mrb[0].mxu0
    %v2810 = vadd.f32 %v2285, %v2809
    %v2811 = vpop.f32.mrb[0].mxu0
    %v2812 = vadd.f32 %v2285, %v2811
    %v2813 = vpop.f32.mrb[0].mxu0
    %v2814 = vadd.f32 %v2290, %v2813
    %v2815 = vpop.f32.mrb[0].mxu0
    %v2816 = vadd.f32 %v2290, %v2815
    %2817 = vdwg.mxu0
    %2818 = vmatprep.subr.bf16.mxu0 %v2579
    %2819 = vmatpush1.bf16.msra.mxu0 %v2578
    %2820 = vmatprep.subr.bf16.mxu0 %v2586
    %2821 = vmatpush1.bf16.msra.mxu0 %v2585
    %2822 = vmatprep.subr.bf16.mxu0 %v2593
    %2823 = vmatpush1.bf16.msra.mxu0 %v2592
    %2824 = vmatprep.subr.bf16.mxu0 %v2600
    %2825 = vmatpush1.bf16.msra.mxu0 %v2599
    %2826 = vmatprep.subr.bf16.mxu0 %v2607
    %2827 = vmatpush1.bf16.msra.mxu0 %v2606
    %2828 = vmatprep.subr.bf16.mxu0 %v2614
    %2829 = vmatpush1.bf16.msra.mxu0 %v2613
    %2830 = vmatprep.subr.bf16.mxu0 %v2621
    %2831 = vmatpush1.bf16.msra.mxu0 %v2620
    %2832 = vmatprep.subr.bf16.mxu0 %v2628
    %2833 = vmatpush1.bf16.msra.mxu0 %v2627
    %2834 = vmatprep.subr.bf16.mxu0 %v2635
    %2835 = vmatpush1.bf16.msra.mxu0 %v2634
    %2836 = vmatprep.subr.bf16.mxu0 %v2642
    %2837 = vmatpush1.bf16.msra.mxu0 %v2641
    %2838 = vmatprep.subr.bf16.mxu0 %v2649
    %2839 = vmatpush1.bf16.msra.mxu0 %v2648
    %2840 = vmatprep.subr.bf16.mxu0 %v2656
    %2841 = vmatpush1.bf16.msra.mxu0 %v2655
    %2842 = vmatprep.subr.bf16.mxu0 %v2764
    %2843 = vmatpush1.bf16.msra.mxu0 %v2761
    %2844 = vmatprep.subr.bf16.mxu0 0
    %2845 = vmatpush1.bf16.msra.mxu0 0
    %2846 = vmatprep.subr.bf16.mxu0 0
    %2847 = vmatpush1.bf16.msra.mxu0 0
    %2848 = vmatprep.subr.bf16.mxu0 0
    %2849 = vmatpush1.bf16.msra.mxu0 0
    %2850 = vmatprep.mubr.bf16.mxu0 %v2752
    %2851 = vmatmul.mubr.bf16.gmra.mrb[0].mxu0 %v2298
    %v2852 = vpop.f32.mrb[0].mxu0
    %v2853 = vadd.f32 %v2285, %v2852
    %v2854 = vpop.f32.mrb[0].mxu0
    %v2855 = vadd.f32 %v2285, %v2854
    %v2856 = vpop.f32.mrb[0].mxu0
    %v2857 = vadd.f32 %v2290, %v2856
    %v2858 = vpop.f32.mrb[0].mxu0
    %v2859 = vadd.f32 %v2290, %v2858
    %2860 = vdwg.mxu0
    %2861 = vmatprep.subr.bf16.mxu0 %v2581
    %2862 = vmatpush1.bf16.msra.mxu0 %v2580
    %2863 = vmatprep.subr.bf16.mxu0 %v2588
    %2864 = vmatpush1.bf16.msra.mxu0 %v2587
    %2865 = vmatprep.subr.bf16.mxu0 %v2595
    %2866 = vmatpush1.bf16.msra.mxu0 %v2594
    %2867 = vmatprep.subr.bf16.mxu0 %v2602
    %2868 = vmatpush1.bf16.msra.mxu0 %v2601
    %2869 = vmatprep.subr.bf16.mxu0 %v2609
    %2870 = vmatpush1.bf16.msra.mxu0 %v2608
    %2871 = vmatprep.subr.bf16.mxu0 %v2616
    %2872 = vmatpush1.bf16.msra.mxu0 %v2615
    %2873 = vmatprep.subr.bf16.mxu0 %v2623
    %2874 = vmatpush1.bf16.msra.mxu0 %v2622
    %2875 = vmatprep.subr.bf16.mxu0 %v2630
    %2876 = vmatpush1.bf16.msra.mxu0 %v2629
    %2877 = vmatprep.subr.bf16.mxu0 %v2637
    %2878 = vmatpush1.bf16.msra.mxu0 %v2636
    %2879 = vmatprep.subr.bf16.mxu0 %v2644
    %2880 = vmatpush1.bf16.msra.mxu0 %v2643
    %2881 = vmatprep.subr.bf16.mxu0 %v2651
    %2882 = vmatpush1.bf16.msra.mxu0 %v2650
    %2883 = vmatprep.subr.bf16.mxu0 %v2658
    %2884 = vmatpush1.bf16.msra.mxu0 %v2657
    %2885 = vmatprep.subr.bf16.mxu0 %v2770
    %2886 = vmatpush1.bf16.msra.mxu0 %v2767
    %2887 = vmatprep.subr.bf16.mxu0 0
    %2888 = vmatpush1.bf16.msra.mxu0 0
    %2889 = vmatprep.subr.bf16.mxu0 0
    %2890 = vmatpush1.bf16.msra.mxu0 0
    %2891 = vmatprep.subr.bf16.mxu0 0
    %2892 = vmatpush1.bf16.msra.mxu0 0
    %2893 = vmatprep.mubr.bf16.mxu0 %v2752
    %2894 = vmatmul.mubr.bf16.gmra.mrb[0].mxu0 %v2298
    %v2895 = vpop.f32.mrb[0].mxu0
    %v2896 = vadd.f32 %v2285, %v2895
    %v2897 = vpop.f32.mrb[0].mxu0
    %v2898 = vadd.f32 %v2285, %v2897
    %v2899 = vpop.f32.mrb[0].mxu0
    %v2900 = vadd.f32 %v2290, %v2899
    %v2901 = vpop.f32.mrb[0].mxu0
    %v2902 = vadd.f32 %v2290, %v2901
    %2903 = vdwg.mxu0
    %2904 = vmatprep.subr.bf16.mxu0 0
    %2905 = vmatpush1.bf16.msra.mxu0 %v2582
    %2906 = vmatprep.subr.bf16.mxu0 0
    %2907 = vmatpush1.bf16.msra.mxu0 %v2589
    %2908 = vmatprep.subr.bf16.mxu0 0
    %2909 = vmatpush1.bf16.msra.mxu0 %v2596
    %2910 = vmatprep.subr.bf16.mxu0 0
    %2911 = vmatpush1.bf16.msra.mxu0 %v2603
    %2912 = vmatprep.subr.bf16.mxu0 0
    %2913 = vmatpush1.bf16.msra.mxu0 %v2610
    %2914 = vmatprep.subr.bf16.mxu0 0
    %2915 = vmatpush1.bf16.msra.mxu0 %v2617
    %2916 = vmatprep.subr.bf16.mxu0 0
    %2917 = vmatpush1.bf16.msra.mxu0 %v2624
    %2918 = vmatprep.subr.bf16.mxu0 0
    %2919 = vmatpush1.bf16.msra.mxu0 %v2631
    %2920 = vmatprep.subr.bf16.mxu0 0
    %2921 = vmatpush1.bf16.msra.mxu0 %v2638
    %2922 = vmatprep.subr.bf16.mxu0 0
    %2923 = vmatpush1.bf16.msra.mxu0 %v2645
    %2924 = vmatprep.subr.bf16.mxu0 0
    %2925 = vmatpush1.bf16.msra.mxu0 %v2652
    %2926 = vmatprep.subr.bf16.mxu0 0
    %2927 = vmatpush1.bf16.msra.mxu0 %v2659
    %2928 = vmatprep.subr.bf16.mxu0 0
    %2929 = vmatpush1.bf16.msra.mxu0 %v2773
    %2930 = vmatprep.subr.bf16.mxu0 0
    %2931 = vmatpush1.bf16.msra.mxu0 0
    %2932 = vmatprep.subr.bf16.mxu0 0
    %2933 = vmatpush1.bf16.msra.mxu0 0
    %2934 = vmatprep.subr.bf16.mxu0 0
    %2935 = vmatpush1.bf16.msra.mxu0 0
    %2936 = vmatprep.mubr.bf16.mxu0 %v2752
    %2937 = vmatmul.mubr.bf16.gmra.mrb[0].mxu0 %v2298
    %v2938 = vpop.f32.mrb[0].mxu0
    %v2939 = vadd.f32 %v2285, %v2938
    %v2940 = vpop.f32.mrb[0].mxu0
    %v2941 = vpop.f32.mrb[0].mxu0
    %v2942 = vadd.f32 %v2290, %v2941
    %v2943 = vpop.f32.mrb[0].mxu0
    %2944 = vdwg.mxu0
    %v2945 = vmax.f32 %v2810, 0.0
    %v2946 = vmax.f32 %v2812, 0.0
    %v2947 = vmax.f32 %v2853, 0.0
    %v2948 = vmax.f32 %v2855, 0.0
    %v2949 = vmax.f32 %v2896, 0.0
    %v2950 = vmax.f32 %v2898, 0.0
    %v2951 = vmax.f32 %v2939, 0.0
    %v2952 = vmax.f32 %v2814, 0.0
    %v2953 = vmax.f32 %v2816, 0.0
    %v2954 = vmax.f32 %v2857, 0.0
    %v2955 = vmax.f32 %v2859, 0.0
    %v2956 = vmax.f32 %v2900, 0.0
    %v2957 = vmax.f32 %v2902, 0.0
    %v2958 = vmax.f32 %v2942, 0.0
    %2973 = vrot.lane.b32.xlu0 %v2945, 127
    %v2974 = vpop.permute.xlu0 %2973
    %2975 = vrot.lane.b32.xlu0 %v2946, 127
    %v2976 = vpop.permute.xlu0 %2975
    %2977 = vrot.lane.b32.xlu0 %v2947, 127
    %v2978 = vpop.permute.xlu0 %2977
    %2979 = vrot.lane.b32.xlu0 %v2948, 127
    %v2980 = vpop.permute.xlu0 %2979
    %2981 = vrot.lane.b32.xlu0 %v2949, 127
    %v2982 = vpop.permute.xlu0 %2981
    %2983 = vrot.lane.b32.xlu0 %v2950, 127
    %v2984 = vpop.permute.xlu0 %2983
    %2985 = vrot.lane.b32.xlu0 %v2951, 127
    %v2986 = vpop.permute.xlu0 %2985
    %2987 = vrot.lane.b32.xlu0 %v2952, 127
    %v2988 = vpop.permute.xlu0 %2987
    %2989 = vrot.lane.b32.xlu0 %v2953, 127
    %v2990 = vpop.permute.xlu0 %2989
    %2991 = vrot.lane.b32.xlu0 %v2954, 127
    %v2992 = vpop.permute.xlu0 %2991
    %2993 = vrot.lane.b32.xlu0 %v2955, 127
    %v2994 = vpop.permute.xlu0 %2993
    %2995 = vrot.lane.b32.xlu0 %v2956, 127
    %v2996 = vpop.permute.xlu0 %2995
    %2997 = vrot.lane.b32.xlu0 %v2957, 127
    %v2998 = vpop.permute.xlu0 %2997
    %2999 = vrot.lane.b32.xlu0 %v2958, 127
    %v3000 = vpop.permute.xlu0 %2999
    %v3001 = vsel %vm1458, %v2974, %v2976
    %v3002 = vsel %vm1458, %v2976, %v2978
    %v3003 = vsel %vm1458, %v2978, %v2980
    %v3004 = vsel %vm1458, %v2980, %v2982
    %v3005 = vsel %vm1458, %v2982, %v2984
    %v3006 = vsel %vm1458, %v2984, %v2986
    %v3007 = vsel %vm1458, %v2988, %v2990
    %v3008 = vsel %vm1458, %v2990, %v2992
    %v3009 = vsel %vm1458, %v2992, %v2994
    %v3010 = vsel %vm1458, %v2994, %v2996
    %v3011 = vsel %vm1458, %v2996, %v2998
    %v3012 = vsel %vm1458, %v2998, %v3000
    %v3027 = vmax.f32 %v2945, %v3001
    %v3028 = vmax.f32 %v2946, %v3002
    %v3029 = vmax.f32 %v2947, %v3003
    %v3030 = vmax.f32 %v2948, %v3004
    %v3031 = vmax.f32 %v2949, %v3005
    %v3032 = vmax.f32 %v2950, %v3006
    %v3033 = vmax.f32 %v2951, %v2986
    %v3034 = vmax.f32 %v2952, %v3007
    %v3035 = vmax.f32 %v2953, %v3008
    %v3036 = vmax.f32 %v2954, %v3009
    %v3037 = vmax.f32 %v2955, %v3010
    %v3038 = vmax.f32 %v2956, %v3011
    %v3039 = vmax.f32 %v2957, %v3012
    %v3040 = vmax.f32 %v2958, %v3000
    %3055 = vrot.lane.b32.xlu0 %v3027, 96
    %v3056 = vpop.permute.xlu0 %3055
    %3057 = vrot.lane.b32.xlu0 %v3028, 96
    %v3058 = vpop.permute.xlu0 %3057
    %3059 = vrot.lane.b32.xlu0 %v3029, 96
    %v3060 = vpop.permute.xlu0 %3059
    %3061 = vrot.lane.b32.xlu0 %v3030, 96
    %v3062 = vpop.permute.xlu0 %3061
    %3063 = vrot.lane.b32.xlu0 %v3031, 96
    %v3064 = vpop.permute.xlu0 %3063
    %3065 = vrot.lane.b32.xlu0 %v3032, 96
    %v3066 = vpop.permute.xlu0 %3065
    %3067 = vrot.lane.b32.xlu0 %v3033, 96
    %v3068 = vpop.permute.xlu0 %3067
    %3069 = vrot.lane.b32.xlu0 %v3034, 96
    %v3070 = vpop.permute.xlu0 %3069
    %3071 = vrot.lane.b32.xlu0 %v3035, 96
    %v3072 = vpop.permute.xlu0 %3071
    %3073 = vrot.lane.b32.xlu0 %v3036, 96
    %v3074 = vpop.permute.xlu0 %3073
    %3075 = vrot.lane.b32.xlu0 %v3037, 96
    %v3076 = vpop.permute.xlu0 %3075
    %3077 = vrot.lane.b32.xlu0 %v3038, 96
    %v3078 = vpop.permute.xlu0 %3077
    %3079 = vrot.lane.b32.xlu0 %v3039, 96
    %v3080 = vpop.permute.xlu0 %3079
    %3081 = vrot.lane.b32.xlu0 %v3040, 96
    %v3082 = vpop.permute.xlu0 %3081
    %v3083 = vsel %vm1541, %v3056, %v3058
    %v3084 = vsel %vm1541, %v3058, %v3060
    %v3085 = vsel %vm1541, %v3060, %v3062
    %v3086 = vsel %vm1541, %v3062, %v3064
    %v3087 = vsel %vm1541, %v3064, %v3066
    %v3088 = vsel %vm1541, %v3066, %v3068
    %v3089 = vsel %vm1541, %v3070, %v3072
    %v3090 = vsel %vm1541, %v3072, %v3074
    %v3091 = vsel %vm1541, %v3074, %v3076
    %v3092 = vsel %vm1541, %v3076, %v3078
    %v3093 = vsel %vm1541, %v3078, %v3080
    %v3094 = vsel %vm1541, %v3080, %v3082
    %v3109 = vmax.f32 %v3027, %v3083
    %v3110 = vmax.f32 %v3028, %v3084
    %v3111 = vmax.f32 %v3029, %v3085
    %v3112 = vmax.f32 %v3030, %v3086
    %v3113 = vmax.f32 %v3031, %v3087
    %v3114 = vmax.f32 %v3032, %v3088
    %v3115 = vmax.f32 %v3033, %v3068
    %v3116 = vmax.f32 %v3034, %v3089
    %v3117 = vmax.f32 %v3035, %v3090
    %v3118 = vmax.f32 %v3036, %v3091
    %v3119 = vmax.f32 %v3037, %v3092
    %v3120 = vmax.f32 %v3038, %v3093
    %v3121 = vmax.f32 %v3039, %v3094
    %v3122 = vmax.f32 %v3040, %v3082
    %v3123 = vpack.c.bf16 %v3116, %v3109
    %v3124 = vpack.c.bf16 %v3117, %v3110
    %v3125 = vpack.c.bf16 %v3118, %v3111
    %v3126 = vpack.c.bf16 %v3119, %v3112
    %v3127 = vpack.c.bf16 %v3120, %v3113
    %v3128 = vpack.c.bf16 %v3121, %v3114
    %v3129 = vpack.c.bf16 %v3122, %v3115
    %3130 = vst [vmem:[#allocation3 + $0x38] sm:$0xff] %v3123
    %3131 = vst [vmem:[#allocation3 + $0x40] sm:$0xff] %v3124
    %3132 = vst [vmem:[#allocation3 + $0x48] sm:$0xff] %v3125
    %3133 = vst [vmem:[#allocation3 + $0x50] sm:$0xff] %v3126
    %3134 = vst [vmem:[#allocation3 + $0x58] sm:$0xff] %v3127
    %3135 = vst [vmem:[#allocation3 + $0x60] sm:$0xff] %v3128
    %3136 = vst.msk [vmem:[#allocation3 + $0x68] sm:$0xff] %vm1595, %v3129
    %v3137 = vld [vmem:[#allocation3] sm:$0xff]
    %v3138 = vld [vmem:[#allocation3 + $0x8] sm:$0xff]
    %v3139 = vld [vmem:[#allocation3 + $0x10] sm:$0xff]
    %v3140 = vld [vmem:[#allocation3 + $0x18] sm:$0xff]
    %v3141 = vld [vmem:[#allocation3 + $0x20] sm:$0xff]
    %v3142 = vld [vmem:[#allocation3 + $0x28] sm:$0xff]
    %v3143 = vld [vmem:[#allocation3 + $0x30] sm:$0xff]
    %v3144 = vld [vmem:[#allocation3 + $0x38] sm:$0xff]
    %v3145 = vld [vmem:[#allocation3 + $0x40] sm:$0xff]
    %v3146 = vld [vmem:[#allocation3 + $0x48] sm:$0xff]
    %v3147 = vld [vmem:[#allocation3 + $0x50] sm:$0xff]
    %v3148 = vld [vmem:[#allocation3 + $0x58] sm:$0xff]
    %v3149 = vld [vmem:[#allocation3 + $0x60] sm:$0xff]
    %v3150 = vld [vmem:[#allocation3 + $0x68] sm:$0xff]
    %v3151 = vld [vmem:[#allocation4] sm:$0xff]
    %v3152 = vld [vmem:[#allocation4 + $0x8] sm:$0xff]
    %v3153 = vld [vmem:[#allocation4 + $0x10] sm:$0xff]
    %v3154 = vld [vmem:[#allocation4 + $0x18] sm:$0xff]
    %v3155 = vld [vmem:[#allocation4 + $0x20] sm:$0xff]
    %v3156 = vld [vmem:[#allocation4 + $0x28] sm:$0xff]
    %v3157 = vld [vmem:[#allocation4 + $0x30] sm:$0xff]
    %v3158 = vld [vmem:[#allocation4 + $0x38] sm:$0xff]
    %v3159 = vld [vmem:[#allocation4 + $0x40] sm:$0xff]
    %v3160 = vld [vmem:[#allocation4 + $0x48] sm:$0xff]
    %v3161 = vld [vmem:[#allocation4 + $0x50] sm:$0xff]
    %v3162 = vld [vmem:[#allocation4 + $0x58] sm:$0xff]
    %v3163 = vld [vmem:[#allocation4 + $0x60] sm:$0xff]
    %v3164 = vld [vmem:[#allocation4 + $0x68] sm:$0xff]
    %v3165 = vld [vmem:[#allocation4 + $0x70] sm:$0xff]
    %v3166 = vld [vmem:[#allocation4 + $0x78] sm:$0xff]
    %v3167 = vld [vmem:[#allocation4 + $0x80] sm:$0xff]
    %v3168 = vld [vmem:[#allocation4 + $0x88] sm:$0xff]
    %v3169 = vld [vmem:[#allocation4 + $0x90] sm:$0xff]
    %v3170 = vld [vmem:[#allocation4 + $0x98] sm:$0xff]
    %v3171 = vld [vmem:[#allocation4 + $0xa0] sm:$0xff]
    %v3172 = vld [vmem:[#allocation4 + $0xa8] sm:$0xff]
    %v3173 = vld [vmem:[#allocation4 + $0xb0] sm:$0xff]
    %v3174 = vld [vmem:[#allocation4 + $0xb8] sm:$0xff]
    %v3175 = vld [vmem:[#allocation4 + $0xc0] sm:$0xff]
    %v3176 = vld [vmem:[#allocation4 + $0xc8] sm:$0xff]
    %v3177 = vld [vmem:[#allocation4 + $0xd0] sm:$0xff]
    %v3178 = vld [vmem:[#allocation4 + $0xd8] sm:$0xff]
    %v3179 = vld [vmem:[#allocation4 + $0xe0] sm:$0xff]
    %v3180 = vld [vmem:[#allocation4 + $0xe8] sm:$0xff]
    %v3181 = vld [vmem:[#allocation4 + $0xf0] sm:$0xff]
    %v3182 = vld [vmem:[#allocation4 + $0xf8] sm:$0xff]
    %v3183 = vld [vmem:[#allocation4 + $0x100] sm:$0xff]
    %v3184 = vld [vmem:[#allocation4 + $0x108] sm:$0xff]
    %v3185 = vld [vmem:[#allocation4 + $0x110] sm:$0xff]
    %v3186 = vld [vmem:[#allocation4 + $0x118] sm:$0xff]
    %v3187 = vld [vmem:[#allocation4 + $0x120] sm:$0xff]
    %v3188 = vld [vmem:[#allocation4 + $0x128] sm:$0xff]
    %v3189 = vld [vmem:[#allocation4 + $0x130] sm:$0xff]
    %v3190 = vld [vmem:[#allocation4 + $0x138] sm:$0xff]
    %v3191 = vld [vmem:[#allocation4 + $0x140] sm:$0xff]
    %v3192 = vld [vmem:[#allocation4 + $0x148] sm:$0xff]
    %v3193 = vld [vmem:[#allocation4 + $0x150] sm:$0xff]
    %v3194 = vld [vmem:[#allocation4 + $0x158] sm:$0xff]
    %v3195 = vld [vmem:[#allocation4 + $0x160] sm:$0xff]
    %v3196 = vld [vmem:[#allocation4 + $0x168] sm:$0xff]
    %v3197 = vld [vmem:[#allocation4 + $0x170] sm:$0xff]
    %v3198 = vld [vmem:[#allocation4 + $0x178] sm:$0xff]
    %v3199 = vld [vmem:[#allocation4 + $0x180] sm:$0xff]
    %v3200 = vld [vmem:[#allocation4 + $0x188] sm:$0xff]
    %v3201 = vld [vmem:[#allocation4 + $0x190] sm:$0xff]
    %v3202 = vld [vmem:[#allocation4 + $0x198] sm:$0xff]
    %v3203 = vld [vmem:[#allocation4 + $0x1a0] sm:$0xff]
    %v3204 = vld [vmem:[#allocation4 + $0x1a8] sm:$0xff]
    %v3205 = vld [vmem:[#allocation4 + $0x1b0] sm:$0xff]
    %v3206 = vld [vmem:[#allocation4 + $0x1b8] sm:$0xff]
    %v3207 = vld [vmem:[#allocation4 + $0x1c0] sm:$0xff]
    %v3208 = vld [vmem:[#allocation4 + $0x1c8] sm:$0xff]
    %v3209 = vld [vmem:[#allocation4 + $0x1d0] sm:$0xff]
    %v3210 = vld [vmem:[#allocation4 + $0x1d8] sm:$0xff]
    %v3211 = vld [vmem:[#allocation4 + $0x1e0] sm:$0xff]
    %v3212 = vld [vmem:[#allocation4 + $0x1e8] sm:$0xff]
    %v3213 = vld [vmem:[#allocation4 + $0x1f0] sm:$0xff]
    %v3214 = vld [vmem:[#allocation4 + $0x1f8] sm:$0xff]
    %v3215 = vld [vmem:[#allocation4 + $0x200] sm:$0xff]
    %v3216 = vld [vmem:[#allocation4 + $0x208] sm:$0xff]
    %v3217 = vld [vmem:[#allocation4 + $0x210] sm:$0xff]
    %v3218 = vld [vmem:[#allocation4 + $0x218] sm:$0xff]
    %v3219 = vld [vmem:[#allocation4 + $0x220] sm:$0xff]
    %v3220 = vld [vmem:[#allocation4 + $0x228] sm:$0xff]
    %v3221 = vld [vmem:[#allocation4 + $0x230] sm:$0xff]
    %v3222 = vld [vmem:[#allocation4 + $0x238] sm:$0xff]
    %v3223 = vld [vmem:[#allocation4 + $0x240] sm:$0xff]
    %v3224 = vld [vmem:[#allocation4 + $0x248] sm:$0xff]
    %v3225 = vld [vmem:[#allocation4 + $0x250] sm:$0xff]
    %v3226 = vld [vmem:[#allocation4 + $0x258] sm:$0xff]
    %v3227 = vld [vmem:[#allocation4 + $0x260] sm:$0xff]
    %v3228 = vld [vmem:[#allocation4 + $0x268] sm:$0xff]
    %v3229 = vld [vmem:[#allocation4 + $0x270] sm:$0xff]
    %v3230 = vld [vmem:[#allocation4 + $0x278] sm:$0xff]
    %v3231 = vld [vmem:[#allocation4 + $0x280] sm:$0xff]
    %v3232 = vld [vmem:[#allocation4 + $0x288] sm:$0xff]
    %v3233 = vld [vmem:[#allocation4 + $0x290] sm:$0xff]
    %v3234 = vld [vmem:[#allocation4 + $0x298] sm:$0xff]
    %v3235 = vld [vmem:[#allocation4 + $0x2a0] sm:$0xff]
    %v3236 = vld [vmem:[#allocation4 + $0x2a8] sm:$0xff]
    %v3237 = vld [vmem:[#allocation4 + $0x2b0] sm:$0xff]
    %v3238 = vld [vmem:[#allocation4 + $0x2b8] sm:$0xff]
    %v3239 = vld [vmem:[#allocation4 + $0x2c0] sm:$0xff]
    %v3240 = vld [vmem:[#allocation4 + $0x2c8] sm:$0xff]
    %v3241 = vld [vmem:[#allocation4 + $0x2d0] sm:$0xff]
    %v3242 = vld [vmem:[#allocation4 + $0x2d8] sm:$0xff]
    %v3243 = vld [vmem:[#allocation4 + $0x2e0] sm:$0xff]
    %v3244 = vld [vmem:[#allocation4 + $0x2e8] sm:$0xff]
    %v3245 = vld [vmem:[#allocation4 + $0x2f0] sm:$0xff]
    %v3246 = vld [vmem:[#allocation4 + $0x2f8] sm:$0xff]
    %v3247 = vld [vmem:[#allocation4 + $0x300] sm:$0xff]
    %v3248 = vld [vmem:[#allocation4 + $0x308] sm:$0xff]
    %v3249 = vld [vmem:[#allocation4 + $0x310] sm:$0xff]
    %v3250 = vld [vmem:[#allocation4 + $0x318] sm:$0xff]
    %v3251 = vld [vmem:[#allocation4 + $0x320] sm:$0xff]
    %v3252 = vld [vmem:[#allocation4 + $0x328] sm:$0xff]
    %v3253 = vld [vmem:[#allocation4 + $0x330] sm:$0xff]
    %v3254 = vld [vmem:[#allocation4 + $0x338] sm:$0xff]
    %v3255 = vld [vmem:[#allocation4 + $0x340] sm:$0xff]
    %v3256 = vld [vmem:[#allocation4 + $0x348] sm:$0xff]
    %v3257 = vld [vmem:[#allocation4 + $0x350] sm:$0xff]
    %v3258 = vld [vmem:[#allocation4 + $0x358] sm:$0x33]
    %v3367 = vunpack.c.l.b16 %v3151
    %v3368 = vunpack.c.h.b16 %v3151
    %v3369 = vunpack.c.l.b16 %v3152
    %v3370 = vunpack.c.h.b16 %v3152
    %v3371 = vunpack.c.l.b16 %v3153
    %v3372 = vunpack.c.h.b16 %v3153
    %v3373 = vunpack.c.l.b16 %v3154
    %v3374 = vunpack.c.h.b16 %v3154
    %v3375 = vunpack.c.l.b16 %v3155
    %v3376 = vunpack.c.h.b16 %v3155
    %v3377 = vunpack.c.l.b16 %v3156
    %v3378 = vunpack.c.h.b16 %v3156
    %v3379 = vunpack.c.l.b16 %v3157
    %v3380 = vunpack.c.h.b16 %v3157
    %v3381 = vunpack.c.l.b16 %v3158
    %v3382 = vunpack.c.h.b16 %v3158
    %v3383 = vunpack.c.l.b16 %v3159
    %v3384 = vunpack.c.h.b16 %v3159
    %v3385 = vunpack.c.l.b16 %v3160
    %v3386 = vunpack.c.h.b16 %v3160
    %v3387 = vunpack.c.l.b16 %v3161
    %v3388 = vunpack.c.h.b16 %v3161
    %v3389 = vunpack.c.l.b16 %v3162
    %v3390 = vunpack.c.h.b16 %v3162
    %v3391 = vunpack.c.l.b16 %v3163
    %v3392 = vunpack.c.h.b16 %v3163
    %v3393 = vunpack.c.l.b16 %v3164
    %v3394 = vunpack.c.h.b16 %v3164
    %v3395 = vunpack.c.l.b16 %v3165
    %v3396 = vunpack.c.h.b16 %v3165
    %v3397 = vunpack.c.l.b16 %v3166
    %v3398 = vunpack.c.h.b16 %v3166
    %v3399 = vunpack.c.l.b16 %v3167
    %v3400 = vunpack.c.h.b16 %v3167
    %v3401 = vunpack.c.l.b16 %v3168
    %v3402 = vunpack.c.h.b16 %v3168
    %v3403 = vunpack.c.l.b16 %v3169
    %v3404 = vunpack.c.h.b16 %v3169
    %v3405 = vunpack.c.l.b16 %v3170
    %v3406 = vunpack.c.h.b16 %v3170
    %v3407 = vunpack.c.l.b16 %v3171
    %v3408 = vunpack.c.h.b16 %v3171
    %v3409 = vunpack.c.l.b16 %v3172
    %v3410 = vunpack.c.h.b16 %v3172
    %v3411 = vunpack.c.l.b16 %v3173
    %v3412 = vunpack.c.h.b16 %v3173
    %v3413 = vunpack.c.l.b16 %v3174
    %v3414 = vunpack.c.h.b16 %v3174
    %v3415 = vunpack.c.l.b16 %v3175
    %v3416 = vunpack.c.h.b16 %v3175
    %v3417 = vunpack.c.l.b16 %v3176
    %v3418 = vunpack.c.h.b16 %v3176
    %v3419 = vunpack.c.l.b16 %v3177
    %v3420 = vunpack.c.h.b16 %v3177
    %v3421 = vunpack.c.l.b16 %v3178
    %v3422 = vunpack.c.h.b16 %v3178
    %v3423 = vunpack.c.l.b16 %v3179
    %v3424 = vunpack.c.h.b16 %v3179
    %v3425 = vunpack.c.l.b16 %v3180
    %v3426 = vunpack.c.h.b16 %v3180
    %v3427 = vunpack.c.l.b16 %v3181
    %v3428 = vunpack.c.h.b16 %v3181
    %v3429 = vunpack.c.l.b16 %v3182
    %v3430 = vunpack.c.h.b16 %v3182
    %v3431 = vunpack.c.l.b16 %v3183
    %v3432 = vunpack.c.h.b16 %v3183
    %v3433 = vunpack.c.l.b16 %v3184
    %v3434 = vunpack.c.h.b16 %v3184
    %v3435 = vunpack.c.l.b16 %v3185
    %v3436 = vunpack.c.h.b16 %v3185
    %v3437 = vunpack.c.l.b16 %v3186
    %v3438 = vunpack.c.h.b16 %v3186
    %v3439 = vunpack.c.l.b16 %v3187
    %v3440 = vunpack.c.h.b16 %v3187
    %v3441 = vunpack.c.l.b16 %v3188
    %v3442 = vunpack.c.h.b16 %v3188
    %v3443 = vunpack.c.l.b16 %v3189
    %v3444 = vunpack.c.h.b16 %v3189
    %v3445 = vunpack.c.l.b16 %v3190
    %v3446 = vunpack.c.h.b16 %v3190
    %v3447 = vunpack.c.l.b16 %v3191
    %v3448 = vunpack.c.h.b16 %v3191
    %v3449 = vunpack.c.l.b16 %v3192
    %v3450 = vunpack.c.h.b16 %v3192
    %v3451 = vunpack.c.l.b16 %v3193
    %v3452 = vunpack.c.h.b16 %v3193
    %v3453 = vunpack.c.l.b16 %v3194
    %v3454 = vunpack.c.h.b16 %v3194
    %v3455 = vunpack.c.l.b16 %v3195
    %v3456 = vunpack.c.h.b16 %v3195
    %v3457 = vunpack.c.l.b16 %v3196
    %v3458 = vunpack.c.h.b16 %v3196
    %v3459 = vunpack.c.l.b16 %v3197
    %v3460 = vunpack.c.h.b16 %v3197
    %v3461 = vunpack.c.l.b16 %v3198
    %v3462 = vunpack.c.h.b16 %v3198
    %v3463 = vunpack.c.l.b16 %v3199
    %v3464 = vunpack.c.h.b16 %v3199
    %v3465 = vunpack.c.l.b16 %v3200
    %v3466 = vunpack.c.h.b16 %v3200
    %v3467 = vunpack.c.l.b16 %v3201
    %v3468 = vunpack.c.h.b16 %v3201
    %v3469 = vunpack.c.l.b16 %v3202
    %v3470 = vunpack.c.h.b16 %v3202
    %v3471 = vunpack.c.l.b16 %v3203
    %v3472 = vunpack.c.h.b16 %v3203
    %v3473 = vunpack.c.l.b16 %v3204
    %v3474 = vunpack.c.h.b16 %v3204
    %v3475 = vunpack.c.l.b16 %v3205
    %v3476 = vunpack.c.h.b16 %v3205
    %v3477 = vunpack.c.l.b16 %v3206
    %v3478 = vunpack.c.h.b16 %v3206
    %v3479 = vunpack.c.l.b16 %v3207
    %v3480 = vunpack.c.h.b16 %v3207
    %v3481 = vunpack.c.l.b16 %v3208
    %v3482 = vunpack.c.h.b16 %v3208
    %v3483 = vunpack.c.l.b16 %v3209
    %v3484 = vunpack.c.h.b16 %v3209
    %v3485 = vunpack.c.l.b16 %v3210
    %v3486 = vunpack.c.h.b16 %v3210
    %v3487 = vunpack.c.l.b16 %v3211
    %v3488 = vunpack.c.h.b16 %v3211
    %v3489 = vunpack.c.l.b16 %v3212
    %v3490 = vunpack.c.h.b16 %v3212
    %v3491 = vunpack.c.l.b16 %v3213
    %v3492 = vunpack.c.h.b16 %v3213
    %v3493 = vunpack.c.l.b16 %v3214
    %v3494 = vunpack.c.h.b16 %v3214
    %v3495 = vunpack.c.l.b16 %v3215
    %v3496 = vunpack.c.h.b16 %v3215
    %v3497 = vunpack.c.l.b16 %v3216
    %v3498 = vunpack.c.h.b16 %v3216
    %v3499 = vunpack.c.l.b16 %v3217
    %v3500 = vunpack.c.h.b16 %v3217
    %v3501 = vunpack.c.l.b16 %v3218
    %v3502 = vunpack.c.h.b16 %v3218
    %v3503 = vunpack.c.l.b16 %v3219
    %v3504 = vunpack.c.h.b16 %v3219
    %v3505 = vunpack.c.l.b16 %v3220
    %v3506 = vunpack.c.h.b16 %v3220
    %v3507 = vunpack.c.l.b16 %v3221
    %v3508 = vunpack.c.h.b16 %v3221
    %v3509 = vunpack.c.l.b16 %v3222
    %v3510 = vunpack.c.h.b16 %v3222
    %v3511 = vunpack.c.l.b16 %v3223
    %v3512 = vunpack.c.h.b16 %v3223
    %v3513 = vunpack.c.l.b16 %v3224
    %v3514 = vunpack.c.h.b16 %v3224
    %v3515 = vunpack.c.l.b16 %v3225
    %v3516 = vunpack.c.h.b16 %v3225
    %v3517 = vunpack.c.l.b16 %v3226
    %v3518 = vunpack.c.h.b16 %v3226
    %v3519 = vunpack.c.l.b16 %v3227
    %v3520 = vunpack.c.h.b16 %v3227
    %v3521 = vunpack.c.l.b16 %v3228
    %v3522 = vunpack.c.h.b16 %v3228
    %v3523 = vunpack.c.l.b16 %v3229
    %v3524 = vunpack.c.h.b16 %v3229
    %v3525 = vunpack.c.l.b16 %v3230
    %v3526 = vunpack.c.h.b16 %v3230
    %v3527 = vunpack.c.l.b16 %v3231
    %v3528 = vunpack.c.h.b16 %v3231
    %v3529 = vunpack.c.l.b16 %v3232
    %v3530 = vunpack.c.h.b16 %v3232
    %v3531 = vunpack.c.l.b16 %v3233
    %v3532 = vunpack.c.h.b16 %v3233
    %v3533 = vunpack.c.l.b16 %v3234
    %v3534 = vunpack.c.h.b16 %v3234
    %v3535 = vunpack.c.l.b16 %v3235
    %v3536 = vunpack.c.h.b16 %v3235
    %v3537 = vunpack.c.l.b16 %v3236
    %v3538 = vunpack.c.h.b16 %v3236
    %v3539 = vunpack.c.l.b16 %v3237
    %v3540 = vunpack.c.h.b16 %v3237
    %v3541 = vunpack.c.l.b16 %v3238
    %v3542 = vunpack.c.h.b16 %v3238
    %v3543 = vunpack.c.l.b16 %v3239
    %v3544 = vunpack.c.h.b16 %v3239
    %v3545 = vunpack.c.l.b16 %v3240
    %v3546 = vunpack.c.h.b16 %v3240
    %v3547 = vunpack.c.l.b16 %v3241
    %v3548 = vunpack.c.h.b16 %v3241
    %v3549 = vunpack.c.l.b16 %v3242
    %v3550 = vunpack.c.h.b16 %v3242
    %v3551 = vunpack.c.l.b16 %v3243
    %v3552 = vunpack.c.h.b16 %v3243
    %v3553 = vunpack.c.l.b16 %v3244
    %v3554 = vunpack.c.h.b16 %v3244
    %v3555 = vunpack.c.l.b16 %v3245
    %v3556 = vunpack.c.h.b16 %v3245
    %v3557 = vunpack.c.l.b16 %v3246
    %v3558 = vunpack.c.h.b16 %v3246
    %v3559 = vunpack.c.l.b16 %v3247
    %v3560 = vunpack.c.h.b16 %v3247
    %v3561 = vunpack.c.l.b16 %v3248
    %v3562 = vunpack.c.h.b16 %v3248
    %v3563 = vunpack.c.l.b16 %v3249
    %v3564 = vunpack.c.h.b16 %v3249
    %v3565 = vunpack.c.l.b16 %v3250
    %v3566 = vunpack.c.h.b16 %v3250
    %v3567 = vunpack.c.l.b16 %v3251
    %v3568 = vunpack.c.h.b16 %v3251
    %v3569 = vunpack.c.l.b16 %v3252
    %v3570 = vunpack.c.h.b16 %v3252
    %v3571 = vunpack.c.l.b16 %v3253
    %v3572 = vunpack.c.h.b16 %v3253
    %v3573 = vunpack.c.l.b16 %v3254
    %v3574 = vunpack.c.h.b16 %v3254
    %v3575 = vunpack.c.l.b16 %v3255
    %v3576 = vunpack.c.h.b16 %v3255
    %v3577 = vunpack.c.l.b16 %v3256
    %v3578 = vunpack.c.h.b16 %v3256
    %v3579 = vunpack.c.l.b16 %v3257
    %v3580 = vunpack.c.h.b16 %v3257
    %v3581 = vunpack.c.l.b16 %v3258
    %v3582 = vunpack.c.h.b16 %v3258
    %v3583 = vpack.c.b16 %v3369, %v3367
    %v3584 = vpack.c.b16 %v3370, %v3368
    %v3585 = vpack.c.b16 %v3373, %v3371
    %v3586 = vpack.c.b16 %v3374, %v3372
    %v3587 = vpack.c.b16 %v3377, %v3375
    %v3588 = vpack.c.b16 %v3378, %v3376
    %v3589 = vpack.c.b16 %v3381, %v3379
    %v3590 = vpack.c.b16 %v3382, %v3380
    %v3591 = vpack.c.b16 %v3385, %v3383
    %v3592 = vpack.c.b16 %v3386, %v3384
    %v3593 = vpack.c.b16 %v3389, %v3387
    %v3594 = vpack.c.b16 %v3390, %v3388
    %v3595 = vpack.c.b16 %v3393, %v3391
    %v3596 = vpack.c.b16 %v3394, %v3392
    %v3597 = vpack.c.b16 %v3397, %v3395
    %v3598 = vpack.c.b16 %v3398, %v3396
    %v3599 = vpack.c.b16 %v3401, %v3399
    %v3600 = vpack.c.b16 %v3402, %v3400
    %v3601 = vpack.c.b16 %v3405, %v3403
    %v3602 = vpack.c.b16 %v3406, %v3404
    %v3603 = vpack.c.b16 %v3409, %v3407
    %v3604 = vpack.c.b16 %v3410, %v3408
    %v3605 = vpack.c.b16 %v3413, %v3411
    %v3606 = vpack.c.b16 %v3414, %v3412
    %v3607 = vpack.c.b16 %v3417, %v3415
    %v3608 = vpack.c.b16 %v3418, %v3416
    %v3609 = vpack.c.b16 %v3421, %v3419
    %v3610 = vpack.c.b16 %v3422, %v3420
    %v3611 = vpack.c.b16 %v3425, %v3423
    %v3612 = vpack.c.b16 %v3426, %v3424
    %v3613 = vpack.c.b16 %v3429, %v3427
    %v3614 = vpack.c.b16 %v3430, %v3428
    %v3615 = vpack.c.b16 %v3433, %v3431
    %v3616 = vpack.c.b16 %v3434, %v3432
    %v3617 = vpack.c.b16 %v3437, %v3435
    %v3618 = vpack.c.b16 %v3438, %v3436
    %v3619 = vpack.c.b16 %v3441, %v3439
    %v3620 = vpack.c.b16 %v3442, %v3440
    %v3621 = vpack.c.b16 %v3445, %v3443
    %v3622 = vpack.c.b16 %v3446, %v3444
    %v3623 = vpack.c.b16 %v3449, %v3447
    %v3624 = vpack.c.b16 %v3450, %v3448
    %v3625 = vpack.c.b16 %v3453, %v3451
    %v3626 = vpack.c.b16 %v3454, %v3452
    %v3627 = vpack.c.b16 %v3457, %v3455
    %v3628 = vpack.c.b16 %v3458, %v3456
    %v3629 = vpack.c.b16 %v3461, %v3459
    %v3630 = vpack.c.b16 %v3462, %v3460
    %v3631 = vpack.c.b16 %v3465, %v3463
    %v3632 = vpack.c.b16 %v3466, %v3464
    %v3633 = vpack.c.b16 %v3469, %v3467
    %v3634 = vpack.c.b16 %v3470, %v3468
    %v3635 = vpack.c.b16 %v3473, %v3471
    %v3636 = vpack.c.b16 %v3474, %v3472
    %v3637 = vpack.c.b16 %v3477, %v3475
    %v3638 = vpack.c.b16 %v3478, %v3476
    %v3639 = vpack.c.b16 %v3481, %v3479
    %v3640 = vpack.c.b16 %v3482, %v3480
    %v3641 = vpack.c.b16 %v3485, %v3483
    %v3642 = vpack.c.b16 %v3486, %v3484
    %v3643 = vpack.c.b16 %v3489, %v3487
    %v3644 = vpack.c.b16 %v3490, %v3488
    %v3645 = vpack.c.b16 %v3493, %v3491
    %v3646 = vpack.c.b16 %v3494, %v3492
    %v3647 = vpack.c.b16 %v3497, %v3495
    %v3648 = vpack.c.b16 %v3498, %v3496
    %v3649 = vpack.c.b16 %v3501, %v3499
    %v3650 = vpack.c.b16 %v3502, %v3500
    %v3651 = vpack.c.b16 %v3505, %v3503
    %v3652 = vpack.c.b16 %v3506, %v3504
    %v3653 = vpack.c.b16 %v3509, %v3507
    %v3654 = vpack.c.b16 %v3510, %v3508
    %v3655 = vpack.c.b16 %v3513, %v3511
    %v3656 = vpack.c.b16 %v3514, %v3512
    %v3657 = vpack.c.b16 %v3517, %v3515
    %v3658 = vpack.c.b16 %v3518, %v3516
    %v3659 = vpack.c.b16 %v3521, %v3519
    %v3660 = vpack.c.b16 %v3522, %v3520
    %v3661 = vpack.c.b16 %v3525, %v3523
    %v3662 = vpack.c.b16 %v3526, %v3524
    %v3663 = vpack.c.b16 %v3529, %v3527
    %v3664 = vpack.c.b16 %v3530, %v3528
    %v3665 = vpack.c.b16 %v3533, %v3531
    %v3666 = vpack.c.b16 %v3534, %v3532
    %v3667 = vpack.c.b16 %v3537, %v3535
    %v3668 = vpack.c.b16 %v3538, %v3536
    %v3669 = vpack.c.b16 %v3541, %v3539
    %v3670 = vpack.c.b16 %v3542, %v3540
    %v3671 = vpack.c.b16 %v3545, %v3543
    %v3672 = vpack.c.b16 %v3546, %v3544
    %v3673 = vpack.c.b16 %v3549, %v3547
    %v3674 = vpack.c.b16 %v3550, %v3548
    %v3675 = vpack.c.b16 %v3553, %v3551
    %v3676 = vpack.c.b16 %v3554, %v3552
    %v3677 = vpack.c.b16 %v3557, %v3555
    %v3678 = vpack.c.b16 %v3558, %v3556
    %v3679 = vpack.c.b16 %v3561, %v3559
    %v3680 = vpack.c.b16 %v3562, %v3560
    %v3681 = vpack.c.b16 %v3565, %v3563
    %v3682 = vpack.c.b16 %v3566, %v3564
    %v3683 = vpack.c.b16 %v3569, %v3567
    %v3684 = vpack.c.b16 %v3570, %v3568
    %v3685 = vpack.c.b16 %v3573, %v3571
    %v3686 = vpack.c.b16 %v3574, %v3572
    %v3687 = vpack.c.b16 %v3577, %v3575
    %v3688 = vpack.c.b16 %v3578, %v3576
    %v3689 = vpack.c.b16 %v3581, %v3579
    %v3690 = vpack.c.b16 %v3582, %v3580
    %v3798 = vsel %vm1595, %v3143, 0
    %v3801 = vsel %vm1595, %v3150, 0
    %vm3803 = vcmask 1044480
    %vm3804 = vcmask 1045504
    %v3805 = vsel %vm3803, 4294967295, 65535
    %v3806 = vsel %vm3804, %v3805, 0
    %v3808 = vand.u32 %v3689, %v3806
    %v3811 = vand.u32 %v3690, %v3806
    %3813 = vmatprep.subr.bf16.mxu0 %v3584
    %3814 = vmatpush1.bf16.msra.mxu0 %v3583
    %3815 = vmatprep.subr.bf16.mxu0 %v3586
    %3816 = vmatpush1.bf16.msra.mxu0 %v3585
    %3817 = vmatprep.subr.bf16.mxu0 %v3588
    %3818 = vmatpush1.bf16.msra.mxu0 %v3587
    %3819 = vmatprep.subr.bf16.mxu0 %v3590
    %3820 = vmatpush1.bf16.msra.mxu0 %v3589
    %3821 = vmatprep.subr.bf16.mxu0 %v3592
    %3822 = vmatpush1.bf16.msra.mxu0 %v3591
    %3823 = vmatprep.subr.bf16.mxu0 %v3594
    %3824 = vmatpush1.bf16.msra.mxu0 %v3593
    %3825 = vmatprep.subr.bf16.mxu0 %v3596
    %3826 = vmatpush1.bf16.msra.mxu0 %v3595
    %3827 = vmatprep.subr.bf16.mxu0 %v3598
    %3828 = vmatpush1.bf16.msra.mxu0 %v3597
    %3829 = vmatprep.subr.bf16.mxu0 %v3600
    %3830 = vmatpush1.bf16.msra.mxu0 %v3599
    %3831 = vmatprep.subr.bf16.mxu0 %v3602
    %3832 = vmatpush1.bf16.msra.mxu0 %v3601
    %3833 = vmatprep.subr.bf16.mxu0 %v3604
    %3834 = vmatpush1.bf16.msra.mxu0 %v3603
    %3835 = vmatprep.subr.bf16.mxu0 %v3606
    %3836 = vmatpush1.bf16.msra.mxu0 %v3605
    %3837 = vmatprep.subr.bf16.mxu0 %v3608
    %3838 = vmatpush1.bf16.msra.mxu0 %v3607
    %3839 = vmatprep.subr.bf16.mxu0 %v3610
    %3840 = vmatpush1.bf16.msra.mxu0 %v3609
    %3841 = vmatprep.subr.bf16.mxu0 %v3612
    %3842 = vmatpush1.bf16.msra.mxu0 %v3611
    %3843 = vmatprep.subr.bf16.mxu0 %v3614
    %3844 = vmatpush1.bf16.msra.mxu0 %v3613
    %3845 = vmatprep.mubr.bf16.mxu0 %v3138
    %3846 = vmatmul.mubr.bf16.gmra.mrb[0].mxu0 %v3137
    %v3847 = vpop.f32.mrb[0].mxu0
    %v3848 = vadd.f32 0.0, %v3847
    %v3849 = vpop.f32.mrb[0].mxu0
    %v3850 = vadd.f32 0.0, %v3849
    %v3851 = vpop.f32.mrb[0].mxu0
    %v3852 = vadd.f32 0.0, %v3851
    %v3853 = vpop.f32.mrb[0].mxu0
    %v3854 = vadd.f32 0.0, %v3853
    %3855 = vmatprep.mubr.bf16.mxu0 %v3145
    %3856 = vmatmul.mubr.bf16.gmra.mrb[0].mxu0 %v3144
    %v3857 = vpop.f32.mrb[0].mxu0
    %v3858 = vadd.f32 0.0, %v3857
    %v3859 = vpop.f32.mrb[0].mxu0
    %v3860 = vadd.f32 0.0, %v3859
    %v3861 = vpop.f32.mrb[0].mxu0
    %v3862 = vadd.f32 0.0, %v3861
    %v3863 = vpop.f32.mrb[0].mxu0
    %v3864 = vadd.f32 0.0, %v3863
    %3865 = vdwg.mxu0
    %3866 = vmatprep.subr.bf16.mxu0 %v3616
    %3867 = vmatpush1.bf16.msra.mxu0 %v3615
    %3868 = vmatprep.subr.bf16.mxu0 %v3618
    %3869 = vmatpush1.bf16.msra.mxu0 %v3617
    %3870 = vmatprep.subr.bf16.mxu0 %v3620
    %3871 = vmatpush1.bf16.msra.mxu0 %v3619
    %3872 = vmatprep.subr.bf16.mxu0 %v3622
    %3873 = vmatpush1.bf16.msra.mxu0 %v3621
    %3874 = vmatprep.subr.bf16.mxu0 %v3624
    %3875 = vmatpush1.bf16.msra.mxu0 %v3623
    %3876 = vmatprep.subr.bf16.mxu0 %v3626
    %3877 = vmatpush1.bf16.msra.mxu0 %v3625
    %3878 = vmatprep.subr.bf16.mxu0 %v3628
    %3879 = vmatpush1.bf16.msra.mxu0 %v3627
    %3880 = vmatprep.subr.bf16.mxu0 %v3630
    %3881 = vmatpush1.bf16.msra.mxu0 %v3629
    %3882 = vmatprep.subr.bf16.mxu0 %v3632
    %3883 = vmatpush1.bf16.msra.mxu0 %v3631
    %3884 = vmatprep.subr.bf16.mxu0 %v3634
    %3885 = vmatpush1.bf16.msra.mxu0 %v3633
    %3886 = vmatprep.subr.bf16.mxu0 %v3636
    %3887 = vmatpush1.bf16.msra.mxu0 %v3635
    %3888 = vmatprep.subr.bf16.mxu0 %v3638
    %3889 = vmatpush1.bf16.msra.mxu0 %v3637
    %3890 = vmatprep.subr.bf16.mxu0 %v3640
    %3891 = vmatpush1.bf16.msra.mxu0 %v3639
    %3892 = vmatprep.subr.bf16.mxu0 %v3642
    %3893 = vmatpush1.bf16.msra.mxu0 %v3641
    %3894 = vmatprep.subr.bf16.mxu0 %v3644
    %3895 = vmatpush1.bf16.msra.mxu0 %v3643
    %3896 = vmatprep.subr.bf16.mxu0 %v3646
    %3897 = vmatpush1.bf16.msra.mxu0 %v3645
    %3898 = vmatprep.mubr.bf16.mxu0 %v3140
    %3899 = vmatmul.mubr.bf16.gmra.mrb[0].mxu0 %v3139
    %v3900 = vpop.f32.mrb[0].mxu0
    %v3901 = vadd.f32 %v3848, %v3900
    %v3902 = vpop.f32.mrb[0].mxu0
    %v3903 = vadd.f32 %v3850, %v3902
    %v3904 = vpop.f32.mrb[0].mxu0
    %v3905 = vadd.f32 %v3852, %v3904
    %v3906 = vpop.f32.mrb[0].mxu0
    %v3907 = vadd.f32 %v3854, %v3906
    %3908 = vmatprep.mubr.bf16.mxu0 %v3147
    %3909 = vmatmul.mubr.bf16.gmra.mrb[0].mxu0 %v3146
    %v3910 = vpop.f32.mrb[0].mxu0
    %v3911 = vadd.f32 %v3858, %v3910
    %v3912 = vpop.f32.mrb[0].mxu0
    %v3913 = vadd.f32 %v3860, %v3912
    %v3914 = vpop.f32.mrb[0].mxu0
    %v3915 = vadd.f32 %v3862, %v3914
    %v3916 = vpop.f32.mrb[0].mxu0
    %v3917 = vadd.f32 %v3864, %v3916
    %3918 = vdwg.mxu0
    %3919 = vmatprep.subr.bf16.mxu0 %v3648
    %3920 = vmatpush1.bf16.msra.mxu0 %v3647
    %3921 = vmatprep.subr.bf16.mxu0 %v3650
    %3922 = vmatpush1.bf16.msra.mxu0 %v3649
    %3923 = vmatprep.subr.bf16.mxu0 %v3652
    %3924 = vmatpush1.bf16.msra.mxu0 %v3651
    %3925 = vmatprep.subr.bf16.mxu0 %v3654
    %3926 = vmatpush1.bf16.msra.mxu0 %v3653
    %3927 = vmatprep.subr.bf16.mxu0 %v3656
    %3928 = vmatpush1.bf16.msra.mxu0 %v3655
    %3929 = vmatprep.subr.bf16.mxu0 %v3658
    %3930 = vmatpush1.bf16.msra.mxu0 %v3657
    %3931 = vmatprep.subr.bf16.mxu0 %v3660
    %3932 = vmatpush1.bf16.msra.mxu0 %v3659
    %3933 = vmatprep.subr.bf16.mxu0 %v3662
    %3934 = vmatpush1.bf16.msra.mxu0 %v3661
    %3935 = vmatprep.subr.bf16.mxu0 %v3664
    %3936 = vmatpush1.bf16.msra.mxu0 %v3663
    %3937 = vmatprep.subr.bf16.mxu0 %v3666
    %3938 = vmatpush1.bf16.msra.mxu0 %v3665
    %3939 = vmatprep.subr.bf16.mxu0 %v3668
    %3940 = vmatpush1.bf16.msra.mxu0 %v3667
    %3941 = vmatprep.subr.bf16.mxu0 %v3670
    %3942 = vmatpush1.bf16.msra.mxu0 %v3669
    %3943 = vmatprep.subr.bf16.mxu0 %v3672
    %3944 = vmatpush1.bf16.msra.mxu0 %v3671
    %3945 = vmatprep.subr.bf16.mxu0 %v3674
    %3946 = vmatpush1.bf16.msra.mxu0 %v3673
    %3947 = vmatprep.subr.bf16.mxu0 %v3676
    %3948 = vmatpush1.bf16.msra.mxu0 %v3675
    %3949 = vmatprep.subr.bf16.mxu0 %v3678
    %3950 = vmatpush1.bf16.msra.mxu0 %v3677
    %3951 = vmatprep.mubr.bf16.mxu0 %v3142
    %3952 = vmatmul.mubr.bf16.gmra.mrb[0].mxu0 %v3141
    %v3953 = vpop.f32.mrb[0].mxu0
    %v3954 = vadd.f32 %v3901, %v3953
    %v3955 = vpop.f32.mrb[0].mxu0
    %v3956 = vadd.f32 %v3903, %v3955
    %v3957 = vpop.f32.mrb[0].mxu0
    %v3958 = vadd.f32 %v3905, %v3957
    %v3959 = vpop.f32.mrb[0].mxu0
    %v3960 = vadd.f32 %v3907, %v3959
    %3961 = vmatprep.mubr.bf16.mxu0 %v3149
    %3962 = vmatmul.mubr.bf16.gmra.mrb[0].mxu0 %v3148
    %v3963 = vpop.f32.mrb[0].mxu0
    %v3964 = vadd.f32 %v3911, %v3963
    %v3965 = vpop.f32.mrb[0].mxu0
    %v3966 = vadd.f32 %v3913, %v3965
    %v3967 = vpop.f32.mrb[0].mxu0
    %v3968 = vadd.f32 %v3915, %v3967
    %v3969 = vpop.f32.mrb[0].mxu0
    %v3970 = vadd.f32 %v3917, %v3969
    %3971 = vdwg.mxu0
    %3972 = vmatprep.subr.bf16.mxu0 %v3680
    %3973 = vmatpush1.bf16.msra.mxu0 %v3679
    %3974 = vmatprep.subr.bf16.mxu0 %v3682
    %3975 = vmatpush1.bf16.msra.mxu0 %v3681
    %3976 = vmatprep.subr.bf16.mxu0 %v3684
    %3977 = vmatpush1.bf16.msra.mxu0 %v3683
    %3978 = vmatprep.subr.bf16.mxu0 %v3686
    %3979 = vmatpush1.bf16.msra.mxu0 %v3685
    %3980 = vmatprep.subr.bf16.mxu0 %v3688
    %3981 = vmatpush1.bf16.msra.mxu0 %v3687
    %3982 = vmatprep.subr.bf16.mxu0 %v3811
    %3983 = vmatpush1.bf16.msra.mxu0 %v3808
    %3984 = vmatprep.subr.bf16.mxu0 0
    %3985 = vmatpush1.bf16.msra.mxu0 0
    %3986 = vmatprep.subr.bf16.mxu0 0
    %3987 = vmatpush1.bf16.msra.mxu0 0
    %3988 = vmatprep.subr.bf16.mxu0 0
    %3989 = vmatpush1.bf16.msra.mxu0 0
    %3990 = vmatprep.subr.bf16.mxu0 0
    %3991 = vmatpush1.bf16.msra.mxu0 0
    %3992 = vmatprep.subr.bf16.mxu0 0
    %3993 = vmatpush1.bf16.msra.mxu0 0
    %3994 = vmatprep.subr.bf16.mxu0 0
    %3995 = vmatpush1.bf16.msra.mxu0 0
    %3996 = vmatprep.subr.bf16.mxu0 0
    %3997 = vmatpush1.bf16.msra.mxu0 0
    %3998 = vmatprep.subr.bf16.mxu0 0
    %3999 = vmatpush1.bf16.msra.mxu0 0
    %4000 = vmatprep.subr.bf16.mxu0 0
    %4001 = vmatpush1.bf16.msra.mxu0 0
    %4002 = vmatprep.subr.bf16.mxu0 0
    %4003 = vmatpush1.bf16.msra.mxu0 0
    %4004 = vmatprep.mubr.bf16.mxu0 0
    %4005 = vmatmul.mubr.bf16.gmra.mrb[0].mxu0 %v3798
    %v4006 = vpop.f32.mrb[0].mxu0
    %v4007 = vadd.f32 %v3954, %v4006
    %v4008 = vpop.f32.mrb[0].mxu0
    %v4009 = vadd.f32 %v3956, %v4008
    %v4010 = vpop.f32.mrb[0].mxu0
    %v4011 = vadd.f32 %v3958, %v4010
    %v4012 = vpop.f32.mrb[0].mxu0
    %v4013 = vadd.f32 %v3960, %v4012
    %4014 = vmatprep.mubr.bf16.mxu0 0
    %4015 = vmatmul.mubr.bf16.gmra.mrb[0].mxu0 %v3801
    %v4016 = vpop.f32.mrb[0].mxu0
    %v4017 = vadd.f32 %v3964, %v4016
    %v4018 = vpop.f32.mrb[0].mxu0
    %v4019 = vadd.f32 %v3966, %v4018
    %v4020 = vpop.f32.mrb[0].mxu0
    %v4021 = vadd.f32 %v3968, %v4020
    %v4022 = vpop.f32.mrb[0].mxu0
    %v4023 = vadd.f32 %v3970, %v4022
    %4024 = vdwg.mxu0
    %v4025 = vpack.c.bf16 %v4011, %v4007
    %v4026 = vpack.c.bf16 %v4013, %v4009
    %v4027 = vpack.c.bf16 %v4021, %v4017
    %v4028 = vpack.c.bf16 %v4023, %v4019
    %v4031 = vunpack.c.l.b16 %v4025
    %v4032 = vunpack.c.l.b16 %v4026
    %v4033 = vunpack.c.h.b16 %v4025
    %v4034 = vunpack.c.h.b16 %v4026
    %v4035 = vpack.c.b16 %v4032, %v4031
    %v4036 = vpack.c.b16 %v4034, %v4033
    %vm4039 = vcmask 556036
    %vm4040 = vmor %vm4039, %vm1210
    %4041 = vst.msk [vmem:[%s4] sm:$0xff] %vm4040, %v4035
    %4042 = vst.msk [vmem:[%s4 + $0x8] sm:$0xff] %vm4040, %v4036
    %v4045 = vunpack.c.l.b16 %v4027
    %v4046 = vunpack.c.l.b16 %v4028
    %v4047 = vunpack.c.h.b16 %v4027
    %v4048 = vunpack.c.h.b16 %v4028
    %v4049 = vpack.c.b16 %v4046, %v4045
    %v4050 = vpack.c.b16 %v4048, %v4047
    %s4053 = scalar_lea.vmem %s4, 16
    %4054 = vst.msk [vmem:[%s4053] sm:$0xff] %vm4040, %v4049
    %4055 = vst.msk [vmem:[%s4053 + $0x8] sm:$0xff] %vm4040, %v4050
    // Predicated region
    $region22: #{lenet_forward.3} parent=1 // pred_check
      _
    $region23: #{lenet_forward.3} parent=1 // pred_check_branch
      %4057 = sbr.rel (0) target = $region25
    $region24: #{lenet_forward.3} parent=1 // pred_region
      _
    $region25: #{lenet_forward.3} parent=1 // pred_fallthru
      _
    // Predicated region
    $region26: #{lenet_forward.3} parent=1 // pred_check
      _
    $region27: #{lenet_forward.3} parent=1 // pred_check_branch
      %4059 = sbr.rel (0) target = $region29
    $region28: #{lenet_forward.3} parent=1 // pred_region
      _
    $region29: #{lenet_forward.3} parent=1 // pred_fallthru
      _
    %4060 = vsyncpa [#allocation5], 1

</llo_original>
